<compile_context>
chip_gen: v6e
topology: v6e:2x2x1
jax: 0.10.0
libtpu: 0.0.40
codegen_flags: <defaults>
</compile_context>

<pallas_src>
import jax
import jax.numpy as jnp
from jax import lax
from jax.experimental import pallas as pl
from jax.experimental.pallas import tpu as pltpu

# ----------------------------- model dims (synthetic, small) ----------------
B = 2        # batch (number of prompts)
S = 8        # sequence length (context length)
D = 32       # transformer width
H = 4        # attention heads
DH = D // H  # head dim
LAYERS = 2   # transformer layers
EMBED = 32   # text_projection output dim
EPS = 1e-5

APPROX_SOFTMAX_RECIP = True   # EUP approx reciprocal in softmax (exact-ish, ~1e-3 rel err)

# ----------------------------- packed-parameter layout ----------------------
WPAD = 4 * D                     # 128: lane width of the packed slabs (lane dense)

# vecs slab (N_VEC, 128): one row per small vector, content left-aligned, zero padded
ROW_POS = 0                      # S rows  : positional embedding      (cols 0:D)
ROW_LNF_G = ROW_POS + S          # 1 row   : ln_final gain
ROW_LNF_B = ROW_LNF_G + 1        # 1 row   : ln_final bias
ROW_TPROJ = ROW_LNF_B + 1        # D rows  : text_projection           (cols 0:EMBED)
ROW_L0 = ROW_TPROJ + D           # per-layer blocks start here
# per-layer block rows:
V_LN1G, V_LN1B, V_BOUT, V_LN2G, V_LN2B, V_BFC, V_BPROJ = range(7)
V_QKVB = 7                       # + t*H + hd : qkv bias for (q/k/v) t, head hd (cols 0:DH)
NPL = 7 + 3 * H                  # rows per layer
N_VEC = ROW_L0 + LAYERS * NPL

# wmats slab (LAYERS, 6D, 128): per-layer dense weights on a lane-dense canvas
WM_FC = 0                        # rows 0:D      cols 0:4D  -> w_fc   (D, 4D)
WM_OUT = D                       # rows D:2D     cols 0:D   -> w_out  (D, D)
WM_PROJ = 2 * D                  # rows 2D:6D    cols 0:D   -> w_proj (4D, D)
WM_ROWS = 6 * D


# ----------------------------- kernel ----------------------------------------
def _layer_norm(x, g, b):
    mu = jnp.mean(x, axis=-1, keepdims=True)
    var = jnp.mean((x - mu) ** 2, axis=-1, keepdims=True)
    return (x - mu) * lax.rsqrt(var + EPS) * g + b


def text_encoder_kernel(prompts_ref, eot_ref, wheads_ref, wmats_ref, vecs_ref,
                        o_ref, xsc_ref):
    """Whole TextEncoder.forward for the full batch in one kernel invocation.

    prompts: (B, S, D) VMEM; eot: (B,) int32 SMEM (argmax of tokens = EOT position);
    wheads: (LAYERS*3*H, D, DH); wmats: (LAYERS, 6D, 128); vecs: (N_VEC, 128).
    Output: (B, EMBED).
    """
    f32 = jnp.float32

    def vrow(r, w):  # (1, w) row slice from the packed vector slab (static offsets)
        return vecs_ref[r:r + 1, 0:w]

    # ---- positional embedding add (fused) ----
    pos = vecs_ref[ROW_POS:ROW_POS + S, 0:D]                  # (S, D)
    x = prompts_ref[...] + pos[None, :, :]                    # (B, S, D)
    xf = x.reshape(B * S, D)                                  # (B*S, D) for LN/MLP

    # ---- causal mask, built ONCE (CLIP build_attention_mask) ----
    rr = lax.broadcasted_iota(jnp.int32, (S, S), 0)
    cc = lax.broadcasted_iota(jnp.int32, (S, S), 1)
    mask = jnp.where(cc <= rr, 0.0, -jnp.inf).astype(f32)     # (S, S)
    scale = f32(DH ** -0.5)

    for l in range(LAYERS):                                   # static unroll over layers
        base = ROW_L0 + l * NPL
        ln1_g = vrow(base + V_LN1G, D); ln1_b = vrow(base + V_LN1B, D)
        b_out = vrow(base + V_BOUT, D)
        ln2_g = vrow(base + V_LN2G, D); ln2_b = vrow(base + V_LN2B, D)
        b_fc = vrow(base + V_BFC, 4 * D)                      # (1, 4D) lane dense
        b_proj = vrow(base + V_BPROJ, D)

        # ---- attention branch ----
        h = _layer_norm(xf, ln1_g, ln1_b)                     # (B*S, D)
        parts = []
        for hd in range(H):                                   # static unroll over heads
            wq = wheads_ref[(l * 3 + 0) * H + hd]             # (D, DH) per-head weights
            wk = wheads_ref[(l * 3 + 1) * H + hd]
            wv = wheads_ref[(l * 3 + 2) * H + hd]
            bq = vrow(base + V_QKVB + 0 * H + hd, DH)         # (1, DH)
            bk = vrow(base + V_QKVB + 1 * H + hd, DH)
            bv = vrow(base + V_QKVB + 2 * H + hd, DH)
            q = (jnp.dot(h, wq, preferred_element_type=f32) + bq).reshape(B, S, DH)
            k = (jnp.dot(h, wk, preferred_element_type=f32) + bk).reshape(B, S, DH)
            v = (jnp.dot(h, wv, preferred_element_type=f32) + bv).reshape(B, S, DH)
            s = jnp.einsum('bqd,bkd->bqk', q, k, preferred_element_type=f32)  # (B,S,S)
            s = s * scale + mask[None, :, :]
            s = s - jnp.max(s, axis=-1, keepdims=True)
            p = jnp.exp(s)
            p = p * pl.reciprocal(jnp.sum(p, axis=-1, keepdims=True),
                                  approx=APPROX_SOFTMAX_RECIP)
            oh = jnp.einsum('bqk,bkd->bqd', p, v, preferred_element_type=f32)  # (B,S,DH)
            parts.append(oh.reshape(B * S, DH))
        # concat heads along lanes (D=32 fits one vreg) -> ONE out-projection matmul
        attn_in = jnp.concatenate(parts, axis=-1)             # (B*S, D)
        w_out = wmats_ref[l, WM_OUT:WM_OUT + D, 0:D]          # (D, D)
        xf = xf + jnp.dot(attn_in, w_out, preferred_element_type=f32) + b_out

        # ---- MLP branch ----
        h2 = _layer_norm(xf, ln2_g, ln2_b)
        w_fc = wmats_ref[l, WM_FC:WM_FC + D, :]               # (D, 4D), lane dense
        fc = jnp.dot(h2, w_fc, preferred_element_type=f32) + b_fc
        fc = fc * jax.nn.sigmoid(1.702 * fc)                  # QuickGELU (CLIP)
        w_proj = wmats_ref[l, WM_PROJ:WM_PROJ + 4 * D, 0:D]   # (4D, D)
        xf = xf + jnp.dot(fc, w_proj, preferred_element_type=f32) + b_proj

    # ---- EOT gather (SMEM scalar index -> dynamic row read from VMEM scratch) ----
    xsc_ref[...] = xf                                         # stage final activations
    rows = []
    for b in range(B):                                        # static unroll, B=2
        idx = b * S + eot_ref[b]
        rows.append(xsc_ref[pl.ds(idx, 1), :])                # (1, D)
    sel = jnp.concatenate(rows, axis=0)                       # (B, D)

    # select-then-ln_final is exact (LN is per-position), then text projection
    sel = _layer_norm(sel, vrow(ROW_LNF_G, D), vrow(ROW_LNF_B, D))
    tproj = vecs_ref[ROW_TPROJ:ROW_TPROJ + D, 0:EMBED]        # (D, EMBED)
    o_ref[...] = jnp.dot(sel, tproj, preferred_element_type=f32)   # (B, EMBED)


# ----------------------------- wrapper ----------------------------------------
def text_encoder_forward(prompts, tokenized_prompts, params):
    """Equivalent of TextEncoder.forward(prompts, tokenized_prompts)."""
    # glue: argmax over tokens (EOT index) as tiny int32 SMEM scalars (plain JAX)
    eot = jnp.argmax(tokenized_prompts, axis=-1).astype(jnp.int32)   # (B,)

    return pl.pallas_call(
        text_encoder_kernel,
        out_shape=jax.ShapeDtypeStruct((B, EMBED), jnp.float32),
        # no grid: single invocation, whole arrays resident (no pipeline buffers)
        in_specs=[
            pl.BlockSpec(memory_space=pltpu.MemorySpace.VMEM),   # prompts (B,S,D)
            pl.BlockSpec(memory_space=pltpu.MemorySpace.SMEM),   # eot indices (B,)
            pl.BlockSpec(memory_space=pltpu.MemorySpace.VMEM),   # wheads
            pl.BlockSpec(memory_space=pltpu.MemorySpace.VMEM),   # wmats
            pl.BlockSpec(memory_space=pltpu.MemorySpace.VMEM),   # vecs
        ],
        out_specs=pl.BlockSpec(memory_space=pltpu.MemorySpace.VMEM),
        scratch_shapes=[pltpu.VMEM((B * S, D), jnp.float32)],     # EOT-gather staging
    )(prompts, eot, params["wheads"], params["wmats"], params["vecs"])


# ----------------------------- deterministic param init ------------------------
def init_params(key):
    def nrm(k, shape, scale=0.02):
        return (scale * jax.random.normal(k, shape)).astype(jnp.float32)

    keys = jax.random.split(key, 2 + LAYERS)
    pos_emb = nrm(keys[0], (S, D))
    text_projection = nrm(keys[1], (D, EMBED))

    vecs = jnp.zeros((N_VEC, WPAD), jnp.float32)
    vecs = vecs.at[ROW_POS:ROW_POS + S, 0:D].set(pos_emb)
    vecs = vecs.at[ROW_LNF_G, 0:D].set(1.0)                      # ln_final gain (bias row stays 0)
    vecs = vecs.at[ROW_TPROJ:ROW_TPROJ + D, 0:EMBED].set(text_projection)

    wheads = jnp.zeros((LAYERS * 3 * H, D, DH), jnp.float32)
    wmats = jnp.zeros((LAYERS, WM_ROWS, WPAD), jnp.float32)

    for l in range(LAYERS):
        lk = jax.random.split(keys[2 + l], 4)
        # PyTorch-convention shapes, then transpose Linear weights to (in, out)
        in_proj_w = nrm(lk[0], (3 * D, D))        # attn.in_proj_weight
        out_proj_w = nrm(lk[1], (D, D))           # attn.out_proj.weight
        fc_w = nrm(lk[2], (4 * D, D))             # mlp.c_fc.weight
        proj_w = nrm(lk[3], (D, 4 * D))           # mlp.c_proj.weight

        # per-head q/k/v projection weights, pre-split in the wrapper
        wqkv_t = in_proj_w.T                      # (D, 3D): cols [q | k | v], head-major inside
        for t in range(3):
            for hd in range(H):
                blk = wqkv_t[:, t * D + hd * DH: t * D + (hd + 1) * DH]   # (D, DH)
                wheads = wheads.at[(l * 3 + t) * H + hd].set(blk)

        # per-layer dense weights on the lane-dense canvas
        wmats = wmats.at[l, WM_FC:WM_FC + D, :].set(fc_w.T)              # (D, 4D)
        wmats = wmats.at[l, WM_OUT:WM_OUT + D, 0:D].set(out_proj_w.T)    # (D, D)
        wmats = wmats.at[l, WM_PROJ:WM_PROJ + 4 * D, 0:D].set(proj_w.T)  # (4D, D)

        # LN gains (LN biases and all matmul biases stay zero, matching the
        # synthetic reference config; the kernel still reads and adds them)
        base = ROW_L0 + l * NPL
        vecs = vecs.at[base + V_LN1G, 0:D].set(1.0)
        vecs = vecs.at[base + V_LN2G, 0:D].set(1.0)

    return {"vecs": vecs, "wheads": wheads, "wmats": wmats}


# ----------------------------- main --------------------------------------------
if __name__ == "__main__":
    key = jax.random.PRNGKey(0)
    k_param, k_prompt, k_tok = jax.random.split(key, 3)

    params = init_params(k_param)
    # prompts: learned context embeddings already in the transformer width
    prompts = (0.02 * jax.random.normal(k_prompt, (B, S, D))).astype(jnp.float32)
    # tokenized prompts: integer token ids; argmax(-1) marks the EOT position
    tokenized_prompts = jax.random.randint(k_tok, (B, S), 0, 1000, dtype=jnp.int32)

    out = text_encoder_forward(prompts, tokenized_prompts, params)
    out = jax.block_until_ready(out)
    assert out.shape == (B, EMBED) and out.dtype == jnp.float32
    assert bool(jnp.all(jnp.isfinite(out)))
    print("KERNEL_OK")
</pallas_src>

<mosaic_0001>
module attributes {stable_mosaic.version = 11 : i64} {
  func.func @text_encoder_kernel(%arg0: memref<2x8x32xf32, #tpu.memory_space<vmem>>, %arg1: memref<2xi32, #tpu.memory_space<smem>>, %arg2: memref<24x32x8xf32, #tpu.memory_space<vmem>>, %arg3: memref<2x192x128xf32, #tpu.memory_space<vmem>>, %arg4: memref<80x128xf32, #tpu.memory_space<vmem>>, %arg5: memref<2x32xf32, #tpu.memory_space<vmem>>, %arg6: memref<16x32xf32, #tpu.memory_space<vmem>>) attributes {dimension_semantics = [], scalar_prefetch = 0 : i64, scratch_operands = 1 : i64, tpu.core_type = #tpu.core_type<tc>} {
    %c0 = arith.constant 0 : index
    %c0_0 = arith.constant 0 : index
    %0 = vector.load %arg4[%c0, %c0_0] : memref<80x128xf32, #tpu.memory_space<vmem>>, vector<8x32xf32>
    %c0_1 = arith.constant 0 : index
    %c0_2 = arith.constant 0 : index
    %c0_3 = arith.constant 0 : index
    %1 = vector.load %arg0[%c0_1, %c0_2, %c0_3] : memref<2x8x32xf32, #tpu.memory_space<vmem>>, vector<2x8x32xf32>
    %2 = vector.shape_cast %0 : vector<8x32xf32> to vector<1x8x32xf32>
    %3 = vector.broadcast %2 : vector<1x8x32xf32> to vector<2x8x32xf32>
    %4 = arith.addf %1, %3 : vector<2x8x32xf32>
    %5 = vector.shape_cast %4 : vector<2x8x32xf32> to vector<16x32xf32>
    %6 = tpu.iota {dimensions = array<i32: 0>} : vector<8x8xi32>
    %7 = tpu.iota {dimensions = array<i32: 1>} : vector<8x8xi32>
    %8 = arith.cmpi sle, %7, %6 : vector<8x8xi32>
    %cst = arith.constant 0.000000e+00 : f32
    %cst_4 = arith.constant 0xFF800000 : f32
    %9 = vector.broadcast %cst : f32 to vector<8x8xf32>
    %10 = vector.broadcast %cst_4 : f32 to vector<8x8xf32>
    %11 = arith.select %8, %9, %10 : vector<8x8xi1>, vector<8x8xf32>
    %c42 = arith.constant 42 : index
    %c0_5 = arith.constant 0 : index
    %12 = vector.load %arg4[%c42, %c0_5] : memref<80x128xf32, #tpu.memory_space<vmem>>, vector<1x32xf32>
    %c43 = arith.constant 43 : index
    %c0_6 = arith.constant 0 : index
    %13 = vector.load %arg4[%c43, %c0_6] : memref<80x128xf32, #tpu.memory_space<vmem>>, vector<1x32xf32>
    %c44 = arith.constant 44 : index
    %c0_7 = arith.constant 0 : index
    %14 = vector.load %arg4[%c44, %c0_7] : memref<80x128xf32, #tpu.memory_space<vmem>>, vector<1x32xf32>
    %c45 = arith.constant 45 : index
    %c0_8 = arith.constant 0 : index
    %15 = vector.load %arg4[%c45, %c0_8] : memref<80x128xf32, #tpu.memory_space<vmem>>, vector<1x32xf32>
    %c46 = arith.constant 46 : index
    %c0_9 = arith.constant 0 : index
    %16 = vector.load %arg4[%c46, %c0_9] : memref<80x128xf32, #tpu.memory_space<vmem>>, vector<1x32xf32>
    %c47 = arith.constant 47 : index
    %c0_10 = arith.constant 0 : index
    %17 = vector.load %arg4[%c47, %c0_10] : memref<80x128xf32, #tpu.memory_space<vmem>>, vector<1x128xf32>
    %c48 = arith.constant 48 : index
    %c0_11 = arith.constant 0 : index
    %18 = vector.load %arg4[%c48, %c0_11] : memref<80x128xf32, #tpu.memory_space<vmem>>, vector<1x32xf32>
    %cst_12 = arith.constant dense<0.000000e+00> : vector<16xf32>
    %19 = vector.multi_reduction <add>, %5, %cst_12 [1] : vector<16x32xf32> to vector<16xf32>
    %20 = vector.shape_cast %19 : vector<16xf32> to vector<16x1xf32>
    %cst_13 = arith.constant 3.200000e+01 : f32
    %21 = vector.broadcast %cst_13 : f32 to vector<16x1xf32>
    %22 = arith.divf %20, %21 : vector<16x1xf32>
    %23 = vector.broadcast %22 : vector<16x1xf32> to vector<16x32xf32>
    %24 = arith.subf %5, %23 : vector<16x32xf32>
    %25 = arith.mulf %24, %24 : vector<16x32xf32>
    %cst_14 = arith.constant dense<0.000000e+00> : vector<16xf32>
    %26 = vector.multi_reduction <add>, %25, %cst_14 [1] : vector<16x32xf32> to vector<16xf32>
    %27 = vector.shape_cast %26 : vector<16xf32> to vector<16x1xf32>
    %cst_15 = arith.constant 3.200000e+01 : f32
    %28 = vector.broadcast %cst_15 : f32 to vector<16x1xf32>
    %29 = arith.divf %27, %28 : vector<16x1xf32>
    %30 = vector.broadcast %22 : vector<16x1xf32> to vector<16x32xf32>
    %31 = arith.subf %5, %30 : vector<16x32xf32>
    %cst_16 = arith.constant 9.99999974E-6 : f32
    %32 = vector.broadcast %cst_16 : f32 to vector<16x1xf32>
    %33 = arith.addf %29, %32 : vector<16x1xf32>
    %34 = math.rsqrt %33 : vector<16x1xf32>
    %35 = vector.broadcast %34 : vector<16x1xf32> to vector<16x32xf32>
    %36 = arith.mulf %31, %35 : vector<16x32xf32>
    %37 = vector.broadcast %12 : vector<1x32xf32> to vector<16x32xf32>
    %38 = arith.mulf %36, %37 : vector<16x32xf32>
    %39 = vector.broadcast %13 : vector<1x32xf32> to vector<16x32xf32>
    %40 = arith.addf %38, %39 : vector<16x32xf32>
    %c0_17 = arith.constant 0 : index
    %c0_18 = arith.constant 0 : index
    %c0_19 = arith.constant 0 : index
    %41 = vector.load %arg2[%c0_17, %c0_18, %c0_19] : memref<24x32x8xf32, #tpu.memory_space<vmem>>, vector<1x32x8xf32>
    %42 = vector.shape_cast %41 : vector<1x32x8xf32> to vector<32x8xf32>
    %c4 = arith.constant 4 : index
    %c0_20 = arith.constant 0 : index
    %c0_21 = arith.constant 0 : index
    %43 = vector.load %arg2[%c4, %c0_20, %c0_21] : memref<24x32x8xf32, #tpu.memory_space<vmem>>, vector<1x32x8xf32>
    %44 = vector.shape_cast %43 : vector<1x32x8xf32> to vector<32x8xf32>
    %c8 = arith.constant 8 : index
    %c0_22 = arith.constant 0 : index
    %c0_23 = arith.constant 0 : index
    %45 = vector.load %arg2[%c8, %c0_22, %c0_23] : memref<24x32x8xf32, #tpu.memory_space<vmem>>, vector<1x32x8xf32>
    %46 = vector.shape_cast %45 : vector<1x32x8xf32> to vector<32x8xf32>
    %c49 = arith.constant 49 : index
    %c0_24 = arith.constant 0 : index
    %47 = vector.load %arg4[%c49, %c0_24] : memref<80x128xf32, #tpu.memory_space<vmem>>, vector<1x8xf32>
    %c53 = arith.constant 53 : index
    %c0_25 = arith.constant 0 : index
    %48 = vector.load %arg4[%c53, %c0_25] : memref<80x128xf32, #tpu.memory_space<vmem>>, vector<1x8xf32>
    %c57 = arith.constant 57 : index
    %c0_26 = arith.constant 0 : index
    %49 = vector.load %arg4[%c57, %c0_26] : memref<80x128xf32, #tpu.memory_space<vmem>>, vector<1x8xf32>
    %cst_27 = arith.constant dense<0.000000e+00> : vector<16x8xf32>
    %50 = tpu.matmul %40, %42, %cst_27 {dimension_numbers = #tpu.dot_dimension_numbers<[1], [0], [0], [1], [0, 0, 1, 1], [], []>} : vector<16x32xf32>, vector<32x8xf32>, vector<16x8xf32> -> vector<16x8xf32>
    %51 = vector.broadcast %47 : vector<1x8xf32> to vector<16x8xf32>
    %52 = arith.addf %50, %51 : vector<16x8xf32>
    %53 = vector.shape_cast %52 : vector<16x8xf32> to vector<2x8x8xf32>
    %cst_28 = arith.constant dense<0.000000e+00> : vector<16x8xf32>
    %54 = tpu.matmul %40, %44, %cst_28 {dimension_numbers = #tpu.dot_dimension_numbers<[1], [0], [0], [1], [0, 0, 1, 1], [], []>} : vector<16x32xf32>, vector<32x8xf32>, vector<16x8xf32> -> vector<16x8xf32>
    %55 = vector.broadcast %48 : vector<1x8xf32> to vector<16x8xf32>
    %56 = arith.addf %54, %55 : vector<16x8xf32>
    %57 = vector.shape_cast %56 : vector<16x8xf32> to vector<2x8x8xf32>
    %cst_29 = arith.constant dense<0.000000e+00> : vector<16x8xf32>
    %58 = tpu.matmul %40, %46, %cst_29 {dimension_numbers = #tpu.dot_dimension_numbers<[1], [0], [0], [1], [0, 0, 1, 1], [], []>} : vector<16x32xf32>, vector<32x8xf32>, vector<16x8xf32> -> vector<16x8xf32>
    %59 = vector.broadcast %49 : vector<1x8xf32> to vector<16x8xf32>
    %60 = arith.addf %58, %59 : vector<16x8xf32>
    %61 = vector.shape_cast %60 : vector<16x8xf32> to vector<2x8x8xf32>
    "tpu.trace_start"() <{level = 10 : i32, message = "bqd,bkd->bqk"}> : () -> ()
    %cst_30 = arith.constant dense<0.000000e+00> : vector<2x8x8xf32>
    %62 = tpu.matmul %53, %57, %cst_30 {dimension_numbers = #tpu.dot_dimension_numbers<[2], [2], [1], [1], [0, 0, 0, 1, 1, 1], [0], [0]>} : vector<2x8x8xf32>, vector<2x8x8xf32>, vector<2x8x8xf32> -> vector<2x8x8xf32>
    "tpu.trace_stop"() : () -> ()
    %cst_31 = arith.constant 0.353553385 : f32
    %63 = vector.broadcast %cst_31 : f32 to vector<2x8x8xf32>
    %64 = arith.mulf %62, %63 : vector<2x8x8xf32>
    %65 = vector.shape_cast %11 : vector<8x8xf32> to vector<1x8x8xf32>
    %66 = vector.broadcast %65 : vector<1x8x8xf32> to vector<2x8x8xf32>
    %67 = arith.addf %64, %66 : vector<2x8x8xf32>
    %cst_32 = arith.constant dense<0xFF800000> : vector<2x8xf32>
    %68 = vector.multi_reduction <maximumf>, %67, %cst_32 [2] : vector<2x8x8xf32> to vector<2x8xf32>
    %69 = vector.shape_cast %68 : vector<2x8xf32> to vector<2x8x1xf32>
    %70 = vector.broadcast %69 : vector<2x8x1xf32> to vector<2x8x8xf32>
    %71 = arith.subf %67, %70 : vector<2x8x8xf32>
    %72 = math.exp %71 : vector<2x8x8xf32>
    %cst_33 = arith.constant dense<0.000000e+00> : vector<2x8xf32>
    %73 = vector.multi_reduction <add>, %72, %cst_33 [2] : vector<2x8x8xf32> to vector<2x8xf32>
    %74 = vector.shape_cast %73 : vector<2x8xf32> to vector<2x8x1xf32>
    %75 = tpu.reciprocal %74 {approx = true} : vector<2x8x1xf32> -> vector<2x8x1xf32>
    %76 = vector.broadcast %75 : vector<2x8x1xf32> to vector<2x8x8xf32>
    %77 = arith.mulf %72, %76 : vector<2x8x8xf32>
    "tpu.trace_start"() <{level = 10 : i32, message = "bqk,bkd->bqd"}> : () -> ()
    %cst_34 = arith.constant dense<0.000000e+00> : vector<2x8x8xf32>
    %78 = tpu.matmul %77, %61, %cst_34 {dimension_numbers = #tpu.dot_dimension_numbers<[2], [1], [1], [2], [0, 0, 0, 1, 1, 2], [0], [0]>} : vector<2x8x8xf32>, vector<2x8x8xf32>, vector<2x8x8xf32> -> vector<2x8x8xf32>
    "tpu.trace_stop"() : () -> ()
    %79 = vector.shape_cast %78 : vector<2x8x8xf32> to vector<16x8xf32>
    %c1 = arith.constant 1 : index
    %c0_35 = arith.constant 0 : index
    %c0_36 = arith.constant 0 : index
    %80 = vector.load %arg2[%c1, %c0_35, %c0_36] : memref<24x32x8xf32, #tpu.memory_space<vmem>>, vector<1x32x8xf32>
    %81 = vector.shape_cast %80 : vector<1x32x8xf32> to vector<32x8xf32>
    %c5 = arith.constant 5 : index
    %c0_37 = arith.constant 0 : index
    %c0_38 = arith.constant 0 : index
    %82 = vector.load %arg2[%c5, %c0_37, %c0_38] : memref<24x32x8xf32, #tpu.memory_space<vmem>>, vector<1x32x8xf32>
    %83 = vector.shape_cast %82 : vector<1x32x8xf32> to vector<32x8xf32>
    %c9 = arith.constant 9 : index
    %c0_39 = arith.constant 0 : index
    %c0_40 = arith.constant 0 : index
    %84 = vector.load %arg2[%c9, %c0_39, %c0_40] : memref<24x32x8xf32, #tpu.memory_space<vmem>>, vector<1x32x8xf32>
    %85 = vector.shape_cast %84 : vector<1x32x8xf32> to vector<32x8xf32>
    %c50 = arith.constant 50 : index
    %c0_41 = arith.constant 0 : index
    %86 = vector.load %arg4[%c50, %c0_41] : memref<80x128xf32, #tpu.memory_space<vmem>>, vector<1x8xf32>
    %c54 = arith.constant 54 : index
    %c0_42 = arith.constant 0 : index
    %87 = vector.load %arg4[%c54, %c0_42] : memref<80x128xf32, #tpu.memory_space<vmem>>, vector<1x8xf32>
    %c58 = arith.constant 58 : index
    %c0_43 = arith.constant 0 : index
    %88 = vector.load %arg4[%c58, %c0_43] : memref<80x128xf32, #tpu.memory_space<vmem>>, vector<1x8xf32>
    %cst_44 = arith.constant dense<0.000000e+00> : vector<16x8xf32>
    %89 = tpu.matmul %40, %81, %cst_44 {dimension_numbers = #tpu.dot_dimension_numbers<[1], [0], [0], [1], [0, 0, 1, 1], [], []>} : vector<16x32xf32>, vector<32x8xf32>, vector<16x8xf32> -> vector<16x8xf32>
    %90 = vector.broadcast %86 : vector<1x8xf32> to vector<16x8xf32>
    %91 = arith.addf %89, %90 : vector<16x8xf32>
    %92 = vector.shape_cast %91 : vector<16x8xf32> to vector<2x8x8xf32>
    %cst_45 = arith.constant dense<0.000000e+00> : vector<16x8xf32>
    %93 = tpu.matmul %40, %83, %cst_45 {dimension_numbers = #tpu.dot_dimension_numbers<[1], [0], [0], [1], [0, 0, 1, 1], [], []>} : vector<16x32xf32>, vector<32x8xf32>, vector<16x8xf32> -> vector<16x8xf32>
    %94 = vector.broadcast %87 : vector<1x8xf32> to vector<16x8xf32>
    %95 = arith.addf %93, %94 : vector<16x8xf32>
    %96 = vector.shape_cast %95 : vector<16x8xf32> to vector<2x8x8xf32>
    %cst_46 = arith.constant dense<0.000000e+00> : vector<16x8xf32>
    %97 = tpu.matmul %40, %85, %cst_46 {dimension_numbers = #tpu.dot_dimension_numbers<[1], [0], [0], [1], [0, 0, 1, 1], [], []>} : vector<16x32xf32>, vector<32x8xf32>, vector<16x8xf32> -> vector<16x8xf32>
    %98 = vector.broadcast %88 : vector<1x8xf32> to vector<16x8xf32>
    %99 = arith.addf %97, %98 : vector<16x8xf32>
    %100 = vector.shape_cast %99 : vector<16x8xf32> to vector<2x8x8xf32>
    "tpu.trace_start"() <{level = 10 : i32, message = "bqd,bkd->bqk"}> : () -> ()
    %cst_47 = arith.constant dense<0.000000e+00> : vector<2x8x8xf32>
    %101 = tpu.matmul %92, %96, %cst_47 {dimension_numbers = #tpu.dot_dimension_numbers<[2], [2], [1], [1], [0, 0, 0, 1, 1, 1], [0], [0]>} : vector<2x8x8xf32>, vector<2x8x8xf32>, vector<2x8x8xf32> -> vector<2x8x8xf32>
    "tpu.trace_stop"() : () -> ()
    %cst_48 = arith.constant 0.353553385 : f32
    %102 = vector.broadcast %cst_48 : f32 to vector<2x8x8xf32>
    %103 = arith.mulf %101, %102 : vector<2x8x8xf32>
    %104 = vector.shape_cast %11 : vector<8x8xf32> to vector<1x8x8xf32>
    %105 = vector.broadcast %104 : vector<1x8x8xf32> to vector<2x8x8xf32>
    %106 = arith.addf %103, %105 : vector<2x8x8xf32>
    %cst_49 = arith.constant dense<0xFF800000> : vector<2x8xf32>
    %107 = vector.multi_reduction <maximumf>, %106, %cst_49 [2] : vector<2x8x8xf32> to vector<2x8xf32>
    %108 = vector.shape_cast %107 : vector<2x8xf32> to vector<2x8x1xf32>
    %109 = vector.broadcast %108 : vector<2x8x1xf32> to vector<2x8x8xf32>
    %110 = arith.subf %106, %109 : vector<2x8x8xf32>
    %111 = math.exp %110 : vector<2x8x8xf32>
    %cst_50 = arith.constant dense<0.000000e+00> : vector<2x8xf32>
    %112 = vector.multi_reduction <add>, %111, %cst_50 [2] : vector<2x8x8xf32> to vector<2x8xf32>
    %113 = vector.shape_cast %112 : vector<2x8xf32> to vector<2x8x1xf32>
    %114 = tpu.reciprocal %113 {approx = true} : vector<2x8x1xf32> -> vector<2x8x1xf32>
    %115 = vector.broadcast %114 : vector<2x8x1xf32> to vector<2x8x8xf32>
    %116 = arith.mulf %111, %115 : vector<2x8x8xf32>
    "tpu.trace_start"() <{level = 10 : i32, message = "bqk,bkd->bqd"}> : () -> ()
    %cst_51 = arith.constant dense<0.000000e+00> : vector<2x8x8xf32>
    %117 = tpu.matmul %116, %100, %cst_51 {dimension_numbers = #tpu.dot_dimension_numbers<[2], [1], [1], [2], [0, 0, 0, 1, 1, 2], [0], [0]>} : vector<2x8x8xf32>, vector<2x8x8xf32>, vector<2x8x8xf32> -> vector<2x8x8xf32>
    "tpu.trace_stop"() : () -> ()
    %118 = vector.shape_cast %117 : vector<2x8x8xf32> to vector<16x8xf32>
    %c2 = arith.constant 2 : index
    %c0_52 = arith.constant 0 : index
    %c0_53 = arith.constant 0 : index
    %119 = vector.load %arg2[%c2, %c0_52, %c0_53] : memref<24x32x8xf32, #tpu.memory_space<vmem>>, vector<1x32x8xf32>
    %120 = vector.shape_cast %119 : vector<1x32x8xf32> to vector<32x8xf32>
    %c6 = arith.constant 6 : index
    %c0_54 = arith.constant 0 : index
    %c0_55 = arith.constant 0 : index
    %121 = vector.load %arg2[%c6, %c0_54, %c0_55] : memref<24x32x8xf32, #tpu.memory_space<vmem>>, vector<1x32x8xf32>
    %122 = vector.shape_cast %121 : vector<1x32x8xf32> to vector<32x8xf32>
    %c10 = arith.constant 10 : index
    %c0_56 = arith.constant 0 : index
    %c0_57 = arith.constant 0 : index
    %123 = vector.load %arg2[%c10, %c0_56, %c0_57] : memref<24x32x8xf32, #tpu.memory_space<vmem>>, vector<1x32x8xf32>
    %124 = vector.shape_cast %123 : vector<1x32x8xf32> to vector<32x8xf32>
    %c51 = arith.constant 51 : index
    %c0_58 = arith.constant 0 : index
    %125 = vector.load %arg4[%c51, %c0_58] : memref<80x128xf32, #tpu.memory_space<vmem>>, vector<1x8xf32>
    %c55 = arith.constant 55 : index
    %c0_59 = arith.constant 0 : index
    %126 = vector.load %arg4[%c55, %c0_59] : memref<80x128xf32, #tpu.memory_space<vmem>>, vector<1x8xf32>
    %c59 = arith.constant 59 : index
    %c0_60 = arith.constant 0 : index
    %127 = vector.load %arg4[%c59, %c0_60] : memref<80x128xf32, #tpu.memory_space<vmem>>, vector<1x8xf32>
    %cst_61 = arith.constant dense<0.000000e+00> : vector<16x8xf32>
    %128 = tpu.matmul %40, %120, %cst_61 {dimension_numbers = #tpu.dot_dimension_numbers<[1], [0], [0], [1], [0, 0, 1, 1], [], []>} : vector<16x32xf32>, vector<32x8xf32>, vector<16x8xf32> -> vector<16x8xf32>
    %129 = vector.broadcast %125 : vector<1x8xf32> to vector<16x8xf32>
    %130 = arith.addf %128, %129 : vector<16x8xf32>
    %131 = vector.shape_cast %130 : vector<16x8xf32> to vector<2x8x8xf32>
    %cst_62 = arith.constant dense<0.000000e+00> : vector<16x8xf32>
    %132 = tpu.matmul %40, %122, %cst_62 {dimension_numbers = #tpu.dot_dimension_numbers<[1], [0], [0], [1], [0, 0, 1, 1], [], []>} : vector<16x32xf32>, vector<32x8xf32>, vector<16x8xf32> -> vector<16x8xf32>
    %133 = vector.broadcast %126 : vector<1x8xf32> to vector<16x8xf32>
    %134 = arith.addf %132, %133 : vector<16x8xf32>
    %135 = vector.shape_cast %134 : vector<16x8xf32> to vector<2x8x8xf32>
    %cst_63 = arith.constant dense<0.000000e+00> : vector<16x8xf32>
    %136 = tpu.matmul %40, %124, %cst_63 {dimension_numbers = #tpu.dot_dimension_numbers<[1], [0], [0], [1], [0, 0, 1, 1], [], []>} : vector<16x32xf32>, vector<32x8xf32>, vector<16x8xf32> -> vector<16x8xf32>
    %137 = vector.broadcast %127 : vector<1x8xf32> to vector<16x8xf32>
    %138 = arith.addf %136, %137 : vector<16x8xf32>
    %139 = vector.shape_cast %138 : vector<16x8xf32> to vector<2x8x8xf32>
    "tpu.trace_start"() <{level = 10 : i32, message = "bqd,bkd->bqk"}> : () -> ()
    %cst_64 = arith.constant dense<0.000000e+00> : vector<2x8x8xf32>
    %140 = tpu.matmul %131, %135, %cst_64 {dimension_numbers = #tpu.dot_dimension_numbers<[2], [2], [1], [1], [0, 0, 0, 1, 1, 1], [0], [0]>} : vector<2x8x8xf32>, vector<2x8x8xf32>, vector<2x8x8xf32> -> vector<2x8x8xf32>
    "tpu.trace_stop"() : () -> ()
    %cst_65 = arith.constant 0.353553385 : f32
    %141 = vector.broadcast %cst_65 : f32 to vector<2x8x8xf32>
    %142 = arith.mulf %140, %141 : vector<2x8x8xf32>
    %143 = vector.shape_cast %11 : vector<8x8xf32> to vector<1x8x8xf32>
    %144 = vector.broadcast %143 : vector<1x8x8xf32> to vector<2x8x8xf32>
    %145 = arith.addf %142, %144 : vector<2x8x8xf32>
    %cst_66 = arith.constant dense<0xFF800000> : vector<2x8xf32>
    %146 = vector.multi_reduction <maximumf>, %145, %cst_66 [2] : vector<2x8x8xf32> to vector<2x8xf32>
    %147 = vector.shape_cast %146 : vector<2x8xf32> to vector<2x8x1xf32>
    %148 = vector.broadcast %147 : vector<2x8x1xf32> to vector<2x8x8xf32>
    %149 = arith.subf %145, %148 : vector<2x8x8xf32>
    %150 = math.exp %149 : vector<2x8x8xf32>
    %cst_67 = arith.constant dense<0.000000e+00> : vector<2x8xf32>
    %151 = vector.multi_reduction <add>, %150, %cst_67 [2] : vector<2x8x8xf32> to vector<2x8xf32>
    %152 = vector.shape_cast %151 : vector<2x8xf32> to vector<2x8x1xf32>
    %153 = tpu.reciprocal %152 {approx = true} : vector<2x8x1xf32> -> vector<2x8x1xf32>
    %154 = vector.broadcast %153 : vector<2x8x1xf32> to vector<2x8x8xf32>
    %155 = arith.mulf %150, %154 : vector<2x8x8xf32>
    "tpu.trace_start"() <{level = 10 : i32, message = "bqk,bkd->bqd"}> : () -> ()
    %cst_68 = arith.constant dense<0.000000e+00> : vector<2x8x8xf32>
    %156 = tpu.matmul %155, %139, %cst_68 {dimension_numbers = #tpu.dot_dimension_numbers<[2], [1], [1], [2], [0, 0, 0, 1, 1, 2], [0], [0]>} : vector<2x8x8xf32>, vector<2x8x8xf32>, vector<2x8x8xf32> -> vector<2x8x8xf32>
    "tpu.trace_stop"() : () -> ()
    %157 = vector.shape_cast %156 : vector<2x8x8xf32> to vector<16x8xf32>
    %c3 = arith.constant 3 : index
    %c0_69 = arith.constant 0 : index
    %c0_70 = arith.constant 0 : index
    %158 = vector.load %arg2[%c3, %c0_69, %c0_70] : memref<24x32x8xf32, #tpu.memory_space<vmem>>, vector<1x32x8xf32>
    %159 = vector.shape_cast %158 : vector<1x32x8xf32> to vector<32x8xf32>
    %c7 = arith.constant 7 : index
    %c0_71 = arith.constant 0 : index
    %c0_72 = arith.constant 0 : index
    %160 = vector.load %arg2[%c7, %c0_71, %c0_72] : memref<24x32x8xf32, #tpu.memory_space<vmem>>, vector<1x32x8xf32>
    %161 = vector.shape_cast %160 : vector<1x32x8xf32> to vector<32x8xf32>
    %c11 = arith.constant 11 : index
    %c0_73 = arith.constant 0 : index
    %c0_74 = arith.constant 0 : index
    %162 = vector.load %arg2[%c11, %c0_73, %c0_74] : memref<24x32x8xf32, #tpu.memory_space<vmem>>, vector<1x32x8xf32>
    %163 = vector.shape_cast %162 : vector<1x32x8xf32> to vector<32x8xf32>
    %c52 = arith.constant 52 : index
    %c0_75 = arith.constant 0 : index
    %164 = vector.load %arg4[%c52, %c0_75] : memref<80x128xf32, #tpu.memory_space<vmem>>, vector<1x8xf32>
    %c56 = arith.constant 56 : index
    %c0_76 = arith.constant 0 : index
    %165 = vector.load %arg4[%c56, %c0_76] : memref<80x128xf32, #tpu.memory_space<vmem>>, vector<1x8xf32>
    %c60 = arith.constant 60 : index
    %c0_77 = arith.constant 0 : index
    %166 = vector.load %arg4[%c60, %c0_77] : memref<80x128xf32, #tpu.memory_space<vmem>>, vector<1x8xf32>
    %cst_78 = arith.constant dense<0.000000e+00> : vector<16x8xf32>
    %167 = tpu.matmul %40, %159, %cst_78 {dimension_numbers = #tpu.dot_dimension_numbers<[1], [0], [0], [1], [0, 0, 1, 1], [], []>} : vector<16x32xf32>, vector<32x8xf32>, vector<16x8xf32> -> vector<16x8xf32>
    %168 = vector.broadcast %164 : vector<1x8xf32> to vector<16x8xf32>
    %169 = arith.addf %167, %168 : vector<16x8xf32>
    %170 = vector.shape_cast %169 : vector<16x8xf32> to vector<2x8x8xf32>
    %cst_79 = arith.constant dense<0.000000e+00> : vector<16x8xf32>
    %171 = tpu.matmul %40, %161, %cst_79 {dimension_numbers = #tpu.dot_dimension_numbers<[1], [0], [0], [1], [0, 0, 1, 1], [], []>} : vector<16x32xf32>, vector<32x8xf32>, vector<16x8xf32> -> vector<16x8xf32>
    %172 = vector.broadcast %165 : vector<1x8xf32> to vector<16x8xf32>
    %173 = arith.addf %171, %172 : vector<16x8xf32>
    %174 = vector.shape_cast %173 : vector<16x8xf32> to vector<2x8x8xf32>
    %cst_80 = arith.constant dense<0.000000e+00> : vector<16x8xf32>
    %175 = tpu.matmul %40, %163, %cst_80 {dimension_numbers = #tpu.dot_dimension_numbers<[1], [0], [0], [1], [0, 0, 1, 1], [], []>} : vector<16x32xf32>, vector<32x8xf32>, vector<16x8xf32> -> vector<16x8xf32>
    %176 = vector.broadcast %166 : vector<1x8xf32> to vector<16x8xf32>
    %177 = arith.addf %175, %176 : vector<16x8xf32>
    %178 = vector.shape_cast %177 : vector<16x8xf32> to vector<2x8x8xf32>
    "tpu.trace_start"() <{level = 10 : i32, message = "bqd,bkd->bqk"}> : () -> ()
    %cst_81 = arith.constant dense<0.000000e+00> : vector<2x8x8xf32>
    %179 = tpu.matmul %170, %174, %cst_81 {dimension_numbers = #tpu.dot_dimension_numbers<[2], [2], [1], [1], [0, 0, 0, 1, 1, 1], [0], [0]>} : vector<2x8x8xf32>, vector<2x8x8xf32>, vector<2x8x8xf32> -> vector<2x8x8xf32>
    "tpu.trace_stop"() : () -> ()
    %cst_82 = arith.constant 0.353553385 : f32
    %180 = vector.broadcast %cst_82 : f32 to vector<2x8x8xf32>
    %181 = arith.mulf %179, %180 : vector<2x8x8xf32>
    %182 = vector.shape_cast %11 : vector<8x8xf32> to vector<1x8x8xf32>
    %183 = vector.broadcast %182 : vector<1x8x8xf32> to vector<2x8x8xf32>
    %184 = arith.addf %181, %183 : vector<2x8x8xf32>
    %cst_83 = arith.constant dense<0xFF800000> : vector<2x8xf32>
    %185 = vector.multi_reduction <maximumf>, %184, %cst_83 [2] : vector<2x8x8xf32> to vector<2x8xf32>
    %186 = vector.shape_cast %185 : vector<2x8xf32> to vector<2x8x1xf32>
    %187 = vector.broadcast %186 : vector<2x8x1xf32> to vector<2x8x8xf32>
    %188 = arith.subf %184, %187 : vector<2x8x8xf32>
    %189 = math.exp %188 : vector<2x8x8xf32>
    %cst_84 = arith.constant dense<0.000000e+00> : vector<2x8xf32>
    %190 = vector.multi_reduction <add>, %189, %cst_84 [2] : vector<2x8x8xf32> to vector<2x8xf32>
    %191 = vector.shape_cast %190 : vector<2x8xf32> to vector<2x8x1xf32>
    %192 = tpu.reciprocal %191 {approx = true} : vector<2x8x1xf32> -> vector<2x8x1xf32>
    %193 = vector.broadcast %192 : vector<2x8x1xf32> to vector<2x8x8xf32>
    %194 = arith.mulf %189, %193 : vector<2x8x8xf32>
    "tpu.trace_start"() <{level = 10 : i32, message = "bqk,bkd->bqd"}> : () -> ()
    %cst_85 = arith.constant dense<0.000000e+00> : vector<2x8x8xf32>
    %195 = tpu.matmul %194, %178, %cst_85 {dimension_numbers = #tpu.dot_dimension_numbers<[2], [1], [1], [2], [0, 0, 0, 1, 1, 2], [0], [0]>} : vector<2x8x8xf32>, vector<2x8x8xf32>, vector<2x8x8xf32> -> vector<2x8x8xf32>
    "tpu.trace_stop"() : () -> ()
    %196 = vector.shape_cast %195 : vector<2x8x8xf32> to vector<16x8xf32>
    %197 = tpu.concatenate %79, %118, %157, %196 in 1 : vector<16x8xf32>, vector<16x8xf32>, vector<16x8xf32>, vector<16x8xf32> -> vector<16x32xf32>
    %c0_86 = arith.constant 0 : index
    %c32 = arith.constant 32 : index
    %c0_87 = arith.constant 0 : index
    %198 = vector.load %arg3[%c0_86, %c32, %c0_87] : memref<2x192x128xf32, #tpu.memory_space<vmem>>, vector<1x32x32xf32>
    %199 = vector.shape_cast %198 : vector<1x32x32xf32> to vector<32x32xf32>
    %cst_88 = arith.constant dense<0.000000e+00> : vector<16x32xf32>
    %200 = tpu.matmul %197, %199, %cst_88 {dimension_numbers = #tpu.dot_dimension_numbers<[1], [0], [0], [1], [0, 0, 1, 1], [], []>} : vector<16x32xf32>, vector<32x32xf32>, vector<16x32xf32> -> vector<16x32xf32>
    %201 = arith.addf %5, %200 : vector<16x32xf32>
    %202 = vector.broadcast %14 : vector<1x32xf32> to vector<16x32xf32>
    %203 = arith.addf %201, %202 : vector<16x32xf32>
    %cst_89 = arith.constant dense<0.000000e+00> : vector<16xf32>
    %204 = vector.multi_reduction <add>, %203, %cst_89 [1] : vector<16x32xf32> to vector<16xf32>
    %205 = vector.shape_cast %204 : vector<16xf32> to vector<16x1xf32>
    %cst_90 = arith.constant 3.200000e+01 : f32
    %206 = vector.broadcast %cst_90 : f32 to vector<16x1xf32>
    %207 = arith.divf %205, %206 : vector<16x1xf32>
    %208 = vector.broadcast %207 : vector<16x1xf32> to vector<16x32xf32>
    %209 = arith.subf %203, %208 : vector<16x32xf32>
    %210 = arith.mulf %209, %209 : vector<16x32xf32>
    %cst_91 = arith.constant dense<0.000000e+00> : vector<16xf32>
    %211 = vector.multi_reduction <add>, %210, %cst_91 [1] : vector<16x32xf32> to vector<16xf32>
    %212 = vector.shape_cast %211 : vector<16xf32> to vector<16x1xf32>
    %cst_92 = arith.constant 3.200000e+01 : f32
    %213 = vector.broadcast %cst_92 : f32 to vector<16x1xf32>
    %214 = arith.divf %212, %213 : vector<16x1xf32>
    %215 = vector.broadcast %207 : vector<16x1xf32> to vector<16x32xf32>
    %216 = arith.subf %203, %215 : vector<16x32xf32>
    %cst_93 = arith.constant 9.99999974E-6 : f32
    %217 = vector.broadcast %cst_93 : f32 to vector<16x1xf32>
    %218 = arith.addf %214, %217 : vector<16x1xf32>
    %219 = math.rsqrt %218 : vector<16x1xf32>
    %220 = vector.broadcast %219 : vector<16x1xf32> to vector<16x32xf32>
    %221 = arith.mulf %216, %220 : vector<16x32xf32>
    %222 = vector.broadcast %15 : vector<1x32xf32> to vector<16x32xf32>
    %223 = arith.mulf %221, %222 : vector<16x32xf32>
    %224 = vector.broadcast %16 : vector<1x32xf32> to vector<16x32xf32>
    %225 = arith.addf %223, %224 : vector<16x32xf32>
    %c0_94 = arith.constant 0 : index
    %c0_95 = arith.constant 0 : index
    %c0_96 = arith.constant 0 : index
    %226 = vector.load %arg3[%c0_94, %c0_95, %c0_96] : memref<2x192x128xf32, #tpu.memory_space<vmem>>, vector<1x32x128xf32>
    %227 = vector.shape_cast %226 : vector<1x32x128xf32> to vector<32x128xf32>
    %cst_97 = arith.constant dense<0.000000e+00> : vector<16x128xf32>
    %228 = tpu.matmul %225, %227, %cst_97 {dimension_numbers = #tpu.dot_dimension_numbers<[1], [0], [0], [1], [0, 0, 1, 1], [], []>} : vector<16x32xf32>, vector<32x128xf32>, vector<16x128xf32> -> vector<16x128xf32>
    %229 = vector.broadcast %17 : vector<1x128xf32> to vector<16x128xf32>
    %230 = arith.addf %228, %229 : vector<16x128xf32>
    %cst_98 = arith.constant 1.702000e+00 : f32
    %231 = vector.broadcast %cst_98 : f32 to vector<16x128xf32>
    %232 = arith.mulf %231, %230 : vector<16x128xf32>
    %233 = arith.negf %232 : vector<16x128xf32>
    %234 = math.exp %233 : vector<16x128xf32>
    %cst_99 = arith.constant 1.000000e+00 : f32
    %235 = vector.broadcast %cst_99 : f32 to vector<16x128xf32>
    %236 = arith.addf %235, %234 : vector<16x128xf32>
    %237 = arith.divf %235, %236 : vector<16x128xf32>
    %238 = arith.mulf %230, %237 : vector<16x128xf32>
    %c0_100 = arith.constant 0 : index
    %c64 = arith.constant 64 : index
    %c0_101 = arith.constant 0 : index
    %239 = vector.load %arg3[%c0_100, %c64, %c0_101] : memref<2x192x128xf32, #tpu.memory_space<vmem>>, vector<1x128x32xf32>
    %240 = vector.shape_cast %239 : vector<1x128x32xf32> to vector<128x32xf32>
    %cst_102 = arith.constant dense<0.000000e+00> : vector<16x32xf32>
    %241 = tpu.matmul %238, %240, %cst_102 {dimension_numbers = #tpu.dot_dimension_numbers<[1], [0], [0], [1], [0, 0, 1, 1], [], []>} : vector<16x128xf32>, vector<128x32xf32>, vector<16x32xf32> -> vector<16x32xf32>
    %242 = arith.addf %203, %241 : vector<16x32xf32>
    %243 = vector.broadcast %18 : vector<1x32xf32> to vector<16x32xf32>
    %244 = arith.addf %242, %243 : vector<16x32xf32>
    %c61 = arith.constant 61 : index
    %c0_103 = arith.constant 0 : index
    %245 = vector.load %arg4[%c61, %c0_103] : memref<80x128xf32, #tpu.memory_space<vmem>>, vector<1x32xf32>
    %c62 = arith.constant 62 : index
    %c0_104 = arith.constant 0 : index
    %246 = vector.load %arg4[%c62, %c0_104] : memref<80x128xf32, #tpu.memory_space<vmem>>, vector<1x32xf32>
    %c63 = arith.constant 63 : index
    %c0_105 = arith.constant 0 : index
    %247 = vector.load %arg4[%c63, %c0_105] : memref<80x128xf32, #tpu.memory_space<vmem>>, vector<1x32xf32>
    %c64_106 = arith.constant 64 : index
    %c0_107 = arith.constant 0 : index
    %248 = vector.load %arg4[%c64_106, %c0_107] : memref<80x128xf32, #tpu.memory_space<vmem>>, vector<1x32xf32>
    %c65 = arith.constant 65 : index
    %c0_108 = arith.constant 0 : index
    %249 = vector.load %arg4[%c65, %c0_108] : memref<80x128xf32, #tpu.memory_space<vmem>>, vector<1x32xf32>
    %c66 = arith.constant 66 : index
    %c0_109 = arith.constant 0 : index
    %250 = vector.load %arg4[%c66, %c0_109] : memref<80x128xf32, #tpu.memory_space<vmem>>, vector<1x128xf32>
    %c67 = arith.constant 67 : index
    %c0_110 = arith.constant 0 : index
    %251 = vector.load %arg4[%c67, %c0_110] : memref<80x128xf32, #tpu.memory_space<vmem>>, vector<1x32xf32>
    %cst_111 = arith.constant dense<0.000000e+00> : vector<16xf32>
    %252 = vector.multi_reduction <add>, %244, %cst_111 [1] : vector<16x32xf32> to vector<16xf32>
    %253 = vector.shape_cast %252 : vector<16xf32> to vector<16x1xf32>
    %cst_112 = arith.constant 3.200000e+01 : f32
    %254 = vector.broadcast %cst_112 : f32 to vector<16x1xf32>
    %255 = arith.divf %253, %254 : vector<16x1xf32>
    %256 = vector.broadcast %255 : vector<16x1xf32> to vector<16x32xf32>
    %257 = arith.subf %244, %256 : vector<16x32xf32>
    %258 = arith.mulf %257, %257 : vector<16x32xf32>
    %cst_113 = arith.constant dense<0.000000e+00> : vector<16xf32>
    %259 = vector.multi_reduction <add>, %258, %cst_113 [1] : vector<16x32xf32> to vector<16xf32>
    %260 = vector.shape_cast %259 : vector<16xf32> to vector<16x1xf32>
    %cst_114 = arith.constant 3.200000e+01 : f32
    %261 = vector.broadcast %cst_114 : f32 to vector<16x1xf32>
    %262 = arith.divf %260, %261 : vector<16x1xf32>
    %263 = vector.broadcast %255 : vector<16x1xf32> to vector<16x32xf32>
    %264 = arith.subf %244, %263 : vector<16x32xf32>
    %cst_115 = arith.constant 9.99999974E-6 : f32
    %265 = vector.broadcast %cst_115 : f32 to vector<16x1xf32>
    %266 = arith.addf %262, %265 : vector<16x1xf32>
    %267 = math.rsqrt %266 : vector<16x1xf32>
    %268 = vector.broadcast %267 : vector<16x1xf32> to vector<16x32xf32>
    %269 = arith.mulf %264, %268 : vector<16x32xf32>
    %270 = vector.broadcast %245 : vector<1x32xf32> to vector<16x32xf32>
    %271 = arith.mulf %269, %270 : vector<16x32xf32>
    %272 = vector.broadcast %246 : vector<1x32xf32> to vector<16x32xf32>
    %273 = arith.addf %271, %272 : vector<16x32xf32>
    %c12 = arith.constant 12 : index
    %c0_116 = arith.constant 0 : index
    %c0_117 = arith.constant 0 : index
    %274 = vector.load %arg2[%c12, %c0_116, %c0_117] : memref<24x32x8xf32, #tpu.memory_space<vmem>>, vector<1x32x8xf32>
    %275 = vector.shape_cast %274 : vector<1x32x8xf32> to vector<32x8xf32>
    %c16 = arith.constant 16 : index
    %c0_118 = arith.constant 0 : index
    %c0_119 = arith.constant 0 : index
    %276 = vector.load %arg2[%c16, %c0_118, %c0_119] : memref<24x32x8xf32, #tpu.memory_space<vmem>>, vector<1x32x8xf32>
    %277 = vector.shape_cast %276 : vector<1x32x8xf32> to vector<32x8xf32>
    %c20 = arith.constant 20 : index
    %c0_120 = arith.constant 0 : index
    %c0_121 = arith.constant 0 : index
    %278 = vector.load %arg2[%c20, %c0_120, %c0_121] : memref<24x32x8xf32, #tpu.memory_space<vmem>>, vector<1x32x8xf32>
    %279 = vector.shape_cast %278 : vector<1x32x8xf32> to vector<32x8xf32>
    %c68 = arith.constant 68 : index
    %c0_122 = arith.constant 0 : index
    %280 = vector.load %arg4[%c68, %c0_122] : memref<80x128xf32, #tpu.memory_space<vmem>>, vector<1x8xf32>
    %c72 = arith.constant 72 : index
    %c0_123 = arith.constant 0 : index
    %281 = vector.load %arg4[%c72, %c0_123] : memref<80x128xf32, #tpu.memory_space<vmem>>, vector<1x8xf32>
    %c76 = arith.constant 76 : index
    %c0_124 = arith.constant 0 : index
    %282 = vector.load %arg4[%c76, %c0_124] : memref<80x128xf32, #tpu.memory_space<vmem>>, vector<1x8xf32>
    %cst_125 = arith.constant dense<0.000000e+00> : vector<16x8xf32>
    %283 = tpu.matmul %273, %275, %cst_125 {dimension_numbers = #tpu.dot_dimension_numbers<[1], [0], [0], [1], [0, 0, 1, 1], [], []>} : vector<16x32xf32>, vector<32x8xf32>, vector<16x8xf32> -> vector<16x8xf32>
    %284 = vector.broadcast %280 : vector<1x8xf32> to vector<16x8xf32>
    %285 = arith.addf %283, %284 : vector<16x8xf32>
    %286 = vector.shape_cast %285 : vector<16x8xf32> to vector<2x8x8xf32>
    %cst_126 = arith.constant dense<0.000000e+00> : vector<16x8xf32>
    %287 = tpu.matmul %273, %277, %cst_126 {dimension_numbers = #tpu.dot_dimension_numbers<[1], [0], [0], [1], [0, 0, 1, 1], [], []>} : vector<16x32xf32>, vector<32x8xf32>, vector<16x8xf32> -> vector<16x8xf32>
    %288 = vector.broadcast %281 : vector<1x8xf32> to vector<16x8xf32>
    %289 = arith.addf %287, %288 : vector<16x8xf32>
    %290 = vector.shape_cast %289 : vector<16x8xf32> to vector<2x8x8xf32>
    %cst_127 = arith.constant dense<0.000000e+00> : vector<16x8xf32>
    %291 = tpu.matmul %273, %279, %cst_127 {dimension_numbers = #tpu.dot_dimension_numbers<[1], [0], [0], [1], [0, 0, 1, 1], [], []>} : vector<16x32xf32>, vector<32x8xf32>, vector<16x8xf32> -> vector<16x8xf32>
    %292 = vector.broadcast %282 : vector<1x8xf32> to vector<16x8xf32>
    %293 = arith.addf %291, %292 : vector<16x8xf32>
    %294 = vector.shape_cast %293 : vector<16x8xf32> to vector<2x8x8xf32>
    "tpu.trace_start"() <{level = 10 : i32, message = "bqd,bkd->bqk"}> : () -> ()
    %cst_128 = arith.constant dense<0.000000e+00> : vector<2x8x8xf32>
    %295 = tpu.matmul %286, %290, %cst_128 {dimension_numbers = #tpu.dot_dimension_numbers<[2], [2], [1], [1], [0, 0, 0, 1, 1, 1], [0], [0]>} : vector<2x8x8xf32>, vector<2x8x8xf32>, vector<2x8x8xf32> -> vector<2x8x8xf32>
    "tpu.trace_stop"() : () -> ()
    %cst_129 = arith.constant 0.353553385 : f32
    %296 = vector.broadcast %cst_129 : f32 to vector<2x8x8xf32>
    %297 = arith.mulf %295, %296 : vector<2x8x8xf32>
    %298 = vector.shape_cast %11 : vector<8x8xf32> to vector<1x8x8xf32>
    %299 = vector.broadcast %298 : vector<1x8x8xf32> to vector<2x8x8xf32>
    %300 = arith.addf %297, %299 : vector<2x8x8xf32>
    %cst_130 = arith.constant dense<0xFF800000> : vector<2x8xf32>
    %301 = vector.multi_reduction <maximumf>, %300, %cst_130 [2] : vector<2x8x8xf32> to vector<2x8xf32>
    %302 = vector.shape_cast %301 : vector<2x8xf32> to vector<2x8x1xf32>
    %303 = vector.broadcast %302 : vector<2x8x1xf32> to vector<2x8x8xf32>
    %304 = arith.subf %300, %303 : vector<2x8x8xf32>
    %305 = math.exp %304 : vector<2x8x8xf32>
    %cst_131 = arith.constant dense<0.000000e+00> : vector<2x8xf32>
    %306 = vector.multi_reduction <add>, %305, %cst_131 [2] : vector<2x8x8xf32> to vector<2x8xf32>
    %307 = vector.shape_cast %306 : vector<2x8xf32> to vector<2x8x1xf32>
    %308 = tpu.reciprocal %307 {approx = true} : vector<2x8x1xf32> -> vector<2x8x1xf32>
    %309 = vector.broadcast %308 : vector<2x8x1xf32> to vector<2x8x8xf32>
    %310 = arith.mulf %305, %309 : vector<2x8x8xf32>
    "tpu.trace_start"() <{level = 10 : i32, message = "bqk,bkd->bqd"}> : () -> ()
    %cst_132 = arith.constant dense<0.000000e+00> : vector<2x8x8xf32>
    %311 = tpu.matmul %310, %294, %cst_132 {dimension_numbers = #tpu.dot_dimension_numbers<[2], [1], [1], [2], [0, 0, 0, 1, 1, 2], [0], [0]>} : vector<2x8x8xf32>, vector<2x8x8xf32>, vector<2x8x8xf32> -> vector<2x8x8xf32>
    "tpu.trace_stop"() : () -> ()
    %312 = vector.shape_cast %311 : vector<2x8x8xf32> to vector<16x8xf32>
    %c13 = arith.constant 13 : index
    %c0_133 = arith.constant 0 : index
    %c0_134 = arith.constant 0 : index
    %313 = vector.load %arg2[%c13, %c0_133, %c0_134] : memref<24x32x8xf32, #tpu.memory_space<vmem>>, vector<1x32x8xf32>
    %314 = vector.shape_cast %313 : vector<1x32x8xf32> to vector<32x8xf32>
    %c17 = arith.constant 17 : index
    %c0_135 = arith.constant 0 : index
    %c0_136 = arith.constant 0 : index
    %315 = vector.load %arg2[%c17, %c0_135, %c0_136] : memref<24x32x8xf32, #tpu.memory_space<vmem>>, vector<1x32x8xf32>
    %316 = vector.shape_cast %315 : vector<1x32x8xf32> to vector<32x8xf32>
    %c21 = arith.constant 21 : index
    %c0_137 = arith.constant 0 : index
    %c0_138 = arith.constant 0 : index
    %317 = vector.load %arg2[%c21, %c0_137, %c0_138] : memref<24x32x8xf32, #tpu.memory_space<vmem>>, vector<1x32x8xf32>
    %318 = vector.shape_cast %317 : vector<1x32x8xf32> to vector<32x8xf32>
    %c69 = arith.constant 69 : index
    %c0_139 = arith.constant 0 : index
    %319 = vector.load %arg4[%c69, %c0_139] : memref<80x128xf32, #tpu.memory_space<vmem>>, vector<1x8xf32>
    %c73 = arith.constant 73 : index
    %c0_140 = arith.constant 0 : index
    %320 = vector.load %arg4[%c73, %c0_140] : memref<80x128xf32, #tpu.memory_space<vmem>>, vector<1x8xf32>
    %c77 = arith.constant 77 : index
    %c0_141 = arith.constant 0 : index
    %321 = vector.load %arg4[%c77, %c0_141] : memref<80x128xf32, #tpu.memory_space<vmem>>, vector<1x8xf32>
    %cst_142 = arith.constant dense<0.000000e+00> : vector<16x8xf32>
    %322 = tpu.matmul %273, %314, %cst_142 {dimension_numbers = #tpu.dot_dimension_numbers<[1], [0], [0], [1], [0, 0, 1, 1], [], []>} : vector<16x32xf32>, vector<32x8xf32>, vector<16x8xf32> -> vector<16x8xf32>
    %323 = vector.broadcast %319 : vector<1x8xf32> to vector<16x8xf32>
    %324 = arith.addf %322, %323 : vector<16x8xf32>
    %325 = vector.shape_cast %324 : vector<16x8xf32> to vector<2x8x8xf32>
    %cst_143 = arith.constant dense<0.000000e+00> : vector<16x8xf32>
    %326 = tpu.matmul %273, %316, %cst_143 {dimension_numbers = #tpu.dot_dimension_numbers<[1], [0], [0], [1], [0, 0, 1, 1], [], []>} : vector<16x32xf32>, vector<32x8xf32>, vector<16x8xf32> -> vector<16x8xf32>
    %327 = vector.broadcast %320 : vector<1x8xf32> to vector<16x8xf32>
    %328 = arith.addf %326, %327 : vector<16x8xf32>
    %329 = vector.shape_cast %328 : vector<16x8xf32> to vector<2x8x8xf32>
    %cst_144 = arith.constant dense<0.000000e+00> : vector<16x8xf32>
    %330 = tpu.matmul %273, %318, %cst_144 {dimension_numbers = #tpu.dot_dimension_numbers<[1], [0], [0], [1], [0, 0, 1, 1], [], []>} : vector<16x32xf32>, vector<32x8xf32>, vector<16x8xf32> -> vector<16x8xf32>
    %331 = vector.broadcast %321 : vector<1x8xf32> to vector<16x8xf32>
    %332 = arith.addf %330, %331 : vector<16x8xf32>
    %333 = vector.shape_cast %332 : vector<16x8xf32> to vector<2x8x8xf32>
    "tpu.trace_start"() <{level = 10 : i32, message = "bqd,bkd->bqk"}> : () -> ()
    %cst_145 = arith.constant dense<0.000000e+00> : vector<2x8x8xf32>
    %334 = tpu.matmul %325, %329, %cst_145 {dimension_numbers = #tpu.dot_dimension_numbers<[2], [2], [1], [1], [0, 0, 0, 1, 1, 1], [0], [0]>} : vector<2x8x8xf32>, vector<2x8x8xf32>, vector<2x8x8xf32> -> vector<2x8x8xf32>
    "tpu.trace_stop"() : () -> ()
    %cst_146 = arith.constant 0.353553385 : f32
    %335 = vector.broadcast %cst_146 : f32 to vector<2x8x8xf32>
    %336 = arith.mulf %334, %335 : vector<2x8x8xf32>
    %337 = vector.shape_cast %11 : vector<8x8xf32> to vector<1x8x8xf32>
    %338 = vector.broadcast %337 : vector<1x8x8xf32> to vector<2x8x8xf32>
    %339 = arith.addf %336, %338 : vector<2x8x8xf32>
    %cst_147 = arith.constant dense<0xFF800000> : vector<2x8xf32>
    %340 = vector.multi_reduction <maximumf>, %339, %cst_147 [2] : vector<2x8x8xf32> to vector<2x8xf32>
    %341 = vector.shape_cast %340 : vector<2x8xf32> to vector<2x8x1xf32>
    %342 = vector.broadcast %341 : vector<2x8x1xf32> to vector<2x8x8xf32>
    %343 = arith.subf %339, %342 : vector<2x8x8xf32>
    %344 = math.exp %343 : vector<2x8x8xf32>
    %cst_148 = arith.constant dense<0.000000e+00> : vector<2x8xf32>
    %345 = vector.multi_reduction <add>, %344, %cst_148 [2] : vector<2x8x8xf32> to vector<2x8xf32>
    %346 = vector.shape_cast %345 : vector<2x8xf32> to vector<2x8x1xf32>
    %347 = tpu.reciprocal %346 {approx = true} : vector<2x8x1xf32> -> vector<2x8x1xf32>
    %348 = vector.broadcast %347 : vector<2x8x1xf32> to vector<2x8x8xf32>
    %349 = arith.mulf %344, %348 : vector<2x8x8xf32>
    "tpu.trace_start"() <{level = 10 : i32, message = "bqk,bkd->bqd"}> : () -> ()
    %cst_149 = arith.constant dense<0.000000e+00> : vector<2x8x8xf32>
    %350 = tpu.matmul %349, %333, %cst_149 {dimension_numbers = #tpu.dot_dimension_numbers<[2], [1], [1], [2], [0, 0, 0, 1, 1, 2], [0], [0]>} : vector<2x8x8xf32>, vector<2x8x8xf32>, vector<2x8x8xf32> -> vector<2x8x8xf32>
    "tpu.trace_stop"() : () -> ()
    %351 = vector.shape_cast %350 : vector<2x8x8xf32> to vector<16x8xf32>
    %c14 = arith.constant 14 : index
    %c0_150 = arith.constant 0 : index
    %c0_151 = arith.constant 0 : index
    %352 = vector.load %arg2[%c14, %c0_150, %c0_151] : memref<24x32x8xf32, #tpu.memory_space<vmem>>, vector<1x32x8xf32>
    %353 = vector.shape_cast %352 : vector<1x32x8xf32> to vector<32x8xf32>
    %c18 = arith.constant 18 : index
    %c0_152 = arith.constant 0 : index
    %c0_153 = arith.constant 0 : index
    %354 = vector.load %arg2[%c18, %c0_152, %c0_153] : memref<24x32x8xf32, #tpu.memory_space<vmem>>, vector<1x32x8xf32>
    %355 = vector.shape_cast %354 : vector<1x32x8xf32> to vector<32x8xf32>
    %c22 = arith.constant 22 : index
    %c0_154 = arith.constant 0 : index
    %c0_155 = arith.constant 0 : index
    %356 = vector.load %arg2[%c22, %c0_154, %c0_155] : memref<24x32x8xf32, #tpu.memory_space<vmem>>, vector<1x32x8xf32>
    %357 = vector.shape_cast %356 : vector<1x32x8xf32> to vector<32x8xf32>
    %c70 = arith.constant 70 : index
    %c0_156 = arith.constant 0 : index
    %358 = vector.load %arg4[%c70, %c0_156] : memref<80x128xf32, #tpu.memory_space<vmem>>, vector<1x8xf32>
    %c74 = arith.constant 74 : index
    %c0_157 = arith.constant 0 : index
    %359 = vector.load %arg4[%c74, %c0_157] : memref<80x128xf32, #tpu.memory_space<vmem>>, vector<1x8xf32>
    %c78 = arith.constant 78 : index
    %c0_158 = arith.constant 0 : index
    %360 = vector.load %arg4[%c78, %c0_158] : memref<80x128xf32, #tpu.memory_space<vmem>>, vector<1x8xf32>
    %cst_159 = arith.constant dense<0.000000e+00> : vector<16x8xf32>
    %361 = tpu.matmul %273, %353, %cst_159 {dimension_numbers = #tpu.dot_dimension_numbers<[1], [0], [0], [1], [0, 0, 1, 1], [], []>} : vector<16x32xf32>, vector<32x8xf32>, vector<16x8xf32> -> vector<16x8xf32>
    %362 = vector.broadcast %358 : vector<1x8xf32> to vector<16x8xf32>
    %363 = arith.addf %361, %362 : vector<16x8xf32>
    %364 = vector.shape_cast %363 : vector<16x8xf32> to vector<2x8x8xf32>
    %cst_160 = arith.constant dense<0.000000e+00> : vector<16x8xf32>
    %365 = tpu.matmul %273, %355, %cst_160 {dimension_numbers = #tpu.dot_dimension_numbers<[1], [0], [0], [1], [0, 0, 1, 1], [], []>} : vector<16x32xf32>, vector<32x8xf32>, vector<16x8xf32> -> vector<16x8xf32>
    %366 = vector.broadcast %359 : vector<1x8xf32> to vector<16x8xf32>
    %367 = arith.addf %365, %366 : vector<16x8xf32>
    %368 = vector.shape_cast %367 : vector<16x8xf32> to vector<2x8x8xf32>
    %cst_161 = arith.constant dense<0.000000e+00> : vector<16x8xf32>
    %369 = tpu.matmul %273, %357, %cst_161 {dimension_numbers = #tpu.dot_dimension_numbers<[1], [0], [0], [1], [0, 0, 1, 1], [], []>} : vector<16x32xf32>, vector<32x8xf32>, vector<16x8xf32> -> vector<16x8xf32>
    %370 = vector.broadcast %360 : vector<1x8xf32> to vector<16x8xf32>
    %371 = arith.addf %369, %370 : vector<16x8xf32>
    %372 = vector.shape_cast %371 : vector<16x8xf32> to vector<2x8x8xf32>
    "tpu.trace_start"() <{level = 10 : i32, message = "bqd,bkd->bqk"}> : () -> ()
    %cst_162 = arith.constant dense<0.000000e+00> : vector<2x8x8xf32>
    %373 = tpu.matmul %364, %368, %cst_162 {dimension_numbers = #tpu.dot_dimension_numbers<[2], [2], [1], [1], [0, 0, 0, 1, 1, 1], [0], [0]>} : vector<2x8x8xf32>, vector<2x8x8xf32>, vector<2x8x8xf32> -> vector<2x8x8xf32>
    "tpu.trace_stop"() : () -> ()
    %cst_163 = arith.constant 0.353553385 : f32
    %374 = vector.broadcast %cst_163 : f32 to vector<2x8x8xf32>
    %375 = arith.mulf %373, %374 : vector<2x8x8xf32>
    %376 = vector.shape_cast %11 : vector<8x8xf32> to vector<1x8x8xf32>
    %377 = vector.broadcast %376 : vector<1x8x8xf32> to vector<2x8x8xf32>
    %378 = arith.addf %375, %377 : vector<2x8x8xf32>
    %cst_164 = arith.constant dense<0xFF800000> : vector<2x8xf32>
    %379 = vector.multi_reduction <maximumf>, %378, %cst_164 [2] : vector<2x8x8xf32> to vector<2x8xf32>
    %380 = vector.shape_cast %379 : vector<2x8xf32> to vector<2x8x1xf32>
    %381 = vector.broadcast %380 : vector<2x8x1xf32> to vector<2x8x8xf32>
    %382 = arith.subf %378, %381 : vector<2x8x8xf32>
    %383 = math.exp %382 : vector<2x8x8xf32>
    %cst_165 = arith.constant dense<0.000000e+00> : vector<2x8xf32>
    %384 = vector.multi_reduction <add>, %383, %cst_165 [2] : vector<2x8x8xf32> to vector<2x8xf32>
    %385 = vector.shape_cast %384 : vector<2x8xf32> to vector<2x8x1xf32>
    %386 = tpu.reciprocal %385 {approx = true} : vector<2x8x1xf32> -> vector<2x8x1xf32>
    %387 = vector.broadcast %386 : vector<2x8x1xf32> to vector<2x8x8xf32>
    %388 = arith.mulf %383, %387 : vector<2x8x8xf32>
    "tpu.trace_start"() <{level = 10 : i32, message = "bqk,bkd->bqd"}> : () -> ()
    %cst_166 = arith.constant dense<0.000000e+00> : vector<2x8x8xf32>
    %389 = tpu.matmul %388, %372, %cst_166 {dimension_numbers = #tpu.dot_dimension_numbers<[2], [1], [1], [2], [0, 0, 0, 1, 1, 2], [0], [0]>} : vector<2x8x8xf32>, vector<2x8x8xf32>, vector<2x8x8xf32> -> vector<2x8x8xf32>
    "tpu.trace_stop"() : () -> ()
    %390 = vector.shape_cast %389 : vector<2x8x8xf32> to vector<16x8xf32>
    %c15 = arith.constant 15 : index
    %c0_167 = arith.constant 0 : index
    %c0_168 = arith.constant 0 : index
    %391 = vector.load %arg2[%c15, %c0_167, %c0_168] : memref<24x32x8xf32, #tpu.memory_space<vmem>>, vector<1x32x8xf32>
    %392 = vector.shape_cast %391 : vector<1x32x8xf32> to vector<32x8xf32>
    %c19 = arith.constant 19 : index
    %c0_169 = arith.constant 0 : index
    %c0_170 = arith.constant 0 : index
    %393 = vector.load %arg2[%c19, %c0_169, %c0_170] : memref<24x32x8xf32, #tpu.memory_space<vmem>>, vector<1x32x8xf32>
    %394 = vector.shape_cast %393 : vector<1x32x8xf32> to vector<32x8xf32>
    %c23 = arith.constant 23 : index
    %c0_171 = arith.constant 0 : index
    %c0_172 = arith.constant 0 : index
    %395 = vector.load %arg2[%c23, %c0_171, %c0_172] : memref<24x32x8xf32, #tpu.memory_space<vmem>>, vector<1x32x8xf32>
    %396 = vector.shape_cast %395 : vector<1x32x8xf32> to vector<32x8xf32>
    %c71 = arith.constant 71 : index
    %c0_173 = arith.constant 0 : index
    %397 = vector.load %arg4[%c71, %c0_173] : memref<80x128xf32, #tpu.memory_space<vmem>>, vector<1x8xf32>
    %c75 = arith.constant 75 : index
    %c0_174 = arith.constant 0 : index
    %398 = vector.load %arg4[%c75, %c0_174] : memref<80x128xf32, #tpu.memory_space<vmem>>, vector<1x8xf32>
    %c79 = arith.constant 79 : index
    %c0_175 = arith.constant 0 : index
    %399 = vector.load %arg4[%c79, %c0_175] : memref<80x128xf32, #tpu.memory_space<vmem>>, vector<1x8xf32>
    %cst_176 = arith.constant dense<0.000000e+00> : vector<16x8xf32>
    %400 = tpu.matmul %273, %392, %cst_176 {dimension_numbers = #tpu.dot_dimension_numbers<[1], [0], [0], [1], [0, 0, 1, 1], [], []>} : vector<16x32xf32>, vector<32x8xf32>, vector<16x8xf32> -> vector<16x8xf32>
    %401 = vector.broadcast %397 : vector<1x8xf32> to vector<16x8xf32>
    %402 = arith.addf %400, %401 : vector<16x8xf32>
    %403 = vector.shape_cast %402 : vector<16x8xf32> to vector<2x8x8xf32>
    %cst_177 = arith.constant dense<0.000000e+00> : vector<16x8xf32>
    %404 = tpu.matmul %273, %394, %cst_177 {dimension_numbers = #tpu.dot_dimension_numbers<[1], [0], [0], [1], [0, 0, 1, 1], [], []>} : vector<16x32xf32>, vector<32x8xf32>, vector<16x8xf32> -> vector<16x8xf32>
    %405 = vector.broadcast %398 : vector<1x8xf32> to vector<16x8xf32>
    %406 = arith.addf %404, %405 : vector<16x8xf32>
    %407 = vector.shape_cast %406 : vector<16x8xf32> to vector<2x8x8xf32>
    %cst_178 = arith.constant dense<0.000000e+00> : vector<16x8xf32>
    %408 = tpu.matmul %273, %396, %cst_178 {dimension_numbers = #tpu.dot_dimension_numbers<[1], [0], [0], [1], [0, 0, 1, 1], [], []>} : vector<16x32xf32>, vector<32x8xf32>, vector<16x8xf32> -> vector<16x8xf32>
    %409 = vector.broadcast %399 : vector<1x8xf32> to vector<16x8xf32>
    %410 = arith.addf %408, %409 : vector<16x8xf32>
    %411 = vector.shape_cast %410 : vector<16x8xf32> to vector<2x8x8xf32>
    "tpu.trace_start"() <{level = 10 : i32, message = "bqd,bkd->bqk"}> : () -> ()
    %cst_179 = arith.constant dense<0.000000e+00> : vector<2x8x8xf32>
    %412 = tpu.matmul %403, %407, %cst_179 {dimension_numbers = #tpu.dot_dimension_numbers<[2], [2], [1], [1], [0, 0, 0, 1, 1, 1], [0], [0]>} : vector<2x8x8xf32>, vector<2x8x8xf32>, vector<2x8x8xf32> -> vector<2x8x8xf32>
    "tpu.trace_stop"() : () -> ()
    %cst_180 = arith.constant 0.353553385 : f32
    %413 = vector.broadcast %cst_180 : f32 to vector<2x8x8xf32>
    %414 = arith.mulf %412, %413 : vector<2x8x8xf32>
    %415 = vector.shape_cast %11 : vector<8x8xf32> to vector<1x8x8xf32>
    %416 = vector.broadcast %415 : vector<1x8x8xf32> to vector<2x8x8xf32>
    %417 = arith.addf %414, %416 : vector<2x8x8xf32>
    %cst_181 = arith.constant dense<0xFF800000> : vector<2x8xf32>
    %418 = vector.multi_reduction <maximumf>, %417, %cst_181 [2] : vector<2x8x8xf32> to vector<2x8xf32>
    %419 = vector.shape_cast %418 : vector<2x8xf32> to vector<2x8x1xf32>
    %420 = vector.broadcast %419 : vector<2x8x1xf32> to vector<2x8x8xf32>
    %421 = arith.subf %417, %420 : vector<2x8x8xf32>
    %422 = math.exp %421 : vector<2x8x8xf32>
    %cst_182 = arith.constant dense<0.000000e+00> : vector<2x8xf32>
    %423 = vector.multi_reduction <add>, %422, %cst_182 [2] : vector<2x8x8xf32> to vector<2x8xf32>
    %424 = vector.shape_cast %423 : vector<2x8xf32> to vector<2x8x1xf32>
    %425 = tpu.reciprocal %424 {approx = true} : vector<2x8x1xf32> -> vector<2x8x1xf32>
    %426 = vector.broadcast %425 : vector<2x8x1xf32> to vector<2x8x8xf32>
    %427 = arith.mulf %422, %426 : vector<2x8x8xf32>
    "tpu.trace_start"() <{level = 10 : i32, message = "bqk,bkd->bqd"}> : () -> ()
    %cst_183 = arith.constant dense<0.000000e+00> : vector<2x8x8xf32>
    %428 = tpu.matmul %427, %411, %cst_183 {dimension_numbers = #tpu.dot_dimension_numbers<[2], [1], [1], [2], [0, 0, 0, 1, 1, 2], [0], [0]>} : vector<2x8x8xf32>, vector<2x8x8xf32>, vector<2x8x8xf32> -> vector<2x8x8xf32>
    "tpu.trace_stop"() : () -> ()
    %429 = vector.shape_cast %428 : vector<2x8x8xf32> to vector<16x8xf32>
    %430 = tpu.concatenate %312, %351, %390, %429 in 1 : vector<16x8xf32>, vector<16x8xf32>, vector<16x8xf32>, vector<16x8xf32> -> vector<16x32xf32>
    %c1_184 = arith.constant 1 : index
    %c32_185 = arith.constant 32 : index
    %c0_186 = arith.constant 0 : index
    %431 = vector.load %arg3[%c1_184, %c32_185, %c0_186] : memref<2x192x128xf32, #tpu.memory_space<vmem>>, vector<1x32x32xf32>
    %432 = vector.shape_cast %431 : vector<1x32x32xf32> to vector<32x32xf32>
    %cst_187 = arith.constant dense<0.000000e+00> : vector<16x32xf32>
    %433 = tpu.matmul %430, %432, %cst_187 {dimension_numbers = #tpu.dot_dimension_numbers<[1], [0], [0], [1], [0, 0, 1, 1], [], []>} : vector<16x32xf32>, vector<32x32xf32>, vector<16x32xf32> -> vector<16x32xf32>
    %434 = arith.addf %244, %433 : vector<16x32xf32>
    %435 = vector.broadcast %247 : vector<1x32xf32> to vector<16x32xf32>
    %436 = arith.addf %434, %435 : vector<16x32xf32>
    %cst_188 = arith.constant dense<0.000000e+00> : vector<16xf32>
    %437 = vector.multi_reduction <add>, %436, %cst_188 [1] : vector<16x32xf32> to vector<16xf32>
    %438 = vector.shape_cast %437 : vector<16xf32> to vector<16x1xf32>
    %cst_189 = arith.constant 3.200000e+01 : f32
    %439 = vector.broadcast %cst_189 : f32 to vector<16x1xf32>
    %440 = arith.divf %438, %439 : vector<16x1xf32>
    %441 = vector.broadcast %440 : vector<16x1xf32> to vector<16x32xf32>
    %442 = arith.subf %436, %441 : vector<16x32xf32>
    %443 = arith.mulf %442, %442 : vector<16x32xf32>
    %cst_190 = arith.constant dense<0.000000e+00> : vector<16xf32>
    %444 = vector.multi_reduction <add>, %443, %cst_190 [1] : vector<16x32xf32> to vector<16xf32>
    %445 = vector.shape_cast %444 : vector<16xf32> to vector<16x1xf32>
    %cst_191 = arith.constant 3.200000e+01 : f32
    %446 = vector.broadcast %cst_191 : f32 to vector<16x1xf32>
    %447 = arith.divf %445, %446 : vector<16x1xf32>
    %448 = vector.broadcast %440 : vector<16x1xf32> to vector<16x32xf32>
    %449 = arith.subf %436, %448 : vector<16x32xf32>
    %cst_192 = arith.constant 9.99999974E-6 : f32
    %450 = vector.broadcast %cst_192 : f32 to vector<16x1xf32>
    %451 = arith.addf %447, %450 : vector<16x1xf32>
    %452 = math.rsqrt %451 : vector<16x1xf32>
    %453 = vector.broadcast %452 : vector<16x1xf32> to vector<16x32xf32>
    %454 = arith.mulf %449, %453 : vector<16x32xf32>
    %455 = vector.broadcast %248 : vector<1x32xf32> to vector<16x32xf32>
    %456 = arith.mulf %454, %455 : vector<16x32xf32>
    %457 = vector.broadcast %249 : vector<1x32xf32> to vector<16x32xf32>
    %458 = arith.addf %456, %457 : vector<16x32xf32>
    %c1_193 = arith.constant 1 : index
    %c0_194 = arith.constant 0 : index
    %c0_195 = arith.constant 0 : index
    %459 = vector.load %arg3[%c1_193, %c0_194, %c0_195] : memref<2x192x128xf32, #tpu.memory_space<vmem>>, vector<1x32x128xf32>
    %460 = vector.shape_cast %459 : vector<1x32x128xf32> to vector<32x128xf32>
    %cst_196 = arith.constant dense<0.000000e+00> : vector<16x128xf32>
    %461 = tpu.matmul %458, %460, %cst_196 {dimension_numbers = #tpu.dot_dimension_numbers<[1], [0], [0], [1], [0, 0, 1, 1], [], []>} : vector<16x32xf32>, vector<32x128xf32>, vector<16x128xf32> -> vector<16x128xf32>
    %462 = vector.broadcast %250 : vector<1x128xf32> to vector<16x128xf32>
    %463 = arith.addf %461, %462 : vector<16x128xf32>
    %cst_197 = arith.constant 1.702000e+00 : f32
    %464 = vector.broadcast %cst_197 : f32 to vector<16x128xf32>
    %465 = arith.mulf %464, %463 : vector<16x128xf32>
    %466 = arith.negf %465 : vector<16x128xf32>
    %467 = math.exp %466 : vector<16x128xf32>
    %cst_198 = arith.constant 1.000000e+00 : f32
    %468 = vector.broadcast %cst_198 : f32 to vector<16x128xf32>
    %469 = arith.addf %468, %467 : vector<16x128xf32>
    %470 = arith.divf %468, %469 : vector<16x128xf32>
    %471 = arith.mulf %463, %470 : vector<16x128xf32>
    %c1_199 = arith.constant 1 : index
    %c64_200 = arith.constant 64 : index
    %c0_201 = arith.constant 0 : index
    %472 = vector.load %arg3[%c1_199, %c64_200, %c0_201] : memref<2x192x128xf32, #tpu.memory_space<vmem>>, vector<1x128x32xf32>
    %473 = vector.shape_cast %472 : vector<1x128x32xf32> to vector<128x32xf32>
    %cst_202 = arith.constant dense<0.000000e+00> : vector<16x32xf32>
    %474 = tpu.matmul %471, %473, %cst_202 {dimension_numbers = #tpu.dot_dimension_numbers<[1], [0], [0], [1], [0, 0, 1, 1], [], []>} : vector<16x128xf32>, vector<128x32xf32>, vector<16x32xf32> -> vector<16x32xf32>
    %475 = arith.addf %436, %474 : vector<16x32xf32>
    %476 = vector.broadcast %251 : vector<1x32xf32> to vector<16x32xf32>
    %477 = arith.addf %475, %476 : vector<16x32xf32>
    %c0_203 = arith.constant 0 : index
    %c0_204 = arith.constant 0 : index
    %478 = vector.load %arg6[%c0_203, %c0_204] : memref<16x32xf32, #tpu.memory_space<vmem>>, vector<16x32xf32>
    tpu.vector_store %arg6[%c0_203, %c0_204], %477 {strides = array<i32>} : memref<16x32xf32, #tpu.memory_space<vmem>>, vector<16x32xf32>,
    %c0_205 = arith.constant 0 : index
    %479 = memref.load %arg1[%c0_205] : memref<2xi32, #tpu.memory_space<smem>>
    %c0_i32 = arith.constant 0 : i32
    %480 = arith.addi %c0_i32, %479 : i32
    %481 = arith.index_cast %480 : i32 to index
    %c0_206 = arith.constant 0 : index
    %482 = vector.load %arg6[%481, %c0_206] : memref<16x32xf32, #tpu.memory_space<vmem>>, vector<1x32xf32>
    %c1_207 = arith.constant 1 : index
    %483 = memref.load %arg1[%c1_207] : memref<2xi32, #tpu.memory_space<smem>>
    %c8_i32 = arith.constant 8 : i32
    %484 = arith.addi %c8_i32, %483 : i32
    %485 = arith.index_cast %484 : i32 to index
    %c0_208 = arith.constant 0 : index
    %486 = vector.load %arg6[%485, %c0_208] : memref<16x32xf32, #tpu.memory_space<vmem>>, vector<1x32xf32>
    %487 = tpu.concatenate %482, %486 in 0 : vector<1x32xf32>, vector<1x32xf32> -> vector<2x32xf32>
    %c8_209 = arith.constant 8 : index
    %c0_210 = arith.constant 0 : index
    %488 = vector.load %arg4[%c8_209, %c0_210] : memref<80x128xf32, #tpu.memory_space<vmem>>, vector<1x32xf32>
    %c9_211 = arith.constant 9 : index
    %c0_212 = arith.constant 0 : index
    %489 = vector.load %arg4[%c9_211, %c0_212] : memref<80x128xf32, #tpu.memory_space<vmem>>, vector<1x32xf32>
    %cst_213 = arith.constant dense<0.000000e+00> : vector<2xf32>
    %490 = vector.multi_reduction <add>, %487, %cst_213 [1] : vector<2x32xf32> to vector<2xf32>
    %491 = vector.shape_cast %490 : vector<2xf32> to vector<2x1xf32>
    %cst_214 = arith.constant 3.200000e+01 : f32
    %492 = vector.broadcast %cst_214 : f32 to vector<2x1xf32>
    %493 = arith.divf %491, %492 : vector<2x1xf32>
    %494 = vector.broadcast %493 : vector<2x1xf32> to vector<2x32xf32>
    %495 = arith.subf %487, %494 : vector<2x32xf32>
    %496 = arith.mulf %495, %495 : vector<2x32xf32>
    %cst_215 = arith.constant dense<0.000000e+00> : vector<2xf32>
    %497 = vector.multi_reduction <add>, %496, %cst_215 [1] : vector<2x32xf32> to vector<2xf32>
    %498 = vector.shape_cast %497 : vector<2xf32> to vector<2x1xf32>
    %cst_216 = arith.constant 3.200000e+01 : f32
    %499 = vector.broadcast %cst_216 : f32 to vector<2x1xf32>
    %500 = arith.divf %498, %499 : vector<2x1xf32>
    %501 = vector.broadcast %493 : vector<2x1xf32> to vector<2x32xf32>
    %502 = arith.subf %487, %501 : vector<2x32xf32>
    %cst_217 = arith.constant 9.99999974E-6 : f32
    %503 = vector.broadcast %cst_217 : f32 to vector<2x1xf32>
    %504 = arith.addf %500, %503 : vector<2x1xf32>
    %505 = math.rsqrt %504 : vector<2x1xf32>
    %506 = vector.broadcast %505 : vector<2x1xf32> to vector<2x32xf32>
    %507 = arith.mulf %502, %506 : vector<2x32xf32>
    %508 = vector.broadcast %488 : vector<1x32xf32> to vector<2x32xf32>
    %509 = arith.mulf %507, %508 : vector<2x32xf32>
    %510 = vector.broadcast %489 : vector<1x32xf32> to vector<2x32xf32>
    %511 = arith.addf %509, %510 : vector<2x32xf32>
    %c10_218 = arith.constant 10 : index
    %c0_219 = arith.constant 0 : index
    %512 = vector.load %arg4[%c10_218, %c0_219] : memref<80x128xf32, #tpu.memory_space<vmem>>, vector<32x32xf32>
    %cst_220 = arith.constant dense<0.000000e+00> : vector<2x32xf32>
    %513 = tpu.matmul %511, %512, %cst_220 {dimension_numbers = #tpu.dot_dimension_numbers<[1], [0], [0], [1], [0, 0, 1, 1], [], []>} : vector<2x32xf32>, vector<32x32xf32>, vector<2x32xf32> -> vector<2x32xf32>
    %c0_221 = arith.constant 0 : index
    %c0_222 = arith.constant 0 : index
    %514 = vector.load %arg5[%c0_221, %c0_222] : memref<2x32xf32, #tpu.memory_space<vmem>>, vector<2x32xf32>
    tpu.vector_store %arg5[%c0_221, %c0_222], %513 {strides = array<i32>} : memref<2x32xf32, #tpu.memory_space<vmem>>, vector<2x32xf32>,
    return
  }
}

</mosaic_0001>

<llo_original>
// kernel: tpu_custom_call.1
$region0: #{tpu_custom_call.1}
  #allocation0 [shape = 'u32[]', space=smem, size = 0x4, offset = 0x4, fixed_abs, tag = 'smem constant byte address 0x4 - core index']
  #allocation1 [shape = 'u32[144,128]{1,0:T(1,128)}', space=vmem, size = 0x12000, scoped, tag = 'internal scratch']
  #allocation2 [shape = 'f32[16,32]{1,0:T(8,128)}', space=vmem, size = 0x2000, scoped, tag = 'scratch operand']
  %s0 = inlined_call_operand.vmem [shape: f32[2,8,32], index: 0, kind: input, shape index: {}]
  %s1 = inlined_call_operand.vmem [shape: s32[2], index: 1, kind: input, shape index: {}]
  %s2 = inlined_call_operand.vmem [shape: f32[24,32,8], index: 2, kind: input, shape index: {}]
  %s3 = inlined_call_operand.vmem [shape: f32[2,192,128], index: 3, kind: input, shape index: {}]
  %s4 = inlined_call_operand.vmem [shape: f32[80,128], index: 4, kind: input, shape index: {}]
  %s5 = inlined_call_operand.hbm [shape: f32[2,32], index: 5, kind: output, shape index: {}]
  %s6 = sld [smem:[#allocation0]]
  $region34: #{tpu_custom_call.1} parent=0
    _
  %s8 = ssub.s32 1, %s6
  %s9 = scalar_select 0, %s8, %s6
  $region1: #{tpu_custom_call.1} parent=0
    #allocation3 [shape = 'u8[512]{0}', space=smem, size = 0x200, scoped, tag = 'input window, operand 1, single buffered']
    #allocation4 [shape = 's32[1]{0}', space=sflag, size = 0x4, scoped, tag = 'scoped memory for tpu_custom_call.1']
    #allocation5 [shape = 's32[1]{0}', space=sflag, size = 0x4, scoped, tag = 'scoped memory for tpu_custom_call.1']
    #allocation6 [shape = 'u8[1024]{0}', space=vmem, size = 0x400, scoped, tag = 'output window, operand 0, single buffered']
    %10 = vsyncpa [#allocation5], 0
    %11 = vsyncpa [#allocation4], 0
    // Predicated region
    $region2: #{tpu_custom_call.1} parent=1 // pred_check
      _
    $region3: #{tpu_custom_call.1} parent=1 // pred_check_branch
      %13 = sbr.rel (0) target = $region5
    $region4: #{tpu_custom_call.1} parent=1 // pred_region
      _
    $region5: #{tpu_custom_call.1} parent=1 // pred_fallthru
      _
    // Predicated region
    $region6: #{tpu_custom_call.1} parent=1 // pred_check
      _
    $region7: #{tpu_custom_call.1} parent=1 // pred_check_branch
      %15 = sbr.rel (0) target = $region9
    $region8: #{tpu_custom_call.1} parent=1 // pred_region
      %s17 = ssub.s32 16, 16
      %18 = vsyncadd [#allocation5], %s17
      %s20 = sshll.u32 %s1, 4
      %s21 = int_to_ptr.vmem [resolvable:$true] %s20
      %23 = dma.vmem_to_smem %s21, 16, [#allocation3], [#allocation5]
    $region9: #{tpu_custom_call.1} parent=1 // pred_fallthru
      _
    // Predicated region
    $region10: #{tpu_custom_call.1} parent=1 // pred_check
      _
    $region11: #{tpu_custom_call.1} parent=1 // pred_check_branch
      %25 = sbr.rel (0) target = $region13
    $region12: #{tpu_custom_call.1} parent=1 // pred_region
      _
    $region13: #{tpu_custom_call.1} parent=1 // pred_fallthru
      _
    // Predicated region
    $region14: #{tpu_custom_call.1} parent=1 // pred_check
      _
    $region15: #{tpu_custom_call.1} parent=1 // pred_check_branch
      %27 = sbr.rel (0) target = $region17
    $region16: #{tpu_custom_call.1} parent=1 // pred_region
      _
    $region17: #{tpu_custom_call.1} parent=1 // pred_fallthru
      _
    // Predicated region
    $region18: #{tpu_custom_call.1} parent=1 // pred_check
      _
    $region19: #{tpu_custom_call.1} parent=1 // pred_check_branch
      %29 = sbr.rel (0) target = $region21
    $region20: #{tpu_custom_call.1} parent=1 // pred_region
      _
    $region21: #{tpu_custom_call.1} parent=1 // pred_fallthru
      _
    // Predicated region
    $region22: #{tpu_custom_call.1} parent=1 // pred_check
      _
    $region23: #{tpu_custom_call.1} parent=1 // pred_check_branch
      %31 = sbr.rel (0) target = $region25
    $region24: #{tpu_custom_call.1} parent=1 // pred_region
      %32 = dma.done [#allocation5], 16
    $region25: #{tpu_custom_call.1} parent=1 // pred_fallthru
      _
    %33 = sfence
    %v34 = vld [vmem:[%s4] sm:$0xff]
    %v35 = vld [vmem:[%s0] sm:$0xff]
    %v36 = vld [vmem:[%s0 + $0x8] sm:$0xff]
    %v37 = vadd.f32 %v35, %v34
    %v38 = vadd.f32 %v36, %v34
    %v39 = vlaneseq
    %v40 = vshrl.u32 %v39, 7
    %v41 = vlaneseq
    %v42 = vand.u32 %v41, 127
    %vm43 = vcmp.le.s32.totalorder %v42, %v40
    %v44 = vsel %vm43, 0.0, -inf
    %v45 = vld [vmem:[%s4 + $0x2a] sm:$0x1]
    %v46 = vld [vmem:[%s4 + $0x2b] sm:$0x1]
    %v47 = vld [vmem:[%s4 + $0x2c] sm:$0x1]
    %v48 = vld [vmem:[%s4 + $0x2d] sm:$0x1]
    %v49 = vld [vmem:[%s4 + $0x2e] sm:$0x1]
    %v50 = vld [vmem:[%s4 + $0x2f] sm:$0x1]
    %v51 = vld [vmem:[%s4 + $0x30] sm:$0x1]
    %vm52 = vcmask 261120
    %v53 = vsel %vm52, %v37, 0.0
    %54 = vadd.xlane.f32.xlu0 %v53
    %v55 = vpop.xlane.xlu0 %54
    %v56 = vsel %vm52, %v38, 0.0
    %57 = vadd.xlane.f32.xlu0 %v56
    %v58 = vpop.xlane.xlu0 %57
    %v59 = vrcp.pop 32.0
    %v60 = vmul.f32 %v55, %v59
    %v61 = vmul.f32 %v58, %v59
    %v62 = vsub.f32 %v37, %v60
    %v63 = vsub.f32 %v38, %v61
    %v64 = vmul.f32 %v62, %v62
    %v65 = vmul.f32 %v63, %v63
    %v66 = vsel %vm52, %v64, 0.0
    %67 = vadd.xlane.f32.xlu0 %v66
    %v68 = vpop.xlane.xlu0 %67
    %v69 = vsel %vm52, %v65, 0.0
    %70 = vadd.xlane.f32.xlu0 %v69
    %v71 = vpop.xlane.xlu0 %70
    %v72 = vmul.f32 %v68, %v59
    %v73 = vmul.f32 %v71, %v59
    %v74 = vadd.f32 %v72, 1e-05
    %v75 = vadd.f32 %v73, 1e-05
    %v76 = vrsqrt.pop %v74
    %v77 = vrsqrt.pop %v75
    %v78 = vmul.f32 %v62, %v76
    %v79 = vmul.f32 %v63, %v77
    %v80 = vlaneseq
    %v81 = vshrl.u32 %v80, 7
    %v82 = vsub.s32 0, %v81
    %v83 = vrot.slane %v45, %v82
    %v84 = vmul.f32 %v78, %v83
    %v85 = vmul.f32 %v79, %v83
    %v86 = vlaneseq
    %v87 = vshrl.u32 %v86, 7
    %v88 = vsub.s32 0, %v87
    %v89 = vrot.slane %v46, %v88
    %v90 = vadd.f32 %v84, %v89
    %v91 = vadd.f32 %v85, %v89
    %v92 = vld [vmem:[%s2] sm:$0xff]
    %v93 = vld [vmem:[%s2 + $0x8] sm:$0xff]
    %v94 = vld [vmem:[%s2 + $0x10] sm:$0xff]
    %v95 = vld [vmem:[%s2 + $0x18] sm:$0xff]
    %s96 = scalar_lea.vmem %s2, 128
    %v97 = vld [vmem:[%s96] sm:$0xff]
    %v98 = vld [vmem:[%s96 + $0x8] sm:$0xff]
    %v99 = vld [vmem:[%s96 + $0x10] sm:$0xff]
    %v100 = vld [vmem:[%s96 + $0x18] sm:$0xff]
    %s101 = scalar_lea.vmem %s2, 256
    %v102 = vld [vmem:[%s101] sm:$0xff]
    %v103 = vld [vmem:[%s101 + $0x8] sm:$0xff]
    %v104 = vld [vmem:[%s101 + $0x10] sm:$0xff]
    %v105 = vld [vmem:[%s101 + $0x18] sm:$0xff]
    %v106 = vld [vmem:[%s4 + $0x31] sm:$0x1]
    %v107 = vld [vmem:[%s4 + $0x35] sm:$0x1]
    %v108 = vld [vmem:[%s4 + $0x39] sm:$0x1]
    %v109 = vlaneseq
    %v110 = vshrl.u32 %v109, 7
    %v111 = vsub.s32 0, %v110
    %v112 = vrot.slane %v106, %v111
    %v114 = vsel %vm52, %v90, 0
    %v117 = vsel %vm52, %v91, 0
    %119 = vmatprep.subr.mxu0 0.0
    %120 = vmatpush1.msra.mxu0 0.0
    %121 = vmatprep.subr.mxu0 0.0
    %122 = vmatpush1.msra.mxu0 0.0
    %123 = vmatprep.subr.mxu0 0.0
    %124 = vmatpush1.msra.mxu0 0.0
    %125 = vmatprep.subr.mxu0 0.0
    %126 = vmatpush1.msra.mxu0 0.0
    %127 = vmatprep.subr.mxu0 0.0
    %128 = vmatpush1.msra.mxu0 0.0
    %129 = vmatprep.subr.mxu0 0.0
    %130 = vmatpush1.msra.mxu0 0.0
    %131 = vmatprep.subr.mxu0 0.0
    %132 = vmatpush1.msra.mxu0 0.0
    %133 = vmatprep.subr.mxu0 0.0
    %134 = vmatpush1.msra.mxu0 0.0
    %135 = vmatprep.subr.mxu0 0.0
    %136 = vmatpush1.msra.mxu0 0.0
    %137 = vmatprep.subr.mxu0 0.0
    %138 = vmatpush1.msra.mxu0 0.0
    %139 = vmatprep.subr.mxu0 0.0
    %140 = vmatpush1.msra.mxu0 0.0
    %141 = vmatprep.subr.mxu0 0.0
    %142 = vmatpush1.msra.mxu0 0.0
    %143 = vmatprep.subr.mxu0 0.0
    %144 = vmatpush1.msra.mxu0 %v95
    %145 = vmatprep.subr.mxu0 0.0
    %146 = vmatpush1.msra.mxu0 %v94
    %147 = vmatprep.subr.mxu0 0.0
    %148 = vmatpush1.msra.mxu0 %v93
    %149 = vmatprep.subr.mxu0 0.0
    %150 = vmatpush1.msra.mxu0 %v92
    %151 = vmatprep.subr.mxu0 0.0
    %152 = vmatpush2.msra.mxu0 0.0
    %153 = vmatprep.subr.mxu0 0.0
    %154 = vmatpush2.msra.mxu0 0.0
    %155 = vmatprep.subr.mxu0 0.0
    %156 = vmatpush2.msra.mxu0 0.0
    %157 = vmatprep.subr.mxu0 0.0
    %158 = vmatpush2.msra.mxu0 0.0
    %159 = vmatprep.subr.mxu0 0.0
    %160 = vmatpush2.msra.mxu0 0.0
    %161 = vmatprep.subr.mxu0 0.0
    %162 = vmatpush2.msra.mxu0 0.0
    %163 = vmatprep.subr.mxu0 0.0
    %164 = vmatpush2.msra.mxu0 0.0
    %165 = vmatprep.subr.mxu0 0.0
    %166 = vmatpush2.msra.mxu0 0.0
    %167 = vmatprep.subr.mxu0 0.0
    %168 = vmatpush2.msra.mxu0 0.0
    %169 = vmatprep.subr.mxu0 0.0
    %170 = vmatpush2.msra.mxu0 0.0
    %171 = vmatprep.subr.mxu0 0.0
    %172 = vmatpush2.msra.mxu0 0.0
    %173 = vmatprep.subr.mxu0 0.0
    %174 = vmatpush2.msra.mxu0 0.0
    %175 = vmatprep.subr.mxu0 0.0
    %176 = vmatpush2.msra.mxu0 0.0
    %177 = vmatprep.subr.mxu0 0.0
    %178 = vmatpush2.msra.mxu0 0.0
    %179 = vmatprep.subr.mxu0 0.0
    %180 = vmatpush2.msra.mxu0 0.0
    %181 = vmatprep.subr.mxu0 0.0
    %182 = vmatpush2.msra.mxu0 0.0
    %183 = vmatprep.mubr.f32.mxu0 0.0
    %184 = vmatmul.mubr.f32.gmra.mxu0 %v114
    %v185 = vpop.f32.mrf.mxu0
    %v186 = vadd.f32 %v112, %v185
    %v187 = vpop.f32.mrf.mxu0
    %188 = vmatprep.mubr.f32.mxu0 0.0
    %189 = vmatmul.mubr.f32.gmra.mxu0 %v117
    %v190 = vpop.f32.mrf.mxu0
    %v191 = vadd.f32 %v112, %v190
    %v192 = vpop.f32.mrf.mxu0
    %193 = vdwg.mxu0
    %v194 = vlaneseq
    %v195 = vshrl.u32 %v194, 7
    %v196 = vsub.s32 0, %v195
    %v197 = vrot.slane %v107, %v196
    %198 = vmatprep.subr.mxu0 0.0
    %199 = vmatpush1.msra.mxu0 0.0
    %200 = vmatprep.subr.mxu0 0.0
    %201 = vmatpush1.msra.mxu0 0.0
    %202 = vmatprep.subr.mxu0 0.0
    %203 = vmatpush1.msra.mxu0 0.0
    %204 = vmatprep.subr.mxu0 0.0
    %205 = vmatpush1.msra.mxu0 0.0
    %206 = vmatprep.subr.mxu0 0.0
    %207 = vmatpush1.msra.mxu0 0.0
    %208 = vmatprep.subr.mxu0 0.0
    %209 = vmatpush1.msra.mxu0 0.0
    %210 = vmatprep.subr.mxu0 0.0
    %211 = vmatpush1.msra.mxu0 0.0
    %212 = vmatprep.subr.mxu0 0.0
    %213 = vmatpush1.msra.mxu0 0.0
    %214 = vmatprep.subr.mxu0 0.0
    %215 = vmatpush1.msra.mxu0 0.0
    %216 = vmatprep.subr.mxu0 0.0
    %217 = vmatpush1.msra.mxu0 0.0
    %218 = vmatprep.subr.mxu0 0.0
    %219 = vmatpush1.msra.mxu0 0.0
    %220 = vmatprep.subr.mxu0 0.0
    %221 = vmatpush1.msra.mxu0 0.0
    %222 = vmatprep.subr.mxu0 0.0
    %223 = vmatpush1.msra.mxu0 %v100
    %224 = vmatprep.subr.mxu0 0.0
    %225 = vmatpush1.msra.mxu0 %v99
    %226 = vmatprep.subr.mxu0 0.0
    %227 = vmatpush1.msra.mxu0 %v98
    %228 = vmatprep.subr.mxu0 0.0
    %229 = vmatpush1.msra.mxu0 %v97
    %230 = vmatprep.subr.mxu0 0.0
    %231 = vmatpush2.msra.mxu0 0.0
    %232 = vmatprep.subr.mxu0 0.0
    %233 = vmatpush2.msra.mxu0 0.0
    %234 = vmatprep.subr.mxu0 0.0
    %235 = vmatpush2.msra.mxu0 0.0
    %236 = vmatprep.subr.mxu0 0.0
    %237 = vmatpush2.msra.mxu0 0.0
    %238 = vmatprep.subr.mxu0 0.0
    %239 = vmatpush2.msra.mxu0 0.0
    %240 = vmatprep.subr.mxu0 0.0
    %241 = vmatpush2.msra.mxu0 0.0
    %242 = vmatprep.subr.mxu0 0.0
    %243 = vmatpush2.msra.mxu0 0.0
    %244 = vmatprep.subr.mxu0 0.0
    %245 = vmatpush2.msra.mxu0 0.0
    %246 = vmatprep.subr.mxu0 0.0
    %247 = vmatpush2.msra.mxu0 0.0
    %248 = vmatprep.subr.mxu0 0.0
    %249 = vmatpush2.msra.mxu0 0.0
    %250 = vmatprep.subr.mxu0 0.0
    %251 = vmatpush2.msra.mxu0 0.0
    %252 = vmatprep.subr.mxu0 0.0
    %253 = vmatpush2.msra.mxu0 0.0
    %254 = vmatprep.subr.mxu0 0.0
    %255 = vmatpush2.msra.mxu0 0.0
    %256 = vmatprep.subr.mxu0 0.0
    %257 = vmatpush2.msra.mxu0 0.0
    %258 = vmatprep.subr.mxu0 0.0
    %259 = vmatpush2.msra.mxu0 0.0
    %260 = vmatprep.subr.mxu0 0.0
    %261 = vmatpush2.msra.mxu0 0.0
    %262 = vmatprep.mubr.f32.mxu0 0.0
    %263 = vmatmul.mubr.f32.gmra.mxu0 %v114
    %v264 = vpop.f32.mrf.mxu0
    %v265 = vadd.f32 %v197, %v264
    %v266 = vpop.f32.mrf.mxu0
    %267 = vmatprep.mubr.f32.mxu0 0.0
    %268 = vmatmul.mubr.f32.gmra.mxu0 %v117
    %v269 = vpop.f32.mrf.mxu0
    %v270 = vadd.f32 %v197, %v269
    %v271 = vpop.f32.mrf.mxu0
    %272 = vdwg.mxu0
    %v273 = vlaneseq
    %v274 = vshrl.u32 %v273, 7
    %v275 = vsub.s32 0, %v274
    %v276 = vrot.slane %v108, %v275
    %277 = vmatprep.subr.mxu0 0.0
    %278 = vmatpush1.msra.mxu0 0.0
    %279 = vmatprep.subr.mxu0 0.0
    %280 = vmatpush1.msra.mxu0 0.0
    %281 = vmatprep.subr.mxu0 0.0
    %282 = vmatpush1.msra.mxu0 0.0
    %283 = vmatprep.subr.mxu0 0.0
    %284 = vmatpush1.msra.mxu0 0.0
    %285 = vmatprep.subr.mxu0 0.0
    %286 = vmatpush1.msra.mxu0 0.0
    %287 = vmatprep.subr.mxu0 0.0
    %288 = vmatpush1.msra.mxu0 0.0
    %289 = vmatprep.subr.mxu0 0.0
    %290 = vmatpush1.msra.mxu0 0.0
    %291 = vmatprep.subr.mxu0 0.0
    %292 = vmatpush1.msra.mxu0 0.0
    %293 = vmatprep.subr.mxu0 0.0
    %294 = vmatpush1.msra.mxu0 0.0
    %295 = vmatprep.subr.mxu0 0.0
    %296 = vmatpush1.msra.mxu0 0.0
    %297 = vmatprep.subr.mxu0 0.0
    %298 = vmatpush1.msra.mxu0 0.0
    %299 = vmatprep.subr.mxu0 0.0
    %300 = vmatpush1.msra.mxu0 0.0
    %301 = vmatprep.subr.mxu0 0.0
    %302 = vmatpush1.msra.mxu0 %v105
    %303 = vmatprep.subr.mxu0 0.0
    %304 = vmatpush1.msra.mxu0 %v104
    %305 = vmatprep.subr.mxu0 0.0
    %306 = vmatpush1.msra.mxu0 %v103
    %307 = vmatprep.subr.mxu0 0.0
    %308 = vmatpush1.msra.mxu0 %v102
    %309 = vmatprep.subr.mxu0 0.0
    %310 = vmatpush2.msra.mxu0 0.0
    %311 = vmatprep.subr.mxu0 0.0
    %312 = vmatpush2.msra.mxu0 0.0
    %313 = vmatprep.subr.mxu0 0.0
    %314 = vmatpush2.msra.mxu0 0.0
    %315 = vmatprep.subr.mxu0 0.0
    %316 = vmatpush2.msra.mxu0 0.0
    %317 = vmatprep.subr.mxu0 0.0
    %318 = vmatpush2.msra.mxu0 0.0
    %319 = vmatprep.subr.mxu0 0.0
    %320 = vmatpush2.msra.mxu0 0.0
    %321 = vmatprep.subr.mxu0 0.0
    %322 = vmatpush2.msra.mxu0 0.0
    %323 = vmatprep.subr.mxu0 0.0
    %324 = vmatpush2.msra.mxu0 0.0
    %325 = vmatprep.subr.mxu0 0.0
    %326 = vmatpush2.msra.mxu0 0.0
    %327 = vmatprep.subr.mxu0 0.0
    %328 = vmatpush2.msra.mxu0 0.0
    %329 = vmatprep.subr.mxu0 0.0
    %330 = vmatpush2.msra.mxu0 0.0
    %331 = vmatprep.subr.mxu0 0.0
    %332 = vmatpush2.msra.mxu0 0.0
    %333 = vmatprep.subr.mxu0 0.0
    %334 = vmatpush2.msra.mxu0 0.0
    %335 = vmatprep.subr.mxu0 0.0
    %336 = vmatpush2.msra.mxu0 0.0
    %337 = vmatprep.subr.mxu0 0.0
    %338 = vmatpush2.msra.mxu0 0.0
    %339 = vmatprep.subr.mxu0 0.0
    %340 = vmatpush2.msra.mxu0 0.0
    %341 = vmatprep.mubr.f32.mxu0 0.0
    %342 = vmatmul.mubr.f32.gmra.mxu0 %v114
    %v343 = vpop.f32.mrf.mxu0
    %v344 = vadd.f32 %v276, %v343
    %v345 = vpop.f32.mrf.mxu0
    %346 = vmatprep.mubr.f32.mxu0 0.0
    %347 = vmatmul.mubr.f32.gmra.mxu0 %v117
    %v348 = vpop.f32.mrf.mxu0
    %v349 = vadd.f32 %v276, %v348
    %v350 = vpop.f32.mrf.mxu0
    %351 = vdwg.mxu0
    %vm352 = vcmask 64512
    %v354 = vsel %vm352, %v186, 0
    %v357 = vsel %vm352, %v265, 0
    %359 = vmatprep.subr.mxu0 0.0
    %360 = vmatpush1.xpose.msra.mxu0 0.0
    %361 = vmatprep.subr.mxu0 0.0
    %362 = vmatpush1.xpose.msra.mxu0 0.0
    %363 = vmatprep.subr.mxu0 0.0
    %364 = vmatpush1.xpose.msra.mxu0 0.0
    %365 = vmatprep.subr.mxu0 0.0
    %366 = vmatpush1.xpose.msra.mxu0 0.0
    %367 = vmatprep.subr.mxu0 0.0
    %368 = vmatpush1.xpose.msra.mxu0 0.0
    %369 = vmatprep.subr.mxu0 0.0
    %370 = vmatpush1.xpose.msra.mxu0 0.0
    %371 = vmatprep.subr.mxu0 0.0
    %372 = vmatpush1.xpose.msra.mxu0 0.0
    %373 = vmatprep.subr.mxu0 0.0
    %374 = vmatpush1.xpose.msra.mxu0 0.0
    %375 = vmatprep.subr.mxu0 0.0
    %376 = vmatpush1.xpose.msra.mxu0 0.0
    %377 = vmatprep.subr.mxu0 0.0
    %378 = vmatpush1.xpose.msra.mxu0 0.0
    %379 = vmatprep.subr.mxu0 0.0
    %380 = vmatpush1.xpose.msra.mxu0 0.0
    %381 = vmatprep.subr.mxu0 0.0
    %382 = vmatpush1.xpose.msra.mxu0 0.0
    %383 = vmatprep.subr.mxu0 0.0
    %384 = vmatpush1.xpose.msra.mxu0 0.0
    %385 = vmatprep.subr.mxu0 0.0
    %386 = vmatpush1.xpose.msra.mxu0 0.0
    %387 = vmatprep.subr.mxu0 0.0
    %388 = vmatpush1.xpose.msra.mxu0 0.0
    %389 = vmatprep.subr.mxu0 0.0
    %390 = vmatpush1.xpose.msra.mxu0 %v357
    %391 = vmatprep.subr.mxu0 0.0
    %392 = vmatpush2.xpose.msra.mxu0 0.0
    %393 = vmatprep.subr.mxu0 0.0
    %394 = vmatpush2.xpose.msra.mxu0 0.0
    %395 = vmatprep.subr.mxu0 0.0
    %396 = vmatpush2.xpose.msra.mxu0 0.0
    %397 = vmatprep.subr.mxu0 0.0
    %398 = vmatpush2.xpose.msra.mxu0 0.0
    %399 = vmatprep.subr.mxu0 0.0
    %400 = vmatpush2.xpose.msra.mxu0 0.0
    %401 = vmatprep.subr.mxu0 0.0
    %402 = vmatpush2.xpose.msra.mxu0 0.0
    %403 = vmatprep.subr.mxu0 0.0
    %404 = vmatpush2.xpose.msra.mxu0 0.0
    %405 = vmatprep.subr.mxu0 0.0
    %406 = vmatpush2.xpose.msra.mxu0 0.0
    %407 = vmatprep.subr.mxu0 0.0
    %408 = vmatpush2.xpose.msra.mxu0 0.0
    %409 = vmatprep.subr.mxu0 0.0
    %410 = vmatpush2.xpose.msra.mxu0 0.0
    %411 = vmatprep.subr.mxu0 0.0
    %412 = vmatpush2.xpose.msra.mxu0 0.0
    %413 = vmatprep.subr.mxu0 0.0
    %414 = vmatpush2.xpose.msra.mxu0 0.0
    %415 = vmatprep.subr.mxu0 0.0
    %416 = vmatpush2.xpose.msra.mxu0 0.0
    %417 = vmatprep.subr.mxu0 0.0
    %418 = vmatpush2.xpose.msra.mxu0 0.0
    %419 = vmatprep.subr.mxu0 0.0
    %420 = vmatpush2.xpose.msra.mxu0 0.0
    %421 = vmatprep.subr.mxu0 0.0
    %422 = vmatpush2.xpose.msra.mxu0 0.0
    %423 = vmatprep.mubr.f32.mxu0 0.0
    %424 = vmatmul.mubr.f32.gmra.mxu0 %v354
    %v425 = vpop.f32.mrf.mxu0
    %v426 = vadd.f32 0.0, %v425
    %v427 = vpop.f32.mrf.mxu0
    %428 = vdwg.mxu0
    %v430 = vsel %vm352, %v191, 0
    %v433 = vsel %vm352, %v270, 0
    %435 = vmatprep.subr.mxu0 0.0
    %436 = vmatpush1.xpose.msra.mxu0 0.0
    %437 = vmatprep.subr.mxu0 0.0
    %438 = vmatpush1.xpose.msra.mxu0 0.0
    %439 = vmatprep.subr.mxu0 0.0
    %440 = vmatpush1.xpose.msra.mxu0 0.0
    %441 = vmatprep.subr.mxu0 0.0
    %442 = vmatpush1.xpose.msra.mxu0 0.0
    %443 = vmatprep.subr.mxu0 0.0
    %444 = vmatpush1.xpose.msra.mxu0 0.0
    %445 = vmatprep.subr.mxu0 0.0
    %446 = vmatpush1.xpose.msra.mxu0 0.0
    %447 = vmatprep.subr.mxu0 0.0
    %448 = vmatpush1.xpose.msra.mxu0 0.0
    %449 = vmatprep.subr.mxu0 0.0
    %450 = vmatpush1.xpose.msra.mxu0 0.0
    %451 = vmatprep.subr.mxu0 0.0
    %452 = vmatpush1.xpose.msra.mxu0 0.0
    %453 = vmatprep.subr.mxu0 0.0
    %454 = vmatpush1.xpose.msra.mxu0 0.0
    %455 = vmatprep.subr.mxu0 0.0
    %456 = vmatpush1.xpose.msra.mxu0 0.0
    %457 = vmatprep.subr.mxu0 0.0
    %458 = vmatpush1.xpose.msra.mxu0 0.0
    %459 = vmatprep.subr.mxu0 0.0
    %460 = vmatpush1.xpose.msra.mxu0 0.0
    %461 = vmatprep.subr.mxu0 0.0
    %462 = vmatpush1.xpose.msra.mxu0 0.0
    %463 = vmatprep.subr.mxu0 0.0
    %464 = vmatpush1.xpose.msra.mxu0 0.0
    %465 = vmatprep.subr.mxu0 0.0
    %466 = vmatpush1.xpose.msra.mxu0 %v433
    %467 = vmatprep.subr.mxu0 0.0
    %468 = vmatpush2.xpose.msra.mxu0 0.0
    %469 = vmatprep.subr.mxu0 0.0
    %470 = vmatpush2.xpose.msra.mxu0 0.0
    %471 = vmatprep.subr.mxu0 0.0
    %472 = vmatpush2.xpose.msra.mxu0 0.0
    %473 = vmatprep.subr.mxu0 0.0
    %474 = vmatpush2.xpose.msra.mxu0 0.0
    %475 = vmatprep.subr.mxu0 0.0
    %476 = vmatpush2.xpose.msra.mxu0 0.0
    %477 = vmatprep.subr.mxu0 0.0
    %478 = vmatpush2.xpose.msra.mxu0 0.0
    %479 = vmatprep.subr.mxu0 0.0
    %480 = vmatpush2.xpose.msra.mxu0 0.0
    %481 = vmatprep.subr.mxu0 0.0
    %482 = vmatpush2.xpose.msra.mxu0 0.0
    %483 = vmatprep.subr.mxu0 0.0
    %484 = vmatpush2.xpose.msra.mxu0 0.0
    %485 = vmatprep.subr.mxu0 0.0
    %486 = vmatpush2.xpose.msra.mxu0 0.0
    %487 = vmatprep.subr.mxu0 0.0
    %488 = vmatpush2.xpose.msra.mxu0 0.0
    %489 = vmatprep.subr.mxu0 0.0
    %490 = vmatpush2.xpose.msra.mxu0 0.0
    %491 = vmatprep.subr.mxu0 0.0
    %492 = vmatpush2.xpose.msra.mxu0 0.0
    %493 = vmatprep.subr.mxu0 0.0
    %494 = vmatpush2.xpose.msra.mxu0 0.0
    %495 = vmatprep.subr.mxu0 0.0
    %496 = vmatpush2.xpose.msra.mxu0 0.0
    %497 = vmatprep.subr.mxu0 0.0
    %498 = vmatpush2.xpose.msra.mxu0 0.0
    %499 = vmatprep.mubr.f32.mxu0 0.0
    %500 = vmatmul.mubr.f32.gmra.mxu0 %v430
    %v501 = vpop.f32.mrf.mxu0
    %v502 = vadd.f32 0.0, %v501
    %v503 = vpop.f32.mrf.mxu0
    %504 = vdwg.mxu0
    %v505 = vmul.f32 %v426, 0.35355338
    %v506 = vmul.f32 %v502, 0.35355338
    %v507 = vadd.f32 %v505, %v44
    %v508 = vadd.f32 %v506, %v44
    %v509 = vsel %vm352, %v507, -inf
    %510 = vmax.xlane.f32.xlu0 %v509
    %v511 = vpop.xlane.xlu0 %510
    %v512 = vsel %vm352, %v508, -inf
    %513 = vmax.xlane.f32.xlu0 %v512
    %v514 = vpop.xlane.xlu0 %513
    %v515 = vsub.f32 %v507, %v511
    %v516 = vsub.f32 %v508, %v514
    %v517 = vmul.f32 %v515, 1.442695
    %v518 = vpow.pop %v517
    %v519 = vmul.f32 %v516, 1.442695
    %v520 = vpow.pop %v519
    %v521 = vsel %vm352, %v518, 0.0
    %522 = vadd.xlane.f32.xlu0 %v521
    %v523 = vpop.xlane.xlu0 %522
    %v524 = vsel %vm352, %v520, 0.0
    %525 = vadd.xlane.f32.xlu0 %v524
    %v526 = vpop.xlane.xlu0 %525
    %v527 = vrcp.pop %v523
    %v528 = vrcp.pop %v526
    %v529 = vmul.f32 %v518, %v527
    %v530 = vmul.f32 %v520, %v528
    %v532 = vsel %vm352, %v529, 0
    %534 = vmatprep.subr.mxu0 0.0
    %535 = vmatpush1.msra.mxu0 0.0
    %536 = vmatprep.subr.mxu0 0.0
    %537 = vmatpush1.msra.mxu0 0.0
    %538 = vmatprep.subr.mxu0 0.0
    %539 = vmatpush1.msra.mxu0 0.0
    %540 = vmatprep.subr.mxu0 0.0
    %541 = vmatpush1.msra.mxu0 0.0
    %542 = vmatprep.subr.mxu0 0.0
    %543 = vmatpush1.msra.mxu0 0.0
    %544 = vmatprep.subr.mxu0 0.0
    %545 = vmatpush1.msra.mxu0 0.0
    %546 = vmatprep.subr.mxu0 0.0
    %547 = vmatpush1.msra.mxu0 0.0
    %548 = vmatprep.subr.mxu0 0.0
    %549 = vmatpush1.msra.mxu0 0.0
    %550 = vmatprep.subr.mxu0 0.0
    %551 = vmatpush1.msra.mxu0 0.0
    %552 = vmatprep.subr.mxu0 0.0
    %553 = vmatpush1.msra.mxu0 0.0
    %554 = vmatprep.subr.mxu0 0.0
    %555 = vmatpush1.msra.mxu0 0.0
    %556 = vmatprep.subr.mxu0 0.0
    %557 = vmatpush1.msra.mxu0 0.0
    %558 = vmatprep.subr.mxu0 0.0
    %559 = vmatpush1.msra.mxu0 0.0
    %560 = vmatprep.subr.mxu0 0.0
    %561 = vmatpush1.msra.mxu0 0.0
    %562 = vmatprep.subr.mxu0 0.0
    %563 = vmatpush1.msra.mxu0 0.0
    %564 = vmatprep.subr.mxu0 0.0
    %565 = vmatpush1.msra.mxu0 %v344
    %566 = vmatprep.subr.mxu0 0.0
    %567 = vmatpush2.msra.mxu0 0.0
    %568 = vmatprep.subr.mxu0 0.0
    %569 = vmatpush2.msra.mxu0 0.0
    %570 = vmatprep.subr.mxu0 0.0
    %571 = vmatpush2.msra.mxu0 0.0
    %572 = vmatprep.subr.mxu0 0.0
    %573 = vmatpush2.msra.mxu0 0.0
    %574 = vmatprep.subr.mxu0 0.0
    %575 = vmatpush2.msra.mxu0 0.0
    %576 = vmatprep.subr.mxu0 0.0
    %577 = vmatpush2.msra.mxu0 0.0
    %578 = vmatprep.subr.mxu0 0.0
    %579 = vmatpush2.msra.mxu0 0.0
    %580 = vmatprep.subr.mxu0 0.0
    %581 = vmatpush2.msra.mxu0 0.0
    %582 = vmatprep.subr.mxu0 0.0
    %583 = vmatpush2.msra.mxu0 0.0
    %584 = vmatprep.subr.mxu0 0.0
    %585 = vmatpush2.msra.mxu0 0.0
    %586 = vmatprep.subr.mxu0 0.0
    %587 = vmatpush2.msra.mxu0 0.0
    %588 = vmatprep.subr.mxu0 0.0
    %589 = vmatpush2.msra.mxu0 0.0
    %590 = vmatprep.subr.mxu0 0.0
    %591 = vmatpush2.msra.mxu0 0.0
    %592 = vmatprep.subr.mxu0 0.0
    %593 = vmatpush2.msra.mxu0 0.0
    %594 = vmatprep.subr.mxu0 0.0
    %595 = vmatpush2.msra.mxu0 0.0
    %596 = vmatprep.subr.mxu0 0.0
    %597 = vmatpush2.msra.mxu0 0.0
    %598 = vmatprep.mubr.f32.mxu0 0.0
    %599 = vmatmul.mubr.f32.gmra.mxu0 %v532
    %v600 = vpop.f32.mrf.mxu0
    %v601 = vadd.f32 0.0, %v600
    %v602 = vpop.f32.mrf.mxu0
    %603 = vdwg.mxu0
    %v605 = vsel %vm352, %v530, 0
    %607 = vmatprep.subr.mxu0 0.0
    %608 = vmatpush1.msra.mxu0 0.0
    %609 = vmatprep.subr.mxu0 0.0
    %610 = vmatpush1.msra.mxu0 0.0
    %611 = vmatprep.subr.mxu0 0.0
    %612 = vmatpush1.msra.mxu0 0.0
    %613 = vmatprep.subr.mxu0 0.0
    %614 = vmatpush1.msra.mxu0 0.0
    %615 = vmatprep.subr.mxu0 0.0
    %616 = vmatpush1.msra.mxu0 0.0
    %617 = vmatprep.subr.mxu0 0.0
    %618 = vmatpush1.msra.mxu0 0.0
    %619 = vmatprep.subr.mxu0 0.0
    %620 = vmatpush1.msra.mxu0 0.0
    %621 = vmatprep.subr.mxu0 0.0
    %622 = vmatpush1.msra.mxu0 0.0
    %623 = vmatprep.subr.mxu0 0.0
    %624 = vmatpush1.msra.mxu0 0.0
    %625 = vmatprep.subr.mxu0 0.0
    %626 = vmatpush1.msra.mxu0 0.0
    %627 = vmatprep.subr.mxu0 0.0
    %628 = vmatpush1.msra.mxu0 0.0
    %629 = vmatprep.subr.mxu0 0.0
    %630 = vmatpush1.msra.mxu0 0.0
    %631 = vmatprep.subr.mxu0 0.0
    %632 = vmatpush1.msra.mxu0 0.0
    %633 = vmatprep.subr.mxu0 0.0
    %634 = vmatpush1.msra.mxu0 0.0
    %635 = vmatprep.subr.mxu0 0.0
    %636 = vmatpush1.msra.mxu0 0.0
    %637 = vmatprep.subr.mxu0 0.0
    %638 = vmatpush1.msra.mxu0 %v349
    %639 = vmatprep.subr.mxu0 0.0
    %640 = vmatpush2.msra.mxu0 0.0
    %641 = vmatprep.subr.mxu0 0.0
    %642 = vmatpush2.msra.mxu0 0.0
    %643 = vmatprep.subr.mxu0 0.0
    %644 = vmatpush2.msra.mxu0 0.0
    %645 = vmatprep.subr.mxu0 0.0
    %646 = vmatpush2.msra.mxu0 0.0
    %647 = vmatprep.subr.mxu0 0.0
    %648 = vmatpush2.msra.mxu0 0.0
    %649 = vmatprep.subr.mxu0 0.0
    %650 = vmatpush2.msra.mxu0 0.0
    %651 = vmatprep.subr.mxu0 0.0
    %652 = vmatpush2.msra.mxu0 0.0
    %653 = vmatprep.subr.mxu0 0.0
    %654 = vmatpush2.msra.mxu0 0.0
    %655 = vmatprep.subr.mxu0 0.0
    %656 = vmatpush2.msra.mxu0 0.0
    %657 = vmatprep.subr.mxu0 0.0
    %658 = vmatpush2.msra.mxu0 0.0
    %659 = vmatprep.subr.mxu0 0.0
    %660 = vmatpush2.msra.mxu0 0.0
    %661 = vmatprep.subr.mxu0 0.0
    %662 = vmatpush2.msra.mxu0 0.0
    %663 = vmatprep.subr.mxu0 0.0
    %664 = vmatpush2.msra.mxu0 0.0
    %665 = vmatprep.subr.mxu0 0.0
    %666 = vmatpush2.msra.mxu0 0.0
    %667 = vmatprep.subr.mxu0 0.0
    %668 = vmatpush2.msra.mxu0 0.0
    %669 = vmatprep.subr.mxu0 0.0
    %670 = vmatpush2.msra.mxu0 0.0
    %671 = vmatprep.mubr.f32.mxu0 0.0
    %672 = vmatmul.mubr.f32.gmra.mxu0 %v605
    %v673 = vpop.f32.mrf.mxu0
    %v674 = vadd.f32 0.0, %v673
    %v675 = vpop.f32.mrf.mxu0
    %676 = vdwg.mxu0
    %s677 = scalar_lea.vmem %s2, 32
    %v678 = vld [vmem:[%s677] sm:$0xff]
    %v679 = vld [vmem:[%s677 + $0x8] sm:$0xff]
    %v680 = vld [vmem:[%s677 + $0x10] sm:$0xff]
    %v681 = vld [vmem:[%s677 + $0x18] sm:$0xff]
    %s682 = scalar_lea.vmem %s2, 160
    %v683 = vld [vmem:[%s682] sm:$0xff]
    %v684 = vld [vmem:[%s682 + $0x8] sm:$0xff]
    %v685 = vld [vmem:[%s682 + $0x10] sm:$0xff]
    %v686 = vld [vmem:[%s682 + $0x18] sm:$0xff]
    %s687 = scalar_lea.vmem %s2, 288
    %v688 = vld [vmem:[%s687] sm:$0xff]
    %v689 = vld [vmem:[%s687 + $0x8] sm:$0xff]
    %v690 = vld [vmem:[%s687 + $0x10] sm:$0xff]
    %v691 = vld [vmem:[%s687 + $0x18] sm:$0xff]
    %v692 = vld [vmem:[%s4 + $0x32] sm:$0x1]
    %v693 = vld [vmem:[%s4 + $0x36] sm:$0x1]
    %v694 = vld [vmem:[%s4 + $0x3a] sm:$0x1]
    %v695 = vlaneseq
    %v696 = vshrl.u32 %v695, 7
    %v697 = vsub.s32 0, %v696
    %v698 = vrot.slane %v692, %v697
    %699 = vmatprep.subr.mxu0 0.0
    %700 = vmatpush1.msra.mxu0 0.0
    %701 = vmatprep.subr.mxu0 0.0
    %702 = vmatpush1.msra.mxu0 0.0
    %703 = vmatprep.subr.mxu0 0.0
    %704 = vmatpush1.msra.mxu0 0.0
    %705 = vmatprep.subr.mxu0 0.0
    %706 = vmatpush1.msra.mxu0 0.0
    %707 = vmatprep.subr.mxu0 0.0
    %708 = vmatpush1.msra.mxu0 0.0
    %709 = vmatprep.subr.mxu0 0.0
    %710 = vmatpush1.msra.mxu0 0.0
    %711 = vmatprep.subr.mxu0 0.0
    %712 = vmatpush1.msra.mxu0 0.0
    %713 = vmatprep.subr.mxu0 0.0
    %714 = vmatpush1.msra.mxu0 0.0
    %715 = vmatprep.subr.mxu0 0.0
    %716 = vmatpush1.msra.mxu0 0.0
    %717 = vmatprep.subr.mxu0 0.0
    %718 = vmatpush1.msra.mxu0 0.0
    %719 = vmatprep.subr.mxu0 0.0
    %720 = vmatpush1.msra.mxu0 0.0
    %721 = vmatprep.subr.mxu0 0.0
    %722 = vmatpush1.msra.mxu0 0.0
    %723 = vmatprep.subr.mxu0 0.0
    %724 = vmatpush1.msra.mxu0 %v681
    %725 = vmatprep.subr.mxu0 0.0
    %726 = vmatpush1.msra.mxu0 %v680
    %727 = vmatprep.subr.mxu0 0.0
    %728 = vmatpush1.msra.mxu0 %v679
    %729 = vmatprep.subr.mxu0 0.0
    %730 = vmatpush1.msra.mxu0 %v678
    %731 = vmatprep.subr.mxu0 0.0
    %732 = vmatpush2.msra.mxu0 0.0
    %733 = vmatprep.subr.mxu0 0.0
    %734 = vmatpush2.msra.mxu0 0.0
    %735 = vmatprep.subr.mxu0 0.0
    %736 = vmatpush2.msra.mxu0 0.0
    %737 = vmatprep.subr.mxu0 0.0
    %738 = vmatpush2.msra.mxu0 0.0
    %739 = vmatprep.subr.mxu0 0.0
    %740 = vmatpush2.msra.mxu0 0.0
    %741 = vmatprep.subr.mxu0 0.0
    %742 = vmatpush2.msra.mxu0 0.0
    %743 = vmatprep.subr.mxu0 0.0
    %744 = vmatpush2.msra.mxu0 0.0
    %745 = vmatprep.subr.mxu0 0.0
    %746 = vmatpush2.msra.mxu0 0.0
    %747 = vmatprep.subr.mxu0 0.0
    %748 = vmatpush2.msra.mxu0 0.0
    %749 = vmatprep.subr.mxu0 0.0
    %750 = vmatpush2.msra.mxu0 0.0
    %751 = vmatprep.subr.mxu0 0.0
    %752 = vmatpush2.msra.mxu0 0.0
    %753 = vmatprep.subr.mxu0 0.0
    %754 = vmatpush2.msra.mxu0 0.0
    %755 = vmatprep.subr.mxu0 0.0
    %756 = vmatpush2.msra.mxu0 0.0
    %757 = vmatprep.subr.mxu0 0.0
    %758 = vmatpush2.msra.mxu0 0.0
    %759 = vmatprep.subr.mxu0 0.0
    %760 = vmatpush2.msra.mxu0 0.0
    %761 = vmatprep.subr.mxu0 0.0
    %762 = vmatpush2.msra.mxu0 0.0
    %763 = vmatprep.mubr.f32.mxu0 0.0
    %764 = vmatmul.mubr.f32.gmra.mxu0 %v114
    %v765 = vpop.f32.mrf.mxu0
    %v766 = vadd.f32 %v698, %v765
    %v767 = vpop.f32.mrf.mxu0
    %768 = vmatprep.mubr.f32.mxu0 0.0
    %769 = vmatmul.mubr.f32.gmra.mxu0 %v117
    %v770 = vpop.f32.mrf.mxu0
    %v771 = vadd.f32 %v698, %v770
    %v772 = vpop.f32.mrf.mxu0
    %773 = vdwg.mxu0
    %v774 = vlaneseq
    %v775 = vshrl.u32 %v774, 7
    %v776 = vsub.s32 0, %v775
    %v777 = vrot.slane %v693, %v776
    %778 = vmatprep.subr.mxu0 0.0
    %779 = vmatpush1.msra.mxu0 0.0
    %780 = vmatprep.subr.mxu0 0.0
    %781 = vmatpush1.msra.mxu0 0.0
    %782 = vmatprep.subr.mxu0 0.0
    %783 = vmatpush1.msra.mxu0 0.0
    %784 = vmatprep.subr.mxu0 0.0
    %785 = vmatpush1.msra.mxu0 0.0
    %786 = vmatprep.subr.mxu0 0.0
    %787 = vmatpush1.msra.mxu0 0.0
    %788 = vmatprep.subr.mxu0 0.0
    %789 = vmatpush1.msra.mxu0 0.0
    %790 = vmatprep.subr.mxu0 0.0
    %791 = vmatpush1.msra.mxu0 0.0
    %792 = vmatprep.subr.mxu0 0.0
    %793 = vmatpush1.msra.mxu0 0.0
    %794 = vmatprep.subr.mxu0 0.0
    %795 = vmatpush1.msra.mxu0 0.0
    %796 = vmatprep.subr.mxu0 0.0
    %797 = vmatpush1.msra.mxu0 0.0
    %798 = vmatprep.subr.mxu0 0.0
    %799 = vmatpush1.msra.mxu0 0.0
    %800 = vmatprep.subr.mxu0 0.0
    %801 = vmatpush1.msra.mxu0 0.0
    %802 = vmatprep.subr.mxu0 0.0
    %803 = vmatpush1.msra.mxu0 %v686
    %804 = vmatprep.subr.mxu0 0.0
    %805 = vmatpush1.msra.mxu0 %v685
    %806 = vmatprep.subr.mxu0 0.0
    %807 = vmatpush1.msra.mxu0 %v684
    %808 = vmatprep.subr.mxu0 0.0
    %809 = vmatpush1.msra.mxu0 %v683
    %810 = vmatprep.subr.mxu0 0.0
    %811 = vmatpush2.msra.mxu0 0.0
    %812 = vmatprep.subr.mxu0 0.0
    %813 = vmatpush2.msra.mxu0 0.0
    %814 = vmatprep.subr.mxu0 0.0
    %815 = vmatpush2.msra.mxu0 0.0
    %816 = vmatprep.subr.mxu0 0.0
    %817 = vmatpush2.msra.mxu0 0.0
    %818 = vmatprep.subr.mxu0 0.0
    %819 = vmatpush2.msra.mxu0 0.0
    %820 = vmatprep.subr.mxu0 0.0
    %821 = vmatpush2.msra.mxu0 0.0
    %822 = vmatprep.subr.mxu0 0.0
    %823 = vmatpush2.msra.mxu0 0.0
    %824 = vmatprep.subr.mxu0 0.0
    %825 = vmatpush2.msra.mxu0 0.0
    %826 = vmatprep.subr.mxu0 0.0
    %827 = vmatpush2.msra.mxu0 0.0
    %828 = vmatprep.subr.mxu0 0.0
    %829 = vmatpush2.msra.mxu0 0.0
    %830 = vmatprep.subr.mxu0 0.0
    %831 = vmatpush2.msra.mxu0 0.0
    %832 = vmatprep.subr.mxu0 0.0
    %833 = vmatpush2.msra.mxu0 0.0
    %834 = vmatprep.subr.mxu0 0.0
    %835 = vmatpush2.msra.mxu0 0.0
    %836 = vmatprep.subr.mxu0 0.0
    %837 = vmatpush2.msra.mxu0 0.0
    %838 = vmatprep.subr.mxu0 0.0
    %839 = vmatpush2.msra.mxu0 0.0
    %840 = vmatprep.subr.mxu0 0.0
    %841 = vmatpush2.msra.mxu0 0.0
    %842 = vmatprep.mubr.f32.mxu0 0.0
    %843 = vmatmul.mubr.f32.gmra.mxu0 %v114
    %v844 = vpop.f32.mrf.mxu0
    %v845 = vadd.f32 %v777, %v844
    %v846 = vpop.f32.mrf.mxu0
    %847 = vmatprep.mubr.f32.mxu0 0.0
    %848 = vmatmul.mubr.f32.gmra.mxu0 %v117
    %v849 = vpop.f32.mrf.mxu0
    %v850 = vadd.f32 %v777, %v849
    %v851 = vpop.f32.mrf.mxu0
    %852 = vdwg.mxu0
    %v853 = vlaneseq
    %v854 = vshrl.u32 %v853, 7
    %v855 = vsub.s32 0, %v854
    %v856 = vrot.slane %v694, %v855
    %857 = vmatprep.subr.mxu0 0.0
    %858 = vmatpush1.msra.mxu0 0.0
    %859 = vmatprep.subr.mxu0 0.0
    %860 = vmatpush1.msra.mxu0 0.0
    %861 = vmatprep.subr.mxu0 0.0
    %862 = vmatpush1.msra.mxu0 0.0
    %863 = vmatprep.subr.mxu0 0.0
    %864 = vmatpush1.msra.mxu0 0.0
    %865 = vmatprep.subr.mxu0 0.0
    %866 = vmatpush1.msra.mxu0 0.0
    %867 = vmatprep.subr.mxu0 0.0
    %868 = vmatpush1.msra.mxu0 0.0
    %869 = vmatprep.subr.mxu0 0.0
    %870 = vmatpush1.msra.mxu0 0.0
    %871 = vmatprep.subr.mxu0 0.0
    %872 = vmatpush1.msra.mxu0 0.0
    %873 = vmatprep.subr.mxu0 0.0
    %874 = vmatpush1.msra.mxu0 0.0
    %875 = vmatprep.subr.mxu0 0.0
    %876 = vmatpush1.msra.mxu0 0.0
    %877 = vmatprep.subr.mxu0 0.0
    %878 = vmatpush1.msra.mxu0 0.0
    %879 = vmatprep.subr.mxu0 0.0
    %880 = vmatpush1.msra.mxu0 0.0
    %881 = vmatprep.subr.mxu0 0.0
    %882 = vmatpush1.msra.mxu0 %v691
    %883 = vmatprep.subr.mxu0 0.0
    %884 = vmatpush1.msra.mxu0 %v690
    %885 = vmatprep.subr.mxu0 0.0
    %886 = vmatpush1.msra.mxu0 %v689
    %887 = vmatprep.subr.mxu0 0.0
    %888 = vmatpush1.msra.mxu0 %v688
    %889 = vmatprep.subr.mxu0 0.0
    %890 = vmatpush2.msra.mxu0 0.0
    %891 = vmatprep.subr.mxu0 0.0
    %892 = vmatpush2.msra.mxu0 0.0
    %893 = vmatprep.subr.mxu0 0.0
    %894 = vmatpush2.msra.mxu0 0.0
    %895 = vmatprep.subr.mxu0 0.0
    %896 = vmatpush2.msra.mxu0 0.0
    %897 = vmatprep.subr.mxu0 0.0
    %898 = vmatpush2.msra.mxu0 0.0
    %899 = vmatprep.subr.mxu0 0.0
    %900 = vmatpush2.msra.mxu0 0.0
    %901 = vmatprep.subr.mxu0 0.0
    %902 = vmatpush2.msra.mxu0 0.0
    %903 = vmatprep.subr.mxu0 0.0
    %904 = vmatpush2.msra.mxu0 0.0
    %905 = vmatprep.subr.mxu0 0.0
    %906 = vmatpush2.msra.mxu0 0.0
    %907 = vmatprep.subr.mxu0 0.0
    %908 = vmatpush2.msra.mxu0 0.0
    %909 = vmatprep.subr.mxu0 0.0
    %910 = vmatpush2.msra.mxu0 0.0
    %911 = vmatprep.subr.mxu0 0.0
    %912 = vmatpush2.msra.mxu0 0.0
    %913 = vmatprep.subr.mxu0 0.0
    %914 = vmatpush2.msra.mxu0 0.0
    %915 = vmatprep.subr.mxu0 0.0
    %916 = vmatpush2.msra.mxu0 0.0
    %917 = vmatprep.subr.mxu0 0.0
    %918 = vmatpush2.msra.mxu0 0.0
    %919 = vmatprep.subr.mxu0 0.0
    %920 = vmatpush2.msra.mxu0 0.0
    %921 = vmatprep.mubr.f32.mxu0 0.0
    %922 = vmatmul.mubr.f32.gmra.mxu0 %v114
    %v923 = vpop.f32.mrf.mxu0
    %v924 = vadd.f32 %v856, %v923
    %v925 = vpop.f32.mrf.mxu0
    %926 = vmatprep.mubr.f32.mxu0 0.0
    %927 = vmatmul.mubr.f32.gmra.mxu0 %v117
    %v928 = vpop.f32.mrf.mxu0
    %v929 = vadd.f32 %v856, %v928
    %v930 = vpop.f32.mrf.mxu0
    %931 = vdwg.mxu0
    %v933 = vsel %vm352, %v766, 0
    %v936 = vsel %vm352, %v845, 0
    %938 = vmatprep.subr.mxu0 0.0
    %939 = vmatpush1.xpose.msra.mxu0 0.0
    %940 = vmatprep.subr.mxu0 0.0
    %941 = vmatpush1.xpose.msra.mxu0 0.0
    %942 = vmatprep.subr.mxu0 0.0
    %943 = vmatpush1.xpose.msra.mxu0 0.0
    %944 = vmatprep.subr.mxu0 0.0
    %945 = vmatpush1.xpose.msra.mxu0 0.0
    %946 = vmatprep.subr.mxu0 0.0
    %947 = vmatpush1.xpose.msra.mxu0 0.0
    %948 = vmatprep.subr.mxu0 0.0
    %949 = vmatpush1.xpose.msra.mxu0 0.0
    %950 = vmatprep.subr.mxu0 0.0
    %951 = vmatpush1.xpose.msra.mxu0 0.0
    %952 = vmatprep.subr.mxu0 0.0
    %953 = vmatpush1.xpose.msra.mxu0 0.0
    %954 = vmatprep.subr.mxu0 0.0
    %955 = vmatpush1.xpose.msra.mxu0 0.0
    %956 = vmatprep.subr.mxu0 0.0
    %957 = vmatpush1.xpose.msra.mxu0 0.0
    %958 = vmatprep.subr.mxu0 0.0
    %959 = vmatpush1.xpose.msra.mxu0 0.0
    %960 = vmatprep.subr.mxu0 0.0
    %961 = vmatpush1.xpose.msra.mxu0 0.0
    %962 = vmatprep.subr.mxu0 0.0
    %963 = vmatpush1.xpose.msra.mxu0 0.0
    %964 = vmatprep.subr.mxu0 0.0
    %965 = vmatpush1.xpose.msra.mxu0 0.0
    %966 = vmatprep.subr.mxu0 0.0
    %967 = vmatpush1.xpose.msra.mxu0 0.0
    %968 = vmatprep.subr.mxu0 0.0
    %969 = vmatpush1.xpose.msra.mxu0 %v936
    %970 = vmatprep.subr.mxu0 0.0
    %971 = vmatpush2.xpose.msra.mxu0 0.0
    %972 = vmatprep.subr.mxu0 0.0
    %973 = vmatpush2.xpose.msra.mxu0 0.0
    %974 = vmatprep.subr.mxu0 0.0
    %975 = vmatpush2.xpose.msra.mxu0 0.0
    %976 = vmatprep.subr.mxu0 0.0
    %977 = vmatpush2.xpose.msra.mxu0 0.0
    %978 = vmatprep.subr.mxu0 0.0
    %979 = vmatpush2.xpose.msra.mxu0 0.0
    %980 = vmatprep.subr.mxu0 0.0
    %981 = vmatpush2.xpose.msra.mxu0 0.0
    %982 = vmatprep.subr.mxu0 0.0
    %983 = vmatpush2.xpose.msra.mxu0 0.0
    %984 = vmatprep.subr.mxu0 0.0
    %985 = vmatpush2.xpose.msra.mxu0 0.0
    %986 = vmatprep.subr.mxu0 0.0
    %987 = vmatpush2.xpose.msra.mxu0 0.0
    %988 = vmatprep.subr.mxu0 0.0
    %989 = vmatpush2.xpose.msra.mxu0 0.0
    %990 = vmatprep.subr.mxu0 0.0
    %991 = vmatpush2.xpose.msra.mxu0 0.0
    %992 = vmatprep.subr.mxu0 0.0
    %993 = vmatpush2.xpose.msra.mxu0 0.0
    %994 = vmatprep.subr.mxu0 0.0
    %995 = vmatpush2.xpose.msra.mxu0 0.0
    %996 = vmatprep.subr.mxu0 0.0
    %997 = vmatpush2.xpose.msra.mxu0 0.0
    %998 = vmatprep.subr.mxu0 0.0
    %999 = vmatpush2.xpose.msra.mxu0 0.0
    %1000 = vmatprep.subr.mxu0 0.0
    %1001 = vmatpush2.xpose.msra.mxu0 0.0
    %1002 = vmatprep.mubr.f32.mxu0 0.0
    %1003 = vmatmul.mubr.f32.gmra.mxu0 %v933
    %v1004 = vpop.f32.mrf.mxu0
    %v1005 = vadd.f32 0.0, %v1004
    %v1006 = vpop.f32.mrf.mxu0
    %1007 = vdwg.mxu0
    %v1009 = vsel %vm352, %v771, 0
    %v1012 = vsel %vm352, %v850, 0
    %1014 = vmatprep.subr.mxu0 0.0
    %1015 = vmatpush1.xpose.msra.mxu0 0.0
    %1016 = vmatprep.subr.mxu0 0.0
    %1017 = vmatpush1.xpose.msra.mxu0 0.0
    %1018 = vmatprep.subr.mxu0 0.0
    %1019 = vmatpush1.xpose.msra.mxu0 0.0
    %1020 = vmatprep.subr.mxu0 0.0
    %1021 = vmatpush1.xpose.msra.mxu0 0.0
    %1022 = vmatprep.subr.mxu0 0.0
    %1023 = vmatpush1.xpose.msra.mxu0 0.0
    %1024 = vmatprep.subr.mxu0 0.0
    %1025 = vmatpush1.xpose.msra.mxu0 0.0
    %1026 = vmatprep.subr.mxu0 0.0
    %1027 = vmatpush1.xpose.msra.mxu0 0.0
    %1028 = vmatprep.subr.mxu0 0.0
    %1029 = vmatpush1.xpose.msra.mxu0 0.0
    %1030 = vmatprep.subr.mxu0 0.0
    %1031 = vmatpush1.xpose.msra.mxu0 0.0
    %1032 = vmatprep.subr.mxu0 0.0
    %1033 = vmatpush1.xpose.msra.mxu0 0.0
    %1034 = vmatprep.subr.mxu0 0.0
    %1035 = vmatpush1.xpose.msra.mxu0 0.0
    %1036 = vmatprep.subr.mxu0 0.0
    %1037 = vmatpush1.xpose.msra.mxu0 0.0
    %1038 = vmatprep.subr.mxu0 0.0
    %1039 = vmatpush1.xpose.msra.mxu0 0.0
    %1040 = vmatprep.subr.mxu0 0.0
    %1041 = vmatpush1.xpose.msra.mxu0 0.0
    %1042 = vmatprep.subr.mxu0 0.0
    %1043 = vmatpush1.xpose.msra.mxu0 0.0
    %1044 = vmatprep.subr.mxu0 0.0
    %1045 = vmatpush1.xpose.msra.mxu0 %v1012
    %1046 = vmatprep.subr.mxu0 0.0
    %1047 = vmatpush2.xpose.msra.mxu0 0.0
    %1048 = vmatprep.subr.mxu0 0.0
    %1049 = vmatpush2.xpose.msra.mxu0 0.0
    %1050 = vmatprep.subr.mxu0 0.0
    %1051 = vmatpush2.xpose.msra.mxu0 0.0
    %1052 = vmatprep.subr.mxu0 0.0
    %1053 = vmatpush2.xpose.msra.mxu0 0.0
    %1054 = vmatprep.subr.mxu0 0.0
    %1055 = vmatpush2.xpose.msra.mxu0 0.0
    %1056 = vmatprep.subr.mxu0 0.0
    %1057 = vmatpush2.xpose.msra.mxu0 0.0
    %1058 = vmatprep.subr.mxu0 0.0
    %1059 = vmatpush2.xpose.msra.mxu0 0.0
    %1060 = vmatprep.subr.mxu0 0.0
    %1061 = vmatpush2.xpose.msra.mxu0 0.0
    %1062 = vmatprep.subr.mxu0 0.0
    %1063 = vmatpush2.xpose.msra.mxu0 0.0
    %1064 = vmatprep.subr.mxu0 0.0
    %1065 = vmatpush2.xpose.msra.mxu0 0.0
    %1066 = vmatprep.subr.mxu0 0.0
    %1067 = vmatpush2.xpose.msra.mxu0 0.0
    %1068 = vmatprep.subr.mxu0 0.0
    %1069 = vmatpush2.xpose.msra.mxu0 0.0
    %1070 = vmatprep.subr.mxu0 0.0
    %1071 = vmatpush2.xpose.msra.mxu0 0.0
    %1072 = vmatprep.subr.mxu0 0.0
    %1073 = vmatpush2.xpose.msra.mxu0 0.0
    %1074 = vmatprep.subr.mxu0 0.0
    %1075 = vmatpush2.xpose.msra.mxu0 0.0
    %1076 = vmatprep.subr.mxu0 0.0
    %1077 = vmatpush2.xpose.msra.mxu0 0.0
    %1078 = vmatprep.mubr.f32.mxu0 0.0
    %1079 = vmatmul.mubr.f32.gmra.mxu0 %v1009
    %v1080 = vpop.f32.mrf.mxu0
    %v1081 = vadd.f32 0.0, %v1080
    %v1082 = vpop.f32.mrf.mxu0
    %1083 = vdwg.mxu0
    %v1084 = vmul.f32 %v1005, 0.35355338
    %v1085 = vmul.f32 %v1081, 0.35355338
    %v1086 = vadd.f32 %v1084, %v44
    %v1087 = vadd.f32 %v1085, %v44
    %v1088 = vsel %vm352, %v1086, -inf
    %1089 = vmax.xlane.f32.xlu0 %v1088
    %v1090 = vpop.xlane.xlu0 %1089
    %v1091 = vsel %vm352, %v1087, -inf
    %1092 = vmax.xlane.f32.xlu0 %v1091
    %v1093 = vpop.xlane.xlu0 %1092
    %v1094 = vsub.f32 %v1086, %v1090
    %v1095 = vsub.f32 %v1087, %v1093
    %v1096 = vmul.f32 %v1094, 1.442695
    %v1097 = vpow.pop %v1096
    %v1098 = vmul.f32 %v1095, 1.442695
    %v1099 = vpow.pop %v1098
    %v1100 = vsel %vm352, %v1097, 0.0
    %1101 = vadd.xlane.f32.xlu0 %v1100
    %v1102 = vpop.xlane.xlu0 %1101
    %v1103 = vsel %vm352, %v1099, 0.0
    %1104 = vadd.xlane.f32.xlu0 %v1103
    %v1105 = vpop.xlane.xlu0 %1104
    %v1106 = vrcp.pop %v1102
    %v1107 = vrcp.pop %v1105
    %v1108 = vmul.f32 %v1097, %v1106
    %v1109 = vmul.f32 %v1099, %v1107
    %v1111 = vsel %vm352, %v1108, 0
    %1113 = vmatprep.subr.mxu0 0.0
    %1114 = vmatpush1.msra.mxu0 0.0
    %1115 = vmatprep.subr.mxu0 0.0
    %1116 = vmatpush1.msra.mxu0 0.0
    %1117 = vmatprep.subr.mxu0 0.0
    %1118 = vmatpush1.msra.mxu0 0.0
    %1119 = vmatprep.subr.mxu0 0.0
    %1120 = vmatpush1.msra.mxu0 0.0
    %1121 = vmatprep.subr.mxu0 0.0
    %1122 = vmatpush1.msra.mxu0 0.0
    %1123 = vmatprep.subr.mxu0 0.0
    %1124 = vmatpush1.msra.mxu0 0.0
    %1125 = vmatprep.subr.mxu0 0.0
    %1126 = vmatpush1.msra.mxu0 0.0
    %1127 = vmatprep.subr.mxu0 0.0
    %1128 = vmatpush1.msra.mxu0 0.0
    %1129 = vmatprep.subr.mxu0 0.0
    %1130 = vmatpush1.msra.mxu0 0.0
    %1131 = vmatprep.subr.mxu0 0.0
    %1132 = vmatpush1.msra.mxu0 0.0
    %1133 = vmatprep.subr.mxu0 0.0
    %1134 = vmatpush1.msra.mxu0 0.0
    %1135 = vmatprep.subr.mxu0 0.0
    %1136 = vmatpush1.msra.mxu0 0.0
    %1137 = vmatprep.subr.mxu0 0.0
    %1138 = vmatpush1.msra.mxu0 0.0
    %1139 = vmatprep.subr.mxu0 0.0
    %1140 = vmatpush1.msra.mxu0 0.0
    %1141 = vmatprep.subr.mxu0 0.0
    %1142 = vmatpush1.msra.mxu0 0.0
    %1143 = vmatprep.subr.mxu0 0.0
    %1144 = vmatpush1.msra.mxu0 %v924
    %1145 = vmatprep.subr.mxu0 0.0
    %1146 = vmatpush2.msra.mxu0 0.0
    %1147 = vmatprep.subr.mxu0 0.0
    %1148 = vmatpush2.msra.mxu0 0.0
    %1149 = vmatprep.subr.mxu0 0.0
    %1150 = vmatpush2.msra.mxu0 0.0
    %1151 = vmatprep.subr.mxu0 0.0
    %1152 = vmatpush2.msra.mxu0 0.0
    %1153 = vmatprep.subr.mxu0 0.0
    %1154 = vmatpush2.msra.mxu0 0.0
    %1155 = vmatprep.subr.mxu0 0.0
    %1156 = vmatpush2.msra.mxu0 0.0
    %1157 = vmatprep.subr.mxu0 0.0
    %1158 = vmatpush2.msra.mxu0 0.0
    %1159 = vmatprep.subr.mxu0 0.0
    %1160 = vmatpush2.msra.mxu0 0.0
    %1161 = vmatprep.subr.mxu0 0.0
    %1162 = vmatpush2.msra.mxu0 0.0
    %1163 = vmatprep.subr.mxu0 0.0
    %1164 = vmatpush2.msra.mxu0 0.0
    %1165 = vmatprep.subr.mxu0 0.0
    %1166 = vmatpush2.msra.mxu0 0.0
    %1167 = vmatprep.subr.mxu0 0.0
    %1168 = vmatpush2.msra.mxu0 0.0
    %1169 = vmatprep.subr.mxu0 0.0
    %1170 = vmatpush2.msra.mxu0 0.0
    %1171 = vmatprep.subr.mxu0 0.0
    %1172 = vmatpush2.msra.mxu0 0.0
    %1173 = vmatprep.subr.mxu0 0.0
    %1174 = vmatpush2.msra.mxu0 0.0
    %1175 = vmatprep.subr.mxu0 0.0
    %1176 = vmatpush2.msra.mxu0 0.0
    %1177 = vmatprep.mubr.f32.mxu0 0.0
    %1178 = vmatmul.mubr.f32.gmra.mxu0 %v1111
    %v1179 = vpop.f32.mrf.mxu0
    %v1180 = vadd.f32 0.0, %v1179
    %v1181 = vpop.f32.mrf.mxu0
    %1182 = vdwg.mxu0
    %v1184 = vsel %vm352, %v1109, 0
    %1186 = vmatprep.subr.mxu0 0.0
    %1187 = vmatpush1.msra.mxu0 0.0
    %1188 = vmatprep.subr.mxu0 0.0
    %1189 = vmatpush1.msra.mxu0 0.0
    %1190 = vmatprep.subr.mxu0 0.0
    %1191 = vmatpush1.msra.mxu0 0.0
    %1192 = vmatprep.subr.mxu0 0.0
    %1193 = vmatpush1.msra.mxu0 0.0
    %1194 = vmatprep.subr.mxu0 0.0
    %1195 = vmatpush1.msra.mxu0 0.0
    %1196 = vmatprep.subr.mxu0 0.0
    %1197 = vmatpush1.msra.mxu0 0.0
    %1198 = vmatprep.subr.mxu0 0.0
    %1199 = vmatpush1.msra.mxu0 0.0
    %1200 = vmatprep.subr.mxu0 0.0
    %1201 = vmatpush1.msra.mxu0 0.0
    %1202 = vmatprep.subr.mxu0 0.0
    %1203 = vmatpush1.msra.mxu0 0.0
    %1204 = vmatprep.subr.mxu0 0.0
    %1205 = vmatpush1.msra.mxu0 0.0
    %1206 = vmatprep.subr.mxu0 0.0
    %1207 = vmatpush1.msra.mxu0 0.0
    %1208 = vmatprep.subr.mxu0 0.0
    %1209 = vmatpush1.msra.mxu0 0.0
    %1210 = vmatprep.subr.mxu0 0.0
    %1211 = vmatpush1.msra.mxu0 0.0
    %1212 = vmatprep.subr.mxu0 0.0
    %1213 = vmatpush1.msra.mxu0 0.0
    %1214 = vmatprep.subr.mxu0 0.0
    %1215 = vmatpush1.msra.mxu0 0.0
    %1216 = vmatprep.subr.mxu0 0.0
    %1217 = vmatpush1.msra.mxu0 %v929
    %1218 = vmatprep.subr.mxu0 0.0
    %1219 = vmatpush2.msra.mxu0 0.0
    %1220 = vmatprep.subr.mxu0 0.0
    %1221 = vmatpush2.msra.mxu0 0.0
    %1222 = vmatprep.subr.mxu0 0.0
    %1223 = vmatpush2.msra.mxu0 0.0
    %1224 = vmatprep.subr.mxu0 0.0
    %1225 = vmatpush2.msra.mxu0 0.0
    %1226 = vmatprep.subr.mxu0 0.0
    %1227 = vmatpush2.msra.mxu0 0.0
    %1228 = vmatprep.subr.mxu0 0.0
    %1229 = vmatpush2.msra.mxu0 0.0
    %1230 = vmatprep.subr.mxu0 0.0
    %1231 = vmatpush2.msra.mxu0 0.0
    %1232 = vmatprep.subr.mxu0 0.0
    %1233 = vmatpush2.msra.mxu0 0.0
    %1234 = vmatprep.subr.mxu0 0.0
    %1235 = vmatpush2.msra.mxu0 0.0
    %1236 = vmatprep.subr.mxu0 0.0
    %1237 = vmatpush2.msra.mxu0 0.0
    %1238 = vmatprep.subr.mxu0 0.0
    %1239 = vmatpush2.msra.mxu0 0.0
    %1240 = vmatprep.subr.mxu0 0.0
    %1241 = vmatpush2.msra.mxu0 0.0
    %1242 = vmatprep.subr.mxu0 0.0
    %1243 = vmatpush2.msra.mxu0 0.0
    %1244 = vmatprep.subr.mxu0 0.0
    %1245 = vmatpush2.msra.mxu0 0.0
    %1246 = vmatprep.subr.mxu0 0.0
    %1247 = vmatpush2.msra.mxu0 0.0
    %1248 = vmatprep.subr.mxu0 0.0
    %1249 = vmatpush2.msra.mxu0 0.0
    %1250 = vmatprep.mubr.f32.mxu0 0.0
    %1251 = vmatmul.mubr.f32.gmra.mxu0 %v1184
    %v1252 = vpop.f32.mrf.mxu0
    %v1253 = vadd.f32 0.0, %v1252
    %v1254 = vpop.f32.mrf.mxu0
    %1255 = vdwg.mxu0
    %s1256 = scalar_lea.vmem %s2, 64
    %v1257 = vld [vmem:[%s1256] sm:$0xff]
    %v1258 = vld [vmem:[%s1256 + $0x8] sm:$0xff]
    %v1259 = vld [vmem:[%s1256 + $0x10] sm:$0xff]
    %v1260 = vld [vmem:[%s1256 + $0x18] sm:$0xff]
    %s1261 = scalar_lea.vmem %s2, 192
    %v1262 = vld [vmem:[%s1261] sm:$0xff]
    %v1263 = vld [vmem:[%s1261 + $0x8] sm:$0xff]
    %v1264 = vld [vmem:[%s1261 + $0x10] sm:$0xff]
    %v1265 = vld [vmem:[%s1261 + $0x18] sm:$0xff]
    %s1266 = scalar_lea.vmem %s2, 320
    %v1267 = vld [vmem:[%s1266] sm:$0xff]
    %v1268 = vld [vmem:[%s1266 + $0x8] sm:$0xff]
    %v1269 = vld [vmem:[%s1266 + $0x10] sm:$0xff]
    %v1270 = vld [vmem:[%s1266 + $0x18] sm:$0xff]
    %v1271 = vld [vmem:[%s4 + $0x33] sm:$0x1]
    %v1272 = vld [vmem:[%s4 + $0x37] sm:$0x1]
    %v1273 = vld [vmem:[%s4 + $0x3b] sm:$0x1]
    %v1274 = vlaneseq
    %v1275 = vshrl.u32 %v1274, 7
    %v1276 = vsub.s32 0, %v1275
    %v1277 = vrot.slane %v1271, %v1276
    %1278 = vmatprep.subr.mxu0 0.0
    %1279 = vmatpush1.msra.mxu0 0.0
    %1280 = vmatprep.subr.mxu0 0.0
    %1281 = vmatpush1.msra.mxu0 0.0
    %1282 = vmatprep.subr.mxu0 0.0
    %1283 = vmatpush1.msra.mxu0 0.0
    %1284 = vmatprep.subr.mxu0 0.0
    %1285 = vmatpush1.msra.mxu0 0.0
    %1286 = vmatprep.subr.mxu0 0.0
    %1287 = vmatpush1.msra.mxu0 0.0
    %1288 = vmatprep.subr.mxu0 0.0
    %1289 = vmatpush1.msra.mxu0 0.0
    %1290 = vmatprep.subr.mxu0 0.0
    %1291 = vmatpush1.msra.mxu0 0.0
    %1292 = vmatprep.subr.mxu0 0.0
    %1293 = vmatpush1.msra.mxu0 0.0
    %1294 = vmatprep.subr.mxu0 0.0
    %1295 = vmatpush1.msra.mxu0 0.0
    %1296 = vmatprep.subr.mxu0 0.0
    %1297 = vmatpush1.msra.mxu0 0.0
    %1298 = vmatprep.subr.mxu0 0.0
    %1299 = vmatpush1.msra.mxu0 0.0
    %1300 = vmatprep.subr.mxu0 0.0
    %1301 = vmatpush1.msra.mxu0 0.0
    %1302 = vmatprep.subr.mxu0 0.0
    %1303 = vmatpush1.msra.mxu0 %v1260
    %1304 = vmatprep.subr.mxu0 0.0
    %1305 = vmatpush1.msra.mxu0 %v1259
    %1306 = vmatprep.subr.mxu0 0.0
    %1307 = vmatpush1.msra.mxu0 %v1258
    %1308 = vmatprep.subr.mxu0 0.0
    %1309 = vmatpush1.msra.mxu0 %v1257
    %1310 = vmatprep.subr.mxu0 0.0
    %1311 = vmatpush2.msra.mxu0 0.0
    %1312 = vmatprep.subr.mxu0 0.0
    %1313 = vmatpush2.msra.mxu0 0.0
    %1314 = vmatprep.subr.mxu0 0.0
    %1315 = vmatpush2.msra.mxu0 0.0
    %1316 = vmatprep.subr.mxu0 0.0
    %1317 = vmatpush2.msra.mxu0 0.0
    %1318 = vmatprep.subr.mxu0 0.0
    %1319 = vmatpush2.msra.mxu0 0.0
    %1320 = vmatprep.subr.mxu0 0.0
    %1321 = vmatpush2.msra.mxu0 0.0
    %1322 = vmatprep.subr.mxu0 0.0
    %1323 = vmatpush2.msra.mxu0 0.0
    %1324 = vmatprep.subr.mxu0 0.0
    %1325 = vmatpush2.msra.mxu0 0.0
    %1326 = vmatprep.subr.mxu0 0.0
    %1327 = vmatpush2.msra.mxu0 0.0
    %1328 = vmatprep.subr.mxu0 0.0
    %1329 = vmatpush2.msra.mxu0 0.0
    %1330 = vmatprep.subr.mxu0 0.0
    %1331 = vmatpush2.msra.mxu0 0.0
    %1332 = vmatprep.subr.mxu0 0.0
    %1333 = vmatpush2.msra.mxu0 0.0
    %1334 = vmatprep.subr.mxu0 0.0
    %1335 = vmatpush2.msra.mxu0 0.0
    %1336 = vmatprep.subr.mxu0 0.0
    %1337 = vmatpush2.msra.mxu0 0.0
    %1338 = vmatprep.subr.mxu0 0.0
    %1339 = vmatpush2.msra.mxu0 0.0
    %1340 = vmatprep.subr.mxu0 0.0
    %1341 = vmatpush2.msra.mxu0 0.0
    %1342 = vmatprep.mubr.f32.mxu0 0.0
    %1343 = vmatmul.mubr.f32.gmra.mxu0 %v114
    %v1344 = vpop.f32.mrf.mxu0
    %v1345 = vadd.f32 %v1277, %v1344
    %v1346 = vpop.f32.mrf.mxu0
    %1347 = vmatprep.mubr.f32.mxu0 0.0
    %1348 = vmatmul.mubr.f32.gmra.mxu0 %v117
    %v1349 = vpop.f32.mrf.mxu0
    %v1350 = vadd.f32 %v1277, %v1349
    %v1351 = vpop.f32.mrf.mxu0
    %1352 = vdwg.mxu0
    %v1353 = vlaneseq
    %v1354 = vshrl.u32 %v1353, 7
    %v1355 = vsub.s32 0, %v1354
    %v1356 = vrot.slane %v1272, %v1355
    %1357 = vmatprep.subr.mxu0 0.0
    %1358 = vmatpush1.msra.mxu0 0.0
    %1359 = vmatprep.subr.mxu0 0.0
    %1360 = vmatpush1.msra.mxu0 0.0
    %1361 = vmatprep.subr.mxu0 0.0
    %1362 = vmatpush1.msra.mxu0 0.0
    %1363 = vmatprep.subr.mxu0 0.0
    %1364 = vmatpush1.msra.mxu0 0.0
    %1365 = vmatprep.subr.mxu0 0.0
    %1366 = vmatpush1.msra.mxu0 0.0
    %1367 = vmatprep.subr.mxu0 0.0
    %1368 = vmatpush1.msra.mxu0 0.0
    %1369 = vmatprep.subr.mxu0 0.0
    %1370 = vmatpush1.msra.mxu0 0.0
    %1371 = vmatprep.subr.mxu0 0.0
    %1372 = vmatpush1.msra.mxu0 0.0
    %1373 = vmatprep.subr.mxu0 0.0
    %1374 = vmatpush1.msra.mxu0 0.0
    %1375 = vmatprep.subr.mxu0 0.0
    %1376 = vmatpush1.msra.mxu0 0.0
    %1377 = vmatprep.subr.mxu0 0.0
    %1378 = vmatpush1.msra.mxu0 0.0
    %1379 = vmatprep.subr.mxu0 0.0
    %1380 = vmatpush1.msra.mxu0 0.0
    %1381 = vmatprep.subr.mxu0 0.0
    %1382 = vmatpush1.msra.mxu0 %v1265
    %1383 = vmatprep.subr.mxu0 0.0
    %1384 = vmatpush1.msra.mxu0 %v1264
    %1385 = vmatprep.subr.mxu0 0.0
    %1386 = vmatpush1.msra.mxu0 %v1263
    %1387 = vmatprep.subr.mxu0 0.0
    %1388 = vmatpush1.msra.mxu0 %v1262
    %1389 = vmatprep.subr.mxu0 0.0
    %1390 = vmatpush2.msra.mxu0 0.0
    %1391 = vmatprep.subr.mxu0 0.0
    %1392 = vmatpush2.msra.mxu0 0.0
    %1393 = vmatprep.subr.mxu0 0.0
    %1394 = vmatpush2.msra.mxu0 0.0
    %1395 = vmatprep.subr.mxu0 0.0
    %1396 = vmatpush2.msra.mxu0 0.0
    %1397 = vmatprep.subr.mxu0 0.0
    %1398 = vmatpush2.msra.mxu0 0.0
    %1399 = vmatprep.subr.mxu0 0.0
    %1400 = vmatpush2.msra.mxu0 0.0
    %1401 = vmatprep.subr.mxu0 0.0
    %1402 = vmatpush2.msra.mxu0 0.0
    %1403 = vmatprep.subr.mxu0 0.0
    %1404 = vmatpush2.msra.mxu0 0.0
    %1405 = vmatprep.subr.mxu0 0.0
    %1406 = vmatpush2.msra.mxu0 0.0
    %1407 = vmatprep.subr.mxu0 0.0
    %1408 = vmatpush2.msra.mxu0 0.0
    %1409 = vmatprep.subr.mxu0 0.0
    %1410 = vmatpush2.msra.mxu0 0.0
    %1411 = vmatprep.subr.mxu0 0.0
    %1412 = vmatpush2.msra.mxu0 0.0
    %1413 = vmatprep.subr.mxu0 0.0
    %1414 = vmatpush2.msra.mxu0 0.0
    %1415 = vmatprep.subr.mxu0 0.0
    %1416 = vmatpush2.msra.mxu0 0.0
    %1417 = vmatprep.subr.mxu0 0.0
    %1418 = vmatpush2.msra.mxu0 0.0
    %1419 = vmatprep.subr.mxu0 0.0
    %1420 = vmatpush2.msra.mxu0 0.0
    %1421 = vmatprep.mubr.f32.mxu0 0.0
    %1422 = vmatmul.mubr.f32.gmra.mxu0 %v114
    %v1423 = vpop.f32.mrf.mxu0
    %v1424 = vadd.f32 %v1356, %v1423
    %v1425 = vpop.f32.mrf.mxu0
    %1426 = vmatprep.mubr.f32.mxu0 0.0
    %1427 = vmatmul.mubr.f32.gmra.mxu0 %v117
    %v1428 = vpop.f32.mrf.mxu0
    %v1429 = vadd.f32 %v1356, %v1428
    %v1430 = vpop.f32.mrf.mxu0
    %1431 = vdwg.mxu0
    %v1432 = vlaneseq
    %v1433 = vshrl.u32 %v1432, 7
    %v1434 = vsub.s32 0, %v1433
    %v1435 = vrot.slane %v1273, %v1434
    %1436 = vmatprep.subr.mxu0 0.0
    %1437 = vmatpush1.msra.mxu0 0.0
    %1438 = vmatprep.subr.mxu0 0.0
    %1439 = vmatpush1.msra.mxu0 0.0
    %1440 = vmatprep.subr.mxu0 0.0
    %1441 = vmatpush1.msra.mxu0 0.0
    %1442 = vmatprep.subr.mxu0 0.0
    %1443 = vmatpush1.msra.mxu0 0.0
    %1444 = vmatprep.subr.mxu0 0.0
    %1445 = vmatpush1.msra.mxu0 0.0
    %1446 = vmatprep.subr.mxu0 0.0
    %1447 = vmatpush1.msra.mxu0 0.0
    %1448 = vmatprep.subr.mxu0 0.0
    %1449 = vmatpush1.msra.mxu0 0.0
    %1450 = vmatprep.subr.mxu0 0.0
    %1451 = vmatpush1.msra.mxu0 0.0
    %1452 = vmatprep.subr.mxu0 0.0
    %1453 = vmatpush1.msra.mxu0 0.0
    %1454 = vmatprep.subr.mxu0 0.0
    %1455 = vmatpush1.msra.mxu0 0.0
    %1456 = vmatprep.subr.mxu0 0.0
    %1457 = vmatpush1.msra.mxu0 0.0
    %1458 = vmatprep.subr.mxu0 0.0
    %1459 = vmatpush1.msra.mxu0 0.0
    %1460 = vmatprep.subr.mxu0 0.0
    %1461 = vmatpush1.msra.mxu0 %v1270
    %1462 = vmatprep.subr.mxu0 0.0
    %1463 = vmatpush1.msra.mxu0 %v1269
    %1464 = vmatprep.subr.mxu0 0.0
    %1465 = vmatpush1.msra.mxu0 %v1268
    %1466 = vmatprep.subr.mxu0 0.0
    %1467 = vmatpush1.msra.mxu0 %v1267
    %1468 = vmatprep.subr.mxu0 0.0
    %1469 = vmatpush2.msra.mxu0 0.0
    %1470 = vmatprep.subr.mxu0 0.0
    %1471 = vmatpush2.msra.mxu0 0.0
    %1472 = vmatprep.subr.mxu0 0.0
    %1473 = vmatpush2.msra.mxu0 0.0
    %1474 = vmatprep.subr.mxu0 0.0
    %1475 = vmatpush2.msra.mxu0 0.0
    %1476 = vmatprep.subr.mxu0 0.0
    %1477 = vmatpush2.msra.mxu0 0.0
    %1478 = vmatprep.subr.mxu0 0.0
    %1479 = vmatpush2.msra.mxu0 0.0
    %1480 = vmatprep.subr.mxu0 0.0
    %1481 = vmatpush2.msra.mxu0 0.0
    %1482 = vmatprep.subr.mxu0 0.0
    %1483 = vmatpush2.msra.mxu0 0.0
    %1484 = vmatprep.subr.mxu0 0.0
    %1485 = vmatpush2.msra.mxu0 0.0
    %1486 = vmatprep.subr.mxu0 0.0
    %1487 = vmatpush2.msra.mxu0 0.0
    %1488 = vmatprep.subr.mxu0 0.0
    %1489 = vmatpush2.msra.mxu0 0.0
    %1490 = vmatprep.subr.mxu0 0.0
    %1491 = vmatpush2.msra.mxu0 0.0
    %1492 = vmatprep.subr.mxu0 0.0
    %1493 = vmatpush2.msra.mxu0 0.0
    %1494 = vmatprep.subr.mxu0 0.0
    %1495 = vmatpush2.msra.mxu0 0.0
    %1496 = vmatprep.subr.mxu0 0.0
    %1497 = vmatpush2.msra.mxu0 0.0
    %1498 = vmatprep.subr.mxu0 0.0
    %1499 = vmatpush2.msra.mxu0 0.0
    %1500 = vmatprep.mubr.f32.mxu0 0.0
    %1501 = vmatmul.mubr.f32.gmra.mxu0 %v114
    %v1502 = vpop.f32.mrf.mxu0
    %v1503 = vadd.f32 %v1435, %v1502
    %v1504 = vpop.f32.mrf.mxu0
    %1505 = vmatprep.mubr.f32.mxu0 0.0
    %1506 = vmatmul.mubr.f32.gmra.mxu0 %v117
    %v1507 = vpop.f32.mrf.mxu0
    %v1508 = vadd.f32 %v1435, %v1507
    %v1509 = vpop.f32.mrf.mxu0
    %1510 = vdwg.mxu0
    %v1512 = vsel %vm352, %v1345, 0
    %v1515 = vsel %vm352, %v1424, 0
    %1517 = vmatprep.subr.mxu0 0.0
    %1518 = vmatpush1.xpose.msra.mxu0 0.0
    %1519 = vmatprep.subr.mxu0 0.0
    %1520 = vmatpush1.xpose.msra.mxu0 0.0
    %1521 = vmatprep.subr.mxu0 0.0
    %1522 = vmatpush1.xpose.msra.mxu0 0.0
    %1523 = vmatprep.subr.mxu0 0.0
    %1524 = vmatpush1.xpose.msra.mxu0 0.0
    %1525 = vmatprep.subr.mxu0 0.0
    %1526 = vmatpush1.xpose.msra.mxu0 0.0
    %1527 = vmatprep.subr.mxu0 0.0
    %1528 = vmatpush1.xpose.msra.mxu0 0.0
    %1529 = vmatprep.subr.mxu0 0.0
    %1530 = vmatpush1.xpose.msra.mxu0 0.0
    %1531 = vmatprep.subr.mxu0 0.0
    %1532 = vmatpush1.xpose.msra.mxu0 0.0
    %1533 = vmatprep.subr.mxu0 0.0
    %1534 = vmatpush1.xpose.msra.mxu0 0.0
    %1535 = vmatprep.subr.mxu0 0.0
    %1536 = vmatpush1.xpose.msra.mxu0 0.0
    %1537 = vmatprep.subr.mxu0 0.0
    %1538 = vmatpush1.xpose.msra.mxu0 0.0
    %1539 = vmatprep.subr.mxu0 0.0
    %1540 = vmatpush1.xpose.msra.mxu0 0.0
    %1541 = vmatprep.subr.mxu0 0.0
    %1542 = vmatpush1.xpose.msra.mxu0 0.0
    %1543 = vmatprep.subr.mxu0 0.0
    %1544 = vmatpush1.xpose.msra.mxu0 0.0
    %1545 = vmatprep.subr.mxu0 0.0
    %1546 = vmatpush1.xpose.msra.mxu0 0.0
    %1547 = vmatprep.subr.mxu0 0.0
    %1548 = vmatpush1.xpose.msra.mxu0 %v1515
    %1549 = vmatprep.subr.mxu0 0.0
    %1550 = vmatpush2.xpose.msra.mxu0 0.0
    %1551 = vmatprep.subr.mxu0 0.0
    %1552 = vmatpush2.xpose.msra.mxu0 0.0
    %1553 = vmatprep.subr.mxu0 0.0
    %1554 = vmatpush2.xpose.msra.mxu0 0.0
    %1555 = vmatprep.subr.mxu0 0.0
    %1556 = vmatpush2.xpose.msra.mxu0 0.0
    %1557 = vmatprep.subr.mxu0 0.0
    %1558 = vmatpush2.xpose.msra.mxu0 0.0
    %1559 = vmatprep.subr.mxu0 0.0
    %1560 = vmatpush2.xpose.msra.mxu0 0.0
    %1561 = vmatprep.subr.mxu0 0.0
    %1562 = vmatpush2.xpose.msra.mxu0 0.0
    %1563 = vmatprep.subr.mxu0 0.0
    %1564 = vmatpush2.xpose.msra.mxu0 0.0
    %1565 = vmatprep.subr.mxu0 0.0
    %1566 = vmatpush2.xpose.msra.mxu0 0.0
    %1567 = vmatprep.subr.mxu0 0.0
    %1568 = vmatpush2.xpose.msra.mxu0 0.0
    %1569 = vmatprep.subr.mxu0 0.0
    %1570 = vmatpush2.xpose.msra.mxu0 0.0
    %1571 = vmatprep.subr.mxu0 0.0
    %1572 = vmatpush2.xpose.msra.mxu0 0.0
    %1573 = vmatprep.subr.mxu0 0.0
    %1574 = vmatpush2.xpose.msra.mxu0 0.0
    %1575 = vmatprep.subr.mxu0 0.0
    %1576 = vmatpush2.xpose.msra.mxu0 0.0
    %1577 = vmatprep.subr.mxu0 0.0
    %1578 = vmatpush2.xpose.msra.mxu0 0.0
    %1579 = vmatprep.subr.mxu0 0.0
    %1580 = vmatpush2.xpose.msra.mxu0 0.0
    %1581 = vmatprep.mubr.f32.mxu0 0.0
    %1582 = vmatmul.mubr.f32.gmra.mxu0 %v1512
    %v1583 = vpop.f32.mrf.mxu0
    %v1584 = vadd.f32 0.0, %v1583
    %v1585 = vpop.f32.mrf.mxu0
    %1586 = vdwg.mxu0
    %v1588 = vsel %vm352, %v1350, 0
    %v1591 = vsel %vm352, %v1429, 0
    %1593 = vmatprep.subr.mxu0 0.0
    %1594 = vmatpush1.xpose.msra.mxu0 0.0
    %1595 = vmatprep.subr.mxu0 0.0
    %1596 = vmatpush1.xpose.msra.mxu0 0.0
    %1597 = vmatprep.subr.mxu0 0.0
    %1598 = vmatpush1.xpose.msra.mxu0 0.0
    %1599 = vmatprep.subr.mxu0 0.0
    %1600 = vmatpush1.xpose.msra.mxu0 0.0
    %1601 = vmatprep.subr.mxu0 0.0
    %1602 = vmatpush1.xpose.msra.mxu0 0.0
    %1603 = vmatprep.subr.mxu0 0.0
    %1604 = vmatpush1.xpose.msra.mxu0 0.0
    %1605 = vmatprep.subr.mxu0 0.0
    %1606 = vmatpush1.xpose.msra.mxu0 0.0
    %1607 = vmatprep.subr.mxu0 0.0
    %1608 = vmatpush1.xpose.msra.mxu0 0.0
    %1609 = vmatprep.subr.mxu0 0.0
    %1610 = vmatpush1.xpose.msra.mxu0 0.0
    %1611 = vmatprep.subr.mxu0 0.0
    %1612 = vmatpush1.xpose.msra.mxu0 0.0
    %1613 = vmatprep.subr.mxu0 0.0
    %1614 = vmatpush1.xpose.msra.mxu0 0.0
    %1615 = vmatprep.subr.mxu0 0.0
    %1616 = vmatpush1.xpose.msra.mxu0 0.0
    %1617 = vmatprep.subr.mxu0 0.0
    %1618 = vmatpush1.xpose.msra.mxu0 0.0
    %1619 = vmatprep.subr.mxu0 0.0
    %1620 = vmatpush1.xpose.msra.mxu0 0.0
    %1621 = vmatprep.subr.mxu0 0.0
    %1622 = vmatpush1.xpose.msra.mxu0 0.0
    %1623 = vmatprep.subr.mxu0 0.0
    %1624 = vmatpush1.xpose.msra.mxu0 %v1591
    %1625 = vmatprep.subr.mxu0 0.0
    %1626 = vmatpush2.xpose.msra.mxu0 0.0
    %1627 = vmatprep.subr.mxu0 0.0
    %1628 = vmatpush2.xpose.msra.mxu0 0.0
    %1629 = vmatprep.subr.mxu0 0.0
    %1630 = vmatpush2.xpose.msra.mxu0 0.0
    %1631 = vmatprep.subr.mxu0 0.0
    %1632 = vmatpush2.xpose.msra.mxu0 0.0
    %1633 = vmatprep.subr.mxu0 0.0
    %1634 = vmatpush2.xpose.msra.mxu0 0.0
    %1635 = vmatprep.subr.mxu0 0.0
    %1636 = vmatpush2.xpose.msra.mxu0 0.0
    %1637 = vmatprep.subr.mxu0 0.0
    %1638 = vmatpush2.xpose.msra.mxu0 0.0
    %1639 = vmatprep.subr.mxu0 0.0
    %1640 = vmatpush2.xpose.msra.mxu0 0.0
    %1641 = vmatprep.subr.mxu0 0.0
    %1642 = vmatpush2.xpose.msra.mxu0 0.0
    %1643 = vmatprep.subr.mxu0 0.0
    %1644 = vmatpush2.xpose.msra.mxu0 0.0
    %1645 = vmatprep.subr.mxu0 0.0
    %1646 = vmatpush2.xpose.msra.mxu0 0.0
    %1647 = vmatprep.subr.mxu0 0.0
    %1648 = vmatpush2.xpose.msra.mxu0 0.0
    %1649 = vmatprep.subr.mxu0 0.0
    %1650 = vmatpush2.xpose.msra.mxu0 0.0
    %1651 = vmatprep.subr.mxu0 0.0
    %1652 = vmatpush2.xpose.msra.mxu0 0.0
    %1653 = vmatprep.subr.mxu0 0.0
    %1654 = vmatpush2.xpose.msra.mxu0 0.0
    %1655 = vmatprep.subr.mxu0 0.0
    %1656 = vmatpush2.xpose.msra.mxu0 0.0
    %1657 = vmatprep.mubr.f32.mxu0 0.0
    %1658 = vmatmul.mubr.f32.gmra.mxu0 %v1588
    %v1659 = vpop.f32.mrf.mxu0
    %v1660 = vadd.f32 0.0, %v1659
    %v1661 = vpop.f32.mrf.mxu0
    %1662 = vdwg.mxu0
    %v1663 = vmul.f32 %v1584, 0.35355338
    %v1664 = vmul.f32 %v1660, 0.35355338
    %v1665 = vadd.f32 %v1663, %v44
    %v1666 = vadd.f32 %v1664, %v44
    %v1667 = vsel %vm352, %v1665, -inf
    %1668 = vmax.xlane.f32.xlu0 %v1667
    %v1669 = vpop.xlane.xlu0 %1668
    %v1670 = vsel %vm352, %v1666, -inf
    %1671 = vmax.xlane.f32.xlu0 %v1670
    %v1672 = vpop.xlane.xlu0 %1671
    %v1673 = vsub.f32 %v1665, %v1669
    %v1674 = vsub.f32 %v1666, %v1672
    %v1675 = vmul.f32 %v1673, 1.442695
    %v1676 = vpow.pop %v1675
    %v1677 = vmul.f32 %v1674, 1.442695
    %v1678 = vpow.pop %v1677
    %v1679 = vsel %vm352, %v1676, 0.0
    %1680 = vadd.xlane.f32.xlu0 %v1679
    %v1681 = vpop.xlane.xlu0 %1680
    %v1682 = vsel %vm352, %v1678, 0.0
    %1683 = vadd.xlane.f32.xlu0 %v1682
    %v1684 = vpop.xlane.xlu0 %1683
    %v1685 = vrcp.pop %v1681
    %v1686 = vrcp.pop %v1684
    %v1687 = vmul.f32 %v1676, %v1685
    %v1688 = vmul.f32 %v1678, %v1686
    %v1690 = vsel %vm352, %v1687, 0
    %1692 = vmatprep.subr.mxu0 0.0
    %1693 = vmatpush1.msra.mxu0 0.0
    %1694 = vmatprep.subr.mxu0 0.0
    %1695 = vmatpush1.msra.mxu0 0.0
    %1696 = vmatprep.subr.mxu0 0.0
    %1697 = vmatpush1.msra.mxu0 0.0
    %1698 = vmatprep.subr.mxu0 0.0
    %1699 = vmatpush1.msra.mxu0 0.0
    %1700 = vmatprep.subr.mxu0 0.0
    %1701 = vmatpush1.msra.mxu0 0.0
    %1702 = vmatprep.subr.mxu0 0.0
    %1703 = vmatpush1.msra.mxu0 0.0
    %1704 = vmatprep.subr.mxu0 0.0
    %1705 = vmatpush1.msra.mxu0 0.0
    %1706 = vmatprep.subr.mxu0 0.0
    %1707 = vmatpush1.msra.mxu0 0.0
    %1708 = vmatprep.subr.mxu0 0.0
    %1709 = vmatpush1.msra.mxu0 0.0
    %1710 = vmatprep.subr.mxu0 0.0
    %1711 = vmatpush1.msra.mxu0 0.0
    %1712 = vmatprep.subr.mxu0 0.0
    %1713 = vmatpush1.msra.mxu0 0.0
    %1714 = vmatprep.subr.mxu0 0.0
    %1715 = vmatpush1.msra.mxu0 0.0
    %1716 = vmatprep.subr.mxu0 0.0
    %1717 = vmatpush1.msra.mxu0 0.0
    %1718 = vmatprep.subr.mxu0 0.0
    %1719 = vmatpush1.msra.mxu0 0.0
    %1720 = vmatprep.subr.mxu0 0.0
    %1721 = vmatpush1.msra.mxu0 0.0
    %1722 = vmatprep.subr.mxu0 0.0
    %1723 = vmatpush1.msra.mxu0 %v1503
    %1724 = vmatprep.subr.mxu0 0.0
    %1725 = vmatpush2.msra.mxu0 0.0
    %1726 = vmatprep.subr.mxu0 0.0
    %1727 = vmatpush2.msra.mxu0 0.0
    %1728 = vmatprep.subr.mxu0 0.0
    %1729 = vmatpush2.msra.mxu0 0.0
    %1730 = vmatprep.subr.mxu0 0.0
    %1731 = vmatpush2.msra.mxu0 0.0
    %1732 = vmatprep.subr.mxu0 0.0
    %1733 = vmatpush2.msra.mxu0 0.0
    %1734 = vmatprep.subr.mxu0 0.0
    %1735 = vmatpush2.msra.mxu0 0.0
    %1736 = vmatprep.subr.mxu0 0.0
    %1737 = vmatpush2.msra.mxu0 0.0
    %1738 = vmatprep.subr.mxu0 0.0
    %1739 = vmatpush2.msra.mxu0 0.0
    %1740 = vmatprep.subr.mxu0 0.0
    %1741 = vmatpush2.msra.mxu0 0.0
    %1742 = vmatprep.subr.mxu0 0.0
    %1743 = vmatpush2.msra.mxu0 0.0
    %1744 = vmatprep.subr.mxu0 0.0
    %1745 = vmatpush2.msra.mxu0 0.0
    %1746 = vmatprep.subr.mxu0 0.0
    %1747 = vmatpush2.msra.mxu0 0.0
    %1748 = vmatprep.subr.mxu0 0.0
    %1749 = vmatpush2.msra.mxu0 0.0
    %1750 = vmatprep.subr.mxu0 0.0
    %1751 = vmatpush2.msra.mxu0 0.0
    %1752 = vmatprep.subr.mxu0 0.0
    %1753 = vmatpush2.msra.mxu0 0.0
    %1754 = vmatprep.subr.mxu0 0.0
    %1755 = vmatpush2.msra.mxu0 0.0
    %1756 = vmatprep.mubr.f32.mxu0 0.0
    %1757 = vmatmul.mubr.f32.gmra.mxu0 %v1690
    %v1758 = vpop.f32.mrf.mxu0
    %v1759 = vadd.f32 0.0, %v1758
    %v1760 = vpop.f32.mrf.mxu0
    %1761 = vdwg.mxu0
    %v1763 = vsel %vm352, %v1688, 0
    %1765 = vmatprep.subr.mxu0 0.0
    %1766 = vmatpush1.msra.mxu0 0.0
    %1767 = vmatprep.subr.mxu0 0.0
    %1768 = vmatpush1.msra.mxu0 0.0
    %1769 = vmatprep.subr.mxu0 0.0
    %1770 = vmatpush1.msra.mxu0 0.0
    %1771 = vmatprep.subr.mxu0 0.0
    %1772 = vmatpush1.msra.mxu0 0.0
    %1773 = vmatprep.subr.mxu0 0.0
    %1774 = vmatpush1.msra.mxu0 0.0
    %1775 = vmatprep.subr.mxu0 0.0
    %1776 = vmatpush1.msra.mxu0 0.0
    %1777 = vmatprep.subr.mxu0 0.0
    %1778 = vmatpush1.msra.mxu0 0.0
    %1779 = vmatprep.subr.mxu0 0.0
    %1780 = vmatpush1.msra.mxu0 0.0
    %1781 = vmatprep.subr.mxu0 0.0
    %1782 = vmatpush1.msra.mxu0 0.0
    %1783 = vmatprep.subr.mxu0 0.0
    %1784 = vmatpush1.msra.mxu0 0.0
    %1785 = vmatprep.subr.mxu0 0.0
    %1786 = vmatpush1.msra.mxu0 0.0
    %1787 = vmatprep.subr.mxu0 0.0
    %1788 = vmatpush1.msra.mxu0 0.0
    %1789 = vmatprep.subr.mxu0 0.0
    %1790 = vmatpush1.msra.mxu0 0.0
    %1791 = vmatprep.subr.mxu0 0.0
    %1792 = vmatpush1.msra.mxu0 0.0
    %1793 = vmatprep.subr.mxu0 0.0
    %1794 = vmatpush1.msra.mxu0 0.0
    %1795 = vmatprep.subr.mxu0 0.0
    %1796 = vmatpush1.msra.mxu0 %v1508
    %1797 = vmatprep.subr.mxu0 0.0
    %1798 = vmatpush2.msra.mxu0 0.0
    %1799 = vmatprep.subr.mxu0 0.0
    %1800 = vmatpush2.msra.mxu0 0.0
    %1801 = vmatprep.subr.mxu0 0.0
    %1802 = vmatpush2.msra.mxu0 0.0
    %1803 = vmatprep.subr.mxu0 0.0
    %1804 = vmatpush2.msra.mxu0 0.0
    %1805 = vmatprep.subr.mxu0 0.0
    %1806 = vmatpush2.msra.mxu0 0.0
    %1807 = vmatprep.subr.mxu0 0.0
    %1808 = vmatpush2.msra.mxu0 0.0
    %1809 = vmatprep.subr.mxu0 0.0
    %1810 = vmatpush2.msra.mxu0 0.0
    %1811 = vmatprep.subr.mxu0 0.0
    %1812 = vmatpush2.msra.mxu0 0.0
    %1813 = vmatprep.subr.mxu0 0.0
    %1814 = vmatpush2.msra.mxu0 0.0
    %1815 = vmatprep.subr.mxu0 0.0
    %1816 = vmatpush2.msra.mxu0 0.0
    %1817 = vmatprep.subr.mxu0 0.0
    %1818 = vmatpush2.msra.mxu0 0.0
    %1819 = vmatprep.subr.mxu0 0.0
    %1820 = vmatpush2.msra.mxu0 0.0
    %1821 = vmatprep.subr.mxu0 0.0
    %1822 = vmatpush2.msra.mxu0 0.0
    %1823 = vmatprep.subr.mxu0 0.0
    %1824 = vmatpush2.msra.mxu0 0.0
    %1825 = vmatprep.subr.mxu0 0.0
    %1826 = vmatpush2.msra.mxu0 0.0
    %1827 = vmatprep.subr.mxu0 0.0
    %1828 = vmatpush2.msra.mxu0 0.0
    %1829 = vmatprep.mubr.f32.mxu0 0.0
    %1830 = vmatmul.mubr.f32.gmra.mxu0 %v1763
    %v1831 = vpop.f32.mrf.mxu0
    %v1832 = vadd.f32 0.0, %v1831
    %v1833 = vpop.f32.mrf.mxu0
    %1834 = vdwg.mxu0
    %s1835 = scalar_lea.vmem %s2, 96
    %v1836 = vld [vmem:[%s1835] sm:$0xff]
    %v1837 = vld [vmem:[%s1835 + $0x8] sm:$0xff]
    %v1838 = vld [vmem:[%s1835 + $0x10] sm:$0xff]
    %v1839 = vld [vmem:[%s1835 + $0x18] sm:$0xff]
    %s1840 = scalar_lea.vmem %s2, 224
    %v1841 = vld [vmem:[%s1840] sm:$0xff]
    %v1842 = vld [vmem:[%s1840 + $0x8] sm:$0xff]
    %v1843 = vld [vmem:[%s1840 + $0x10] sm:$0xff]
    %v1844 = vld [vmem:[%s1840 + $0x18] sm:$0xff]
    %s1845 = scalar_lea.vmem %s2, 352
    %v1846 = vld [vmem:[%s1845] sm:$0xff]
    %v1847 = vld [vmem:[%s1845 + $0x8] sm:$0xff]
    %v1848 = vld [vmem:[%s1845 + $0x10] sm:$0xff]
    %v1849 = vld [vmem:[%s1845 + $0x18] sm:$0xff]
    %v1850 = vld [vmem:[%s4 + $0x34] sm:$0x1]
    %v1851 = vld [vmem:[%s4 + $0x38] sm:$0x1]
    %v1852 = vld [vmem:[%s4 + $0x3c] sm:$0x1]
    %v1853 = vlaneseq
    %v1854 = vshrl.u32 %v1853, 7
    %v1855 = vsub.s32 0, %v1854
    %v1856 = vrot.slane %v1850, %v1855
    %1857 = vmatprep.subr.mxu0 0.0
    %1858 = vmatpush1.msra.mxu0 0.0
    %1859 = vmatprep.subr.mxu0 0.0
    %1860 = vmatpush1.msra.mxu0 0.0
    %1861 = vmatprep.subr.mxu0 0.0
    %1862 = vmatpush1.msra.mxu0 0.0
    %1863 = vmatprep.subr.mxu0 0.0
    %1864 = vmatpush1.msra.mxu0 0.0
    %1865 = vmatprep.subr.mxu0 0.0
    %1866 = vmatpush1.msra.mxu0 0.0
    %1867 = vmatprep.subr.mxu0 0.0
    %1868 = vmatpush1.msra.mxu0 0.0
    %1869 = vmatprep.subr.mxu0 0.0
    %1870 = vmatpush1.msra.mxu0 0.0
    %1871 = vmatprep.subr.mxu0 0.0
    %1872 = vmatpush1.msra.mxu0 0.0
    %1873 = vmatprep.subr.mxu0 0.0
    %1874 = vmatpush1.msra.mxu0 0.0
    %1875 = vmatprep.subr.mxu0 0.0
    %1876 = vmatpush1.msra.mxu0 0.0
    %1877 = vmatprep.subr.mxu0 0.0
    %1878 = vmatpush1.msra.mxu0 0.0
    %1879 = vmatprep.subr.mxu0 0.0
    %1880 = vmatpush1.msra.mxu0 0.0
    %1881 = vmatprep.subr.mxu0 0.0
    %1882 = vmatpush1.msra.mxu0 %v1839
    %1883 = vmatprep.subr.mxu0 0.0
    %1884 = vmatpush1.msra.mxu0 %v1838
    %1885 = vmatprep.subr.mxu0 0.0
    %1886 = vmatpush1.msra.mxu0 %v1837
    %1887 = vmatprep.subr.mxu0 0.0
    %1888 = vmatpush1.msra.mxu0 %v1836
    %1889 = vmatprep.subr.mxu0 0.0
    %1890 = vmatpush2.msra.mxu0 0.0
    %1891 = vmatprep.subr.mxu0 0.0
    %1892 = vmatpush2.msra.mxu0 0.0
    %1893 = vmatprep.subr.mxu0 0.0
    %1894 = vmatpush2.msra.mxu0 0.0
    %1895 = vmatprep.subr.mxu0 0.0
    %1896 = vmatpush2.msra.mxu0 0.0
    %1897 = vmatprep.subr.mxu0 0.0
    %1898 = vmatpush2.msra.mxu0 0.0
    %1899 = vmatprep.subr.mxu0 0.0
    %1900 = vmatpush2.msra.mxu0 0.0
    %1901 = vmatprep.subr.mxu0 0.0
    %1902 = vmatpush2.msra.mxu0 0.0
    %1903 = vmatprep.subr.mxu0 0.0
    %1904 = vmatpush2.msra.mxu0 0.0
    %1905 = vmatprep.subr.mxu0 0.0
    %1906 = vmatpush2.msra.mxu0 0.0
    %1907 = vmatprep.subr.mxu0 0.0
    %1908 = vmatpush2.msra.mxu0 0.0
    %1909 = vmatprep.subr.mxu0 0.0
    %1910 = vmatpush2.msra.mxu0 0.0
    %1911 = vmatprep.subr.mxu0 0.0
    %1912 = vmatpush2.msra.mxu0 0.0
    %1913 = vmatprep.subr.mxu0 0.0
    %1914 = vmatpush2.msra.mxu0 0.0
    %1915 = vmatprep.subr.mxu0 0.0
    %1916 = vmatpush2.msra.mxu0 0.0
    %1917 = vmatprep.subr.mxu0 0.0
    %1918 = vmatpush2.msra.mxu0 0.0
    %1919 = vmatprep.subr.mxu0 0.0
    %1920 = vmatpush2.msra.mxu0 0.0
    %1921 = vmatprep.mubr.f32.mxu0 0.0
    %1922 = vmatmul.mubr.f32.gmra.mxu0 %v114
    %v1923 = vpop.f32.mrf.mxu0
    %v1924 = vadd.f32 %v1856, %v1923
    %v1925 = vpop.f32.mrf.mxu0
    %1926 = vmatprep.mubr.f32.mxu0 0.0
    %1927 = vmatmul.mubr.f32.gmra.mxu0 %v117
    %v1928 = vpop.f32.mrf.mxu0
    %v1929 = vadd.f32 %v1856, %v1928
    %v1930 = vpop.f32.mrf.mxu0
    %1931 = vdwg.mxu0
    %v1932 = vlaneseq
    %v1933 = vshrl.u32 %v1932, 7
    %v1934 = vsub.s32 0, %v1933
    %v1935 = vrot.slane %v1851, %v1934
    %1936 = vmatprep.subr.mxu0 0.0
    %1937 = vmatpush1.msra.mxu0 0.0
    %1938 = vmatprep.subr.mxu0 0.0
    %1939 = vmatpush1.msra.mxu0 0.0
    %1940 = vmatprep.subr.mxu0 0.0
    %1941 = vmatpush1.msra.mxu0 0.0
    %1942 = vmatprep.subr.mxu0 0.0
    %1943 = vmatpush1.msra.mxu0 0.0
    %1944 = vmatprep.subr.mxu0 0.0
    %1945 = vmatpush1.msra.mxu0 0.0
    %1946 = vmatprep.subr.mxu0 0.0
    %1947 = vmatpush1.msra.mxu0 0.0
    %1948 = vmatprep.subr.mxu0 0.0
    %1949 = vmatpush1.msra.mxu0 0.0
    %1950 = vmatprep.subr.mxu0 0.0
    %1951 = vmatpush1.msra.mxu0 0.0
    %1952 = vmatprep.subr.mxu0 0.0
    %1953 = vmatpush1.msra.mxu0 0.0
    %1954 = vmatprep.subr.mxu0 0.0
    %1955 = vmatpush1.msra.mxu0 0.0
    %1956 = vmatprep.subr.mxu0 0.0
    %1957 = vmatpush1.msra.mxu0 0.0
    %1958 = vmatprep.subr.mxu0 0.0
    %1959 = vmatpush1.msra.mxu0 0.0
    %1960 = vmatprep.subr.mxu0 0.0
    %1961 = vmatpush1.msra.mxu0 %v1844
    %1962 = vmatprep.subr.mxu0 0.0
    %1963 = vmatpush1.msra.mxu0 %v1843
    %1964 = vmatprep.subr.mxu0 0.0
    %1965 = vmatpush1.msra.mxu0 %v1842
    %1966 = vmatprep.subr.mxu0 0.0
    %1967 = vmatpush1.msra.mxu0 %v1841
    %1968 = vmatprep.subr.mxu0 0.0
    %1969 = vmatpush2.msra.mxu0 0.0
    %1970 = vmatprep.subr.mxu0 0.0
    %1971 = vmatpush2.msra.mxu0 0.0
    %1972 = vmatprep.subr.mxu0 0.0
    %1973 = vmatpush2.msra.mxu0 0.0
    %1974 = vmatprep.subr.mxu0 0.0
    %1975 = vmatpush2.msra.mxu0 0.0
    %1976 = vmatprep.subr.mxu0 0.0
    %1977 = vmatpush2.msra.mxu0 0.0
    %1978 = vmatprep.subr.mxu0 0.0
    %1979 = vmatpush2.msra.mxu0 0.0
    %1980 = vmatprep.subr.mxu0 0.0
    %1981 = vmatpush2.msra.mxu0 0.0
    %1982 = vmatprep.subr.mxu0 0.0
    %1983 = vmatpush2.msra.mxu0 0.0
    %1984 = vmatprep.subr.mxu0 0.0
    %1985 = vmatpush2.msra.mxu0 0.0
    %1986 = vmatprep.subr.mxu0 0.0
    %1987 = vmatpush2.msra.mxu0 0.0
    %1988 = vmatprep.subr.mxu0 0.0
    %1989 = vmatpush2.msra.mxu0 0.0
    %1990 = vmatprep.subr.mxu0 0.0
    %1991 = vmatpush2.msra.mxu0 0.0
    %1992 = vmatprep.subr.mxu0 0.0
    %1993 = vmatpush2.msra.mxu0 0.0
    %1994 = vmatprep.subr.mxu0 0.0
    %1995 = vmatpush2.msra.mxu0 0.0
    %1996 = vmatprep.subr.mxu0 0.0
    %1997 = vmatpush2.msra.mxu0 0.0
    %1998 = vmatprep.subr.mxu0 0.0
    %1999 = vmatpush2.msra.mxu0 0.0
    %2000 = vmatprep.mubr.f32.mxu0 0.0
    %2001 = vmatmul.mubr.f32.gmra.mxu0 %v114
    %v2002 = vpop.f32.mrf.mxu0
    %v2003 = vadd.f32 %v1935, %v2002
    %v2004 = vpop.f32.mrf.mxu0
    %2005 = vmatprep.mubr.f32.mxu0 0.0
    %2006 = vmatmul.mubr.f32.gmra.mxu0 %v117
    %v2007 = vpop.f32.mrf.mxu0
    %v2008 = vadd.f32 %v1935, %v2007
    %v2009 = vpop.f32.mrf.mxu0
    %2010 = vdwg.mxu0
    %v2011 = vlaneseq
    %v2012 = vshrl.u32 %v2011, 7
    %v2013 = vsub.s32 0, %v2012
    %v2014 = vrot.slane %v1852, %v2013
    %2015 = vmatprep.subr.mxu0 0.0
    %2016 = vmatpush1.msra.mxu0 0.0
    %2017 = vmatprep.subr.mxu0 0.0
    %2018 = vmatpush1.msra.mxu0 0.0
    %2019 = vmatprep.subr.mxu0 0.0
    %2020 = vmatpush1.msra.mxu0 0.0
    %2021 = vmatprep.subr.mxu0 0.0
    %2022 = vmatpush1.msra.mxu0 0.0
    %2023 = vmatprep.subr.mxu0 0.0
    %2024 = vmatpush1.msra.mxu0 0.0
    %2025 = vmatprep.subr.mxu0 0.0
    %2026 = vmatpush1.msra.mxu0 0.0
    %2027 = vmatprep.subr.mxu0 0.0
    %2028 = vmatpush1.msra.mxu0 0.0
    %2029 = vmatprep.subr.mxu0 0.0
    %2030 = vmatpush1.msra.mxu0 0.0
    %2031 = vmatprep.subr.mxu0 0.0
    %2032 = vmatpush1.msra.mxu0 0.0
    %2033 = vmatprep.subr.mxu0 0.0
    %2034 = vmatpush1.msra.mxu0 0.0
    %2035 = vmatprep.subr.mxu0 0.0
    %2036 = vmatpush1.msra.mxu0 0.0
    %2037 = vmatprep.subr.mxu0 0.0
    %2038 = vmatpush1.msra.mxu0 0.0
    %2039 = vmatprep.subr.mxu0 0.0
    %2040 = vmatpush1.msra.mxu0 %v1849
    %2041 = vmatprep.subr.mxu0 0.0
    %2042 = vmatpush1.msra.mxu0 %v1848
    %2043 = vmatprep.subr.mxu0 0.0
    %2044 = vmatpush1.msra.mxu0 %v1847
    %2045 = vmatprep.subr.mxu0 0.0
    %2046 = vmatpush1.msra.mxu0 %v1846
    %2047 = vmatprep.subr.mxu0 0.0
    %2048 = vmatpush2.msra.mxu0 0.0
    %2049 = vmatprep.subr.mxu0 0.0
    %2050 = vmatpush2.msra.mxu0 0.0
    %2051 = vmatprep.subr.mxu0 0.0
    %2052 = vmatpush2.msra.mxu0 0.0
    %2053 = vmatprep.subr.mxu0 0.0
    %2054 = vmatpush2.msra.mxu0 0.0
    %2055 = vmatprep.subr.mxu0 0.0
    %2056 = vmatpush2.msra.mxu0 0.0
    %2057 = vmatprep.subr.mxu0 0.0
    %2058 = vmatpush2.msra.mxu0 0.0
    %2059 = vmatprep.subr.mxu0 0.0
    %2060 = vmatpush2.msra.mxu0 0.0
    %2061 = vmatprep.subr.mxu0 0.0
    %2062 = vmatpush2.msra.mxu0 0.0
    %2063 = vmatprep.subr.mxu0 0.0
    %2064 = vmatpush2.msra.mxu0 0.0
    %2065 = vmatprep.subr.mxu0 0.0
    %2066 = vmatpush2.msra.mxu0 0.0
    %2067 = vmatprep.subr.mxu0 0.0
    %2068 = vmatpush2.msra.mxu0 0.0
    %2069 = vmatprep.subr.mxu0 0.0
    %2070 = vmatpush2.msra.mxu0 0.0
    %2071 = vmatprep.subr.mxu0 0.0
    %2072 = vmatpush2.msra.mxu0 0.0
    %2073 = vmatprep.subr.mxu0 0.0
    %2074 = vmatpush2.msra.mxu0 0.0
    %2075 = vmatprep.subr.mxu0 0.0
    %2076 = vmatpush2.msra.mxu0 0.0
    %2077 = vmatprep.subr.mxu0 0.0
    %2078 = vmatpush2.msra.mxu0 0.0
    %2079 = vmatprep.mubr.f32.mxu0 0.0
    %2080 = vmatmul.mubr.f32.gmra.mxu0 %v114
    %v2081 = vpop.f32.mrf.mxu0
    %v2082 = vadd.f32 %v2014, %v2081
    %v2083 = vpop.f32.mrf.mxu0
    %2084 = vmatprep.mubr.f32.mxu0 0.0
    %2085 = vmatmul.mubr.f32.gmra.mxu0 %v117
    %v2086 = vpop.f32.mrf.mxu0
    %v2087 = vadd.f32 %v2014, %v2086
    %v2088 = vpop.f32.mrf.mxu0
    %2089 = vdwg.mxu0
    %v2091 = vsel %vm352, %v1924, 0
    %v2094 = vsel %vm352, %v2003, 0
    %2096 = vmatprep.subr.mxu0 0.0
    %2097 = vmatpush1.xpose.msra.mxu0 0.0
    %2098 = vmatprep.subr.mxu0 0.0
    %2099 = vmatpush1.xpose.msra.mxu0 0.0
    %2100 = vmatprep.subr.mxu0 0.0
    %2101 = vmatpush1.xpose.msra.mxu0 0.0
    %2102 = vmatprep.subr.mxu0 0.0
    %2103 = vmatpush1.xpose.msra.mxu0 0.0
    %2104 = vmatprep.subr.mxu0 0.0
    %2105 = vmatpush1.xpose.msra.mxu0 0.0
    %2106 = vmatprep.subr.mxu0 0.0
    %2107 = vmatpush1.xpose.msra.mxu0 0.0
    %2108 = vmatprep.subr.mxu0 0.0
    %2109 = vmatpush1.xpose.msra.mxu0 0.0
    %2110 = vmatprep.subr.mxu0 0.0
    %2111 = vmatpush1.xpose.msra.mxu0 0.0
    %2112 = vmatprep.subr.mxu0 0.0
    %2113 = vmatpush1.xpose.msra.mxu0 0.0
    %2114 = vmatprep.subr.mxu0 0.0
    %2115 = vmatpush1.xpose.msra.mxu0 0.0
    %2116 = vmatprep.subr.mxu0 0.0
    %2117 = vmatpush1.xpose.msra.mxu0 0.0
    %2118 = vmatprep.subr.mxu0 0.0
    %2119 = vmatpush1.xpose.msra.mxu0 0.0
    %2120 = vmatprep.subr.mxu0 0.0
    %2121 = vmatpush1.xpose.msra.mxu0 0.0
    %2122 = vmatprep.subr.mxu0 0.0
    %2123 = vmatpush1.xpose.msra.mxu0 0.0
    %2124 = vmatprep.subr.mxu0 0.0
    %2125 = vmatpush1.xpose.msra.mxu0 0.0
    %2126 = vmatprep.subr.mxu0 0.0
    %2127 = vmatpush1.xpose.msra.mxu0 %v2094
    %2128 = vmatprep.subr.mxu0 0.0
    %2129 = vmatpush2.xpose.msra.mxu0 0.0
    %2130 = vmatprep.subr.mxu0 0.0
    %2131 = vmatpush2.xpose.msra.mxu0 0.0
    %2132 = vmatprep.subr.mxu0 0.0
    %2133 = vmatpush2.xpose.msra.mxu0 0.0
    %2134 = vmatprep.subr.mxu0 0.0
    %2135 = vmatpush2.xpose.msra.mxu0 0.0
    %2136 = vmatprep.subr.mxu0 0.0
    %2137 = vmatpush2.xpose.msra.mxu0 0.0
    %2138 = vmatprep.subr.mxu0 0.0
    %2139 = vmatpush2.xpose.msra.mxu0 0.0
    %2140 = vmatprep.subr.mxu0 0.0
    %2141 = vmatpush2.xpose.msra.mxu0 0.0
    %2142 = vmatprep.subr.mxu0 0.0
    %2143 = vmatpush2.xpose.msra.mxu0 0.0
    %2144 = vmatprep.subr.mxu0 0.0
    %2145 = vmatpush2.xpose.msra.mxu0 0.0
    %2146 = vmatprep.subr.mxu0 0.0
    %2147 = vmatpush2.xpose.msra.mxu0 0.0
    %2148 = vmatprep.subr.mxu0 0.0
    %2149 = vmatpush2.xpose.msra.mxu0 0.0
    %2150 = vmatprep.subr.mxu0 0.0
    %2151 = vmatpush2.xpose.msra.mxu0 0.0
    %2152 = vmatprep.subr.mxu0 0.0
    %2153 = vmatpush2.xpose.msra.mxu0 0.0
    %2154 = vmatprep.subr.mxu0 0.0
    %2155 = vmatpush2.xpose.msra.mxu0 0.0
    %2156 = vmatprep.subr.mxu0 0.0
    %2157 = vmatpush2.xpose.msra.mxu0 0.0
    %2158 = vmatprep.subr.mxu0 0.0
    %2159 = vmatpush2.xpose.msra.mxu0 0.0
    %2160 = vmatprep.mubr.f32.mxu0 0.0
    %2161 = vmatmul.mubr.f32.gmra.mxu0 %v2091
    %v2162 = vpop.f32.mrf.mxu0
    %v2163 = vadd.f32 0.0, %v2162
    %v2164 = vpop.f32.mrf.mxu0
    %2165 = vdwg.mxu0
    %v2167 = vsel %vm352, %v1929, 0
    %v2170 = vsel %vm352, %v2008, 0
    %2172 = vmatprep.subr.mxu0 0.0
    %2173 = vmatpush1.xpose.msra.mxu0 0.0
    %2174 = vmatprep.subr.mxu0 0.0
    %2175 = vmatpush1.xpose.msra.mxu0 0.0
    %2176 = vmatprep.subr.mxu0 0.0
    %2177 = vmatpush1.xpose.msra.mxu0 0.0
    %2178 = vmatprep.subr.mxu0 0.0
    %2179 = vmatpush1.xpose.msra.mxu0 0.0
    %2180 = vmatprep.subr.mxu0 0.0
    %2181 = vmatpush1.xpose.msra.mxu0 0.0
    %2182 = vmatprep.subr.mxu0 0.0
    %2183 = vmatpush1.xpose.msra.mxu0 0.0
    %2184 = vmatprep.subr.mxu0 0.0
    %2185 = vmatpush1.xpose.msra.mxu0 0.0
    %2186 = vmatprep.subr.mxu0 0.0
    %2187 = vmatpush1.xpose.msra.mxu0 0.0
    %2188 = vmatprep.subr.mxu0 0.0
    %2189 = vmatpush1.xpose.msra.mxu0 0.0
    %2190 = vmatprep.subr.mxu0 0.0
    %2191 = vmatpush1.xpose.msra.mxu0 0.0
    %2192 = vmatprep.subr.mxu0 0.0
    %2193 = vmatpush1.xpose.msra.mxu0 0.0
    %2194 = vmatprep.subr.mxu0 0.0
    %2195 = vmatpush1.xpose.msra.mxu0 0.0
    %2196 = vmatprep.subr.mxu0 0.0
    %2197 = vmatpush1.xpose.msra.mxu0 0.0
    %2198 = vmatprep.subr.mxu0 0.0
    %2199 = vmatpush1.xpose.msra.mxu0 0.0
    %2200 = vmatprep.subr.mxu0 0.0
    %2201 = vmatpush1.xpose.msra.mxu0 0.0
    %2202 = vmatprep.subr.mxu0 0.0
    %2203 = vmatpush1.xpose.msra.mxu0 %v2170
    %2204 = vmatprep.subr.mxu0 0.0
    %2205 = vmatpush2.xpose.msra.mxu0 0.0
    %2206 = vmatprep.subr.mxu0 0.0
    %2207 = vmatpush2.xpose.msra.mxu0 0.0
    %2208 = vmatprep.subr.mxu0 0.0
    %2209 = vmatpush2.xpose.msra.mxu0 0.0
    %2210 = vmatprep.subr.mxu0 0.0
    %2211 = vmatpush2.xpose.msra.mxu0 0.0
    %2212 = vmatprep.subr.mxu0 0.0
    %2213 = vmatpush2.xpose.msra.mxu0 0.0
    %2214 = vmatprep.subr.mxu0 0.0
    %2215 = vmatpush2.xpose.msra.mxu0 0.0
    %2216 = vmatprep.subr.mxu0 0.0
    %2217 = vmatpush2.xpose.msra.mxu0 0.0
    %2218 = vmatprep.subr.mxu0 0.0
    %2219 = vmatpush2.xpose.msra.mxu0 0.0
    %2220 = vmatprep.subr.mxu0 0.0
    %2221 = vmatpush2.xpose.msra.mxu0 0.0
    %2222 = vmatprep.subr.mxu0 0.0
    %2223 = vmatpush2.xpose.msra.mxu0 0.0
    %2224 = vmatprep.subr.mxu0 0.0
    %2225 = vmatpush2.xpose.msra.mxu0 0.0
    %2226 = vmatprep.subr.mxu0 0.0
    %2227 = vmatpush2.xpose.msra.mxu0 0.0
    %2228 = vmatprep.subr.mxu0 0.0
    %2229 = vmatpush2.xpose.msra.mxu0 0.0
    %2230 = vmatprep.subr.mxu0 0.0
    %2231 = vmatpush2.xpose.msra.mxu0 0.0
    %2232 = vmatprep.subr.mxu0 0.0
    %2233 = vmatpush2.xpose.msra.mxu0 0.0
    %2234 = vmatprep.subr.mxu0 0.0
    %2235 = vmatpush2.xpose.msra.mxu0 0.0
    %2236 = vmatprep.mubr.f32.mxu0 0.0
    %2237 = vmatmul.mubr.f32.gmra.mxu0 %v2167
    %v2238 = vpop.f32.mrf.mxu0
    %v2239 = vadd.f32 0.0, %v2238
    %v2240 = vpop.f32.mrf.mxu0
    %2241 = vdwg.mxu0
    %v2242 = vmul.f32 %v2163, 0.35355338
    %v2243 = vmul.f32 %v2239, 0.35355338
    %v2244 = vadd.f32 %v2242, %v44
    %v2245 = vadd.f32 %v2243, %v44
    %v2246 = vsel %vm352, %v2244, -inf
    %2247 = vmax.xlane.f32.xlu0 %v2246
    %v2248 = vpop.xlane.xlu0 %2247
    %v2249 = vsel %vm352, %v2245, -inf
    %2250 = vmax.xlane.f32.xlu0 %v2249
    %v2251 = vpop.xlane.xlu0 %2250
    %v2252 = vsub.f32 %v2244, %v2248
    %v2253 = vsub.f32 %v2245, %v2251
    %v2254 = vmul.f32 %v2252, 1.442695
    %v2255 = vpow.pop %v2254
    %v2256 = vmul.f32 %v2253, 1.442695
    %v2257 = vpow.pop %v2256
    %v2258 = vsel %vm352, %v2255, 0.0
    %2259 = vadd.xlane.f32.xlu0 %v2258
    %v2260 = vpop.xlane.xlu0 %2259
    %v2261 = vsel %vm352, %v2257, 0.0
    %2262 = vadd.xlane.f32.xlu0 %v2261
    %v2263 = vpop.xlane.xlu0 %2262
    %v2264 = vrcp.pop %v2260
    %v2265 = vrcp.pop %v2263
    %v2266 = vmul.f32 %v2255, %v2264
    %v2267 = vmul.f32 %v2257, %v2265
    %v2269 = vsel %vm352, %v2266, 0
    %2271 = vmatprep.subr.mxu0 0.0
    %2272 = vmatpush1.msra.mxu0 0.0
    %2273 = vmatprep.subr.mxu0 0.0
    %2274 = vmatpush1.msra.mxu0 0.0
    %2275 = vmatprep.subr.mxu0 0.0
    %2276 = vmatpush1.msra.mxu0 0.0
    %2277 = vmatprep.subr.mxu0 0.0
    %2278 = vmatpush1.msra.mxu0 0.0
    %2279 = vmatprep.subr.mxu0 0.0
    %2280 = vmatpush1.msra.mxu0 0.0
    %2281 = vmatprep.subr.mxu0 0.0
    %2282 = vmatpush1.msra.mxu0 0.0
    %2283 = vmatprep.subr.mxu0 0.0
    %2284 = vmatpush1.msra.mxu0 0.0
    %2285 = vmatprep.subr.mxu0 0.0
    %2286 = vmatpush1.msra.mxu0 0.0
    %2287 = vmatprep.subr.mxu0 0.0
    %2288 = vmatpush1.msra.mxu0 0.0
    %2289 = vmatprep.subr.mxu0 0.0
    %2290 = vmatpush1.msra.mxu0 0.0
    %2291 = vmatprep.subr.mxu0 0.0
    %2292 = vmatpush1.msra.mxu0 0.0
    %2293 = vmatprep.subr.mxu0 0.0
    %2294 = vmatpush1.msra.mxu0 0.0
    %2295 = vmatprep.subr.mxu0 0.0
    %2296 = vmatpush1.msra.mxu0 0.0
    %2297 = vmatprep.subr.mxu0 0.0
    %2298 = vmatpush1.msra.mxu0 0.0
    %2299 = vmatprep.subr.mxu0 0.0
    %2300 = vmatpush1.msra.mxu0 0.0
    %2301 = vmatprep.subr.mxu0 0.0
    %2302 = vmatpush1.msra.mxu0 %v2082
    %2303 = vmatprep.subr.mxu0 0.0
    %2304 = vmatpush2.msra.mxu0 0.0
    %2305 = vmatprep.subr.mxu0 0.0
    %2306 = vmatpush2.msra.mxu0 0.0
    %2307 = vmatprep.subr.mxu0 0.0
    %2308 = vmatpush2.msra.mxu0 0.0
    %2309 = vmatprep.subr.mxu0 0.0
    %2310 = vmatpush2.msra.mxu0 0.0
    %2311 = vmatprep.subr.mxu0 0.0
    %2312 = vmatpush2.msra.mxu0 0.0
    %2313 = vmatprep.subr.mxu0 0.0
    %2314 = vmatpush2.msra.mxu0 0.0
    %2315 = vmatprep.subr.mxu0 0.0
    %2316 = vmatpush2.msra.mxu0 0.0
    %2317 = vmatprep.subr.mxu0 0.0
    %2318 = vmatpush2.msra.mxu0 0.0
    %2319 = vmatprep.subr.mxu0 0.0
    %2320 = vmatpush2.msra.mxu0 0.0
    %2321 = vmatprep.subr.mxu0 0.0
    %2322 = vmatpush2.msra.mxu0 0.0
    %2323 = vmatprep.subr.mxu0 0.0
    %2324 = vmatpush2.msra.mxu0 0.0
    %2325 = vmatprep.subr.mxu0 0.0
    %2326 = vmatpush2.msra.mxu0 0.0
    %2327 = vmatprep.subr.mxu0 0.0
    %2328 = vmatpush2.msra.mxu0 0.0
    %2329 = vmatprep.subr.mxu0 0.0
    %2330 = vmatpush2.msra.mxu0 0.0
    %2331 = vmatprep.subr.mxu0 0.0
    %2332 = vmatpush2.msra.mxu0 0.0
    %2333 = vmatprep.subr.mxu0 0.0
    %2334 = vmatpush2.msra.mxu0 0.0
    %2335 = vmatprep.mubr.f32.mxu0 0.0
    %2336 = vmatmul.mubr.f32.gmra.mxu0 %v2269
    %v2337 = vpop.f32.mrf.mxu0
    %v2338 = vadd.f32 0.0, %v2337
    %v2339 = vpop.f32.mrf.mxu0
    %2340 = vdwg.mxu0
    %v2342 = vsel %vm352, %v2267, 0
    %2344 = vmatprep.subr.mxu0 0.0
    %2345 = vmatpush1.msra.mxu0 0.0
    %2346 = vmatprep.subr.mxu0 0.0
    %2347 = vmatpush1.msra.mxu0 0.0
    %2348 = vmatprep.subr.mxu0 0.0
    %2349 = vmatpush1.msra.mxu0 0.0
    %2350 = vmatprep.subr.mxu0 0.0
    %2351 = vmatpush1.msra.mxu0 0.0
    %2352 = vmatprep.subr.mxu0 0.0
    %2353 = vmatpush1.msra.mxu0 0.0
    %2354 = vmatprep.subr.mxu0 0.0
    %2355 = vmatpush1.msra.mxu0 0.0
    %2356 = vmatprep.subr.mxu0 0.0
    %2357 = vmatpush1.msra.mxu0 0.0
    %2358 = vmatprep.subr.mxu0 0.0
    %2359 = vmatpush1.msra.mxu0 0.0
    %2360 = vmatprep.subr.mxu0 0.0
    %2361 = vmatpush1.msra.mxu0 0.0
    %2362 = vmatprep.subr.mxu0 0.0
    %2363 = vmatpush1.msra.mxu0 0.0
    %2364 = vmatprep.subr.mxu0 0.0
    %2365 = vmatpush1.msra.mxu0 0.0
    %2366 = vmatprep.subr.mxu0 0.0
    %2367 = vmatpush1.msra.mxu0 0.0
    %2368 = vmatprep.subr.mxu0 0.0
    %2369 = vmatpush1.msra.mxu0 0.0
    %2370 = vmatprep.subr.mxu0 0.0
    %2371 = vmatpush1.msra.mxu0 0.0
    %2372 = vmatprep.subr.mxu0 0.0
    %2373 = vmatpush1.msra.mxu0 0.0
    %2374 = vmatprep.subr.mxu0 0.0
    %2375 = vmatpush1.msra.mxu0 %v2087
    %2376 = vmatprep.subr.mxu0 0.0
    %2377 = vmatpush2.msra.mxu0 0.0
    %2378 = vmatprep.subr.mxu0 0.0
    %2379 = vmatpush2.msra.mxu0 0.0
    %2380 = vmatprep.subr.mxu0 0.0
    %2381 = vmatpush2.msra.mxu0 0.0
    %2382 = vmatprep.subr.mxu0 0.0
    %2383 = vmatpush2.msra.mxu0 0.0
    %2384 = vmatprep.subr.mxu0 0.0
    %2385 = vmatpush2.msra.mxu0 0.0
    %2386 = vmatprep.subr.mxu0 0.0
    %2387 = vmatpush2.msra.mxu0 0.0
    %2388 = vmatprep.subr.mxu0 0.0
    %2389 = vmatpush2.msra.mxu0 0.0
    %2390 = vmatprep.subr.mxu0 0.0
    %2391 = vmatpush2.msra.mxu0 0.0
    %2392 = vmatprep.subr.mxu0 0.0
    %2393 = vmatpush2.msra.mxu0 0.0
    %2394 = vmatprep.subr.mxu0 0.0
    %2395 = vmatpush2.msra.mxu0 0.0
    %2396 = vmatprep.subr.mxu0 0.0
    %2397 = vmatpush2.msra.mxu0 0.0
    %2398 = vmatprep.subr.mxu0 0.0
    %2399 = vmatpush2.msra.mxu0 0.0
    %2400 = vmatprep.subr.mxu0 0.0
    %2401 = vmatpush2.msra.mxu0 0.0
    %2402 = vmatprep.subr.mxu0 0.0
    %2403 = vmatpush2.msra.mxu0 0.0
    %2404 = vmatprep.subr.mxu0 0.0
    %2405 = vmatpush2.msra.mxu0 0.0
    %2406 = vmatprep.subr.mxu0 0.0
    %2407 = vmatpush2.msra.mxu0 0.0
    %2408 = vmatprep.mubr.f32.mxu0 0.0
    %2409 = vmatmul.mubr.f32.gmra.mxu0 %v2342
    %v2410 = vpop.f32.mrf.mxu0
    %v2411 = vadd.f32 0.0, %v2410
    %v2412 = vpop.f32.mrf.mxu0
    %2413 = vdwg.mxu0
    %2416 = vrot.lane.b32.xlu0 %v1180, 8
    %v2417 = vpop.permute.xlu0 %2416
    %2418 = vrot.lane.b32.xlu0 %v1253, 8
    %v2419 = vpop.permute.xlu0 %2418
    %2424 = vrot.lane.b32.xlu0 %v1759, 16
    %v2425 = vpop.permute.xlu0 %2424
    %2426 = vrot.lane.b32.xlu0 %v1832, 16
    %v2427 = vpop.permute.xlu0 %2426
    %2432 = vrot.lane.b32.xlu0 %v2338, 24
    %v2433 = vpop.permute.xlu0 %2432
    %2434 = vrot.lane.b32.xlu0 %v2411, 24
    %v2435 = vpop.permute.xlu0 %2434
    %v2438 = vsel %vm352, %v601, %v2417
    %v2439 = vsel %vm352, %v674, %v2419
    %vm2440 = vcmask 130048
    %v2441 = vsel %vm2440, %v2438, %v2425
    %v2442 = vsel %vm2440, %v2439, %v2427
    %vm2443 = vcmask 195584
    %v2444 = vsel %vm2443, %v2441, %v2433
    %v2445 = vsel %vm2443, %v2442, %v2435
    %v2446 = vld [vmem:[%s3 + $0x20] sm:$0xff]
    %v2447 = vld [vmem:[%s3 + $0x28] sm:$0xff]
    %v2448 = vld [vmem:[%s3 + $0x30] sm:$0xff]
    %v2449 = vld [vmem:[%s3 + $0x38] sm:$0xff]
    %v2451 = vsel %vm52, %v2444, 0
    %v2454 = vsel %vm52, %v2445, 0
    %2456 = vmatprep.subr.mxu0 0.0
    %2457 = vmatpush1.msra.mxu0 0.0
    %2458 = vmatprep.subr.mxu0 0.0
    %2459 = vmatpush1.msra.mxu0 0.0
    %2460 = vmatprep.subr.mxu0 0.0
    %2461 = vmatpush1.msra.mxu0 0.0
    %2462 = vmatprep.subr.mxu0 0.0
    %2463 = vmatpush1.msra.mxu0 0.0
    %2464 = vmatprep.subr.mxu0 0.0
    %2465 = vmatpush1.msra.mxu0 0.0
    %2466 = vmatprep.subr.mxu0 0.0
    %2467 = vmatpush1.msra.mxu0 0.0
    %2468 = vmatprep.subr.mxu0 0.0
    %2469 = vmatpush1.msra.mxu0 0.0
    %2470 = vmatprep.subr.mxu0 0.0
    %2471 = vmatpush1.msra.mxu0 0.0
    %2472 = vmatprep.subr.mxu0 0.0
    %2473 = vmatpush1.msra.mxu0 0.0
    %2474 = vmatprep.subr.mxu0 0.0
    %2475 = vmatpush1.msra.mxu0 0.0
    %2476 = vmatprep.subr.mxu0 0.0
    %2477 = vmatpush1.msra.mxu0 0.0
    %2478 = vmatprep.subr.mxu0 0.0
    %2479 = vmatpush1.msra.mxu0 0.0
    %2480 = vmatprep.subr.mxu0 0.0
    %2481 = vmatpush1.msra.mxu0 %v2449
    %2482 = vmatprep.subr.mxu0 0.0
    %2483 = vmatpush1.msra.mxu0 %v2448
    %2484 = vmatprep.subr.mxu0 0.0
    %2485 = vmatpush1.msra.mxu0 %v2447
    %2486 = vmatprep.subr.mxu0 0.0
    %2487 = vmatpush1.msra.mxu0 %v2446
    %2488 = vmatprep.subr.mxu0 0.0
    %2489 = vmatpush2.msra.mxu0 0.0
    %2490 = vmatprep.subr.mxu0 0.0
    %2491 = vmatpush2.msra.mxu0 0.0
    %2492 = vmatprep.subr.mxu0 0.0
    %2493 = vmatpush2.msra.mxu0 0.0
    %2494 = vmatprep.subr.mxu0 0.0
    %2495 = vmatpush2.msra.mxu0 0.0
    %2496 = vmatprep.subr.mxu0 0.0
    %2497 = vmatpush2.msra.mxu0 0.0
    %2498 = vmatprep.subr.mxu0 0.0
    %2499 = vmatpush2.msra.mxu0 0.0
    %2500 = vmatprep.subr.mxu0 0.0
    %2501 = vmatpush2.msra.mxu0 0.0
    %2502 = vmatprep.subr.mxu0 0.0
    %2503 = vmatpush2.msra.mxu0 0.0
    %2504 = vmatprep.subr.mxu0 0.0
    %2505 = vmatpush2.msra.mxu0 0.0
    %2506 = vmatprep.subr.mxu0 0.0
    %2507 = vmatpush2.msra.mxu0 0.0
    %2508 = vmatprep.subr.mxu0 0.0
    %2509 = vmatpush2.msra.mxu0 0.0
    %2510 = vmatprep.subr.mxu0 0.0
    %2511 = vmatpush2.msra.mxu0 0.0
    %2512 = vmatprep.subr.mxu0 0.0
    %2513 = vmatpush2.msra.mxu0 0.0
    %2514 = vmatprep.subr.mxu0 0.0
    %2515 = vmatpush2.msra.mxu0 0.0
    %2516 = vmatprep.subr.mxu0 0.0
    %2517 = vmatpush2.msra.mxu0 0.0
    %2518 = vmatprep.subr.mxu0 0.0
    %2519 = vmatpush2.msra.mxu0 0.0
    %2520 = vmatprep.mubr.f32.mxu0 0.0
    %2521 = vmatmul.mubr.f32.gmra.mxu0 %v2451
    %v2522 = vpop.f32.mrf.mxu0
    %v2523 = vadd.f32 0.0, %v2522
    %v2524 = vpop.f32.mrf.mxu0
    %2525 = vmatprep.mubr.f32.mxu0 0.0
    %2526 = vmatmul.mubr.f32.gmra.mxu0 %v2454
    %v2527 = vpop.f32.mrf.mxu0
    %v2528 = vadd.f32 0.0, %v2527
    %v2529 = vpop.f32.mrf.mxu0
    %2530 = vdwg.mxu0
    %v2531 = vadd.f32 %v37, %v2523
    %v2532 = vadd.f32 %v38, %v2528
    %v2533 = vlaneseq
    %v2534 = vshrl.u32 %v2533, 7
    %v2535 = vsub.s32 0, %v2534
    %v2536 = vrot.slane %v47, %v2535
    %v2537 = vadd.f32 %v2531, %v2536
    %v2538 = vadd.f32 %v2532, %v2536
    %v2539 = vsel %vm52, %v2537, 0.0
    %2540 = vadd.xlane.f32.xlu0 %v2539
    %v2541 = vpop.xlane.xlu0 %2540
    %v2542 = vsel %vm52, %v2538, 0.0
    %2543 = vadd.xlane.f32.xlu0 %v2542
    %v2544 = vpop.xlane.xlu0 %2543
    %v2545 = vmul.f32 %v2541, %v59
    %v2546 = vmul.f32 %v2544, %v59
    %v2547 = vsub.f32 %v2537, %v2545
    %v2548 = vsub.f32 %v2538, %v2546
    %v2549 = vmul.f32 %v2547, %v2547
    %v2550 = vmul.f32 %v2548, %v2548
    %v2551 = vsel %vm52, %v2549, 0.0
    %2552 = vadd.xlane.f32.xlu0 %v2551
    %v2553 = vpop.xlane.xlu0 %2552
    %v2554 = vsel %vm52, %v2550, 0.0
    %2555 = vadd.xlane.f32.xlu0 %v2554
    %v2556 = vpop.xlane.xlu0 %2555
    %v2557 = vmul.f32 %v2553, %v59
    %v2558 = vmul.f32 %v2556, %v59
    %v2559 = vadd.f32 %v2557, 1e-05
    %v2560 = vadd.f32 %v2558, 1e-05
    %v2561 = vrsqrt.pop %v2559
    %v2562 = vrsqrt.pop %v2560
    %v2563 = vmul.f32 %v2547, %v2561
    %v2564 = vmul.f32 %v2548, %v2562
    %v2565 = vlaneseq
    %v2566 = vshrl.u32 %v2565, 7
    %v2567 = vsub.s32 0, %v2566
    %v2568 = vrot.slane %v48, %v2567
    %v2569 = vmul.f32 %v2563, %v2568
    %v2570 = vmul.f32 %v2564, %v2568
    %v2571 = vlaneseq
    %v2572 = vshrl.u32 %v2571, 7
    %v2573 = vsub.s32 0, %v2572
    %v2574 = vrot.slane %v49, %v2573
    %v2575 = vadd.f32 %v2569, %v2574
    %v2576 = vadd.f32 %v2570, %v2574
    %v2577 = vld [vmem:[%s3] sm:$0xff]
    %v2578 = vld [vmem:[%s3 + $0x8] sm:$0xff]
    %v2579 = vld [vmem:[%s3 + $0x10] sm:$0xff]
    %v2580 = vld [vmem:[%s3 + $0x18] sm:$0xff]
    %v2581 = vlaneseq
    %v2582 = vshrl.u32 %v2581, 7
    %v2583 = vsub.s32 0, %v2582
    %v2584 = vrot.slane %v50, %v2583
    %v2586 = vsel %vm52, %v2575, 0
    %v2589 = vsel %vm52, %v2576, 0
    %2591 = vmatprep.subr.mxu0 0.0
    %2592 = vmatpush1.msra.mxu0 0.0
    %2593 = vmatprep.subr.mxu0 0.0
    %2594 = vmatpush1.msra.mxu0 0.0
    %2595 = vmatprep.subr.mxu0 0.0
    %2596 = vmatpush1.msra.mxu0 0.0
    %2597 = vmatprep.subr.mxu0 0.0
    %2598 = vmatpush1.msra.mxu0 0.0
    %2599 = vmatprep.subr.mxu0 0.0
    %2600 = vmatpush1.msra.mxu0 0.0
    %2601 = vmatprep.subr.mxu0 0.0
    %2602 = vmatpush1.msra.mxu0 0.0
    %2603 = vmatprep.subr.mxu0 0.0
    %2604 = vmatpush1.msra.mxu0 0.0
    %2605 = vmatprep.subr.mxu0 0.0
    %2606 = vmatpush1.msra.mxu0 0.0
    %2607 = vmatprep.subr.mxu0 0.0
    %2608 = vmatpush1.msra.mxu0 0.0
    %2609 = vmatprep.subr.mxu0 0.0
    %2610 = vmatpush1.msra.mxu0 0.0
    %2611 = vmatprep.subr.mxu0 0.0
    %2612 = vmatpush1.msra.mxu0 0.0
    %2613 = vmatprep.subr.mxu0 0.0
    %2614 = vmatpush1.msra.mxu0 0.0
    %2615 = vmatprep.subr.mxu0 0.0
    %2616 = vmatpush1.msra.mxu0 %v2580
    %2617 = vmatprep.subr.mxu0 0.0
    %2618 = vmatpush1.msra.mxu0 %v2579
    %2619 = vmatprep.subr.mxu0 0.0
    %2620 = vmatpush1.msra.mxu0 %v2578
    %2621 = vmatprep.subr.mxu0 0.0
    %2622 = vmatpush1.msra.mxu0 %v2577
    %2623 = vmatprep.subr.mxu0 0.0
    %2624 = vmatpush2.msra.mxu0 0.0
    %2625 = vmatprep.subr.mxu0 0.0
    %2626 = vmatpush2.msra.mxu0 0.0
    %2627 = vmatprep.subr.mxu0 0.0
    %2628 = vmatpush2.msra.mxu0 0.0
    %2629 = vmatprep.subr.mxu0 0.0
    %2630 = vmatpush2.msra.mxu0 0.0
    %2631 = vmatprep.subr.mxu0 0.0
    %2632 = vmatpush2.msra.mxu0 0.0
    %2633 = vmatprep.subr.mxu0 0.0
    %2634 = vmatpush2.msra.mxu0 0.0
    %2635 = vmatprep.subr.mxu0 0.0
    %2636 = vmatpush2.msra.mxu0 0.0
    %2637 = vmatprep.subr.mxu0 0.0
    %2638 = vmatpush2.msra.mxu0 0.0
    %2639 = vmatprep.subr.mxu0 0.0
    %2640 = vmatpush2.msra.mxu0 0.0
    %2641 = vmatprep.subr.mxu0 0.0
    %2642 = vmatpush2.msra.mxu0 0.0
    %2643 = vmatprep.subr.mxu0 0.0
    %2644 = vmatpush2.msra.mxu0 0.0
    %2645 = vmatprep.subr.mxu0 0.0
    %2646 = vmatpush2.msra.mxu0 0.0
    %2647 = vmatprep.subr.mxu0 0.0
    %2648 = vmatpush2.msra.mxu0 0.0
    %2649 = vmatprep.subr.mxu0 0.0
    %2650 = vmatpush2.msra.mxu0 0.0
    %2651 = vmatprep.subr.mxu0 0.0
    %2652 = vmatpush2.msra.mxu0 0.0
    %2653 = vmatprep.subr.mxu0 0.0
    %2654 = vmatpush2.msra.mxu0 0.0
    %2655 = vmatprep.mubr.f32.mxu0 0.0
    %2656 = vmatmul.mubr.f32.gmra.mxu0 %v2586
    %v2657 = vpop.f32.mrf.mxu0
    %v2658 = vadd.f32 %v2584, %v2657
    %v2659 = vpop.f32.mrf.mxu0
    %2660 = vmatprep.mubr.f32.mxu0 0.0
    %2661 = vmatmul.mubr.f32.gmra.mxu0 %v2589
    %v2662 = vpop.f32.mrf.mxu0
    %v2663 = vadd.f32 %v2584, %v2662
    %v2664 = vpop.f32.mrf.mxu0
    %2665 = vdwg.mxu0
    %v2666 = vmul.f32 %v2658, 1.702
    %v2667 = vmul.f32 %v2663, 1.702
    %v2668 = vxor.u32 %v2666, 2147483648
    %v2669 = vxor.u32 %v2667, 2147483648
    %v2670 = vmul.f32 %v2668, 1.442695
    %v2671 = vpow.pop %v2670
    %v2672 = vmul.f32 %v2669, 1.442695
    %v2673 = vpow.pop %v2672
    %v2674 = vadd.f32 %v2671, 1.0
    %v2675 = vadd.f32 %v2673, 1.0
    %v2676 = vrcp.pop %v2674
    %v2677 = vmul.f32 1.0, %v2676
    %v2678 = vrcp.pop %v2675
    %v2679 = vmul.f32 1.0, %v2678
    %v2680 = vmul.f32 %v2658, %v2677
    %v2681 = vmul.f32 %v2663, %v2679
    %v2682 = vld [vmem:[%s3 + $0x40] sm:$0xff]
    %v2683 = vld [vmem:[%s3 + $0x48] sm:$0xff]
    %v2684 = vld [vmem:[%s3 + $0x50] sm:$0xff]
    %v2685 = vld [vmem:[%s3 + $0x58] sm:$0xff]
    %v2686 = vld [vmem:[%s3 + $0x60] sm:$0xff]
    %v2687 = vld [vmem:[%s3 + $0x68] sm:$0xff]
    %v2688 = vld [vmem:[%s3 + $0x70] sm:$0xff]
    %v2689 = vld [vmem:[%s3 + $0x78] sm:$0xff]
    %v2690 = vld [vmem:[%s3 + $0x80] sm:$0xff]
    %v2691 = vld [vmem:[%s3 + $0x88] sm:$0xff]
    %v2692 = vld [vmem:[%s3 + $0x90] sm:$0xff]
    %v2693 = vld [vmem:[%s3 + $0x98] sm:$0xff]
    %v2694 = vld [vmem:[%s3 + $0xa0] sm:$0xff]
    %v2695 = vld [vmem:[%s3 + $0xa8] sm:$0xff]
    %v2696 = vld [vmem:[%s3 + $0xb0] sm:$0xff]
    %v2697 = vld [vmem:[%s3 + $0xb8] sm:$0xff]
    %2698 = vmatprep.subr.mxu0 0.0
    %2699 = vmatpush1.msra.mxu0 %v2697
    %2700 = vmatprep.subr.mxu0 0.0
    %2701 = vmatpush1.msra.mxu0 %v2696
    %2702 = vmatprep.subr.mxu0 0.0
    %2703 = vmatpush1.msra.mxu0 %v2695
    %2704 = vmatprep.subr.mxu0 0.0
    %2705 = vmatpush1.msra.mxu0 %v2694
    %2706 = vmatprep.subr.mxu0 0.0
    %2707 = vmatpush1.msra.mxu0 %v2693
    %2708 = vmatprep.subr.mxu0 0.0
    %2709 = vmatpush1.msra.mxu0 %v2692
    %2710 = vmatprep.subr.mxu0 0.0
    %2711 = vmatpush1.msra.mxu0 %v2691
    %2712 = vmatprep.subr.mxu0 0.0
    %2713 = vmatpush1.msra.mxu0 %v2690
    %2714 = vmatprep.subr.mxu0 0.0
    %2715 = vmatpush1.msra.mxu0 %v2689
    %2716 = vmatprep.subr.mxu0 0.0
    %2717 = vmatpush1.msra.mxu0 %v2688
    %2718 = vmatprep.subr.mxu0 0.0
    %2719 = vmatpush1.msra.mxu0 %v2687
    %2720 = vmatprep.subr.mxu0 0.0
    %2721 = vmatpush1.msra.mxu0 %v2686
    %2722 = vmatprep.subr.mxu0 0.0
    %2723 = vmatpush1.msra.mxu0 %v2685
    %2724 = vmatprep.subr.mxu0 0.0
    %2725 = vmatpush1.msra.mxu0 %v2684
    %2726 = vmatprep.subr.mxu0 0.0
    %2727 = vmatpush1.msra.mxu0 %v2683
    %2728 = vmatprep.subr.mxu0 0.0
    %2729 = vmatpush1.msra.mxu0 %v2682
    %2730 = vmatprep.subr.mxu0 0.0
    %2731 = vmatpush2.msra.mxu0 0.0
    %2732 = vmatprep.subr.mxu0 0.0
    %2733 = vmatpush2.msra.mxu0 0.0
    %2734 = vmatprep.subr.mxu0 0.0
    %2735 = vmatpush2.msra.mxu0 0.0
    %2736 = vmatprep.subr.mxu0 0.0
    %2737 = vmatpush2.msra.mxu0 0.0
    %2738 = vmatprep.subr.mxu0 0.0
    %2739 = vmatpush2.msra.mxu0 0.0
    %2740 = vmatprep.subr.mxu0 0.0
    %2741 = vmatpush2.msra.mxu0 0.0
    %2742 = vmatprep.subr.mxu0 0.0
    %2743 = vmatpush2.msra.mxu0 0.0
    %2744 = vmatprep.subr.mxu0 0.0
    %2745 = vmatpush2.msra.mxu0 0.0
    %2746 = vmatprep.subr.mxu0 0.0
    %2747 = vmatpush2.msra.mxu0 0.0
    %2748 = vmatprep.subr.mxu0 0.0
    %2749 = vmatpush2.msra.mxu0 0.0
    %2750 = vmatprep.subr.mxu0 0.0
    %2751 = vmatpush2.msra.mxu0 0.0
    %2752 = vmatprep.subr.mxu0 0.0
    %2753 = vmatpush2.msra.mxu0 0.0
    %2754 = vmatprep.subr.mxu0 0.0
    %2755 = vmatpush2.msra.mxu0 0.0
    %2756 = vmatprep.subr.mxu0 0.0
    %2757 = vmatpush2.msra.mxu0 0.0
    %2758 = vmatprep.subr.mxu0 0.0
    %2759 = vmatpush2.msra.mxu0 0.0
    %2760 = vmatprep.subr.mxu0 0.0
    %2761 = vmatpush2.msra.mxu0 0.0
    %2762 = vmatprep.mubr.f32.mxu0 0.0
    %2763 = vmatmul.mubr.f32.gmra.mxu0 %v2680
    %v2764 = vpop.f32.mrf.mxu0
    %v2765 = vadd.f32 0.0, %v2764
    %v2766 = vpop.f32.mrf.mxu0
    %2767 = vmatprep.mubr.f32.mxu0 0.0
    %2768 = vmatmul.mubr.f32.gmra.mxu0 %v2681
    %v2769 = vpop.f32.mrf.mxu0
    %v2770 = vadd.f32 0.0, %v2769
    %v2771 = vpop.f32.mrf.mxu0
    %2772 = vdwg.mxu0
    %v2773 = vadd.f32 %v2537, %v2765
    %v2774 = vadd.f32 %v2538, %v2770
    %v2775 = vlaneseq
    %v2776 = vshrl.u32 %v2775, 7
    %v2777 = vsub.s32 0, %v2776
    %v2778 = vrot.slane %v51, %v2777
    %v2779 = vadd.f32 %v2773, %v2778
    %v2780 = vadd.f32 %v2774, %v2778
    %v2781 = vld [vmem:[%s4 + $0x3d] sm:$0x1]
    %v2782 = vld [vmem:[%s4 + $0x3e] sm:$0x1]
    %v2783 = vld [vmem:[%s4 + $0x3f] sm:$0x1]
    %v2784 = vld [vmem:[%s4 + $0x40] sm:$0x1]
    %v2785 = vld [vmem:[%s4 + $0x41] sm:$0x1]
    %v2786 = vld [vmem:[%s4 + $0x42] sm:$0x1]
    %v2787 = vld [vmem:[%s4 + $0x43] sm:$0x1]
    %v2788 = vsel %vm52, %v2779, 0.0
    %2789 = vadd.xlane.f32.xlu0 %v2788
    %v2790 = vpop.xlane.xlu0 %2789
    %v2791 = vsel %vm52, %v2780, 0.0
    %2792 = vadd.xlane.f32.xlu0 %v2791
    %v2793 = vpop.xlane.xlu0 %2792
    %v2794 = vmul.f32 %v2790, %v59
    %v2795 = vmul.f32 %v2793, %v59
    %v2796 = vsub.f32 %v2779, %v2794
    %v2797 = vsub.f32 %v2780, %v2795
    %v2798 = vmul.f32 %v2796, %v2796
    %v2799 = vmul.f32 %v2797, %v2797
    %v2800 = vsel %vm52, %v2798, 0.0
    %2801 = vadd.xlane.f32.xlu0 %v2800
    %v2802 = vpop.xlane.xlu0 %2801
    %v2803 = vsel %vm52, %v2799, 0.0
    %2804 = vadd.xlane.f32.xlu0 %v2803
    %v2805 = vpop.xlane.xlu0 %2804
    %v2806 = vmul.f32 %v2802, %v59
    %v2807 = vmul.f32 %v2805, %v59
    %v2808 = vadd.f32 %v2806, 1e-05
    %v2809 = vadd.f32 %v2807, 1e-05
    %v2810 = vrsqrt.pop %v2808
    %v2811 = vrsqrt.pop %v2809
    %v2812 = vmul.f32 %v2796, %v2810
    %v2813 = vmul.f32 %v2797, %v2811
    %v2814 = vlaneseq
    %v2815 = vshrl.u32 %v2814, 7
    %v2816 = vsub.s32 0, %v2815
    %v2817 = vrot.slane %v2781, %v2816
    %v2818 = vmul.f32 %v2812, %v2817
    %v2819 = vmul.f32 %v2813, %v2817
    %v2820 = vlaneseq
    %v2821 = vshrl.u32 %v2820, 7
    %v2822 = vsub.s32 0, %v2821
    %v2823 = vrot.slane %v2782, %v2822
    %v2824 = vadd.f32 %v2818, %v2823
    %v2825 = vadd.f32 %v2819, %v2823
    %s2826 = scalar_lea.vmem %s2, 384
    %v2827 = vld [vmem:[%s2826] sm:$0xff]
    %v2828 = vld [vmem:[%s2826 + $0x8] sm:$0xff]
    %v2829 = vld [vmem:[%s2826 + $0x10] sm:$0xff]
    %v2830 = vld [vmem:[%s2826 + $0x18] sm:$0xff]
    %s2831 = scalar_lea.vmem %s2, 512
    %v2832 = vld [vmem:[%s2831] sm:$0xff]
    %v2833 = vld [vmem:[%s2831 + $0x8] sm:$0xff]
    %v2834 = vld [vmem:[%s2831 + $0x10] sm:$0xff]
    %v2835 = vld [vmem:[%s2831 + $0x18] sm:$0xff]
    %s2836 = scalar_lea.vmem %s2, 640
    %v2837 = vld [vmem:[%s2836] sm:$0xff]
    %v2838 = vld [vmem:[%s2836 + $0x8] sm:$0xff]
    %v2839 = vld [vmem:[%s2836 + $0x10] sm:$0xff]
    %v2840 = vld [vmem:[%s2836 + $0x18] sm:$0xff]
    %v2841 = vld [vmem:[%s4 + $0x44] sm:$0x1]
    %v2842 = vld [vmem:[%s4 + $0x48] sm:$0x1]
    %v2843 = vld [vmem:[%s4 + $0x4c] sm:$0x1]
    %v2844 = vlaneseq
    %v2845 = vshrl.u32 %v2844, 7
    %v2846 = vsub.s32 0, %v2845
    %v2847 = vrot.slane %v2841, %v2846
    %v2849 = vsel %vm52, %v2824, 0
    %v2852 = vsel %vm52, %v2825, 0
    %2854 = vmatprep.subr.mxu0 0.0
    %2855 = vmatpush1.msra.mxu0 0.0
    %2856 = vmatprep.subr.mxu0 0.0
    %2857 = vmatpush1.msra.mxu0 0.0
    %2858 = vmatprep.subr.mxu0 0.0
    %2859 = vmatpush1.msra.mxu0 0.0
    %2860 = vmatprep.subr.mxu0 0.0
    %2861 = vmatpush1.msra.mxu0 0.0
    %2862 = vmatprep.subr.mxu0 0.0
    %2863 = vmatpush1.msra.mxu0 0.0
    %2864 = vmatprep.subr.mxu0 0.0
    %2865 = vmatpush1.msra.mxu0 0.0
    %2866 = vmatprep.subr.mxu0 0.0
    %2867 = vmatpush1.msra.mxu0 0.0
    %2868 = vmatprep.subr.mxu0 0.0
    %2869 = vmatpush1.msra.mxu0 0.0
    %2870 = vmatprep.subr.mxu0 0.0
    %2871 = vmatpush1.msra.mxu0 0.0
    %2872 = vmatprep.subr.mxu0 0.0
    %2873 = vmatpush1.msra.mxu0 0.0
    %2874 = vmatprep.subr.mxu0 0.0
    %2875 = vmatpush1.msra.mxu0 0.0
    %2876 = vmatprep.subr.mxu0 0.0
    %2877 = vmatpush1.msra.mxu0 0.0
    %2878 = vmatprep.subr.mxu0 0.0
    %2879 = vmatpush1.msra.mxu0 %v2830
    %2880 = vmatprep.subr.mxu0 0.0
    %2881 = vmatpush1.msra.mxu0 %v2829
    %2882 = vmatprep.subr.mxu0 0.0
    %2883 = vmatpush1.msra.mxu0 %v2828
    %2884 = vmatprep.subr.mxu0 0.0
    %2885 = vmatpush1.msra.mxu0 %v2827
    %2886 = vmatprep.subr.mxu0 0.0
    %2887 = vmatpush2.msra.mxu0 0.0
    %2888 = vmatprep.subr.mxu0 0.0
    %2889 = vmatpush2.msra.mxu0 0.0
    %2890 = vmatprep.subr.mxu0 0.0
    %2891 = vmatpush2.msra.mxu0 0.0
    %2892 = vmatprep.subr.mxu0 0.0
    %2893 = vmatpush2.msra.mxu0 0.0
    %2894 = vmatprep.subr.mxu0 0.0
    %2895 = vmatpush2.msra.mxu0 0.0
    %2896 = vmatprep.subr.mxu0 0.0
    %2897 = vmatpush2.msra.mxu0 0.0
    %2898 = vmatprep.subr.mxu0 0.0
    %2899 = vmatpush2.msra.mxu0 0.0
    %2900 = vmatprep.subr.mxu0 0.0
    %2901 = vmatpush2.msra.mxu0 0.0
    %2902 = vmatprep.subr.mxu0 0.0
    %2903 = vmatpush2.msra.mxu0 0.0
    %2904 = vmatprep.subr.mxu0 0.0
    %2905 = vmatpush2.msra.mxu0 0.0
    %2906 = vmatprep.subr.mxu0 0.0
    %2907 = vmatpush2.msra.mxu0 0.0
    %2908 = vmatprep.subr.mxu0 0.0
    %2909 = vmatpush2.msra.mxu0 0.0
    %2910 = vmatprep.subr.mxu0 0.0
    %2911 = vmatpush2.msra.mxu0 0.0
    %2912 = vmatprep.subr.mxu0 0.0
    %2913 = vmatpush2.msra.mxu0 0.0
    %2914 = vmatprep.subr.mxu0 0.0
    %2915 = vmatpush2.msra.mxu0 0.0
    %2916 = vmatprep.subr.mxu0 0.0
    %2917 = vmatpush2.msra.mxu0 0.0
    %2918 = vmatprep.mubr.f32.mxu0 0.0
    %2919 = vmatmul.mubr.f32.gmra.mxu0 %v2849
    %v2920 = vpop.f32.mrf.mxu0
    %v2921 = vadd.f32 %v2847, %v2920
    %v2922 = vpop.f32.mrf.mxu0
    %2923 = vmatprep.mubr.f32.mxu0 0.0
    %2924 = vmatmul.mubr.f32.gmra.mxu0 %v2852
    %v2925 = vpop.f32.mrf.mxu0
    %v2926 = vadd.f32 %v2847, %v2925
    %v2927 = vpop.f32.mrf.mxu0
    %2928 = vdwg.mxu0
    %v2929 = vlaneseq
    %v2930 = vshrl.u32 %v2929, 7
    %v2931 = vsub.s32 0, %v2930
    %v2932 = vrot.slane %v2842, %v2931
    %2933 = vmatprep.subr.mxu0 0.0
    %2934 = vmatpush1.msra.mxu0 0.0
    %2935 = vmatprep.subr.mxu0 0.0
    %2936 = vmatpush1.msra.mxu0 0.0
    %2937 = vmatprep.subr.mxu0 0.0
    %2938 = vmatpush1.msra.mxu0 0.0
    %2939 = vmatprep.subr.mxu0 0.0
    %2940 = vmatpush1.msra.mxu0 0.0
    %2941 = vmatprep.subr.mxu0 0.0
    %2942 = vmatpush1.msra.mxu0 0.0
    %2943 = vmatprep.subr.mxu0 0.0
    %2944 = vmatpush1.msra.mxu0 0.0
    %2945 = vmatprep.subr.mxu0 0.0
    %2946 = vmatpush1.msra.mxu0 0.0
    %2947 = vmatprep.subr.mxu0 0.0
    %2948 = vmatpush1.msra.mxu0 0.0
    %2949 = vmatprep.subr.mxu0 0.0
    %2950 = vmatpush1.msra.mxu0 0.0
    %2951 = vmatprep.subr.mxu0 0.0
    %2952 = vmatpush1.msra.mxu0 0.0
    %2953 = vmatprep.subr.mxu0 0.0
    %2954 = vmatpush1.msra.mxu0 0.0
    %2955 = vmatprep.subr.mxu0 0.0
    %2956 = vmatpush1.msra.mxu0 0.0
    %2957 = vmatprep.subr.mxu0 0.0
    %2958 = vmatpush1.msra.mxu0 %v2835
    %2959 = vmatprep.subr.mxu0 0.0
    %2960 = vmatpush1.msra.mxu0 %v2834
    %2961 = vmatprep.subr.mxu0 0.0
    %2962 = vmatpush1.msra.mxu0 %v2833
    %2963 = vmatprep.subr.mxu0 0.0
    %2964 = vmatpush1.msra.mxu0 %v2832
    %2965 = vmatprep.subr.mxu0 0.0
    %2966 = vmatpush2.msra.mxu0 0.0
    %2967 = vmatprep.subr.mxu0 0.0
    %2968 = vmatpush2.msra.mxu0 0.0
    %2969 = vmatprep.subr.mxu0 0.0
    %2970 = vmatpush2.msra.mxu0 0.0
    %2971 = vmatprep.subr.mxu0 0.0
    %2972 = vmatpush2.msra.mxu0 0.0
    %2973 = vmatprep.subr.mxu0 0.0
    %2974 = vmatpush2.msra.mxu0 0.0
    %2975 = vmatprep.subr.mxu0 0.0
    %2976 = vmatpush2.msra.mxu0 0.0
    %2977 = vmatprep.subr.mxu0 0.0
    %2978 = vmatpush2.msra.mxu0 0.0
    %2979 = vmatprep.subr.mxu0 0.0
    %2980 = vmatpush2.msra.mxu0 0.0
    %2981 = vmatprep.subr.mxu0 0.0
    %2982 = vmatpush2.msra.mxu0 0.0
    %2983 = vmatprep.subr.mxu0 0.0
    %2984 = vmatpush2.msra.mxu0 0.0
    %2985 = vmatprep.subr.mxu0 0.0
    %2986 = vmatpush2.msra.mxu0 0.0
    %2987 = vmatprep.subr.mxu0 0.0
    %2988 = vmatpush2.msra.mxu0 0.0
    %2989 = vmatprep.subr.mxu0 0.0
    %2990 = vmatpush2.msra.mxu0 0.0
    %2991 = vmatprep.subr.mxu0 0.0
    %2992 = vmatpush2.msra.mxu0 0.0
    %2993 = vmatprep.subr.mxu0 0.0
    %2994 = vmatpush2.msra.mxu0 0.0
    %2995 = vmatprep.subr.mxu0 0.0
    %2996 = vmatpush2.msra.mxu0 0.0
    %2997 = vmatprep.mubr.f32.mxu0 0.0
    %2998 = vmatmul.mubr.f32.gmra.mxu0 %v2849
    %v2999 = vpop.f32.mrf.mxu0
    %v3000 = vadd.f32 %v2932, %v2999
    %v3001 = vpop.f32.mrf.mxu0
    %3002 = vmatprep.mubr.f32.mxu0 0.0
    %3003 = vmatmul.mubr.f32.gmra.mxu0 %v2852
    %v3004 = vpop.f32.mrf.mxu0
    %v3005 = vadd.f32 %v2932, %v3004
    %v3006 = vpop.f32.mrf.mxu0
    %3007 = vdwg.mxu0
    %v3008 = vlaneseq
    %v3009 = vshrl.u32 %v3008, 7
    %v3010 = vsub.s32 0, %v3009
    %v3011 = vrot.slane %v2843, %v3010
    %3012 = vmatprep.subr.mxu0 0.0
    %3013 = vmatpush1.msra.mxu0 0.0
    %3014 = vmatprep.subr.mxu0 0.0
    %3015 = vmatpush1.msra.mxu0 0.0
    %3016 = vmatprep.subr.mxu0 0.0
    %3017 = vmatpush1.msra.mxu0 0.0
    %3018 = vmatprep.subr.mxu0 0.0
    %3019 = vmatpush1.msra.mxu0 0.0
    %3020 = vmatprep.subr.mxu0 0.0
    %3021 = vmatpush1.msra.mxu0 0.0
    %3022 = vmatprep.subr.mxu0 0.0
    %3023 = vmatpush1.msra.mxu0 0.0
    %3024 = vmatprep.subr.mxu0 0.0
    %3025 = vmatpush1.msra.mxu0 0.0
    %3026 = vmatprep.subr.mxu0 0.0
    %3027 = vmatpush1.msra.mxu0 0.0
    %3028 = vmatprep.subr.mxu0 0.0
    %3029 = vmatpush1.msra.mxu0 0.0
    %3030 = vmatprep.subr.mxu0 0.0
    %3031 = vmatpush1.msra.mxu0 0.0
    %3032 = vmatprep.subr.mxu0 0.0
    %3033 = vmatpush1.msra.mxu0 0.0
    %3034 = vmatprep.subr.mxu0 0.0
    %3035 = vmatpush1.msra.mxu0 0.0
    %3036 = vmatprep.subr.mxu0 0.0
    %3037 = vmatpush1.msra.mxu0 %v2840
    %3038 = vmatprep.subr.mxu0 0.0
    %3039 = vmatpush1.msra.mxu0 %v2839
    %3040 = vmatprep.subr.mxu0 0.0
    %3041 = vmatpush1.msra.mxu0 %v2838
    %3042 = vmatprep.subr.mxu0 0.0
    %3043 = vmatpush1.msra.mxu0 %v2837
    %3044 = vmatprep.subr.mxu0 0.0
    %3045 = vmatpush2.msra.mxu0 0.0
    %3046 = vmatprep.subr.mxu0 0.0
    %3047 = vmatpush2.msra.mxu0 0.0
    %3048 = vmatprep.subr.mxu0 0.0
    %3049 = vmatpush2.msra.mxu0 0.0
    %3050 = vmatprep.subr.mxu0 0.0
    %3051 = vmatpush2.msra.mxu0 0.0
    %3052 = vmatprep.subr.mxu0 0.0
    %3053 = vmatpush2.msra.mxu0 0.0
    %3054 = vmatprep.subr.mxu0 0.0
    %3055 = vmatpush2.msra.mxu0 0.0
    %3056 = vmatprep.subr.mxu0 0.0
    %3057 = vmatpush2.msra.mxu0 0.0
    %3058 = vmatprep.subr.mxu0 0.0
    %3059 = vmatpush2.msra.mxu0 0.0
    %3060 = vmatprep.subr.mxu0 0.0
    %3061 = vmatpush2.msra.mxu0 0.0
    %3062 = vmatprep.subr.mxu0 0.0
    %3063 = vmatpush2.msra.mxu0 0.0
    %3064 = vmatprep.subr.mxu0 0.0
    %3065 = vmatpush2.msra.mxu0 0.0
    %3066 = vmatprep.subr.mxu0 0.0
    %3067 = vmatpush2.msra.mxu0 0.0
    %3068 = vmatprep.subr.mxu0 0.0
    %3069 = vmatpush2.msra.mxu0 0.0
    %3070 = vmatprep.subr.mxu0 0.0
    %3071 = vmatpush2.msra.mxu0 0.0
    %3072 = vmatprep.subr.mxu0 0.0
    %3073 = vmatpush2.msra.mxu0 0.0
    %3074 = vmatprep.subr.mxu0 0.0
    %3075 = vmatpush2.msra.mxu0 0.0
    %3076 = vmatprep.mubr.f32.mxu0 0.0
    %3077 = vmatmul.mubr.f32.gmra.mxu0 %v2849
    %v3078 = vpop.f32.mrf.mxu0
    %v3079 = vadd.f32 %v3011, %v3078
    %v3080 = vpop.f32.mrf.mxu0
    %3081 = vmatprep.mubr.f32.mxu0 0.0
    %3082 = vmatmul.mubr.f32.gmra.mxu0 %v2852
    %v3083 = vpop.f32.mrf.mxu0
    %v3084 = vadd.f32 %v3011, %v3083
    %v3085 = vpop.f32.mrf.mxu0
    %3086 = vdwg.mxu0
    %v3088 = vsel %vm352, %v2921, 0
    %v3091 = vsel %vm352, %v3000, 0
    %3093 = vmatprep.subr.mxu0 0.0
    %3094 = vmatpush1.xpose.msra.mxu0 0.0
    %3095 = vmatprep.subr.mxu0 0.0
    %3096 = vmatpush1.xpose.msra.mxu0 0.0
    %3097 = vmatprep.subr.mxu0 0.0
    %3098 = vmatpush1.xpose.msra.mxu0 0.0
    %3099 = vmatprep.subr.mxu0 0.0
    %3100 = vmatpush1.xpose.msra.mxu0 0.0
    %3101 = vmatprep.subr.mxu0 0.0
    %3102 = vmatpush1.xpose.msra.mxu0 0.0
    %3103 = vmatprep.subr.mxu0 0.0
    %3104 = vmatpush1.xpose.msra.mxu0 0.0
    %3105 = vmatprep.subr.mxu0 0.0
    %3106 = vmatpush1.xpose.msra.mxu0 0.0
    %3107 = vmatprep.subr.mxu0 0.0
    %3108 = vmatpush1.xpose.msra.mxu0 0.0
    %3109 = vmatprep.subr.mxu0 0.0
    %3110 = vmatpush1.xpose.msra.mxu0 0.0
    %3111 = vmatprep.subr.mxu0 0.0
    %3112 = vmatpush1.xpose.msra.mxu0 0.0
    %3113 = vmatprep.subr.mxu0 0.0
    %3114 = vmatpush1.xpose.msra.mxu0 0.0
    %3115 = vmatprep.subr.mxu0 0.0
    %3116 = vmatpush1.xpose.msra.mxu0 0.0
    %3117 = vmatprep.subr.mxu0 0.0
    %3118 = vmatpush1.xpose.msra.mxu0 0.0
    %3119 = vmatprep.subr.mxu0 0.0
    %3120 = vmatpush1.xpose.msra.mxu0 0.0
    %3121 = vmatprep.subr.mxu0 0.0
    %3122 = vmatpush1.xpose.msra.mxu0 0.0
    %3123 = vmatprep.subr.mxu0 0.0
    %3124 = vmatpush1.xpose.msra.mxu0 %v3091
    %3125 = vmatprep.subr.mxu0 0.0
    %3126 = vmatpush2.xpose.msra.mxu0 0.0
    %3127 = vmatprep.subr.mxu0 0.0
    %3128 = vmatpush2.xpose.msra.mxu0 0.0
    %3129 = vmatprep.subr.mxu0 0.0
    %3130 = vmatpush2.xpose.msra.mxu0 0.0
    %3131 = vmatprep.subr.mxu0 0.0
    %3132 = vmatpush2.xpose.msra.mxu0 0.0
    %3133 = vmatprep.subr.mxu0 0.0
    %3134 = vmatpush2.xpose.msra.mxu0 0.0
    %3135 = vmatprep.subr.mxu0 0.0
    %3136 = vmatpush2.xpose.msra.mxu0 0.0
    %3137 = vmatprep.subr.mxu0 0.0
    %3138 = vmatpush2.xpose.msra.mxu0 0.0
    %3139 = vmatprep.subr.mxu0 0.0
    %3140 = vmatpush2.xpose.msra.mxu0 0.0
    %3141 = vmatprep.subr.mxu0 0.0
    %3142 = vmatpush2.xpose.msra.mxu0 0.0
    %3143 = vmatprep.subr.mxu0 0.0
    %3144 = vmatpush2.xpose.msra.mxu0 0.0
    %3145 = vmatprep.subr.mxu0 0.0
    %3146 = vmatpush2.xpose.msra.mxu0 0.0
    %3147 = vmatprep.subr.mxu0 0.0
    %3148 = vmatpush2.xpose.msra.mxu0 0.0
    %3149 = vmatprep.subr.mxu0 0.0
    %3150 = vmatpush2.xpose.msra.mxu0 0.0
    %3151 = vmatprep.subr.mxu0 0.0
    %3152 = vmatpush2.xpose.msra.mxu0 0.0
    %3153 = vmatprep.subr.mxu0 0.0
    %3154 = vmatpush2.xpose.msra.mxu0 0.0
    %3155 = vmatprep.subr.mxu0 0.0
    %3156 = vmatpush2.xpose.msra.mxu0 0.0
    %3157 = vmatprep.mubr.f32.mxu0 0.0
    %3158 = vmatmul.mubr.f32.gmra.mxu0 %v3088
    %v3159 = vpop.f32.mrf.mxu0
    %v3160 = vadd.f32 0.0, %v3159
    %v3161 = vpop.f32.mrf.mxu0
    %3162 = vdwg.mxu0
    %v3164 = vsel %vm352, %v2926, 0
    %v3167 = vsel %vm352, %v3005, 0
    %3169 = vmatprep.subr.mxu0 0.0
    %3170 = vmatpush1.xpose.msra.mxu0 0.0
    %3171 = vmatprep.subr.mxu0 0.0
    %3172 = vmatpush1.xpose.msra.mxu0 0.0
    %3173 = vmatprep.subr.mxu0 0.0
    %3174 = vmatpush1.xpose.msra.mxu0 0.0
    %3175 = vmatprep.subr.mxu0 0.0
    %3176 = vmatpush1.xpose.msra.mxu0 0.0
    %3177 = vmatprep.subr.mxu0 0.0
    %3178 = vmatpush1.xpose.msra.mxu0 0.0
    %3179 = vmatprep.subr.mxu0 0.0
    %3180 = vmatpush1.xpose.msra.mxu0 0.0
    %3181 = vmatprep.subr.mxu0 0.0
    %3182 = vmatpush1.xpose.msra.mxu0 0.0
    %3183 = vmatprep.subr.mxu0 0.0
    %3184 = vmatpush1.xpose.msra.mxu0 0.0
    %3185 = vmatprep.subr.mxu0 0.0
    %3186 = vmatpush1.xpose.msra.mxu0 0.0
    %3187 = vmatprep.subr.mxu0 0.0
    %3188 = vmatpush1.xpose.msra.mxu0 0.0
    %3189 = vmatprep.subr.mxu0 0.0
    %3190 = vmatpush1.xpose.msra.mxu0 0.0
    %3191 = vmatprep.subr.mxu0 0.0
    %3192 = vmatpush1.xpose.msra.mxu0 0.0
    %3193 = vmatprep.subr.mxu0 0.0
    %3194 = vmatpush1.xpose.msra.mxu0 0.0
    %3195 = vmatprep.subr.mxu0 0.0
    %3196 = vmatpush1.xpose.msra.mxu0 0.0
    %3197 = vmatprep.subr.mxu0 0.0
    %3198 = vmatpush1.xpose.msra.mxu0 0.0
    %3199 = vmatprep.subr.mxu0 0.0
    %3200 = vmatpush1.xpose.msra.mxu0 %v3167
    %3201 = vmatprep.subr.mxu0 0.0
    %3202 = vmatpush2.xpose.msra.mxu0 0.0
    %3203 = vmatprep.subr.mxu0 0.0
    %3204 = vmatpush2.xpose.msra.mxu0 0.0
    %3205 = vmatprep.subr.mxu0 0.0
    %3206 = vmatpush2.xpose.msra.mxu0 0.0
    %3207 = vmatprep.subr.mxu0 0.0
    %3208 = vmatpush2.xpose.msra.mxu0 0.0
    %3209 = vmatprep.subr.mxu0 0.0
    %3210 = vmatpush2.xpose.msra.mxu0 0.0
    %3211 = vmatprep.subr.mxu0 0.0
    %3212 = vmatpush2.xpose.msra.mxu0 0.0
    %3213 = vmatprep.subr.mxu0 0.0
    %3214 = vmatpush2.xpose.msra.mxu0 0.0
    %3215 = vmatprep.subr.mxu0 0.0
    %3216 = vmatpush2.xpose.msra.mxu0 0.0
    %3217 = vmatprep.subr.mxu0 0.0
    %3218 = vmatpush2.xpose.msra.mxu0 0.0
    %3219 = vmatprep.subr.mxu0 0.0
    %3220 = vmatpush2.xpose.msra.mxu0 0.0
    %3221 = vmatprep.subr.mxu0 0.0
    %3222 = vmatpush2.xpose.msra.mxu0 0.0
    %3223 = vmatprep.subr.mxu0 0.0
    %3224 = vmatpush2.xpose.msra.mxu0 0.0
    %3225 = vmatprep.subr.mxu0 0.0
    %3226 = vmatpush2.xpose.msra.mxu0 0.0
    %3227 = vmatprep.subr.mxu0 0.0
    %3228 = vmatpush2.xpose.msra.mxu0 0.0
    %3229 = vmatprep.subr.mxu0 0.0
    %3230 = vmatpush2.xpose.msra.mxu0 0.0
    %3231 = vmatprep.subr.mxu0 0.0
    %3232 = vmatpush2.xpose.msra.mxu0 0.0
    %3233 = vmatprep.mubr.f32.mxu0 0.0
    %3234 = vmatmul.mubr.f32.gmra.mxu0 %v3164
    %v3235 = vpop.f32.mrf.mxu0
    %v3236 = vadd.f32 0.0, %v3235
    %v3237 = vpop.f32.mrf.mxu0
    %3238 = vdwg.mxu0
    %v3239 = vmul.f32 %v3160, 0.35355338
    %v3240 = vmul.f32 %v3236, 0.35355338
    %v3241 = vadd.f32 %v3239, %v44
    %v3242 = vadd.f32 %v3240, %v44
    %v3243 = vsel %vm352, %v3241, -inf
    %3244 = vmax.xlane.f32.xlu0 %v3243
    %v3245 = vpop.xlane.xlu0 %3244
    %v3246 = vsel %vm352, %v3242, -inf
    %3247 = vmax.xlane.f32.xlu0 %v3246
    %v3248 = vpop.xlane.xlu0 %3247
    %v3249 = vsub.f32 %v3241, %v3245
    %v3250 = vsub.f32 %v3242, %v3248
    %v3251 = vmul.f32 %v3249, 1.442695
    %v3252 = vpow.pop %v3251
    %v3253 = vmul.f32 %v3250, 1.442695
    %v3254 = vpow.pop %v3253
    %v3255 = vsel %vm352, %v3252, 0.0
    %3256 = vadd.xlane.f32.xlu0 %v3255
    %v3257 = vpop.xlane.xlu0 %3256
    %v3258 = vsel %vm352, %v3254, 0.0
    %3259 = vadd.xlane.f32.xlu0 %v3258
    %v3260 = vpop.xlane.xlu0 %3259
    %v3261 = vrcp.pop %v3257
    %v3262 = vrcp.pop %v3260
    %v3263 = vmul.f32 %v3252, %v3261
    %v3264 = vmul.f32 %v3254, %v3262
    %v3266 = vsel %vm352, %v3263, 0
    %3268 = vmatprep.subr.mxu0 0.0
    %3269 = vmatpush1.msra.mxu0 0.0
    %3270 = vmatprep.subr.mxu0 0.0
    %3271 = vmatpush1.msra.mxu0 0.0
    %3272 = vmatprep.subr.mxu0 0.0
    %3273 = vmatpush1.msra.mxu0 0.0
    %3274 = vmatprep.subr.mxu0 0.0
    %3275 = vmatpush1.msra.mxu0 0.0
    %3276 = vmatprep.subr.mxu0 0.0
    %3277 = vmatpush1.msra.mxu0 0.0
    %3278 = vmatprep.subr.mxu0 0.0
    %3279 = vmatpush1.msra.mxu0 0.0
    %3280 = vmatprep.subr.mxu0 0.0
    %3281 = vmatpush1.msra.mxu0 0.0
    %3282 = vmatprep.subr.mxu0 0.0
    %3283 = vmatpush1.msra.mxu0 0.0
    %3284 = vmatprep.subr.mxu0 0.0
    %3285 = vmatpush1.msra.mxu0 0.0
    %3286 = vmatprep.subr.mxu0 0.0
    %3287 = vmatpush1.msra.mxu0 0.0
    %3288 = vmatprep.subr.mxu0 0.0
    %3289 = vmatpush1.msra.mxu0 0.0
    %3290 = vmatprep.subr.mxu0 0.0
    %3291 = vmatpush1.msra.mxu0 0.0
    %3292 = vmatprep.subr.mxu0 0.0
    %3293 = vmatpush1.msra.mxu0 0.0
    %3294 = vmatprep.subr.mxu0 0.0
    %3295 = vmatpush1.msra.mxu0 0.0
    %3296 = vmatprep.subr.mxu0 0.0
    %3297 = vmatpush1.msra.mxu0 0.0
    %3298 = vmatprep.subr.mxu0 0.0
    %3299 = vmatpush1.msra.mxu0 %v3079
    %3300 = vmatprep.subr.mxu0 0.0
    %3301 = vmatpush2.msra.mxu0 0.0
    %3302 = vmatprep.subr.mxu0 0.0
    %3303 = vmatpush2.msra.mxu0 0.0
    %3304 = vmatprep.subr.mxu0 0.0
    %3305 = vmatpush2.msra.mxu0 0.0
    %3306 = vmatprep.subr.mxu0 0.0
    %3307 = vmatpush2.msra.mxu0 0.0
    %3308 = vmatprep.subr.mxu0 0.0
    %3309 = vmatpush2.msra.mxu0 0.0
    %3310 = vmatprep.subr.mxu0 0.0
    %3311 = vmatpush2.msra.mxu0 0.0
    %3312 = vmatprep.subr.mxu0 0.0
    %3313 = vmatpush2.msra.mxu0 0.0
    %3314 = vmatprep.subr.mxu0 0.0
    %3315 = vmatpush2.msra.mxu0 0.0
    %3316 = vmatprep.subr.mxu0 0.0
    %3317 = vmatpush2.msra.mxu0 0.0
    %3318 = vmatprep.subr.mxu0 0.0
    %3319 = vmatpush2.msra.mxu0 0.0
    %3320 = vmatprep.subr.mxu0 0.0
    %3321 = vmatpush2.msra.mxu0 0.0
    %3322 = vmatprep.subr.mxu0 0.0
    %3323 = vmatpush2.msra.mxu0 0.0
    %3324 = vmatprep.subr.mxu0 0.0
    %3325 = vmatpush2.msra.mxu0 0.0
    %3326 = vmatprep.subr.mxu0 0.0
    %3327 = vmatpush2.msra.mxu0 0.0
    %3328 = vmatprep.subr.mxu0 0.0
    %3329 = vmatpush2.msra.mxu0 0.0
    %3330 = vmatprep.subr.mxu0 0.0
    %3331 = vmatpush2.msra.mxu0 0.0
    %3332 = vmatprep.mubr.f32.mxu0 0.0
    %3333 = vmatmul.mubr.f32.gmra.mxu0 %v3266
    %v3334 = vpop.f32.mrf.mxu0
    %v3335 = vadd.f32 0.0, %v3334
    %v3336 = vpop.f32.mrf.mxu0
    %3337 = vdwg.mxu0
    %v3339 = vsel %vm352, %v3264, 0
    %3341 = vmatprep.subr.mxu0 0.0
    %3342 = vmatpush1.msra.mxu0 0.0
    %3343 = vmatprep.subr.mxu0 0.0
    %3344 = vmatpush1.msra.mxu0 0.0
    %3345 = vmatprep.subr.mxu0 0.0
    %3346 = vmatpush1.msra.mxu0 0.0
    %3347 = vmatprep.subr.mxu0 0.0
    %3348 = vmatpush1.msra.mxu0 0.0
    %3349 = vmatprep.subr.mxu0 0.0
    %3350 = vmatpush1.msra.mxu0 0.0
    %3351 = vmatprep.subr.mxu0 0.0
    %3352 = vmatpush1.msra.mxu0 0.0
    %3353 = vmatprep.subr.mxu0 0.0
    %3354 = vmatpush1.msra.mxu0 0.0
    %3355 = vmatprep.subr.mxu0 0.0
    %3356 = vmatpush1.msra.mxu0 0.0
    %3357 = vmatprep.subr.mxu0 0.0
    %3358 = vmatpush1.msra.mxu0 0.0
    %3359 = vmatprep.subr.mxu0 0.0
    %3360 = vmatpush1.msra.mxu0 0.0
    %3361 = vmatprep.subr.mxu0 0.0
    %3362 = vmatpush1.msra.mxu0 0.0
    %3363 = vmatprep.subr.mxu0 0.0
    %3364 = vmatpush1.msra.mxu0 0.0
    %3365 = vmatprep.subr.mxu0 0.0
    %3366 = vmatpush1.msra.mxu0 0.0
    %3367 = vmatprep.subr.mxu0 0.0
    %3368 = vmatpush1.msra.mxu0 0.0
    %3369 = vmatprep.subr.mxu0 0.0
    %3370 = vmatpush1.msra.mxu0 0.0
    %3371 = vmatprep.subr.mxu0 0.0
    %3372 = vmatpush1.msra.mxu0 %v3084
    %3373 = vmatprep.subr.mxu0 0.0
    %3374 = vmatpush2.msra.mxu0 0.0
    %3375 = vmatprep.subr.mxu0 0.0
    %3376 = vmatpush2.msra.mxu0 0.0
    %3377 = vmatprep.subr.mxu0 0.0
    %3378 = vmatpush2.msra.mxu0 0.0
    %3379 = vmatprep.subr.mxu0 0.0
    %3380 = vmatpush2.msra.mxu0 0.0
    %3381 = vmatprep.subr.mxu0 0.0
    %3382 = vmatpush2.msra.mxu0 0.0
    %3383 = vmatprep.subr.mxu0 0.0
    %3384 = vmatpush2.msra.mxu0 0.0
    %3385 = vmatprep.subr.mxu0 0.0
    %3386 = vmatpush2.msra.mxu0 0.0
    %3387 = vmatprep.subr.mxu0 0.0
    %3388 = vmatpush2.msra.mxu0 0.0
    %3389 = vmatprep.subr.mxu0 0.0
    %3390 = vmatpush2.msra.mxu0 0.0
    %3391 = vmatprep.subr.mxu0 0.0
    %3392 = vmatpush2.msra.mxu0 0.0
    %3393 = vmatprep.subr.mxu0 0.0
    %3394 = vmatpush2.msra.mxu0 0.0
    %3395 = vmatprep.subr.mxu0 0.0
    %3396 = vmatpush2.msra.mxu0 0.0
    %3397 = vmatprep.subr.mxu0 0.0
    %3398 = vmatpush2.msra.mxu0 0.0
    %3399 = vmatprep.subr.mxu0 0.0
    %3400 = vmatpush2.msra.mxu0 0.0
    %3401 = vmatprep.subr.mxu0 0.0
    %3402 = vmatpush2.msra.mxu0 0.0
    %3403 = vmatprep.subr.mxu0 0.0
    %3404 = vmatpush2.msra.mxu0 0.0
    %3405 = vmatprep.mubr.f32.mxu0 0.0
    %3406 = vmatmul.mubr.f32.gmra.mxu0 %v3339
    %v3407 = vpop.f32.mrf.mxu0
    %v3408 = vadd.f32 0.0, %v3407
    %v3409 = vpop.f32.mrf.mxu0
    %3410 = vdwg.mxu0
    %s3411 = scalar_lea.vmem %s2, 416
    %v3412 = vld [vmem:[%s3411] sm:$0xff]
    %v3413 = vld [vmem:[%s3411 + $0x8] sm:$0xff]
    %v3414 = vld [vmem:[%s3411 + $0x10] sm:$0xff]
    %v3415 = vld [vmem:[%s3411 + $0x18] sm:$0xff]
    %s3416 = scalar_lea.vmem %s2, 544
    %v3417 = vld [vmem:[%s3416] sm:$0xff]
    %v3418 = vld [vmem:[%s3416 + $0x8] sm:$0xff]
    %v3419 = vld [vmem:[%s3416 + $0x10] sm:$0xff]
    %v3420 = vld [vmem:[%s3416 + $0x18] sm:$0xff]
    %s3421 = scalar_lea.vmem %s2, 672
    %v3422 = vld [vmem:[%s3421] sm:$0xff]
    %v3423 = vld [vmem:[%s3421 + $0x8] sm:$0xff]
    %v3424 = vld [vmem:[%s3421 + $0x10] sm:$0xff]
    %v3425 = vld [vmem:[%s3421 + $0x18] sm:$0xff]
    %v3426 = vld [vmem:[%s4 + $0x45] sm:$0x1]
    %v3427 = vld [vmem:[%s4 + $0x49] sm:$0x1]
    %v3428 = vld [vmem:[%s4 + $0x4d] sm:$0x1]
    %v3429 = vlaneseq
    %v3430 = vshrl.u32 %v3429, 7
    %v3431 = vsub.s32 0, %v3430
    %v3432 = vrot.slane %v3426, %v3431
    %3433 = vmatprep.subr.mxu0 0.0
    %3434 = vmatpush1.msra.mxu0 0.0
    %3435 = vmatprep.subr.mxu0 0.0
    %3436 = vmatpush1.msra.mxu0 0.0
    %3437 = vmatprep.subr.mxu0 0.0
    %3438 = vmatpush1.msra.mxu0 0.0
    %3439 = vmatprep.subr.mxu0 0.0
    %3440 = vmatpush1.msra.mxu0 0.0
    %3441 = vmatprep.subr.mxu0 0.0
    %3442 = vmatpush1.msra.mxu0 0.0
    %3443 = vmatprep.subr.mxu0 0.0
    %3444 = vmatpush1.msra.mxu0 0.0
    %3445 = vmatprep.subr.mxu0 0.0
    %3446 = vmatpush1.msra.mxu0 0.0
    %3447 = vmatprep.subr.mxu0 0.0
    %3448 = vmatpush1.msra.mxu0 0.0
    %3449 = vmatprep.subr.mxu0 0.0
    %3450 = vmatpush1.msra.mxu0 0.0
    %3451 = vmatprep.subr.mxu0 0.0
    %3452 = vmatpush1.msra.mxu0 0.0
    %3453 = vmatprep.subr.mxu0 0.0
    %3454 = vmatpush1.msra.mxu0 0.0
    %3455 = vmatprep.subr.mxu0 0.0
    %3456 = vmatpush1.msra.mxu0 0.0
    %3457 = vmatprep.subr.mxu0 0.0
    %3458 = vmatpush1.msra.mxu0 %v3415
    %3459 = vmatprep.subr.mxu0 0.0
    %3460 = vmatpush1.msra.mxu0 %v3414
    %3461 = vmatprep.subr.mxu0 0.0
    %3462 = vmatpush1.msra.mxu0 %v3413
    %3463 = vmatprep.subr.mxu0 0.0
    %3464 = vmatpush1.msra.mxu0 %v3412
    %3465 = vmatprep.subr.mxu0 0.0
    %3466 = vmatpush2.msra.mxu0 0.0
    %3467 = vmatprep.subr.mxu0 0.0
    %3468 = vmatpush2.msra.mxu0 0.0
    %3469 = vmatprep.subr.mxu0 0.0
    %3470 = vmatpush2.msra.mxu0 0.0
    %3471 = vmatprep.subr.mxu0 0.0
    %3472 = vmatpush2.msra.mxu0 0.0
    %3473 = vmatprep.subr.mxu0 0.0
    %3474 = vmatpush2.msra.mxu0 0.0
    %3475 = vmatprep.subr.mxu0 0.0
    %3476 = vmatpush2.msra.mxu0 0.0
    %3477 = vmatprep.subr.mxu0 0.0
    %3478 = vmatpush2.msra.mxu0 0.0
    %3479 = vmatprep.subr.mxu0 0.0
    %3480 = vmatpush2.msra.mxu0 0.0
    %3481 = vmatprep.subr.mxu0 0.0
    %3482 = vmatpush2.msra.mxu0 0.0
    %3483 = vmatprep.subr.mxu0 0.0
    %3484 = vmatpush2.msra.mxu0 0.0
    %3485 = vmatprep.subr.mxu0 0.0
    %3486 = vmatpush2.msra.mxu0 0.0
    %3487 = vmatprep.subr.mxu0 0.0
    %3488 = vmatpush2.msra.mxu0 0.0
    %3489 = vmatprep.subr.mxu0 0.0
    %3490 = vmatpush2.msra.mxu0 0.0
    %3491 = vmatprep.subr.mxu0 0.0
    %3492 = vmatpush2.msra.mxu0 0.0
    %3493 = vmatprep.subr.mxu0 0.0
    %3494 = vmatpush2.msra.mxu0 0.0
    %3495 = vmatprep.subr.mxu0 0.0
    %3496 = vmatpush2.msra.mxu0 0.0
    %3497 = vmatprep.mubr.f32.mxu0 0.0
    %3498 = vmatmul.mubr.f32.gmra.mxu0 %v2849
    %v3499 = vpop.f32.mrf.mxu0
    %v3500 = vadd.f32 %v3432, %v3499
    %v3501 = vpop.f32.mrf.mxu0
    %3502 = vmatprep.mubr.f32.mxu0 0.0
    %3503 = vmatmul.mubr.f32.gmra.mxu0 %v2852
    %v3504 = vpop.f32.mrf.mxu0
    %v3505 = vadd.f32 %v3432, %v3504
    %v3506 = vpop.f32.mrf.mxu0
    %3507 = vdwg.mxu0
    %v3508 = vlaneseq
    %v3509 = vshrl.u32 %v3508, 7
    %v3510 = vsub.s32 0, %v3509
    %v3511 = vrot.slane %v3427, %v3510
    %3512 = vmatprep.subr.mxu0 0.0
    %3513 = vmatpush1.msra.mxu0 0.0
    %3514 = vmatprep.subr.mxu0 0.0
    %3515 = vmatpush1.msra.mxu0 0.0
    %3516 = vmatprep.subr.mxu0 0.0
    %3517 = vmatpush1.msra.mxu0 0.0
    %3518 = vmatprep.subr.mxu0 0.0
    %3519 = vmatpush1.msra.mxu0 0.0
    %3520 = vmatprep.subr.mxu0 0.0
    %3521 = vmatpush1.msra.mxu0 0.0
    %3522 = vmatprep.subr.mxu0 0.0
    %3523 = vmatpush1.msra.mxu0 0.0
    %3524 = vmatprep.subr.mxu0 0.0
    %3525 = vmatpush1.msra.mxu0 0.0
    %3526 = vmatprep.subr.mxu0 0.0
    %3527 = vmatpush1.msra.mxu0 0.0
    %3528 = vmatprep.subr.mxu0 0.0
    %3529 = vmatpush1.msra.mxu0 0.0
    %3530 = vmatprep.subr.mxu0 0.0
    %3531 = vmatpush1.msra.mxu0 0.0
    %3532 = vmatprep.subr.mxu0 0.0
    %3533 = vmatpush1.msra.mxu0 0.0
    %3534 = vmatprep.subr.mxu0 0.0
    %3535 = vmatpush1.msra.mxu0 0.0
    %3536 = vmatprep.subr.mxu0 0.0
    %3537 = vmatpush1.msra.mxu0 %v3420
    %3538 = vmatprep.subr.mxu0 0.0
    %3539 = vmatpush1.msra.mxu0 %v3419
    %3540 = vmatprep.subr.mxu0 0.0
    %3541 = vmatpush1.msra.mxu0 %v3418
    %3542 = vmatprep.subr.mxu0 0.0
    %3543 = vmatpush1.msra.mxu0 %v3417
    %3544 = vmatprep.subr.mxu0 0.0
    %3545 = vmatpush2.msra.mxu0 0.0
    %3546 = vmatprep.subr.mxu0 0.0
    %3547 = vmatpush2.msra.mxu0 0.0
    %3548 = vmatprep.subr.mxu0 0.0
    %3549 = vmatpush2.msra.mxu0 0.0
    %3550 = vmatprep.subr.mxu0 0.0
    %3551 = vmatpush2.msra.mxu0 0.0
    %3552 = vmatprep.subr.mxu0 0.0
    %3553 = vmatpush2.msra.mxu0 0.0
    %3554 = vmatprep.subr.mxu0 0.0
    %3555 = vmatpush2.msra.mxu0 0.0
    %3556 = vmatprep.subr.mxu0 0.0
    %3557 = vmatpush2.msra.mxu0 0.0
    %3558 = vmatprep.subr.mxu0 0.0
    %3559 = vmatpush2.msra.mxu0 0.0
    %3560 = vmatprep.subr.mxu0 0.0
    %3561 = vmatpush2.msra.mxu0 0.0
    %3562 = vmatprep.subr.mxu0 0.0
    %3563 = vmatpush2.msra.mxu0 0.0
    %3564 = vmatprep.subr.mxu0 0.0
    %3565 = vmatpush2.msra.mxu0 0.0
    %3566 = vmatprep.subr.mxu0 0.0
    %3567 = vmatpush2.msra.mxu0 0.0
    %3568 = vmatprep.subr.mxu0 0.0
    %3569 = vmatpush2.msra.mxu0 0.0
    %3570 = vmatprep.subr.mxu0 0.0
    %3571 = vmatpush2.msra.mxu0 0.0
    %3572 = vmatprep.subr.mxu0 0.0
    %3573 = vmatpush2.msra.mxu0 0.0
    %3574 = vmatprep.subr.mxu0 0.0
    %3575 = vmatpush2.msra.mxu0 0.0
    %3576 = vmatprep.mubr.f32.mxu0 0.0
    %3577 = vmatmul.mubr.f32.gmra.mxu0 %v2849
    %v3578 = vpop.f32.mrf.mxu0
    %v3579 = vadd.f32 %v3511, %v3578
    %v3580 = vpop.f32.mrf.mxu0
    %3581 = vmatprep.mubr.f32.mxu0 0.0
    %3582 = vmatmul.mubr.f32.gmra.mxu0 %v2852
    %v3583 = vpop.f32.mrf.mxu0
    %v3584 = vadd.f32 %v3511, %v3583
    %v3585 = vpop.f32.mrf.mxu0
    %3586 = vdwg.mxu0
    %v3587 = vlaneseq
    %v3588 = vshrl.u32 %v3587, 7
    %v3589 = vsub.s32 0, %v3588
    %v3590 = vrot.slane %v3428, %v3589
    %3591 = vmatprep.subr.mxu0 0.0
    %3592 = vmatpush1.msra.mxu0 0.0
    %3593 = vmatprep.subr.mxu0 0.0
    %3594 = vmatpush1.msra.mxu0 0.0
    %3595 = vmatprep.subr.mxu0 0.0
    %3596 = vmatpush1.msra.mxu0 0.0
    %3597 = vmatprep.subr.mxu0 0.0
    %3598 = vmatpush1.msra.mxu0 0.0
    %3599 = vmatprep.subr.mxu0 0.0
    %3600 = vmatpush1.msra.mxu0 0.0
    %3601 = vmatprep.subr.mxu0 0.0
    %3602 = vmatpush1.msra.mxu0 0.0
    %3603 = vmatprep.subr.mxu0 0.0
    %3604 = vmatpush1.msra.mxu0 0.0
    %3605 = vmatprep.subr.mxu0 0.0
    %3606 = vmatpush1.msra.mxu0 0.0
    %3607 = vmatprep.subr.mxu0 0.0
    %3608 = vmatpush1.msra.mxu0 0.0
    %3609 = vmatprep.subr.mxu0 0.0
    %3610 = vmatpush1.msra.mxu0 0.0
    %3611 = vmatprep.subr.mxu0 0.0
    %3612 = vmatpush1.msra.mxu0 0.0
    %3613 = vmatprep.subr.mxu0 0.0
    %3614 = vmatpush1.msra.mxu0 0.0
    %3615 = vmatprep.subr.mxu0 0.0
    %3616 = vmatpush1.msra.mxu0 %v3425
    %3617 = vmatprep.subr.mxu0 0.0
    %3618 = vmatpush1.msra.mxu0 %v3424
    %3619 = vmatprep.subr.mxu0 0.0
    %3620 = vmatpush1.msra.mxu0 %v3423
    %3621 = vmatprep.subr.mxu0 0.0
    %3622 = vmatpush1.msra.mxu0 %v3422
    %3623 = vmatprep.subr.mxu0 0.0
    %3624 = vmatpush2.msra.mxu0 0.0
    %3625 = vmatprep.subr.mxu0 0.0
    %3626 = vmatpush2.msra.mxu0 0.0
    %3627 = vmatprep.subr.mxu0 0.0
    %3628 = vmatpush2.msra.mxu0 0.0
    %3629 = vmatprep.subr.mxu0 0.0
    %3630 = vmatpush2.msra.mxu0 0.0
    %3631 = vmatprep.subr.mxu0 0.0
    %3632 = vmatpush2.msra.mxu0 0.0
    %3633 = vmatprep.subr.mxu0 0.0
    %3634 = vmatpush2.msra.mxu0 0.0
    %3635 = vmatprep.subr.mxu0 0.0
    %3636 = vmatpush2.msra.mxu0 0.0
    %3637 = vmatprep.subr.mxu0 0.0
    %3638 = vmatpush2.msra.mxu0 0.0
    %3639 = vmatprep.subr.mxu0 0.0
    %3640 = vmatpush2.msra.mxu0 0.0
    %3641 = vmatprep.subr.mxu0 0.0
    %3642 = vmatpush2.msra.mxu0 0.0
    %3643 = vmatprep.subr.mxu0 0.0
    %3644 = vmatpush2.msra.mxu0 0.0
    %3645 = vmatprep.subr.mxu0 0.0
    %3646 = vmatpush2.msra.mxu0 0.0
    %3647 = vmatprep.subr.mxu0 0.0
    %3648 = vmatpush2.msra.mxu0 0.0
    %3649 = vmatprep.subr.mxu0 0.0
    %3650 = vmatpush2.msra.mxu0 0.0
    %3651 = vmatprep.subr.mxu0 0.0
    %3652 = vmatpush2.msra.mxu0 0.0
    %3653 = vmatprep.subr.mxu0 0.0
    %3654 = vmatpush2.msra.mxu0 0.0
    %3655 = vmatprep.mubr.f32.mxu0 0.0
    %3656 = vmatmul.mubr.f32.gmra.mxu0 %v2849
    %v3657 = vpop.f32.mrf.mxu0
    %v3658 = vadd.f32 %v3590, %v3657
    %v3659 = vpop.f32.mrf.mxu0
    %3660 = vmatprep.mubr.f32.mxu0 0.0
    %3661 = vmatmul.mubr.f32.gmra.mxu0 %v2852
    %v3662 = vpop.f32.mrf.mxu0
    %v3663 = vadd.f32 %v3590, %v3662
    %v3664 = vpop.f32.mrf.mxu0
    %3665 = vdwg.mxu0
    %v3667 = vsel %vm352, %v3500, 0
    %v3670 = vsel %vm352, %v3579, 0
    %3672 = vmatprep.subr.mxu0 0.0
    %3673 = vmatpush1.xpose.msra.mxu0 0.0
    %3674 = vmatprep.subr.mxu0 0.0
    %3675 = vmatpush1.xpose.msra.mxu0 0.0
    %3676 = vmatprep.subr.mxu0 0.0
    %3677 = vmatpush1.xpose.msra.mxu0 0.0
    %3678 = vmatprep.subr.mxu0 0.0
    %3679 = vmatpush1.xpose.msra.mxu0 0.0
    %3680 = vmatprep.subr.mxu0 0.0
    %3681 = vmatpush1.xpose.msra.mxu0 0.0
    %3682 = vmatprep.subr.mxu0 0.0
    %3683 = vmatpush1.xpose.msra.mxu0 0.0
    %3684 = vmatprep.subr.mxu0 0.0
    %3685 = vmatpush1.xpose.msra.mxu0 0.0
    %3686 = vmatprep.subr.mxu0 0.0
    %3687 = vmatpush1.xpose.msra.mxu0 0.0
    %3688 = vmatprep.subr.mxu0 0.0
    %3689 = vmatpush1.xpose.msra.mxu0 0.0
    %3690 = vmatprep.subr.mxu0 0.0
    %3691 = vmatpush1.xpose.msra.mxu0 0.0
    %3692 = vmatprep.subr.mxu0 0.0
    %3693 = vmatpush1.xpose.msra.mxu0 0.0
    %3694 = vmatprep.subr.mxu0 0.0
    %3695 = vmatpush1.xpose.msra.mxu0 0.0
    %3696 = vmatprep.subr.mxu0 0.0
    %3697 = vmatpush1.xpose.msra.mxu0 0.0
    %3698 = vmatprep.subr.mxu0 0.0
    %3699 = vmatpush1.xpose.msra.mxu0 0.0
    %3700 = vmatprep.subr.mxu0 0.0
    %3701 = vmatpush1.xpose.msra.mxu0 0.0
    %3702 = vmatprep.subr.mxu0 0.0
    %3703 = vmatpush1.xpose.msra.mxu0 %v3670
    %3704 = vmatprep.subr.mxu0 0.0
    %3705 = vmatpush2.xpose.msra.mxu0 0.0
    %3706 = vmatprep.subr.mxu0 0.0
    %3707 = vmatpush2.xpose.msra.mxu0 0.0
    %3708 = vmatprep.subr.mxu0 0.0
    %3709 = vmatpush2.xpose.msra.mxu0 0.0
    %3710 = vmatprep.subr.mxu0 0.0
    %3711 = vmatpush2.xpose.msra.mxu0 0.0
    %3712 = vmatprep.subr.mxu0 0.0
    %3713 = vmatpush2.xpose.msra.mxu0 0.0
    %3714 = vmatprep.subr.mxu0 0.0
    %3715 = vmatpush2.xpose.msra.mxu0 0.0
    %3716 = vmatprep.subr.mxu0 0.0
    %3717 = vmatpush2.xpose.msra.mxu0 0.0
    %3718 = vmatprep.subr.mxu0 0.0
    %3719 = vmatpush2.xpose.msra.mxu0 0.0
    %3720 = vmatprep.subr.mxu0 0.0
    %3721 = vmatpush2.xpose.msra.mxu0 0.0
    %3722 = vmatprep.subr.mxu0 0.0
    %3723 = vmatpush2.xpose.msra.mxu0 0.0
    %3724 = vmatprep.subr.mxu0 0.0
    %3725 = vmatpush2.xpose.msra.mxu0 0.0
    %3726 = vmatprep.subr.mxu0 0.0
    %3727 = vmatpush2.xpose.msra.mxu0 0.0
    %3728 = vmatprep.subr.mxu0 0.0
    %3729 = vmatpush2.xpose.msra.mxu0 0.0
    %3730 = vmatprep.subr.mxu0 0.0
    %3731 = vmatpush2.xpose.msra.mxu0 0.0
    %3732 = vmatprep.subr.mxu0 0.0
    %3733 = vmatpush2.xpose.msra.mxu0 0.0
    %3734 = vmatprep.subr.mxu0 0.0
    %3735 = vmatpush2.xpose.msra.mxu0 0.0
    %3736 = vmatprep.mubr.f32.mxu0 0.0
    %3737 = vmatmul.mubr.f32.gmra.mxu0 %v3667
    %v3738 = vpop.f32.mrf.mxu0
    %v3739 = vadd.f32 0.0, %v3738
    %v3740 = vpop.f32.mrf.mxu0
    %3741 = vdwg.mxu0
    %v3743 = vsel %vm352, %v3505, 0
    %v3746 = vsel %vm352, %v3584, 0
    %3748 = vmatprep.subr.mxu0 0.0
    %3749 = vmatpush1.xpose.msra.mxu0 0.0
    %3750 = vmatprep.subr.mxu0 0.0
    %3751 = vmatpush1.xpose.msra.mxu0 0.0
    %3752 = vmatprep.subr.mxu0 0.0
    %3753 = vmatpush1.xpose.msra.mxu0 0.0
    %3754 = vmatprep.subr.mxu0 0.0
    %3755 = vmatpush1.xpose.msra.mxu0 0.0
    %3756 = vmatprep.subr.mxu0 0.0
    %3757 = vmatpush1.xpose.msra.mxu0 0.0
    %3758 = vmatprep.subr.mxu0 0.0
    %3759 = vmatpush1.xpose.msra.mxu0 0.0
    %3760 = vmatprep.subr.mxu0 0.0
    %3761 = vmatpush1.xpose.msra.mxu0 0.0
    %3762 = vmatprep.subr.mxu0 0.0
    %3763 = vmatpush1.xpose.msra.mxu0 0.0
    %3764 = vmatprep.subr.mxu0 0.0
    %3765 = vmatpush1.xpose.msra.mxu0 0.0
    %3766 = vmatprep.subr.mxu0 0.0
    %3767 = vmatpush1.xpose.msra.mxu0 0.0
    %3768 = vmatprep.subr.mxu0 0.0
    %3769 = vmatpush1.xpose.msra.mxu0 0.0
    %3770 = vmatprep.subr.mxu0 0.0
    %3771 = vmatpush1.xpose.msra.mxu0 0.0
    %3772 = vmatprep.subr.mxu0 0.0
    %3773 = vmatpush1.xpose.msra.mxu0 0.0
    %3774 = vmatprep.subr.mxu0 0.0
    %3775 = vmatpush1.xpose.msra.mxu0 0.0
    %3776 = vmatprep.subr.mxu0 0.0
    %3777 = vmatpush1.xpose.msra.mxu0 0.0
    %3778 = vmatprep.subr.mxu0 0.0
    %3779 = vmatpush1.xpose.msra.mxu0 %v3746
    %3780 = vmatprep.subr.mxu0 0.0
    %3781 = vmatpush2.xpose.msra.mxu0 0.0
    %3782 = vmatprep.subr.mxu0 0.0
    %3783 = vmatpush2.xpose.msra.mxu0 0.0
    %3784 = vmatprep.subr.mxu0 0.0
    %3785 = vmatpush2.xpose.msra.mxu0 0.0
    %3786 = vmatprep.subr.mxu0 0.0
    %3787 = vmatpush2.xpose.msra.mxu0 0.0
    %3788 = vmatprep.subr.mxu0 0.0
    %3789 = vmatpush2.xpose.msra.mxu0 0.0
    %3790 = vmatprep.subr.mxu0 0.0
    %3791 = vmatpush2.xpose.msra.mxu0 0.0
    %3792 = vmatprep.subr.mxu0 0.0
    %3793 = vmatpush2.xpose.msra.mxu0 0.0
    %3794 = vmatprep.subr.mxu0 0.0
    %3795 = vmatpush2.xpose.msra.mxu0 0.0
    %3796 = vmatprep.subr.mxu0 0.0
    %3797 = vmatpush2.xpose.msra.mxu0 0.0
    %3798 = vmatprep.subr.mxu0 0.0
    %3799 = vmatpush2.xpose.msra.mxu0 0.0
    %3800 = vmatprep.subr.mxu0 0.0
    %3801 = vmatpush2.xpose.msra.mxu0 0.0
    %3802 = vmatprep.subr.mxu0 0.0
    %3803 = vmatpush2.xpose.msra.mxu0 0.0
    %3804 = vmatprep.subr.mxu0 0.0
    %3805 = vmatpush2.xpose.msra.mxu0 0.0
    %3806 = vmatprep.subr.mxu0 0.0
    %3807 = vmatpush2.xpose.msra.mxu0 0.0
    %3808 = vmatprep.subr.mxu0 0.0
    %3809 = vmatpush2.xpose.msra.mxu0 0.0
    %3810 = vmatprep.subr.mxu0 0.0
    %3811 = vmatpush2.xpose.msra.mxu0 0.0
    %3812 = vmatprep.mubr.f32.mxu0 0.0
    %3813 = vmatmul.mubr.f32.gmra.mxu0 %v3743
    %v3814 = vpop.f32.mrf.mxu0
    %v3815 = vadd.f32 0.0, %v3814
    %v3816 = vpop.f32.mrf.mxu0
    %3817 = vdwg.mxu0
    %v3818 = vmul.f32 %v3739, 0.35355338
    %v3819 = vmul.f32 %v3815, 0.35355338
    %v3820 = vadd.f32 %v3818, %v44
    %v3821 = vadd.f32 %v3819, %v44
    %v3822 = vsel %vm352, %v3820, -inf
    %3823 = vmax.xlane.f32.xlu0 %v3822
    %v3824 = vpop.xlane.xlu0 %3823
    %v3825 = vsel %vm352, %v3821, -inf
    %3826 = vmax.xlane.f32.xlu0 %v3825
    %v3827 = vpop.xlane.xlu0 %3826
    %v3828 = vsub.f32 %v3820, %v3824
    %v3829 = vsub.f32 %v3821, %v3827
    %v3830 = vmul.f32 %v3828, 1.442695
    %v3831 = vpow.pop %v3830
    %v3832 = vmul.f32 %v3829, 1.442695
    %v3833 = vpow.pop %v3832
    %v3834 = vsel %vm352, %v3831, 0.0
    %3835 = vadd.xlane.f32.xlu0 %v3834
    %v3836 = vpop.xlane.xlu0 %3835
    %v3837 = vsel %vm352, %v3833, 0.0
    %3838 = vadd.xlane.f32.xlu0 %v3837
    %v3839 = vpop.xlane.xlu0 %3838
    %v3840 = vrcp.pop %v3836
    %v3841 = vrcp.pop %v3839
    %v3842 = vmul.f32 %v3831, %v3840
    %v3843 = vmul.f32 %v3833, %v3841
    %v3845 = vsel %vm352, %v3842, 0
    %3847 = vmatprep.subr.mxu0 0.0
    %3848 = vmatpush1.msra.mxu0 0.0
    %3849 = vmatprep.subr.mxu0 0.0
    %3850 = vmatpush1.msra.mxu0 0.0
    %3851 = vmatprep.subr.mxu0 0.0
    %3852 = vmatpush1.msra.mxu0 0.0
    %3853 = vmatprep.subr.mxu0 0.0
    %3854 = vmatpush1.msra.mxu0 0.0
    %3855 = vmatprep.subr.mxu0 0.0
    %3856 = vmatpush1.msra.mxu0 0.0
    %3857 = vmatprep.subr.mxu0 0.0
    %3858 = vmatpush1.msra.mxu0 0.0
    %3859 = vmatprep.subr.mxu0 0.0
    %3860 = vmatpush1.msra.mxu0 0.0
    %3861 = vmatprep.subr.mxu0 0.0
    %3862 = vmatpush1.msra.mxu0 0.0
    %3863 = vmatprep.subr.mxu0 0.0
    %3864 = vmatpush1.msra.mxu0 0.0
    %3865 = vmatprep.subr.mxu0 0.0
    %3866 = vmatpush1.msra.mxu0 0.0
    %3867 = vmatprep.subr.mxu0 0.0
    %3868 = vmatpush1.msra.mxu0 0.0
    %3869 = vmatprep.subr.mxu0 0.0
    %3870 = vmatpush1.msra.mxu0 0.0
    %3871 = vmatprep.subr.mxu0 0.0
    %3872 = vmatpush1.msra.mxu0 0.0
    %3873 = vmatprep.subr.mxu0 0.0
    %3874 = vmatpush1.msra.mxu0 0.0
    %3875 = vmatprep.subr.mxu0 0.0
    %3876 = vmatpush1.msra.mxu0 0.0
    %3877 = vmatprep.subr.mxu0 0.0
    %3878 = vmatpush1.msra.mxu0 %v3658
    %3879 = vmatprep.subr.mxu0 0.0
    %3880 = vmatpush2.msra.mxu0 0.0
    %3881 = vmatprep.subr.mxu0 0.0
    %3882 = vmatpush2.msra.mxu0 0.0
    %3883 = vmatprep.subr.mxu0 0.0
    %3884 = vmatpush2.msra.mxu0 0.0
    %3885 = vmatprep.subr.mxu0 0.0
    %3886 = vmatpush2.msra.mxu0 0.0
    %3887 = vmatprep.subr.mxu0 0.0
    %3888 = vmatpush2.msra.mxu0 0.0
    %3889 = vmatprep.subr.mxu0 0.0
    %3890 = vmatpush2.msra.mxu0 0.0
    %3891 = vmatprep.subr.mxu0 0.0
    %3892 = vmatpush2.msra.mxu0 0.0
    %3893 = vmatprep.subr.mxu0 0.0
    %3894 = vmatpush2.msra.mxu0 0.0
    %3895 = vmatprep.subr.mxu0 0.0
    %3896 = vmatpush2.msra.mxu0 0.0
    %3897 = vmatprep.subr.mxu0 0.0
    %3898 = vmatpush2.msra.mxu0 0.0
    %3899 = vmatprep.subr.mxu0 0.0
    %3900 = vmatpush2.msra.mxu0 0.0
    %3901 = vmatprep.subr.mxu0 0.0
    %3902 = vmatpush2.msra.mxu0 0.0
    %3903 = vmatprep.subr.mxu0 0.0
    %3904 = vmatpush2.msra.mxu0 0.0
    %3905 = vmatprep.subr.mxu0 0.0
    %3906 = vmatpush2.msra.mxu0 0.0
    %3907 = vmatprep.subr.mxu0 0.0
    %3908 = vmatpush2.msra.mxu0 0.0
    %3909 = vmatprep.subr.mxu0 0.0
    %3910 = vmatpush2.msra.mxu0 0.0
    %3911 = vmatprep.mubr.f32.mxu0 0.0
    %3912 = vmatmul.mubr.f32.gmra.mxu0 %v3845
    %v3913 = vpop.f32.mrf.mxu0
    %v3914 = vadd.f32 0.0, %v3913
    %v3915 = vpop.f32.mrf.mxu0
    %3916 = vdwg.mxu0
    %v3918 = vsel %vm352, %v3843, 0
    %3920 = vmatprep.subr.mxu0 0.0
    %3921 = vmatpush1.msra.mxu0 0.0
    %3922 = vmatprep.subr.mxu0 0.0
    %3923 = vmatpush1.msra.mxu0 0.0
    %3924 = vmatprep.subr.mxu0 0.0
    %3925 = vmatpush1.msra.mxu0 0.0
    %3926 = vmatprep.subr.mxu0 0.0
    %3927 = vmatpush1.msra.mxu0 0.0
    %3928 = vmatprep.subr.mxu0 0.0
    %3929 = vmatpush1.msra.mxu0 0.0
    %3930 = vmatprep.subr.mxu0 0.0
    %3931 = vmatpush1.msra.mxu0 0.0
    %3932 = vmatprep.subr.mxu0 0.0
    %3933 = vmatpush1.msra.mxu0 0.0
    %3934 = vmatprep.subr.mxu0 0.0
    %3935 = vmatpush1.msra.mxu0 0.0
    %3936 = vmatprep.subr.mxu0 0.0
    %3937 = vmatpush1.msra.mxu0 0.0
    %3938 = vmatprep.subr.mxu0 0.0
    %3939 = vmatpush1.msra.mxu0 0.0
    %3940 = vmatprep.subr.mxu0 0.0
    %3941 = vmatpush1.msra.mxu0 0.0
    %3942 = vmatprep.subr.mxu0 0.0
    %3943 = vmatpush1.msra.mxu0 0.0
    %3944 = vmatprep.subr.mxu0 0.0
    %3945 = vmatpush1.msra.mxu0 0.0
    %3946 = vmatprep.subr.mxu0 0.0
    %3947 = vmatpush1.msra.mxu0 0.0
    %3948 = vmatprep.subr.mxu0 0.0
    %3949 = vmatpush1.msra.mxu0 0.0
    %3950 = vmatprep.subr.mxu0 0.0
    %3951 = vmatpush1.msra.mxu0 %v3663
    %3952 = vmatprep.subr.mxu0 0.0
    %3953 = vmatpush2.msra.mxu0 0.0
    %3954 = vmatprep.subr.mxu0 0.0
    %3955 = vmatpush2.msra.mxu0 0.0
    %3956 = vmatprep.subr.mxu0 0.0
    %3957 = vmatpush2.msra.mxu0 0.0
    %3958 = vmatprep.subr.mxu0 0.0
    %3959 = vmatpush2.msra.mxu0 0.0
    %3960 = vmatprep.subr.mxu0 0.0
    %3961 = vmatpush2.msra.mxu0 0.0
    %3962 = vmatprep.subr.mxu0 0.0
    %3963 = vmatpush2.msra.mxu0 0.0
    %3964 = vmatprep.subr.mxu0 0.0
    %3965 = vmatpush2.msra.mxu0 0.0
    %3966 = vmatprep.subr.mxu0 0.0
    %3967 = vmatpush2.msra.mxu0 0.0
    %3968 = vmatprep.subr.mxu0 0.0
    %3969 = vmatpush2.msra.mxu0 0.0
    %3970 = vmatprep.subr.mxu0 0.0
    %3971 = vmatpush2.msra.mxu0 0.0
    %3972 = vmatprep.subr.mxu0 0.0
    %3973 = vmatpush2.msra.mxu0 0.0
    %3974 = vmatprep.subr.mxu0 0.0
    %3975 = vmatpush2.msra.mxu0 0.0
    %3976 = vmatprep.subr.mxu0 0.0
    %3977 = vmatpush2.msra.mxu0 0.0
    %3978 = vmatprep.subr.mxu0 0.0
    %3979 = vmatpush2.msra.mxu0 0.0
    %3980 = vmatprep.subr.mxu0 0.0
    %3981 = vmatpush2.msra.mxu0 0.0
    %3982 = vmatprep.subr.mxu0 0.0
    %3983 = vmatpush2.msra.mxu0 0.0
    %3984 = vmatprep.mubr.f32.mxu0 0.0
    %3985 = vmatmul.mubr.f32.gmra.mxu0 %v3918
    %v3986 = vpop.f32.mrf.mxu0
    %v3987 = vadd.f32 0.0, %v3986
    %v3988 = vpop.f32.mrf.mxu0
    %3989 = vdwg.mxu0
    %s3990 = scalar_lea.vmem %s2, 448
    %v3991 = vld [vmem:[%s3990] sm:$0xff]
    %v3992 = vld [vmem:[%s3990 + $0x8] sm:$0xff]
    %v3993 = vld [vmem:[%s3990 + $0x10] sm:$0xff]
    %v3994 = vld [vmem:[%s3990 + $0x18] sm:$0xff]
    %s3995 = scalar_lea.vmem %s2, 576
    %v3996 = vld [vmem:[%s3995] sm:$0xff]
    %v3997 = vld [vmem:[%s3995 + $0x8] sm:$0xff]
    %v3998 = vld [vmem:[%s3995 + $0x10] sm:$0xff]
    %v3999 = vld [vmem:[%s3995 + $0x18] sm:$0xff]
    %s4000 = scalar_lea.vmem %s2, 704
    %v4001 = vld [vmem:[%s4000] sm:$0xff]
    %v4002 = vld [vmem:[%s4000 + $0x8] sm:$0xff]
    %v4003 = vld [vmem:[%s4000 + $0x10] sm:$0xff]
    %v4004 = vld [vmem:[%s4000 + $0x18] sm:$0xff]
    %v4005 = vld [vmem:[%s4 + $0x46] sm:$0x1]
    %v4006 = vld [vmem:[%s4 + $0x4a] sm:$0x1]
    %v4007 = vld [vmem:[%s4 + $0x4e] sm:$0x1]
    %v4008 = vlaneseq
    %v4009 = vshrl.u32 %v4008, 7
    %v4010 = vsub.s32 0, %v4009
    %v4011 = vrot.slane %v4005, %v4010
    %4012 = vmatprep.subr.mxu0 0.0
    %4013 = vmatpush1.msra.mxu0 0.0
    %4014 = vmatprep.subr.mxu0 0.0
    %4015 = vmatpush1.msra.mxu0 0.0
    %4016 = vmatprep.subr.mxu0 0.0
    %4017 = vmatpush1.msra.mxu0 0.0
    %4018 = vmatprep.subr.mxu0 0.0
    %4019 = vmatpush1.msra.mxu0 0.0
    %4020 = vmatprep.subr.mxu0 0.0
    %4021 = vmatpush1.msra.mxu0 0.0
    %4022 = vmatprep.subr.mxu0 0.0
    %4023 = vmatpush1.msra.mxu0 0.0
    %4024 = vmatprep.subr.mxu0 0.0
    %4025 = vmatpush1.msra.mxu0 0.0
    %4026 = vmatprep.subr.mxu0 0.0
    %4027 = vmatpush1.msra.mxu0 0.0
    %4028 = vmatprep.subr.mxu0 0.0
    %4029 = vmatpush1.msra.mxu0 0.0
    %4030 = vmatprep.subr.mxu0 0.0
    %4031 = vmatpush1.msra.mxu0 0.0
    %4032 = vmatprep.subr.mxu0 0.0
    %4033 = vmatpush1.msra.mxu0 0.0
    %4034 = vmatprep.subr.mxu0 0.0
    %4035 = vmatpush1.msra.mxu0 0.0
    %4036 = vmatprep.subr.mxu0 0.0
    %4037 = vmatpush1.msra.mxu0 %v3994
    %4038 = vmatprep.subr.mxu0 0.0
    %4039 = vmatpush1.msra.mxu0 %v3993
    %4040 = vmatprep.subr.mxu0 0.0
    %4041 = vmatpush1.msra.mxu0 %v3992
    %4042 = vmatprep.subr.mxu0 0.0
    %4043 = vmatpush1.msra.mxu0 %v3991
    %4044 = vmatprep.subr.mxu0 0.0
    %4045 = vmatpush2.msra.mxu0 0.0
    %4046 = vmatprep.subr.mxu0 0.0
    %4047 = vmatpush2.msra.mxu0 0.0
    %4048 = vmatprep.subr.mxu0 0.0
    %4049 = vmatpush2.msra.mxu0 0.0
    %4050 = vmatprep.subr.mxu0 0.0
    %4051 = vmatpush2.msra.mxu0 0.0
    %4052 = vmatprep.subr.mxu0 0.0
    %4053 = vmatpush2.msra.mxu0 0.0
    %4054 = vmatprep.subr.mxu0 0.0
    %4055 = vmatpush2.msra.mxu0 0.0
    %4056 = vmatprep.subr.mxu0 0.0
    %4057 = vmatpush2.msra.mxu0 0.0
    %4058 = vmatprep.subr.mxu0 0.0
    %4059 = vmatpush2.msra.mxu0 0.0
    %4060 = vmatprep.subr.mxu0 0.0
    %4061 = vmatpush2.msra.mxu0 0.0
    %4062 = vmatprep.subr.mxu0 0.0
    %4063 = vmatpush2.msra.mxu0 0.0
    %4064 = vmatprep.subr.mxu0 0.0
    %4065 = vmatpush2.msra.mxu0 0.0
    %4066 = vmatprep.subr.mxu0 0.0
    %4067 = vmatpush2.msra.mxu0 0.0
    %4068 = vmatprep.subr.mxu0 0.0
    %4069 = vmatpush2.msra.mxu0 0.0
    %4070 = vmatprep.subr.mxu0 0.0
    %4071 = vmatpush2.msra.mxu0 0.0
    %4072 = vmatprep.subr.mxu0 0.0
    %4073 = vmatpush2.msra.mxu0 0.0
    %4074 = vmatprep.subr.mxu0 0.0
    %4075 = vmatpush2.msra.mxu0 0.0
    %4076 = vmatprep.mubr.f32.mxu0 0.0
    %4077 = vmatmul.mubr.f32.gmra.mxu0 %v2849
    %v4078 = vpop.f32.mrf.mxu0
    %v4079 = vadd.f32 %v4011, %v4078
    %v4080 = vpop.f32.mrf.mxu0
    %4081 = vmatprep.mubr.f32.mxu0 0.0
    %4082 = vmatmul.mubr.f32.gmra.mxu0 %v2852
    %v4083 = vpop.f32.mrf.mxu0
    %v4084 = vadd.f32 %v4011, %v4083
    %v4085 = vpop.f32.mrf.mxu0
    %4086 = vdwg.mxu0
    %v4087 = vlaneseq
    %v4088 = vshrl.u32 %v4087, 7
    %v4089 = vsub.s32 0, %v4088
    %v4090 = vrot.slane %v4006, %v4089
    %4091 = vmatprep.subr.mxu0 0.0
    %4092 = vmatpush1.msra.mxu0 0.0
    %4093 = vmatprep.subr.mxu0 0.0
    %4094 = vmatpush1.msra.mxu0 0.0
    %4095 = vmatprep.subr.mxu0 0.0
    %4096 = vmatpush1.msra.mxu0 0.0
    %4097 = vmatprep.subr.mxu0 0.0
    %4098 = vmatpush1.msra.mxu0 0.0
    %4099 = vmatprep.subr.mxu0 0.0
    %4100 = vmatpush1.msra.mxu0 0.0
    %4101 = vmatprep.subr.mxu0 0.0
    %4102 = vmatpush1.msra.mxu0 0.0
    %4103 = vmatprep.subr.mxu0 0.0
    %4104 = vmatpush1.msra.mxu0 0.0
    %4105 = vmatprep.subr.mxu0 0.0
    %4106 = vmatpush1.msra.mxu0 0.0
    %4107 = vmatprep.subr.mxu0 0.0
    %4108 = vmatpush1.msra.mxu0 0.0
    %4109 = vmatprep.subr.mxu0 0.0
    %4110 = vmatpush1.msra.mxu0 0.0
    %4111 = vmatprep.subr.mxu0 0.0
    %4112 = vmatpush1.msra.mxu0 0.0
    %4113 = vmatprep.subr.mxu0 0.0
    %4114 = vmatpush1.msra.mxu0 0.0
    %4115 = vmatprep.subr.mxu0 0.0
    %4116 = vmatpush1.msra.mxu0 %v3999
    %4117 = vmatprep.subr.mxu0 0.0
    %4118 = vmatpush1.msra.mxu0 %v3998
    %4119 = vmatprep.subr.mxu0 0.0
    %4120 = vmatpush1.msra.mxu0 %v3997
    %4121 = vmatprep.subr.mxu0 0.0
    %4122 = vmatpush1.msra.mxu0 %v3996
    %4123 = vmatprep.subr.mxu0 0.0
    %4124 = vmatpush2.msra.mxu0 0.0
    %4125 = vmatprep.subr.mxu0 0.0
    %4126 = vmatpush2.msra.mxu0 0.0
    %4127 = vmatprep.subr.mxu0 0.0
    %4128 = vmatpush2.msra.mxu0 0.0
    %4129 = vmatprep.subr.mxu0 0.0
    %4130 = vmatpush2.msra.mxu0 0.0
    %4131 = vmatprep.subr.mxu0 0.0
    %4132 = vmatpush2.msra.mxu0 0.0
    %4133 = vmatprep.subr.mxu0 0.0
    %4134 = vmatpush2.msra.mxu0 0.0
    %4135 = vmatprep.subr.mxu0 0.0
    %4136 = vmatpush2.msra.mxu0 0.0
    %4137 = vmatprep.subr.mxu0 0.0
    %4138 = vmatpush2.msra.mxu0 0.0
    %4139 = vmatprep.subr.mxu0 0.0
    %4140 = vmatpush2.msra.mxu0 0.0
    %4141 = vmatprep.subr.mxu0 0.0
    %4142 = vmatpush2.msra.mxu0 0.0
    %4143 = vmatprep.subr.mxu0 0.0
    %4144 = vmatpush2.msra.mxu0 0.0
    %4145 = vmatprep.subr.mxu0 0.0
    %4146 = vmatpush2.msra.mxu0 0.0
    %4147 = vmatprep.subr.mxu0 0.0
    %4148 = vmatpush2.msra.mxu0 0.0
    %4149 = vmatprep.subr.mxu0 0.0
    %4150 = vmatpush2.msra.mxu0 0.0
    %4151 = vmatprep.subr.mxu0 0.0
    %4152 = vmatpush2.msra.mxu0 0.0
    %4153 = vmatprep.subr.mxu0 0.0
    %4154 = vmatpush2.msra.mxu0 0.0
    %4155 = vmatprep.mubr.f32.mxu0 0.0
    %4156 = vmatmul.mubr.f32.gmra.mxu0 %v2849
    %v4157 = vpop.f32.mrf.mxu0
    %v4158 = vadd.f32 %v4090, %v4157
    %v4159 = vpop.f32.mrf.mxu0
    %4160 = vmatprep.mubr.f32.mxu0 0.0
    %4161 = vmatmul.mubr.f32.gmra.mxu0 %v2852
    %v4162 = vpop.f32.mrf.mxu0
    %v4163 = vadd.f32 %v4090, %v4162
    %v4164 = vpop.f32.mrf.mxu0
    %4165 = vdwg.mxu0
    %v4166 = vlaneseq
    %v4167 = vshrl.u32 %v4166, 7
    %v4168 = vsub.s32 0, %v4167
    %v4169 = vrot.slane %v4007, %v4168
    %4170 = vmatprep.subr.mxu0 0.0
    %4171 = vmatpush1.msra.mxu0 0.0
    %4172 = vmatprep.subr.mxu0 0.0
    %4173 = vmatpush1.msra.mxu0 0.0
    %4174 = vmatprep.subr.mxu0 0.0
    %4175 = vmatpush1.msra.mxu0 0.0
    %4176 = vmatprep.subr.mxu0 0.0
    %4177 = vmatpush1.msra.mxu0 0.0
    %4178 = vmatprep.subr.mxu0 0.0
    %4179 = vmatpush1.msra.mxu0 0.0
    %4180 = vmatprep.subr.mxu0 0.0
    %4181 = vmatpush1.msra.mxu0 0.0
    %4182 = vmatprep.subr.mxu0 0.0
    %4183 = vmatpush1.msra.mxu0 0.0
    %4184 = vmatprep.subr.mxu0 0.0
    %4185 = vmatpush1.msra.mxu0 0.0
    %4186 = vmatprep.subr.mxu0 0.0
    %4187 = vmatpush1.msra.mxu0 0.0
    %4188 = vmatprep.subr.mxu0 0.0
    %4189 = vmatpush1.msra.mxu0 0.0
    %4190 = vmatprep.subr.mxu0 0.0
    %4191 = vmatpush1.msra.mxu0 0.0
    %4192 = vmatprep.subr.mxu0 0.0
    %4193 = vmatpush1.msra.mxu0 0.0
    %4194 = vmatprep.subr.mxu0 0.0
    %4195 = vmatpush1.msra.mxu0 %v4004
    %4196 = vmatprep.subr.mxu0 0.0
    %4197 = vmatpush1.msra.mxu0 %v4003
    %4198 = vmatprep.subr.mxu0 0.0
    %4199 = vmatpush1.msra.mxu0 %v4002
    %4200 = vmatprep.subr.mxu0 0.0
    %4201 = vmatpush1.msra.mxu0 %v4001
    %4202 = vmatprep.subr.mxu0 0.0
    %4203 = vmatpush2.msra.mxu0 0.0
    %4204 = vmatprep.subr.mxu0 0.0
    %4205 = vmatpush2.msra.mxu0 0.0
    %4206 = vmatprep.subr.mxu0 0.0
    %4207 = vmatpush2.msra.mxu0 0.0
    %4208 = vmatprep.subr.mxu0 0.0
    %4209 = vmatpush2.msra.mxu0 0.0
    %4210 = vmatprep.subr.mxu0 0.0
    %4211 = vmatpush2.msra.mxu0 0.0
    %4212 = vmatprep.subr.mxu0 0.0
    %4213 = vmatpush2.msra.mxu0 0.0
    %4214 = vmatprep.subr.mxu0 0.0
    %4215 = vmatpush2.msra.mxu0 0.0
    %4216 = vmatprep.subr.mxu0 0.0
    %4217 = vmatpush2.msra.mxu0 0.0
    %4218 = vmatprep.subr.mxu0 0.0
    %4219 = vmatpush2.msra.mxu0 0.0
    %4220 = vmatprep.subr.mxu0 0.0
    %4221 = vmatpush2.msra.mxu0 0.0
    %4222 = vmatprep.subr.mxu0 0.0
    %4223 = vmatpush2.msra.mxu0 0.0
    %4224 = vmatprep.subr.mxu0 0.0
    %4225 = vmatpush2.msra.mxu0 0.0
    %4226 = vmatprep.subr.mxu0 0.0
    %4227 = vmatpush2.msra.mxu0 0.0
    %4228 = vmatprep.subr.mxu0 0.0
    %4229 = vmatpush2.msra.mxu0 0.0
    %4230 = vmatprep.subr.mxu0 0.0
    %4231 = vmatpush2.msra.mxu0 0.0
    %4232 = vmatprep.subr.mxu0 0.0
    %4233 = vmatpush2.msra.mxu0 0.0
    %4234 = vmatprep.mubr.f32.mxu0 0.0
    %4235 = vmatmul.mubr.f32.gmra.mxu0 %v2849
    %v4236 = vpop.f32.mrf.mxu0
    %v4237 = vadd.f32 %v4169, %v4236
    %v4238 = vpop.f32.mrf.mxu0
    %4239 = vmatprep.mubr.f32.mxu0 0.0
    %4240 = vmatmul.mubr.f32.gmra.mxu0 %v2852
    %v4241 = vpop.f32.mrf.mxu0
    %v4242 = vadd.f32 %v4169, %v4241
    %v4243 = vpop.f32.mrf.mxu0
    %4244 = vdwg.mxu0
    %v4246 = vsel %vm352, %v4079, 0
    %v4249 = vsel %vm352, %v4158, 0
    %4251 = vmatprep.subr.mxu0 0.0
    %4252 = vmatpush1.xpose.msra.mxu0 0.0
    %4253 = vmatprep.subr.mxu0 0.0
    %4254 = vmatpush1.xpose.msra.mxu0 0.0
    %4255 = vmatprep.subr.mxu0 0.0
    %4256 = vmatpush1.xpose.msra.mxu0 0.0
    %4257 = vmatprep.subr.mxu0 0.0
    %4258 = vmatpush1.xpose.msra.mxu0 0.0
    %4259 = vmatprep.subr.mxu0 0.0
    %4260 = vmatpush1.xpose.msra.mxu0 0.0
    %4261 = vmatprep.subr.mxu0 0.0
    %4262 = vmatpush1.xpose.msra.mxu0 0.0
    %4263 = vmatprep.subr.mxu0 0.0
    %4264 = vmatpush1.xpose.msra.mxu0 0.0
    %4265 = vmatprep.subr.mxu0 0.0
    %4266 = vmatpush1.xpose.msra.mxu0 0.0
    %4267 = vmatprep.subr.mxu0 0.0
    %4268 = vmatpush1.xpose.msra.mxu0 0.0
    %4269 = vmatprep.subr.mxu0 0.0
    %4270 = vmatpush1.xpose.msra.mxu0 0.0
    %4271 = vmatprep.subr.mxu0 0.0
    %4272 = vmatpush1.xpose.msra.mxu0 0.0
    %4273 = vmatprep.subr.mxu0 0.0
    %4274 = vmatpush1.xpose.msra.mxu0 0.0
    %4275 = vmatprep.subr.mxu0 0.0
    %4276 = vmatpush1.xpose.msra.mxu0 0.0
    %4277 = vmatprep.subr.mxu0 0.0
    %4278 = vmatpush1.xpose.msra.mxu0 0.0
    %4279 = vmatprep.subr.mxu0 0.0
    %4280 = vmatpush1.xpose.msra.mxu0 0.0
    %4281 = vmatprep.subr.mxu0 0.0
    %4282 = vmatpush1.xpose.msra.mxu0 %v4249
    %4283 = vmatprep.subr.mxu0 0.0
    %4284 = vmatpush2.xpose.msra.mxu0 0.0
    %4285 = vmatprep.subr.mxu0 0.0
    %4286 = vmatpush2.xpose.msra.mxu0 0.0
    %4287 = vmatprep.subr.mxu0 0.0
    %4288 = vmatpush2.xpose.msra.mxu0 0.0
    %4289 = vmatprep.subr.mxu0 0.0
    %4290 = vmatpush2.xpose.msra.mxu0 0.0
    %4291 = vmatprep.subr.mxu0 0.0
    %4292 = vmatpush2.xpose.msra.mxu0 0.0
    %4293 = vmatprep.subr.mxu0 0.0
    %4294 = vmatpush2.xpose.msra.mxu0 0.0
    %4295 = vmatprep.subr.mxu0 0.0
    %4296 = vmatpush2.xpose.msra.mxu0 0.0
    %4297 = vmatprep.subr.mxu0 0.0
    %4298 = vmatpush2.xpose.msra.mxu0 0.0
    %4299 = vmatprep.subr.mxu0 0.0
    %4300 = vmatpush2.xpose.msra.mxu0 0.0
    %4301 = vmatprep.subr.mxu0 0.0
    %4302 = vmatpush2.xpose.msra.mxu0 0.0
    %4303 = vmatprep.subr.mxu0 0.0
    %4304 = vmatpush2.xpose.msra.mxu0 0.0
    %4305 = vmatprep.subr.mxu0 0.0
    %4306 = vmatpush2.xpose.msra.mxu0 0.0
    %4307 = vmatprep.subr.mxu0 0.0
    %4308 = vmatpush2.xpose.msra.mxu0 0.0
    %4309 = vmatprep.subr.mxu0 0.0
    %4310 = vmatpush2.xpose.msra.mxu0 0.0
    %4311 = vmatprep.subr.mxu0 0.0
    %4312 = vmatpush2.xpose.msra.mxu0 0.0
    %4313 = vmatprep.subr.mxu0 0.0
    %4314 = vmatpush2.xpose.msra.mxu0 0.0
    %4315 = vmatprep.mubr.f32.mxu0 0.0
    %4316 = vmatmul.mubr.f32.gmra.mxu0 %v4246
    %v4317 = vpop.f32.mrf.mxu0
    %v4318 = vadd.f32 0.0, %v4317
    %v4319 = vpop.f32.mrf.mxu0
    %4320 = vdwg.mxu0
    %v4322 = vsel %vm352, %v4084, 0
    %v4325 = vsel %vm352, %v4163, 0
    %4327 = vmatprep.subr.mxu0 0.0
    %4328 = vmatpush1.xpose.msra.mxu0 0.0
    %4329 = vmatprep.subr.mxu0 0.0
    %4330 = vmatpush1.xpose.msra.mxu0 0.0
    %4331 = vmatprep.subr.mxu0 0.0
    %4332 = vmatpush1.xpose.msra.mxu0 0.0
    %4333 = vmatprep.subr.mxu0 0.0
    %4334 = vmatpush1.xpose.msra.mxu0 0.0
    %4335 = vmatprep.subr.mxu0 0.0
    %4336 = vmatpush1.xpose.msra.mxu0 0.0
    %4337 = vmatprep.subr.mxu0 0.0
    %4338 = vmatpush1.xpose.msra.mxu0 0.0
    %4339 = vmatprep.subr.mxu0 0.0
    %4340 = vmatpush1.xpose.msra.mxu0 0.0
    %4341 = vmatprep.subr.mxu0 0.0
    %4342 = vmatpush1.xpose.msra.mxu0 0.0
    %4343 = vmatprep.subr.mxu0 0.0
    %4344 = vmatpush1.xpose.msra.mxu0 0.0
    %4345 = vmatprep.subr.mxu0 0.0
    %4346 = vmatpush1.xpose.msra.mxu0 0.0
    %4347 = vmatprep.subr.mxu0 0.0
    %4348 = vmatpush1.xpose.msra.mxu0 0.0
    %4349 = vmatprep.subr.mxu0 0.0
    %4350 = vmatpush1.xpose.msra.mxu0 0.0
    %4351 = vmatprep.subr.mxu0 0.0
    %4352 = vmatpush1.xpose.msra.mxu0 0.0
    %4353 = vmatprep.subr.mxu0 0.0
    %4354 = vmatpush1.xpose.msra.mxu0 0.0
    %4355 = vmatprep.subr.mxu0 0.0
    %4356 = vmatpush1.xpose.msra.mxu0 0.0
    %4357 = vmatprep.subr.mxu0 0.0
    %4358 = vmatpush1.xpose.msra.mxu0 %v4325
    %4359 = vmatprep.subr.mxu0 0.0
    %4360 = vmatpush2.xpose.msra.mxu0 0.0
    %4361 = vmatprep.subr.mxu0 0.0
    %4362 = vmatpush2.xpose.msra.mxu0 0.0
    %4363 = vmatprep.subr.mxu0 0.0
    %4364 = vmatpush2.xpose.msra.mxu0 0.0
    %4365 = vmatprep.subr.mxu0 0.0
    %4366 = vmatpush2.xpose.msra.mxu0 0.0
    %4367 = vmatprep.subr.mxu0 0.0
    %4368 = vmatpush2.xpose.msra.mxu0 0.0
    %4369 = vmatprep.subr.mxu0 0.0
    %4370 = vmatpush2.xpose.msra.mxu0 0.0
    %4371 = vmatprep.subr.mxu0 0.0
    %4372 = vmatpush2.xpose.msra.mxu0 0.0
    %4373 = vmatprep.subr.mxu0 0.0
    %4374 = vmatpush2.xpose.msra.mxu0 0.0
    %4375 = vmatprep.subr.mxu0 0.0
    %4376 = vmatpush2.xpose.msra.mxu0 0.0
    %4377 = vmatprep.subr.mxu0 0.0
    %4378 = vmatpush2.xpose.msra.mxu0 0.0
    %4379 = vmatprep.subr.mxu0 0.0
    %4380 = vmatpush2.xpose.msra.mxu0 0.0
    %4381 = vmatprep.subr.mxu0 0.0
    %4382 = vmatpush2.xpose.msra.mxu0 0.0
    %4383 = vmatprep.subr.mxu0 0.0
    %4384 = vmatpush2.xpose.msra.mxu0 0.0
    %4385 = vmatprep.subr.mxu0 0.0
    %4386 = vmatpush2.xpose.msra.mxu0 0.0
    %4387 = vmatprep.subr.mxu0 0.0
    %4388 = vmatpush2.xpose.msra.mxu0 0.0
    %4389 = vmatprep.subr.mxu0 0.0
    %4390 = vmatpush2.xpose.msra.mxu0 0.0
    %4391 = vmatprep.mubr.f32.mxu0 0.0
    %4392 = vmatmul.mubr.f32.gmra.mxu0 %v4322
    %v4393 = vpop.f32.mrf.mxu0
    %v4394 = vadd.f32 0.0, %v4393
    %v4395 = vpop.f32.mrf.mxu0
    %4396 = vdwg.mxu0
    %v4397 = vmul.f32 %v4318, 0.35355338
    %v4398 = vmul.f32 %v4394, 0.35355338
    %v4399 = vadd.f32 %v4397, %v44
    %v4400 = vadd.f32 %v4398, %v44
    %v4401 = vsel %vm352, %v4399, -inf
    %4402 = vmax.xlane.f32.xlu0 %v4401
    %v4403 = vpop.xlane.xlu0 %4402
    %v4404 = vsel %vm352, %v4400, -inf
    %4405 = vmax.xlane.f32.xlu0 %v4404
    %v4406 = vpop.xlane.xlu0 %4405
    %v4407 = vsub.f32 %v4399, %v4403
    %v4408 = vsub.f32 %v4400, %v4406
    %v4409 = vmul.f32 %v4407, 1.442695
    %v4410 = vpow.pop %v4409
    %v4411 = vmul.f32 %v4408, 1.442695
    %v4412 = vpow.pop %v4411
    %v4413 = vsel %vm352, %v4410, 0.0
    %4414 = vadd.xlane.f32.xlu0 %v4413
    %v4415 = vpop.xlane.xlu0 %4414
    %v4416 = vsel %vm352, %v4412, 0.0
    %4417 = vadd.xlane.f32.xlu0 %v4416
    %v4418 = vpop.xlane.xlu0 %4417
    %v4419 = vrcp.pop %v4415
    %v4420 = vrcp.pop %v4418
    %v4421 = vmul.f32 %v4410, %v4419
    %v4422 = vmul.f32 %v4412, %v4420
    %v4424 = vsel %vm352, %v4421, 0
    %4426 = vmatprep.subr.mxu0 0.0
    %4427 = vmatpush1.msra.mxu0 0.0
    %4428 = vmatprep.subr.mxu0 0.0
    %4429 = vmatpush1.msra.mxu0 0.0
    %4430 = vmatprep.subr.mxu0 0.0
    %4431 = vmatpush1.msra.mxu0 0.0
    %4432 = vmatprep.subr.mxu0 0.0
    %4433 = vmatpush1.msra.mxu0 0.0
    %4434 = vmatprep.subr.mxu0 0.0
    %4435 = vmatpush1.msra.mxu0 0.0
    %4436 = vmatprep.subr.mxu0 0.0
    %4437 = vmatpush1.msra.mxu0 0.0
    %4438 = vmatprep.subr.mxu0 0.0
    %4439 = vmatpush1.msra.mxu0 0.0
    %4440 = vmatprep.subr.mxu0 0.0
    %4441 = vmatpush1.msra.mxu0 0.0
    %4442 = vmatprep.subr.mxu0 0.0
    %4443 = vmatpush1.msra.mxu0 0.0
    %4444 = vmatprep.subr.mxu0 0.0
    %4445 = vmatpush1.msra.mxu0 0.0
    %4446 = vmatprep.subr.mxu0 0.0
    %4447 = vmatpush1.msra.mxu0 0.0
    %4448 = vmatprep.subr.mxu0 0.0
    %4449 = vmatpush1.msra.mxu0 0.0
    %4450 = vmatprep.subr.mxu0 0.0
    %4451 = vmatpush1.msra.mxu0 0.0
    %4452 = vmatprep.subr.mxu0 0.0
    %4453 = vmatpush1.msra.mxu0 0.0
    %4454 = vmatprep.subr.mxu0 0.0
    %4455 = vmatpush1.msra.mxu0 0.0
    %4456 = vmatprep.subr.mxu0 0.0
    %4457 = vmatpush1.msra.mxu0 %v4237
    %4458 = vmatprep.subr.mxu0 0.0
    %4459 = vmatpush2.msra.mxu0 0.0
    %4460 = vmatprep.subr.mxu0 0.0
    %4461 = vmatpush2.msra.mxu0 0.0
    %4462 = vmatprep.subr.mxu0 0.0
    %4463 = vmatpush2.msra.mxu0 0.0
    %4464 = vmatprep.subr.mxu0 0.0
    %4465 = vmatpush2.msra.mxu0 0.0
    %4466 = vmatprep.subr.mxu0 0.0
    %4467 = vmatpush2.msra.mxu0 0.0
    %4468 = vmatprep.subr.mxu0 0.0
    %4469 = vmatpush2.msra.mxu0 0.0
    %4470 = vmatprep.subr.mxu0 0.0
    %4471 = vmatpush2.msra.mxu0 0.0
    %4472 = vmatprep.subr.mxu0 0.0
    %4473 = vmatpush2.msra.mxu0 0.0
    %4474 = vmatprep.subr.mxu0 0.0
    %4475 = vmatpush2.msra.mxu0 0.0
    %4476 = vmatprep.subr.mxu0 0.0
    %4477 = vmatpush2.msra.mxu0 0.0
    %4478 = vmatprep.subr.mxu0 0.0
    %4479 = vmatpush2.msra.mxu0 0.0
    %4480 = vmatprep.subr.mxu0 0.0
    %4481 = vmatpush2.msra.mxu0 0.0
    %4482 = vmatprep.subr.mxu0 0.0
    %4483 = vmatpush2.msra.mxu0 0.0
    %4484 = vmatprep.subr.mxu0 0.0
    %4485 = vmatpush2.msra.mxu0 0.0
    %4486 = vmatprep.subr.mxu0 0.0
    %4487 = vmatpush2.msra.mxu0 0.0
    %4488 = vmatprep.subr.mxu0 0.0
    %4489 = vmatpush2.msra.mxu0 0.0
    %4490 = vmatprep.mubr.f32.mxu0 0.0
    %4491 = vmatmul.mubr.f32.gmra.mxu0 %v4424
    %v4492 = vpop.f32.mrf.mxu0
    %v4493 = vadd.f32 0.0, %v4492
    %v4494 = vpop.f32.mrf.mxu0
    %4495 = vdwg.mxu0
    %v4497 = vsel %vm352, %v4422, 0
    %4499 = vmatprep.subr.mxu0 0.0
    %4500 = vmatpush1.msra.mxu0 0.0
    %4501 = vmatprep.subr.mxu0 0.0
    %4502 = vmatpush1.msra.mxu0 0.0
    %4503 = vmatprep.subr.mxu0 0.0
    %4504 = vmatpush1.msra.mxu0 0.0
    %4505 = vmatprep.subr.mxu0 0.0
    %4506 = vmatpush1.msra.mxu0 0.0
    %4507 = vmatprep.subr.mxu0 0.0
    %4508 = vmatpush1.msra.mxu0 0.0
    %4509 = vmatprep.subr.mxu0 0.0
    %4510 = vmatpush1.msra.mxu0 0.0
    %4511 = vmatprep.subr.mxu0 0.0
    %4512 = vmatpush1.msra.mxu0 0.0
    %4513 = vmatprep.subr.mxu0 0.0
    %4514 = vmatpush1.msra.mxu0 0.0
    %4515 = vmatprep.subr.mxu0 0.0
    %4516 = vmatpush1.msra.mxu0 0.0
    %4517 = vmatprep.subr.mxu0 0.0
    %4518 = vmatpush1.msra.mxu0 0.0
    %4519 = vmatprep.subr.mxu0 0.0
    %4520 = vmatpush1.msra.mxu0 0.0
    %4521 = vmatprep.subr.mxu0 0.0
    %4522 = vmatpush1.msra.mxu0 0.0
    %4523 = vmatprep.subr.mxu0 0.0
    %4524 = vmatpush1.msra.mxu0 0.0
    %4525 = vmatprep.subr.mxu0 0.0
    %4526 = vmatpush1.msra.mxu0 0.0
    %4527 = vmatprep.subr.mxu0 0.0
    %4528 = vmatpush1.msra.mxu0 0.0
    %4529 = vmatprep.subr.mxu0 0.0
    %4530 = vmatpush1.msra.mxu0 %v4242
    %4531 = vmatprep.subr.mxu0 0.0
    %4532 = vmatpush2.msra.mxu0 0.0
    %4533 = vmatprep.subr.mxu0 0.0
    %4534 = vmatpush2.msra.mxu0 0.0
    %4535 = vmatprep.subr.mxu0 0.0
    %4536 = vmatpush2.msra.mxu0 0.0
    %4537 = vmatprep.subr.mxu0 0.0
    %4538 = vmatpush2.msra.mxu0 0.0
    %4539 = vmatprep.subr.mxu0 0.0
    %4540 = vmatpush2.msra.mxu0 0.0
    %4541 = vmatprep.subr.mxu0 0.0
    %4542 = vmatpush2.msra.mxu0 0.0
    %4543 = vmatprep.subr.mxu0 0.0
    %4544 = vmatpush2.msra.mxu0 0.0
    %4545 = vmatprep.subr.mxu0 0.0
    %4546 = vmatpush2.msra.mxu0 0.0
    %4547 = vmatprep.subr.mxu0 0.0
    %4548 = vmatpush2.msra.mxu0 0.0
    %4549 = vmatprep.subr.mxu0 0.0
    %4550 = vmatpush2.msra.mxu0 0.0
    %4551 = vmatprep.subr.mxu0 0.0
    %4552 = vmatpush2.msra.mxu0 0.0
    %4553 = vmatprep.subr.mxu0 0.0
    %4554 = vmatpush2.msra.mxu0 0.0
    %4555 = vmatprep.subr.mxu0 0.0
    %4556 = vmatpush2.msra.mxu0 0.0
    %4557 = vmatprep.subr.mxu0 0.0
    %4558 = vmatpush2.msra.mxu0 0.0
    %4559 = vmatprep.subr.mxu0 0.0
    %4560 = vmatpush2.msra.mxu0 0.0
    %4561 = vmatprep.subr.mxu0 0.0
    %4562 = vmatpush2.msra.mxu0 0.0
    %4563 = vmatprep.mubr.f32.mxu0 0.0
    %4564 = vmatmul.mubr.f32.gmra.mxu0 %v4497
    %v4565 = vpop.f32.mrf.mxu0
    %v4566 = vadd.f32 0.0, %v4565
    %v4567 = vpop.f32.mrf.mxu0
    %4568 = vdwg.mxu0
    %s4569 = scalar_lea.vmem %s2, 480
    %v4570 = vld [vmem:[%s4569] sm:$0xff]
    %v4571 = vld [vmem:[%s4569 + $0x8] sm:$0xff]
    %v4572 = vld [vmem:[%s4569 + $0x10] sm:$0xff]
    %v4573 = vld [vmem:[%s4569 + $0x18] sm:$0xff]
    %s4574 = scalar_lea.vmem %s2, 608
    %v4575 = vld [vmem:[%s4574] sm:$0xff]
    %v4576 = vld [vmem:[%s4574 + $0x8] sm:$0xff]
    %v4577 = vld [vmem:[%s4574 + $0x10] sm:$0xff]
    %v4578 = vld [vmem:[%s4574 + $0x18] sm:$0xff]
    %s4579 = scalar_lea.vmem %s2, 736
    %v4580 = vld [vmem:[%s4579] sm:$0xff]
    %v4581 = vld [vmem:[%s4579 + $0x8] sm:$0xff]
    %v4582 = vld [vmem:[%s4579 + $0x10] sm:$0xff]
    %v4583 = vld [vmem:[%s4579 + $0x18] sm:$0xff]
    %v4584 = vld [vmem:[%s4 + $0x47] sm:$0x1]
    %v4585 = vld [vmem:[%s4 + $0x4b] sm:$0x1]
    %v4586 = vld [vmem:[%s4 + $0x4f] sm:$0x1]
    %v4587 = vlaneseq
    %v4588 = vshrl.u32 %v4587, 7
    %v4589 = vsub.s32 0, %v4588
    %v4590 = vrot.slane %v4584, %v4589
    %4591 = vmatprep.subr.mxu0 0.0
    %4592 = vmatpush1.msra.mxu0 0.0
    %4593 = vmatprep.subr.mxu0 0.0
    %4594 = vmatpush1.msra.mxu0 0.0
    %4595 = vmatprep.subr.mxu0 0.0
    %4596 = vmatpush1.msra.mxu0 0.0
    %4597 = vmatprep.subr.mxu0 0.0
    %4598 = vmatpush1.msra.mxu0 0.0
    %4599 = vmatprep.subr.mxu0 0.0
    %4600 = vmatpush1.msra.mxu0 0.0
    %4601 = vmatprep.subr.mxu0 0.0
    %4602 = vmatpush1.msra.mxu0 0.0
    %4603 = vmatprep.subr.mxu0 0.0
    %4604 = vmatpush1.msra.mxu0 0.0
    %4605 = vmatprep.subr.mxu0 0.0
    %4606 = vmatpush1.msra.mxu0 0.0
    %4607 = vmatprep.subr.mxu0 0.0
    %4608 = vmatpush1.msra.mxu0 0.0
    %4609 = vmatprep.subr.mxu0 0.0
    %4610 = vmatpush1.msra.mxu0 0.0
    %4611 = vmatprep.subr.mxu0 0.0
    %4612 = vmatpush1.msra.mxu0 0.0
    %4613 = vmatprep.subr.mxu0 0.0
    %4614 = vmatpush1.msra.mxu0 0.0
    %4615 = vmatprep.subr.mxu0 0.0
    %4616 = vmatpush1.msra.mxu0 %v4573
    %4617 = vmatprep.subr.mxu0 0.0
    %4618 = vmatpush1.msra.mxu0 %v4572
    %4619 = vmatprep.subr.mxu0 0.0
    %4620 = vmatpush1.msra.mxu0 %v4571
    %4621 = vmatprep.subr.mxu0 0.0
    %4622 = vmatpush1.msra.mxu0 %v4570
    %4623 = vmatprep.subr.mxu0 0.0
    %4624 = vmatpush2.msra.mxu0 0.0
    %4625 = vmatprep.subr.mxu0 0.0
    %4626 = vmatpush2.msra.mxu0 0.0
    %4627 = vmatprep.subr.mxu0 0.0
    %4628 = vmatpush2.msra.mxu0 0.0
    %4629 = vmatprep.subr.mxu0 0.0
    %4630 = vmatpush2.msra.mxu0 0.0
    %4631 = vmatprep.subr.mxu0 0.0
    %4632 = vmatpush2.msra.mxu0 0.0
    %4633 = vmatprep.subr.mxu0 0.0
    %4634 = vmatpush2.msra.mxu0 0.0
    %4635 = vmatprep.subr.mxu0 0.0
    %4636 = vmatpush2.msra.mxu0 0.0
    %4637 = vmatprep.subr.mxu0 0.0
    %4638 = vmatpush2.msra.mxu0 0.0
    %4639 = vmatprep.subr.mxu0 0.0
    %4640 = vmatpush2.msra.mxu0 0.0
    %4641 = vmatprep.subr.mxu0 0.0
    %4642 = vmatpush2.msra.mxu0 0.0
    %4643 = vmatprep.subr.mxu0 0.0
    %4644 = vmatpush2.msra.mxu0 0.0
    %4645 = vmatprep.subr.mxu0 0.0
    %4646 = vmatpush2.msra.mxu0 0.0
    %4647 = vmatprep.subr.mxu0 0.0
    %4648 = vmatpush2.msra.mxu0 0.0
    %4649 = vmatprep.subr.mxu0 0.0
    %4650 = vmatpush2.msra.mxu0 0.0
    %4651 = vmatprep.subr.mxu0 0.0
    %4652 = vmatpush2.msra.mxu0 0.0
    %4653 = vmatprep.subr.mxu0 0.0
    %4654 = vmatpush2.msra.mxu0 0.0
    %4655 = vmatprep.mubr.f32.mxu0 0.0
    %4656 = vmatmul.mubr.f32.gmra.mxu0 %v2849
    %v4657 = vpop.f32.mrf.mxu0
    %v4658 = vadd.f32 %v4590, %v4657
    %v4659 = vpop.f32.mrf.mxu0
    %4660 = vmatprep.mubr.f32.mxu0 0.0
    %4661 = vmatmul.mubr.f32.gmra.mxu0 %v2852
    %v4662 = vpop.f32.mrf.mxu0
    %v4663 = vadd.f32 %v4590, %v4662
    %v4664 = vpop.f32.mrf.mxu0
    %4665 = vdwg.mxu0
    %v4666 = vlaneseq
    %v4667 = vshrl.u32 %v4666, 7
    %v4668 = vsub.s32 0, %v4667
    %v4669 = vrot.slane %v4585, %v4668
    %4670 = vmatprep.subr.mxu0 0.0
    %4671 = vmatpush1.msra.mxu0 0.0
    %4672 = vmatprep.subr.mxu0 0.0
    %4673 = vmatpush1.msra.mxu0 0.0
    %4674 = vmatprep.subr.mxu0 0.0
    %4675 = vmatpush1.msra.mxu0 0.0
    %4676 = vmatprep.subr.mxu0 0.0
    %4677 = vmatpush1.msra.mxu0 0.0
    %4678 = vmatprep.subr.mxu0 0.0
    %4679 = vmatpush1.msra.mxu0 0.0
    %4680 = vmatprep.subr.mxu0 0.0
    %4681 = vmatpush1.msra.mxu0 0.0
    %4682 = vmatprep.subr.mxu0 0.0
    %4683 = vmatpush1.msra.mxu0 0.0
    %4684 = vmatprep.subr.mxu0 0.0
    %4685 = vmatpush1.msra.mxu0 0.0
    %4686 = vmatprep.subr.mxu0 0.0
    %4687 = vmatpush1.msra.mxu0 0.0
    %4688 = vmatprep.subr.mxu0 0.0
    %4689 = vmatpush1.msra.mxu0 0.0
    %4690 = vmatprep.subr.mxu0 0.0
    %4691 = vmatpush1.msra.mxu0 0.0
    %4692 = vmatprep.subr.mxu0 0.0
    %4693 = vmatpush1.msra.mxu0 0.0
    %4694 = vmatprep.subr.mxu0 0.0
    %4695 = vmatpush1.msra.mxu0 %v4578
    %4696 = vmatprep.subr.mxu0 0.0
    %4697 = vmatpush1.msra.mxu0 %v4577
    %4698 = vmatprep.subr.mxu0 0.0
    %4699 = vmatpush1.msra.mxu0 %v4576
    %4700 = vmatprep.subr.mxu0 0.0
    %4701 = vmatpush1.msra.mxu0 %v4575
    %4702 = vmatprep.subr.mxu0 0.0
    %4703 = vmatpush2.msra.mxu0 0.0
    %4704 = vmatprep.subr.mxu0 0.0
    %4705 = vmatpush2.msra.mxu0 0.0
    %4706 = vmatprep.subr.mxu0 0.0
    %4707 = vmatpush2.msra.mxu0 0.0
    %4708 = vmatprep.subr.mxu0 0.0
    %4709 = vmatpush2.msra.mxu0 0.0
    %4710 = vmatprep.subr.mxu0 0.0
    %4711 = vmatpush2.msra.mxu0 0.0
    %4712 = vmatprep.subr.mxu0 0.0
    %4713 = vmatpush2.msra.mxu0 0.0
    %4714 = vmatprep.subr.mxu0 0.0
    %4715 = vmatpush2.msra.mxu0 0.0
    %4716 = vmatprep.subr.mxu0 0.0
    %4717 = vmatpush2.msra.mxu0 0.0
    %4718 = vmatprep.subr.mxu0 0.0
    %4719 = vmatpush2.msra.mxu0 0.0
    %4720 = vmatprep.subr.mxu0 0.0
    %4721 = vmatpush2.msra.mxu0 0.0
    %4722 = vmatprep.subr.mxu0 0.0
    %4723 = vmatpush2.msra.mxu0 0.0
    %4724 = vmatprep.subr.mxu0 0.0
    %4725 = vmatpush2.msra.mxu0 0.0
    %4726 = vmatprep.subr.mxu0 0.0
    %4727 = vmatpush2.msra.mxu0 0.0
    %4728 = vmatprep.subr.mxu0 0.0
    %4729 = vmatpush2.msra.mxu0 0.0
    %4730 = vmatprep.subr.mxu0 0.0
    %4731 = vmatpush2.msra.mxu0 0.0
    %4732 = vmatprep.subr.mxu0 0.0
    %4733 = vmatpush2.msra.mxu0 0.0
    %4734 = vmatprep.mubr.f32.mxu0 0.0
    %4735 = vmatmul.mubr.f32.gmra.mxu0 %v2849
    %v4736 = vpop.f32.mrf.mxu0
    %v4737 = vadd.f32 %v4669, %v4736
    %v4738 = vpop.f32.mrf.mxu0
    %4739 = vmatprep.mubr.f32.mxu0 0.0
    %4740 = vmatmul.mubr.f32.gmra.mxu0 %v2852
    %v4741 = vpop.f32.mrf.mxu0
    %v4742 = vadd.f32 %v4669, %v4741
    %v4743 = vpop.f32.mrf.mxu0
    %4744 = vdwg.mxu0
    %v4745 = vlaneseq
    %v4746 = vshrl.u32 %v4745, 7
    %v4747 = vsub.s32 0, %v4746
    %v4748 = vrot.slane %v4586, %v4747
    %4749 = vmatprep.subr.mxu0 0.0
    %4750 = vmatpush1.msra.mxu0 0.0
    %4751 = vmatprep.subr.mxu0 0.0
    %4752 = vmatpush1.msra.mxu0 0.0
    %4753 = vmatprep.subr.mxu0 0.0
    %4754 = vmatpush1.msra.mxu0 0.0
    %4755 = vmatprep.subr.mxu0 0.0
    %4756 = vmatpush1.msra.mxu0 0.0
    %4757 = vmatprep.subr.mxu0 0.0
    %4758 = vmatpush1.msra.mxu0 0.0
    %4759 = vmatprep.subr.mxu0 0.0
    %4760 = vmatpush1.msra.mxu0 0.0
    %4761 = vmatprep.subr.mxu0 0.0
    %4762 = vmatpush1.msra.mxu0 0.0
    %4763 = vmatprep.subr.mxu0 0.0
    %4764 = vmatpush1.msra.mxu0 0.0
    %4765 = vmatprep.subr.mxu0 0.0
    %4766 = vmatpush1.msra.mxu0 0.0
    %4767 = vmatprep.subr.mxu0 0.0
    %4768 = vmatpush1.msra.mxu0 0.0
    %4769 = vmatprep.subr.mxu0 0.0
    %4770 = vmatpush1.msra.mxu0 0.0
    %4771 = vmatprep.subr.mxu0 0.0
    %4772 = vmatpush1.msra.mxu0 0.0
    %4773 = vmatprep.subr.mxu0 0.0
    %4774 = vmatpush1.msra.mxu0 %v4583
    %4775 = vmatprep.subr.mxu0 0.0
    %4776 = vmatpush1.msra.mxu0 %v4582
    %4777 = vmatprep.subr.mxu0 0.0
    %4778 = vmatpush1.msra.mxu0 %v4581
    %4779 = vmatprep.subr.mxu0 0.0
    %4780 = vmatpush1.msra.mxu0 %v4580
    %4781 = vmatprep.subr.mxu0 0.0
    %4782 = vmatpush2.msra.mxu0 0.0
    %4783 = vmatprep.subr.mxu0 0.0
    %4784 = vmatpush2.msra.mxu0 0.0
    %4785 = vmatprep.subr.mxu0 0.0
    %4786 = vmatpush2.msra.mxu0 0.0
    %4787 = vmatprep.subr.mxu0 0.0
    %4788 = vmatpush2.msra.mxu0 0.0
    %4789 = vmatprep.subr.mxu0 0.0
    %4790 = vmatpush2.msra.mxu0 0.0
    %4791 = vmatprep.subr.mxu0 0.0
    %4792 = vmatpush2.msra.mxu0 0.0
    %4793 = vmatprep.subr.mxu0 0.0
    %4794 = vmatpush2.msra.mxu0 0.0
    %4795 = vmatprep.subr.mxu0 0.0
    %4796 = vmatpush2.msra.mxu0 0.0
    %4797 = vmatprep.subr.mxu0 0.0
    %4798 = vmatpush2.msra.mxu0 0.0
    %4799 = vmatprep.subr.mxu0 0.0
    %4800 = vmatpush2.msra.mxu0 0.0
    %4801 = vmatprep.subr.mxu0 0.0
    %4802 = vmatpush2.msra.mxu0 0.0
    %4803 = vmatprep.subr.mxu0 0.0
    %4804 = vmatpush2.msra.mxu0 0.0
    %4805 = vmatprep.subr.mxu0 0.0
    %4806 = vmatpush2.msra.mxu0 0.0
    %4807 = vmatprep.subr.mxu0 0.0
    %4808 = vmatpush2.msra.mxu0 0.0
    %4809 = vmatprep.subr.mxu0 0.0
    %4810 = vmatpush2.msra.mxu0 0.0
    %4811 = vmatprep.subr.mxu0 0.0
    %4812 = vmatpush2.msra.mxu0 0.0
    %4813 = vmatprep.mubr.f32.mxu0 0.0
    %4814 = vmatmul.mubr.f32.gmra.mxu0 %v2849
    %v4815 = vpop.f32.mrf.mxu0
    %v4816 = vadd.f32 %v4748, %v4815
    %v4817 = vpop.f32.mrf.mxu0
    %4818 = vmatprep.mubr.f32.mxu0 0.0
    %4819 = vmatmul.mubr.f32.gmra.mxu0 %v2852
    %v4820 = vpop.f32.mrf.mxu0
    %v4821 = vadd.f32 %v4748, %v4820
    %v4822 = vpop.f32.mrf.mxu0
    %4823 = vdwg.mxu0
    %v4825 = vsel %vm352, %v4658, 0
    %v4828 = vsel %vm352, %v4737, 0
    %4830 = vmatprep.subr.mxu0 0.0
    %4831 = vmatpush1.xpose.msra.mxu0 0.0
    %4832 = vmatprep.subr.mxu0 0.0
    %4833 = vmatpush1.xpose.msra.mxu0 0.0
    %4834 = vmatprep.subr.mxu0 0.0
    %4835 = vmatpush1.xpose.msra.mxu0 0.0
    %4836 = vmatprep.subr.mxu0 0.0
    %4837 = vmatpush1.xpose.msra.mxu0 0.0
    %4838 = vmatprep.subr.mxu0 0.0
    %4839 = vmatpush1.xpose.msra.mxu0 0.0
    %4840 = vmatprep.subr.mxu0 0.0
    %4841 = vmatpush1.xpose.msra.mxu0 0.0
    %4842 = vmatprep.subr.mxu0 0.0
    %4843 = vmatpush1.xpose.msra.mxu0 0.0
    %4844 = vmatprep.subr.mxu0 0.0
    %4845 = vmatpush1.xpose.msra.mxu0 0.0
    %4846 = vmatprep.subr.mxu0 0.0
    %4847 = vmatpush1.xpose.msra.mxu0 0.0
    %4848 = vmatprep.subr.mxu0 0.0
    %4849 = vmatpush1.xpose.msra.mxu0 0.0
    %4850 = vmatprep.subr.mxu0 0.0
    %4851 = vmatpush1.xpose.msra.mxu0 0.0
    %4852 = vmatprep.subr.mxu0 0.0
    %4853 = vmatpush1.xpose.msra.mxu0 0.0
    %4854 = vmatprep.subr.mxu0 0.0
    %4855 = vmatpush1.xpose.msra.mxu0 0.0
    %4856 = vmatprep.subr.mxu0 0.0
    %4857 = vmatpush1.xpose.msra.mxu0 0.0
    %4858 = vmatprep.subr.mxu0 0.0
    %4859 = vmatpush1.xpose.msra.mxu0 0.0
    %4860 = vmatprep.subr.mxu0 0.0
    %4861 = vmatpush1.xpose.msra.mxu0 %v4828
    %4862 = vmatprep.subr.mxu0 0.0
    %4863 = vmatpush2.xpose.msra.mxu0 0.0
    %4864 = vmatprep.subr.mxu0 0.0
    %4865 = vmatpush2.xpose.msra.mxu0 0.0
    %4866 = vmatprep.subr.mxu0 0.0
    %4867 = vmatpush2.xpose.msra.mxu0 0.0
    %4868 = vmatprep.subr.mxu0 0.0
    %4869 = vmatpush2.xpose.msra.mxu0 0.0
    %4870 = vmatprep.subr.mxu0 0.0
    %4871 = vmatpush2.xpose.msra.mxu0 0.0
    %4872 = vmatprep.subr.mxu0 0.0
    %4873 = vmatpush2.xpose.msra.mxu0 0.0
    %4874 = vmatprep.subr.mxu0 0.0
    %4875 = vmatpush2.xpose.msra.mxu0 0.0
    %4876 = vmatprep.subr.mxu0 0.0
    %4877 = vmatpush2.xpose.msra.mxu0 0.0
    %4878 = vmatprep.subr.mxu0 0.0
    %4879 = vmatpush2.xpose.msra.mxu0 0.0
    %4880 = vmatprep.subr.mxu0 0.0
    %4881 = vmatpush2.xpose.msra.mxu0 0.0
    %4882 = vmatprep.subr.mxu0 0.0
    %4883 = vmatpush2.xpose.msra.mxu0 0.0
    %4884 = vmatprep.subr.mxu0 0.0
    %4885 = vmatpush2.xpose.msra.mxu0 0.0
    %4886 = vmatprep.subr.mxu0 0.0
    %4887 = vmatpush2.xpose.msra.mxu0 0.0
    %4888 = vmatprep.subr.mxu0 0.0
    %4889 = vmatpush2.xpose.msra.mxu0 0.0
    %4890 = vmatprep.subr.mxu0 0.0
    %4891 = vmatpush2.xpose.msra.mxu0 0.0
    %4892 = vmatprep.subr.mxu0 0.0
    %4893 = vmatpush2.xpose.msra.mxu0 0.0
    %4894 = vmatprep.mubr.f32.mxu0 0.0
    %4895 = vmatmul.mubr.f32.gmra.mxu0 %v4825
    %v4896 = vpop.f32.mrf.mxu0
    %v4897 = vadd.f32 0.0, %v4896
    %v4898 = vpop.f32.mrf.mxu0
    %4899 = vdwg.mxu0
    %v4901 = vsel %vm352, %v4663, 0
    %v4904 = vsel %vm352, %v4742, 0
    %4906 = vmatprep.subr.mxu0 0.0
    %4907 = vmatpush1.xpose.msra.mxu0 0.0
    %4908 = vmatprep.subr.mxu0 0.0
    %4909 = vmatpush1.xpose.msra.mxu0 0.0
    %4910 = vmatprep.subr.mxu0 0.0
    %4911 = vmatpush1.xpose.msra.mxu0 0.0
    %4912 = vmatprep.subr.mxu0 0.0
    %4913 = vmatpush1.xpose.msra.mxu0 0.0
    %4914 = vmatprep.subr.mxu0 0.0
    %4915 = vmatpush1.xpose.msra.mxu0 0.0
    %4916 = vmatprep.subr.mxu0 0.0
    %4917 = vmatpush1.xpose.msra.mxu0 0.0
    %4918 = vmatprep.subr.mxu0 0.0
    %4919 = vmatpush1.xpose.msra.mxu0 0.0
    %4920 = vmatprep.subr.mxu0 0.0
    %4921 = vmatpush1.xpose.msra.mxu0 0.0
    %4922 = vmatprep.subr.mxu0 0.0
    %4923 = vmatpush1.xpose.msra.mxu0 0.0
    %4924 = vmatprep.subr.mxu0 0.0
    %4925 = vmatpush1.xpose.msra.mxu0 0.0
    %4926 = vmatprep.subr.mxu0 0.0
    %4927 = vmatpush1.xpose.msra.mxu0 0.0
    %4928 = vmatprep.subr.mxu0 0.0
    %4929 = vmatpush1.xpose.msra.mxu0 0.0
    %4930 = vmatprep.subr.mxu0 0.0
    %4931 = vmatpush1.xpose.msra.mxu0 0.0
    %4932 = vmatprep.subr.mxu0 0.0
    %4933 = vmatpush1.xpose.msra.mxu0 0.0
    %4934 = vmatprep.subr.mxu0 0.0
    %4935 = vmatpush1.xpose.msra.mxu0 0.0
    %4936 = vmatprep.subr.mxu0 0.0
    %4937 = vmatpush1.xpose.msra.mxu0 %v4904
    %4938 = vmatprep.subr.mxu0 0.0
    %4939 = vmatpush2.xpose.msra.mxu0 0.0
    %4940 = vmatprep.subr.mxu0 0.0
    %4941 = vmatpush2.xpose.msra.mxu0 0.0
    %4942 = vmatprep.subr.mxu0 0.0
    %4943 = vmatpush2.xpose.msra.mxu0 0.0
    %4944 = vmatprep.subr.mxu0 0.0
    %4945 = vmatpush2.xpose.msra.mxu0 0.0
    %4946 = vmatprep.subr.mxu0 0.0
    %4947 = vmatpush2.xpose.msra.mxu0 0.0
    %4948 = vmatprep.subr.mxu0 0.0
    %4949 = vmatpush2.xpose.msra.mxu0 0.0
    %4950 = vmatprep.subr.mxu0 0.0
    %4951 = vmatpush2.xpose.msra.mxu0 0.0
    %4952 = vmatprep.subr.mxu0 0.0
    %4953 = vmatpush2.xpose.msra.mxu0 0.0
    %4954 = vmatprep.subr.mxu0 0.0
    %4955 = vmatpush2.xpose.msra.mxu0 0.0
    %4956 = vmatprep.subr.mxu0 0.0
    %4957 = vmatpush2.xpose.msra.mxu0 0.0
    %4958 = vmatprep.subr.mxu0 0.0
    %4959 = vmatpush2.xpose.msra.mxu0 0.0
    %4960 = vmatprep.subr.mxu0 0.0
    %4961 = vmatpush2.xpose.msra.mxu0 0.0
    %4962 = vmatprep.subr.mxu0 0.0
    %4963 = vmatpush2.xpose.msra.mxu0 0.0
    %4964 = vmatprep.subr.mxu0 0.0
    %4965 = vmatpush2.xpose.msra.mxu0 0.0
    %4966 = vmatprep.subr.mxu0 0.0
    %4967 = vmatpush2.xpose.msra.mxu0 0.0
    %4968 = vmatprep.subr.mxu0 0.0
    %4969 = vmatpush2.xpose.msra.mxu0 0.0
    %4970 = vmatprep.mubr.f32.mxu0 0.0
    %4971 = vmatmul.mubr.f32.gmra.mxu0 %v4901
    %v4972 = vpop.f32.mrf.mxu0
    %v4973 = vadd.f32 0.0, %v4972
    %v4974 = vpop.f32.mrf.mxu0
    %4975 = vdwg.mxu0
    %v4976 = vmul.f32 %v4897, 0.35355338
    %v4977 = vmul.f32 %v4973, 0.35355338
    %v4978 = vadd.f32 %v4976, %v44
    %v4979 = vadd.f32 %v4977, %v44
    %v4980 = vsel %vm352, %v4978, -inf
    %4981 = vmax.xlane.f32.xlu0 %v4980
    %v4982 = vpop.xlane.xlu0 %4981
    %v4983 = vsel %vm352, %v4979, -inf
    %4984 = vmax.xlane.f32.xlu0 %v4983
    %v4985 = vpop.xlane.xlu0 %4984
    %v4986 = vsub.f32 %v4978, %v4982
    %v4987 = vsub.f32 %v4979, %v4985
    %v4988 = vmul.f32 %v4986, 1.442695
    %v4989 = vpow.pop %v4988
    %v4990 = vmul.f32 %v4987, 1.442695
    %v4991 = vpow.pop %v4990
    %v4992 = vsel %vm352, %v4989, 0.0
    %4993 = vadd.xlane.f32.xlu0 %v4992
    %v4994 = vpop.xlane.xlu0 %4993
    %v4995 = vsel %vm352, %v4991, 0.0
    %4996 = vadd.xlane.f32.xlu0 %v4995
    %v4997 = vpop.xlane.xlu0 %4996
    %v4998 = vrcp.pop %v4994
    %v4999 = vrcp.pop %v4997
    %v5000 = vmul.f32 %v4989, %v4998
    %v5001 = vmul.f32 %v4991, %v4999
    %v5003 = vsel %vm352, %v5000, 0
    %5005 = vmatprep.subr.mxu0 0.0
    %5006 = vmatpush1.msra.mxu0 0.0
    %5007 = vmatprep.subr.mxu0 0.0
    %5008 = vmatpush1.msra.mxu0 0.0
    %5009 = vmatprep.subr.mxu0 0.0
    %5010 = vmatpush1.msra.mxu0 0.0
    %5011 = vmatprep.subr.mxu0 0.0
    %5012 = vmatpush1.msra.mxu0 0.0
    %5013 = vmatprep.subr.mxu0 0.0
    %5014 = vmatpush1.msra.mxu0 0.0
    %5015 = vmatprep.subr.mxu0 0.0
    %5016 = vmatpush1.msra.mxu0 0.0
    %5017 = vmatprep.subr.mxu0 0.0
    %5018 = vmatpush1.msra.mxu0 0.0
    %5019 = vmatprep.subr.mxu0 0.0
    %5020 = vmatpush1.msra.mxu0 0.0
    %5021 = vmatprep.subr.mxu0 0.0
    %5022 = vmatpush1.msra.mxu0 0.0
    %5023 = vmatprep.subr.mxu0 0.0
    %5024 = vmatpush1.msra.mxu0 0.0
    %5025 = vmatprep.subr.mxu0 0.0
    %5026 = vmatpush1.msra.mxu0 0.0
    %5027 = vmatprep.subr.mxu0 0.0
    %5028 = vmatpush1.msra.mxu0 0.0
    %5029 = vmatprep.subr.mxu0 0.0
    %5030 = vmatpush1.msra.mxu0 0.0
    %5031 = vmatprep.subr.mxu0 0.0
    %5032 = vmatpush1.msra.mxu0 0.0
    %5033 = vmatprep.subr.mxu0 0.0
    %5034 = vmatpush1.msra.mxu0 0.0
    %5035 = vmatprep.subr.mxu0 0.0
    %5036 = vmatpush1.msra.mxu0 %v4816
    %5037 = vmatprep.subr.mxu0 0.0
    %5038 = vmatpush2.msra.mxu0 0.0
    %5039 = vmatprep.subr.mxu0 0.0
    %5040 = vmatpush2.msra.mxu0 0.0
    %5041 = vmatprep.subr.mxu0 0.0
    %5042 = vmatpush2.msra.mxu0 0.0
    %5043 = vmatprep.subr.mxu0 0.0
    %5044 = vmatpush2.msra.mxu0 0.0
    %5045 = vmatprep.subr.mxu0 0.0
    %5046 = vmatpush2.msra.mxu0 0.0
    %5047 = vmatprep.subr.mxu0 0.0
    %5048 = vmatpush2.msra.mxu0 0.0
    %5049 = vmatprep.subr.mxu0 0.0
    %5050 = vmatpush2.msra.mxu0 0.0
    %5051 = vmatprep.subr.mxu0 0.0
    %5052 = vmatpush2.msra.mxu0 0.0
    %5053 = vmatprep.subr.mxu0 0.0
    %5054 = vmatpush2.msra.mxu0 0.0
    %5055 = vmatprep.subr.mxu0 0.0
    %5056 = vmatpush2.msra.mxu0 0.0
    %5057 = vmatprep.subr.mxu0 0.0
    %5058 = vmatpush2.msra.mxu0 0.0
    %5059 = vmatprep.subr.mxu0 0.0
    %5060 = vmatpush2.msra.mxu0 0.0
    %5061 = vmatprep.subr.mxu0 0.0
    %5062 = vmatpush2.msra.mxu0 0.0
    %5063 = vmatprep.subr.mxu0 0.0
    %5064 = vmatpush2.msra.mxu0 0.0
    %5065 = vmatprep.subr.mxu0 0.0
    %5066 = vmatpush2.msra.mxu0 0.0
    %5067 = vmatprep.subr.mxu0 0.0
    %5068 = vmatpush2.msra.mxu0 0.0
    %5069 = vmatprep.mubr.f32.mxu0 0.0
    %5070 = vmatmul.mubr.f32.gmra.mxu0 %v5003
    %v5071 = vpop.f32.mrf.mxu0
    %v5072 = vadd.f32 0.0, %v5071
    %v5073 = vpop.f32.mrf.mxu0
    %5074 = vdwg.mxu0
    %v5076 = vsel %vm352, %v5001, 0
    %5078 = vmatprep.subr.mxu0 0.0
    %5079 = vmatpush1.msra.mxu0 0.0
    %5080 = vmatprep.subr.mxu0 0.0
    %5081 = vmatpush1.msra.mxu0 0.0
    %5082 = vmatprep.subr.mxu0 0.0
    %5083 = vmatpush1.msra.mxu0 0.0
    %5084 = vmatprep.subr.mxu0 0.0
    %5085 = vmatpush1.msra.mxu0 0.0
    %5086 = vmatprep.subr.mxu0 0.0
    %5087 = vmatpush1.msra.mxu0 0.0
    %5088 = vmatprep.subr.mxu0 0.0
    %5089 = vmatpush1.msra.mxu0 0.0
    %5090 = vmatprep.subr.mxu0 0.0
    %5091 = vmatpush1.msra.mxu0 0.0
    %5092 = vmatprep.subr.mxu0 0.0
    %5093 = vmatpush1.msra.mxu0 0.0
    %5094 = vmatprep.subr.mxu0 0.0
    %5095 = vmatpush1.msra.mxu0 0.0
    %5096 = vmatprep.subr.mxu0 0.0
    %5097 = vmatpush1.msra.mxu0 0.0
    %5098 = vmatprep.subr.mxu0 0.0
    %5099 = vmatpush1.msra.mxu0 0.0
    %5100 = vmatprep.subr.mxu0 0.0
    %5101 = vmatpush1.msra.mxu0 0.0
    %5102 = vmatprep.subr.mxu0 0.0
    %5103 = vmatpush1.msra.mxu0 0.0
    %5104 = vmatprep.subr.mxu0 0.0
    %5105 = vmatpush1.msra.mxu0 0.0
    %5106 = vmatprep.subr.mxu0 0.0
    %5107 = vmatpush1.msra.mxu0 0.0
    %5108 = vmatprep.subr.mxu0 0.0
    %5109 = vmatpush1.msra.mxu0 %v4821
    %5110 = vmatprep.subr.mxu0 0.0
    %5111 = vmatpush2.msra.mxu0 0.0
    %5112 = vmatprep.subr.mxu0 0.0
    %5113 = vmatpush2.msra.mxu0 0.0
    %5114 = vmatprep.subr.mxu0 0.0
    %5115 = vmatpush2.msra.mxu0 0.0
    %5116 = vmatprep.subr.mxu0 0.0
    %5117 = vmatpush2.msra.mxu0 0.0
    %5118 = vmatprep.subr.mxu0 0.0
    %5119 = vmatpush2.msra.mxu0 0.0
    %5120 = vmatprep.subr.mxu0 0.0
    %5121 = vmatpush2.msra.mxu0 0.0
    %5122 = vmatprep.subr.mxu0 0.0
    %5123 = vmatpush2.msra.mxu0 0.0
    %5124 = vmatprep.subr.mxu0 0.0
    %5125 = vmatpush2.msra.mxu0 0.0
    %5126 = vmatprep.subr.mxu0 0.0
    %5127 = vmatpush2.msra.mxu0 0.0
    %5128 = vmatprep.subr.mxu0 0.0
    %5129 = vmatpush2.msra.mxu0 0.0
    %5130 = vmatprep.subr.mxu0 0.0
    %5131 = vmatpush2.msra.mxu0 0.0
    %5132 = vmatprep.subr.mxu0 0.0
    %5133 = vmatpush2.msra.mxu0 0.0
    %5134 = vmatprep.subr.mxu0 0.0
    %5135 = vmatpush2.msra.mxu0 0.0
    %5136 = vmatprep.subr.mxu0 0.0
    %5137 = vmatpush2.msra.mxu0 0.0
    %5138 = vmatprep.subr.mxu0 0.0
    %5139 = vmatpush2.msra.mxu0 0.0
    %5140 = vmatprep.subr.mxu0 0.0
    %5141 = vmatpush2.msra.mxu0 0.0
    %5142 = vmatprep.mubr.f32.mxu0 0.0
    %5143 = vmatmul.mubr.f32.gmra.mxu0 %v5076
    %v5144 = vpop.f32.mrf.mxu0
    %v5145 = vadd.f32 0.0, %v5144
    %v5146 = vpop.f32.mrf.mxu0
    %5147 = vdwg.mxu0
    %5150 = vrot.lane.b32.xlu0 %v3914, 8
    %v5151 = vpop.permute.xlu0 %5150
    %5152 = vrot.lane.b32.xlu0 %v3987, 8
    %v5153 = vpop.permute.xlu0 %5152
    %5158 = vrot.lane.b32.xlu0 %v4493, 16
    %v5159 = vpop.permute.xlu0 %5158
    %5160 = vrot.lane.b32.xlu0 %v4566, 16
    %v5161 = vpop.permute.xlu0 %5160
    %5166 = vrot.lane.b32.xlu0 %v5072, 24
    %v5167 = vpop.permute.xlu0 %5166
    %5168 = vrot.lane.b32.xlu0 %v5145, 24
    %v5169 = vpop.permute.xlu0 %5168
    %v5172 = vsel %vm352, %v3335, %v5151
    %v5173 = vsel %vm352, %v3408, %v5153
    %v5174 = vsel %vm2440, %v5172, %v5159
    %v5175 = vsel %vm2440, %v5173, %v5161
    %v5176 = vsel %vm2443, %v5174, %v5167
    %v5177 = vsel %vm2443, %v5175, %v5169
    %s5178 = scalar_lea.vmem %s3, 192
    %v5179 = vld [vmem:[%s5178 + $0x20] sm:$0xff]
    %v5180 = vld [vmem:[%s5178 + $0x28] sm:$0xff]
    %v5181 = vld [vmem:[%s5178 + $0x30] sm:$0xff]
    %v5182 = vld [vmem:[%s5178 + $0x38] sm:$0xff]
    %v5184 = vsel %vm52, %v5176, 0
    %v5187 = vsel %vm52, %v5177, 0
    %5189 = vmatprep.subr.mxu0 0.0
    %5190 = vmatpush1.msra.mxu0 0.0
    %5191 = vmatprep.subr.mxu0 0.0
    %5192 = vmatpush1.msra.mxu0 0.0
    %5193 = vmatprep.subr.mxu0 0.0
    %5194 = vmatpush1.msra.mxu0 0.0
    %5195 = vmatprep.subr.mxu0 0.0
    %5196 = vmatpush1.msra.mxu0 0.0
    %5197 = vmatprep.subr.mxu0 0.0
    %5198 = vmatpush1.msra.mxu0 0.0
    %5199 = vmatprep.subr.mxu0 0.0
    %5200 = vmatpush1.msra.mxu0 0.0
    %5201 = vmatprep.subr.mxu0 0.0
    %5202 = vmatpush1.msra.mxu0 0.0
    %5203 = vmatprep.subr.mxu0 0.0
    %5204 = vmatpush1.msra.mxu0 0.0
    %5205 = vmatprep.subr.mxu0 0.0
    %5206 = vmatpush1.msra.mxu0 0.0
    %5207 = vmatprep.subr.mxu0 0.0
    %5208 = vmatpush1.msra.mxu0 0.0
    %5209 = vmatprep.subr.mxu0 0.0
    %5210 = vmatpush1.msra.mxu0 0.0
    %5211 = vmatprep.subr.mxu0 0.0
    %5212 = vmatpush1.msra.mxu0 0.0
    %5213 = vmatprep.subr.mxu0 0.0
    %5214 = vmatpush1.msra.mxu0 %v5182
    %5215 = vmatprep.subr.mxu0 0.0
    %5216 = vmatpush1.msra.mxu0 %v5181
    %5217 = vmatprep.subr.mxu0 0.0
    %5218 = vmatpush1.msra.mxu0 %v5180
    %5219 = vmatprep.subr.mxu0 0.0
    %5220 = vmatpush1.msra.mxu0 %v5179
    %5221 = vmatprep.subr.mxu0 0.0
    %5222 = vmatpush2.msra.mxu0 0.0
    %5223 = vmatprep.subr.mxu0 0.0
    %5224 = vmatpush2.msra.mxu0 0.0
    %5225 = vmatprep.subr.mxu0 0.0
    %5226 = vmatpush2.msra.mxu0 0.0
    %5227 = vmatprep.subr.mxu0 0.0
    %5228 = vmatpush2.msra.mxu0 0.0
    %5229 = vmatprep.subr.mxu0 0.0
    %5230 = vmatpush2.msra.mxu0 0.0
    %5231 = vmatprep.subr.mxu0 0.0
    %5232 = vmatpush2.msra.mxu0 0.0
    %5233 = vmatprep.subr.mxu0 0.0
    %5234 = vmatpush2.msra.mxu0 0.0
    %5235 = vmatprep.subr.mxu0 0.0
    %5236 = vmatpush2.msra.mxu0 0.0
    %5237 = vmatprep.subr.mxu0 0.0
    %5238 = vmatpush2.msra.mxu0 0.0
    %5239 = vmatprep.subr.mxu0 0.0
    %5240 = vmatpush2.msra.mxu0 0.0
    %5241 = vmatprep.subr.mxu0 0.0
    %5242 = vmatpush2.msra.mxu0 0.0
    %5243 = vmatprep.subr.mxu0 0.0
    %5244 = vmatpush2.msra.mxu0 0.0
    %5245 = vmatprep.subr.mxu0 0.0
    %5246 = vmatpush2.msra.mxu0 0.0
    %5247 = vmatprep.subr.mxu0 0.0
    %5248 = vmatpush2.msra.mxu0 0.0
    %5249 = vmatprep.subr.mxu0 0.0
    %5250 = vmatpush2.msra.mxu0 0.0
    %5251 = vmatprep.subr.mxu0 0.0
    %5252 = vmatpush2.msra.mxu0 0.0
    %5253 = vmatprep.mubr.f32.mxu0 0.0
    %5254 = vmatmul.mubr.f32.gmra.mxu0 %v5184
    %v5255 = vpop.f32.mrf.mxu0
    %v5256 = vadd.f32 0.0, %v5255
    %v5257 = vpop.f32.mrf.mxu0
    %5258 = vmatprep.mubr.f32.mxu0 0.0
    %5259 = vmatmul.mubr.f32.gmra.mxu0 %v5187
    %v5260 = vpop.f32.mrf.mxu0
    %v5261 = vadd.f32 0.0, %v5260
    %v5262 = vpop.f32.mrf.mxu0
    %5263 = vdwg.mxu0
    %v5264 = vadd.f32 %v2779, %v5256
    %v5265 = vadd.f32 %v2780, %v5261
    %v5266 = vlaneseq
    %v5267 = vshrl.u32 %v5266, 7
    %v5268 = vsub.s32 0, %v5267
    %v5269 = vrot.slane %v2783, %v5268
    %v5270 = vadd.f32 %v5264, %v5269
    %v5271 = vadd.f32 %v5265, %v5269
    %v5272 = vsel %vm52, %v5270, 0.0
    %5273 = vadd.xlane.f32.xlu0 %v5272
    %v5274 = vpop.xlane.xlu0 %5273
    %v5275 = vsel %vm52, %v5271, 0.0
    %5276 = vadd.xlane.f32.xlu0 %v5275
    %v5277 = vpop.xlane.xlu0 %5276
    %v5278 = vmul.f32 %v5274, %v59
    %v5279 = vmul.f32 %v5277, %v59
    %v5280 = vsub.f32 %v5270, %v5278
    %v5281 = vsub.f32 %v5271, %v5279
    %v5282 = vmul.f32 %v5280, %v5280
    %v5283 = vmul.f32 %v5281, %v5281
    %v5284 = vsel %vm52, %v5282, 0.0
    %5285 = vadd.xlane.f32.xlu0 %v5284
    %v5286 = vpop.xlane.xlu0 %5285
    %v5287 = vsel %vm52, %v5283, 0.0
    %5288 = vadd.xlane.f32.xlu0 %v5287
    %v5289 = vpop.xlane.xlu0 %5288
    %v5290 = vmul.f32 %v5286, %v59
    %v5291 = vmul.f32 %v5289, %v59
    %v5292 = vadd.f32 %v5290, 1e-05
    %v5293 = vadd.f32 %v5291, 1e-05
    %v5294 = vrsqrt.pop %v5292
    %v5295 = vrsqrt.pop %v5293
    %v5296 = vmul.f32 %v5280, %v5294
    %v5297 = vmul.f32 %v5281, %v5295
    %v5298 = vlaneseq
    %v5299 = vshrl.u32 %v5298, 7
    %v5300 = vsub.s32 0, %v5299
    %v5301 = vrot.slane %v2784, %v5300
    %v5302 = vmul.f32 %v5296, %v5301
    %v5303 = vmul.f32 %v5297, %v5301
    %v5304 = vlaneseq
    %v5305 = vshrl.u32 %v5304, 7
    %v5306 = vsub.s32 0, %v5305
    %v5307 = vrot.slane %v2785, %v5306
    %v5308 = vadd.f32 %v5302, %v5307
    %v5309 = vadd.f32 %v5303, %v5307
    %v5310 = vld [vmem:[%s5178] sm:$0xff]
    %v5311 = vld [vmem:[%s5178 + $0x8] sm:$0xff]
    %v5312 = vld [vmem:[%s5178 + $0x10] sm:$0xff]
    %v5313 = vld [vmem:[%s5178 + $0x18] sm:$0xff]
    %v5314 = vlaneseq
    %v5315 = vshrl.u32 %v5314, 7
    %v5316 = vsub.s32 0, %v5315
    %v5317 = vrot.slane %v2786, %v5316
    %v5319 = vsel %vm52, %v5308, 0
    %v5322 = vsel %vm52, %v5309, 0
    %5324 = vmatprep.subr.mxu0 0.0
    %5325 = vmatpush1.msra.mxu0 0.0
    %5326 = vmatprep.subr.mxu0 0.0
    %5327 = vmatpush1.msra.mxu0 0.0
    %5328 = vmatprep.subr.mxu0 0.0
    %5329 = vmatpush1.msra.mxu0 0.0
    %5330 = vmatprep.subr.mxu0 0.0
    %5331 = vmatpush1.msra.mxu0 0.0
    %5332 = vmatprep.subr.mxu0 0.0
    %5333 = vmatpush1.msra.mxu0 0.0
    %5334 = vmatprep.subr.mxu0 0.0
    %5335 = vmatpush1.msra.mxu0 0.0
    %5336 = vmatprep.subr.mxu0 0.0
    %5337 = vmatpush1.msra.mxu0 0.0
    %5338 = vmatprep.subr.mxu0 0.0
    %5339 = vmatpush1.msra.mxu0 0.0
    %5340 = vmatprep.subr.mxu0 0.0
    %5341 = vmatpush1.msra.mxu0 0.0
    %5342 = vmatprep.subr.mxu0 0.0
    %5343 = vmatpush1.msra.mxu0 0.0
    %5344 = vmatprep.subr.mxu0 0.0
    %5345 = vmatpush1.msra.mxu0 0.0
    %5346 = vmatprep.subr.mxu0 0.0
    %5347 = vmatpush1.msra.mxu0 0.0
    %5348 = vmatprep.subr.mxu0 0.0
    %5349 = vmatpush1.msra.mxu0 %v5313
    %5350 = vmatprep.subr.mxu0 0.0
    %5351 = vmatpush1.msra.mxu0 %v5312
    %5352 = vmatprep.subr.mxu0 0.0
    %5353 = vmatpush1.msra.mxu0 %v5311
    %5354 = vmatprep.subr.mxu0 0.0
    %5355 = vmatpush1.msra.mxu0 %v5310
    %5356 = vmatprep.subr.mxu0 0.0
    %5357 = vmatpush2.msra.mxu0 0.0
    %5358 = vmatprep.subr.mxu0 0.0
    %5359 = vmatpush2.msra.mxu0 0.0
    %5360 = vmatprep.subr.mxu0 0.0
    %5361 = vmatpush2.msra.mxu0 0.0
    %5362 = vmatprep.subr.mxu0 0.0
    %5363 = vmatpush2.msra.mxu0 0.0
    %5364 = vmatprep.subr.mxu0 0.0
    %5365 = vmatpush2.msra.mxu0 0.0
    %5366 = vmatprep.subr.mxu0 0.0
    %5367 = vmatpush2.msra.mxu0 0.0
    %5368 = vmatprep.subr.mxu0 0.0
    %5369 = vmatpush2.msra.mxu0 0.0
    %5370 = vmatprep.subr.mxu0 0.0
    %5371 = vmatpush2.msra.mxu0 0.0
    %5372 = vmatprep.subr.mxu0 0.0
    %5373 = vmatpush2.msra.mxu0 0.0
    %5374 = vmatprep.subr.mxu0 0.0
    %5375 = vmatpush2.msra.mxu0 0.0
    %5376 = vmatprep.subr.mxu0 0.0
    %5377 = vmatpush2.msra.mxu0 0.0
    %5378 = vmatprep.subr.mxu0 0.0
    %5379 = vmatpush2.msra.mxu0 0.0
    %5380 = vmatprep.subr.mxu0 0.0
    %5381 = vmatpush2.msra.mxu0 0.0
    %5382 = vmatprep.subr.mxu0 0.0
    %5383 = vmatpush2.msra.mxu0 0.0
    %5384 = vmatprep.subr.mxu0 0.0
    %5385 = vmatpush2.msra.mxu0 0.0
    %5386 = vmatprep.subr.mxu0 0.0
    %5387 = vmatpush2.msra.mxu0 0.0
    %5388 = vmatprep.mubr.f32.mxu0 0.0
    %5389 = vmatmul.mubr.f32.gmra.mxu0 %v5319
    %v5390 = vpop.f32.mrf.mxu0
    %v5391 = vadd.f32 %v5317, %v5390
    %v5392 = vpop.f32.mrf.mxu0
    %5393 = vmatprep.mubr.f32.mxu0 0.0
    %5394 = vmatmul.mubr.f32.gmra.mxu0 %v5322
    %v5395 = vpop.f32.mrf.mxu0
    %v5396 = vadd.f32 %v5317, %v5395
    %v5397 = vpop.f32.mrf.mxu0
    %5398 = vdwg.mxu0
    %v5399 = vmul.f32 %v5391, 1.702
    %v5400 = vmul.f32 %v5396, 1.702
    %v5401 = vxor.u32 %v5399, 2147483648
    %v5402 = vxor.u32 %v5400, 2147483648
    %v5403 = vmul.f32 %v5401, 1.442695
    %v5404 = vpow.pop %v5403
    %v5405 = vmul.f32 %v5402, 1.442695
    %v5406 = vpow.pop %v5405
    %v5407 = vadd.f32 %v5404, 1.0
    %v5408 = vadd.f32 %v5406, 1.0
    %v5409 = vrcp.pop %v5407
    %v5410 = vmul.f32 1.0, %v5409
    %v5411 = vrcp.pop %v5408
    %v5412 = vmul.f32 1.0, %v5411
    %v5413 = vmul.f32 %v5391, %v5410
    %v5414 = vmul.f32 %v5396, %v5412
    %v5415 = vld [vmem:[%s5178 + $0x40] sm:$0xff]
    %v5416 = vld [vmem:[%s5178 + $0x48] sm:$0xff]
    %v5417 = vld [vmem:[%s5178 + $0x50] sm:$0xff]
    %v5418 = vld [vmem:[%s5178 + $0x58] sm:$0xff]
    %v5419 = vld [vmem:[%s5178 + $0x60] sm:$0xff]
    %v5420 = vld [vmem:[%s5178 + $0x68] sm:$0xff]
    %v5421 = vld [vmem:[%s5178 + $0x70] sm:$0xff]
    %v5422 = vld [vmem:[%s5178 + $0x78] sm:$0xff]
    %v5423 = vld [vmem:[%s5178 + $0x80] sm:$0xff]
    %v5424 = vld [vmem:[%s5178 + $0x88] sm:$0xff]
    %v5425 = vld [vmem:[%s5178 + $0x90] sm:$0xff]
    %v5426 = vld [vmem:[%s5178 + $0x98] sm:$0xff]
    %v5427 = vld [vmem:[%s5178 + $0xa0] sm:$0xff]
    %v5428 = vld [vmem:[%s5178 + $0xa8] sm:$0xff]
    %v5429 = vld [vmem:[%s5178 + $0xb0] sm:$0xff]
    %v5430 = vld [vmem:[%s5178 + $0xb8] sm:$0xff]
    %5431 = vmatprep.subr.mxu0 0.0
    %5432 = vmatpush1.msra.mxu0 %v5430
    %5433 = vmatprep.subr.mxu0 0.0
    %5434 = vmatpush1.msra.mxu0 %v5429
    %5435 = vmatprep.subr.mxu0 0.0
    %5436 = vmatpush1.msra.mxu0 %v5428
    %5437 = vmatprep.subr.mxu0 0.0
    %5438 = vmatpush1.msra.mxu0 %v5427
    %5439 = vmatprep.subr.mxu0 0.0
    %5440 = vmatpush1.msra.mxu0 %v5426
    %5441 = vmatprep.subr.mxu0 0.0
    %5442 = vmatpush1.msra.mxu0 %v5425
    %5443 = vmatprep.subr.mxu0 0.0
    %5444 = vmatpush1.msra.mxu0 %v5424
    %5445 = vmatprep.subr.mxu0 0.0
    %5446 = vmatpush1.msra.mxu0 %v5423
    %5447 = vmatprep.subr.mxu0 0.0
    %5448 = vmatpush1.msra.mxu0 %v5422
    %5449 = vmatprep.subr.mxu0 0.0
    %5450 = vmatpush1.msra.mxu0 %v5421
    %5451 = vmatprep.subr.mxu0 0.0
    %5452 = vmatpush1.msra.mxu0 %v5420
    %5453 = vmatprep.subr.mxu0 0.0
    %5454 = vmatpush1.msra.mxu0 %v5419
    %5455 = vmatprep.subr.mxu0 0.0
    %5456 = vmatpush1.msra.mxu0 %v5418
    %5457 = vmatprep.subr.mxu0 0.0
    %5458 = vmatpush1.msra.mxu0 %v5417
    %5459 = vmatprep.subr.mxu0 0.0
    %5460 = vmatpush1.msra.mxu0 %v5416
    %5461 = vmatprep.subr.mxu0 0.0
    %5462 = vmatpush1.msra.mxu0 %v5415
    %5463 = vmatprep.subr.mxu0 0.0
    %5464 = vmatpush2.msra.mxu0 0.0
    %5465 = vmatprep.subr.mxu0 0.0
    %5466 = vmatpush2.msra.mxu0 0.0
    %5467 = vmatprep.subr.mxu0 0.0
    %5468 = vmatpush2.msra.mxu0 0.0
    %5469 = vmatprep.subr.mxu0 0.0
    %5470 = vmatpush2.msra.mxu0 0.0
    %5471 = vmatprep.subr.mxu0 0.0
    %5472 = vmatpush2.msra.mxu0 0.0
    %5473 = vmatprep.subr.mxu0 0.0
    %5474 = vmatpush2.msra.mxu0 0.0
    %5475 = vmatprep.subr.mxu0 0.0
    %5476 = vmatpush2.msra.mxu0 0.0
    %5477 = vmatprep.subr.mxu0 0.0
    %5478 = vmatpush2.msra.mxu0 0.0
    %5479 = vmatprep.subr.mxu0 0.0
    %5480 = vmatpush2.msra.mxu0 0.0
    %5481 = vmatprep.subr.mxu0 0.0
    %5482 = vmatpush2.msra.mxu0 0.0
    %5483 = vmatprep.subr.mxu0 0.0
    %5484 = vmatpush2.msra.mxu0 0.0
    %5485 = vmatprep.subr.mxu0 0.0
    %5486 = vmatpush2.msra.mxu0 0.0
    %5487 = vmatprep.subr.mxu0 0.0
    %5488 = vmatpush2.msra.mxu0 0.0
    %5489 = vmatprep.subr.mxu0 0.0
    %5490 = vmatpush2.msra.mxu0 0.0
    %5491 = vmatprep.subr.mxu0 0.0
    %5492 = vmatpush2.msra.mxu0 0.0
    %5493 = vmatprep.subr.mxu0 0.0
    %5494 = vmatpush2.msra.mxu0 0.0
    %5495 = vmatprep.mubr.f32.mxu0 0.0
    %5496 = vmatmul.mubr.f32.gmra.mxu0 %v5413
    %v5497 = vpop.f32.mrf.mxu0
    %v5498 = vadd.f32 0.0, %v5497
    %v5499 = vpop.f32.mrf.mxu0
    %5500 = vmatprep.mubr.f32.mxu0 0.0
    %5501 = vmatmul.mubr.f32.gmra.mxu0 %v5414
    %v5502 = vpop.f32.mrf.mxu0
    %v5503 = vadd.f32 0.0, %v5502
    %v5504 = vpop.f32.mrf.mxu0
    %5505 = vdwg.mxu0
    %v5506 = vadd.f32 %v5270, %v5498
    %v5507 = vadd.f32 %v5271, %v5503
    %v5508 = vlaneseq
    %v5509 = vshrl.u32 %v5508, 7
    %v5510 = vsub.s32 0, %v5509
    %v5511 = vrot.slane %v2787, %v5510
    %v5512 = vadd.f32 %v5506, %v5511
    %v5513 = vadd.f32 %v5507, %v5511
    %5514 = vst.msk [vmem:[#allocation2] sm:$0xff] %vm52, %v5512
    %5515 = vst.msk [vmem:[#allocation2 + $0x8] sm:$0xff] %vm52, %v5513
    %s5516 = sld [smem:[#allocation3]]
    %s5517 = scalar_lea.vmem [#allocation2], %s5516
    %v5518 = vld [vmem:[%s5517] sm:$0x1]
    %s5519 = sld [smem:[#allocation3 + $0x1]]
    %s5520 = sadd.s32 %s5519, 8
    %s5521 = scalar_lea.vmem [#allocation2], %s5520
    %v5522 = vld [vmem:[%s5521] sm:$0x1]
    %v5524 = vrot.slane %v5522, 7
    %vm5526 = vcmask 1040384
    %v5527 = vsel %vm5526, %v5518, %v5524
    %v5528 = vld [vmem:[%s4 + $0x8] sm:$0x1]
    %v5529 = vld [vmem:[%s4 + $0x9] sm:$0x1]
    %vm5530 = vcmask 254976
    %v5531 = vsel %vm5530, %v5527, 0.0
    %5532 = vadd.xlane.f32.xlu0 %v5531
    %v5533 = vpop.xlane.xlu0 %5532
    %v5534 = vmul.f32 %v5533, %v59
    %v5535 = vsub.f32 %v5527, %v5534
    %v5536 = vmul.f32 %v5535, %v5535
    %v5537 = vsel %vm5530, %v5536, 0.0
    %5538 = vadd.xlane.f32.xlu0 %v5537
    %v5539 = vpop.xlane.xlu0 %5538
    %v5540 = vmul.f32 %v5539, %v59
    %v5541 = vadd.f32 %v5540, 1e-05
    %v5542 = vrsqrt.pop %v5541
    %v5543 = vmul.f32 %v5535, %v5542
    %v5544 = vlaneseq
    %v5545 = vshrl.u32 %v5544, 7
    %v5546 = vsub.s32 0, %v5545
    %v5547 = vrot.slane %v5528, %v5546
    %v5548 = vmul.f32 %v5543, %v5547
    %v5549 = vlaneseq
    %v5550 = vshrl.u32 %v5549, 7
    %v5551 = vsub.s32 0, %v5550
    %v5552 = vrot.slane %v5529, %v5551
    %v5553 = vadd.f32 %v5548, %v5552
    %v5554 = vld [vmem:[%s4 + $0xa] sm:$0xff]
    %v5555 = vld [vmem:[%s4 + $0x12] sm:$0xff]
    %v5556 = vld [vmem:[%s4 + $0x1a] sm:$0xff]
    %v5557 = vld [vmem:[%s4 + $0x22] sm:$0xff]
    %v5559 = vsel %vm52, %v5553, 0
    %5561 = vmatprep.subr.mxu0 0.0
    %5562 = vmatpush1.msra.mxu0 0.0
    %5563 = vmatprep.subr.mxu0 0.0
    %5564 = vmatpush1.msra.mxu0 0.0
    %5565 = vmatprep.subr.mxu0 0.0
    %5566 = vmatpush1.msra.mxu0 0.0
    %5567 = vmatprep.subr.mxu0 0.0
    %5568 = vmatpush1.msra.mxu0 0.0
    %5569 = vmatprep.subr.mxu0 0.0
    %5570 = vmatpush1.msra.mxu0 0.0
    %5571 = vmatprep.subr.mxu0 0.0
    %5572 = vmatpush1.msra.mxu0 0.0
    %5573 = vmatprep.subr.mxu0 0.0
    %5574 = vmatpush1.msra.mxu0 0.0
    %5575 = vmatprep.subr.mxu0 0.0
    %5576 = vmatpush1.msra.mxu0 0.0
    %5577 = vmatprep.subr.mxu0 0.0
    %5578 = vmatpush1.msra.mxu0 0.0
    %5579 = vmatprep.subr.mxu0 0.0
    %5580 = vmatpush1.msra.mxu0 0.0
    %5581 = vmatprep.subr.mxu0 0.0
    %5582 = vmatpush1.msra.mxu0 0.0
    %5583 = vmatprep.subr.mxu0 0.0
    %5584 = vmatpush1.msra.mxu0 0.0
    %5585 = vmatprep.subr.mxu0 0.0
    %5586 = vmatpush1.msra.mxu0 %v5557
    %5587 = vmatprep.subr.mxu0 0.0
    %5588 = vmatpush1.msra.mxu0 %v5556
    %5589 = vmatprep.subr.mxu0 0.0
    %5590 = vmatpush1.msra.mxu0 %v5555
    %5591 = vmatprep.subr.mxu0 0.0
    %5592 = vmatpush1.msra.mxu0 %v5554
    %5593 = vmatprep.subr.mxu0 0.0
    %5594 = vmatpush2.msra.mxu0 0.0
    %5595 = vmatprep.subr.mxu0 0.0
    %5596 = vmatpush2.msra.mxu0 0.0
    %5597 = vmatprep.subr.mxu0 0.0
    %5598 = vmatpush2.msra.mxu0 0.0
    %5599 = vmatprep.subr.mxu0 0.0
    %5600 = vmatpush2.msra.mxu0 0.0
    %5601 = vmatprep.subr.mxu0 0.0
    %5602 = vmatpush2.msra.mxu0 0.0
    %5603 = vmatprep.subr.mxu0 0.0
    %5604 = vmatpush2.msra.mxu0 0.0
    %5605 = vmatprep.subr.mxu0 0.0
    %5606 = vmatpush2.msra.mxu0 0.0
    %5607 = vmatprep.subr.mxu0 0.0
    %5608 = vmatpush2.msra.mxu0 0.0
    %5609 = vmatprep.subr.mxu0 0.0
    %5610 = vmatpush2.msra.mxu0 0.0
    %5611 = vmatprep.subr.mxu0 0.0
    %5612 = vmatpush2.msra.mxu0 0.0
    %5613 = vmatprep.subr.mxu0 0.0
    %5614 = vmatpush2.msra.mxu0 0.0
    %5615 = vmatprep.subr.mxu0 0.0
    %5616 = vmatpush2.msra.mxu0 0.0
    %5617 = vmatprep.subr.mxu0 0.0
    %5618 = vmatpush2.msra.mxu0 0.0
    %5619 = vmatprep.subr.mxu0 0.0
    %5620 = vmatpush2.msra.mxu0 0.0
    %5621 = vmatprep.subr.mxu0 0.0
    %5622 = vmatpush2.msra.mxu0 0.0
    %5623 = vmatprep.subr.mxu0 0.0
    %5624 = vmatpush2.msra.mxu0 0.0
    %5625 = vmatprep.mubr.f32.mxu0 0.0
    %5626 = vmatmul.mubr.f32.gmra.mxu0 %v5559
    %v5627 = vpop.f32.mrf.mxu0
    %v5628 = vadd.f32 0.0, %v5627
    %v5629 = vpop.f32.mrf.mxu0
    %5630 = vdwg.mxu0
    %5631 = vst.msk [vmem:[#allocation6] sm:$0x3] %vm5530, %v5628
    // Predicated region
    $region26: #{tpu_custom_call.1} parent=1 // pred_check
      _
    $region27: #{tpu_custom_call.1} parent=1 // pred_check_branch
      %5633 = sbr.rel (0) target = $region29
    $region28: #{tpu_custom_call.1} parent=1 // pred_region
      %s5635 = ssub.s32 32, 32
      %5636 = vsyncadd [#allocation4], %s5635
      %s5638 = sshll.u32 [#allocation6], 4
      %s5639 = int_to_ptr.vmem [resolvable:$true] %s5638
      %5641 = dma.vmem_to_hbm [thread:$0]  %s5639, 32, %s5, [#allocation4]
    $region29: #{tpu_custom_call.1} parent=1 // pred_fallthru
      _
    // Predicated region
    $region30: #{tpu_custom_call.1} parent=1 // pred_check
      _
    $region31: #{tpu_custom_call.1} parent=1 // pred_check_branch
      %5643 = sbr.rel (0) target = $region33
    $region32: #{tpu_custom_call.1} parent=1 // pred_region
      %5644 = dma.done [#allocation4], 32
    $region33: #{tpu_custom_call.1} parent=1 // pred_fallthru
      _
    %5645 = vsyncpa [#allocation4], 1
    %5646 = vsyncpa [#allocation5], 1

</llo_original>
